<compile_context>
chip_gen: v7x
topology: tpu7x:2x2x1
jax: 0.10.0
libtpu: 0.0.40
codegen_flags: <defaults>
</compile_context>

<pallas_src>
import numpy as np
import jax
import jax.numpy as jnp
from jax.experimental import pallas as pl
from jax.experimental.pallas import tpu as pltpu

MLP_LAYERS = [1, 32, 32, 1]   # mlp_layers from the module (first/last must be 1)
HIDDEN = MLP_LAYERS[1]
ROWS = 2048                   # packed rows per grid step -> ROWS * PACK elements/step


def _pick_pack_factor():
    """Elements packed per hidden row: fill the MXU width (128 on v4/v5, 256 on v6e/v7x)."""
    try:
        kind = jax.devices()[0].device_kind.lower()
    except Exception:
        kind = ""
    return 4 if ("v4" in kind or "v5" in kind) else 8


def value_layer_kernel(x_ref, w1_ref, b1_ref, w2_ref, b2_ref, w3_ref, b3_ref, o_ref):
    # x: (R, P)   w1: (P, PH)  b1: (1, PH)  w2: (PH, PH)  b2: (1, PH)
    # w3: (PH, P) b3: SMEM (1, 1)           o: (R, P)
    x = x_ref[...]                                                     # (R, P)
    # Layer 1: Linear(1 -> H) packed as block-diagonal expansion, + ReLU.
    h = jnp.dot(x, w1_ref[...], preferred_element_type=jnp.float32) + b1_ref[...]
    h = jnp.maximum(h, 0.0)                                            # (R, PH)
    # Layer 2: Linear(H -> H), block-diagonal; K = N = P*H fills the MXU, + ReLU.
    h = jnp.dot(h, w2_ref[...], preferred_element_type=jnp.float32) + b2_ref[...]
    h = jnp.maximum(h, 0.0)                                            # (R, PH)
    # Layer 3: Linear(H -> 1), packed per-group reduction; b3 read from SMEM.
    y = jnp.dot(h, w3_ref[...], preferred_element_type=jnp.float32) + b3_ref[0, 0]
    o_ref[...] = y                                                     # (R, P)


def init_params(key):
    """Deterministic PyTorch-Linear-style init (uniform +-1/sqrt(fan_in)).

    Weights are stored already transposed (in_features, out_features) so the
    math is x @ W + b.
    """
    # TODO(synk): the trilinear_init.pth / init_kernel Adam training loop is an
    # init-time fit, not part of forward; weights here are synthetic.
    ks = jax.random.split(key, 6)
    def lin(kw, kb, fan_in, fan_out):
        bound = 1.0 / np.sqrt(fan_in)
        w = jax.random.uniform(kw, (fan_in, fan_out), jnp.float32, -bound, bound)
        b = jax.random.uniform(kb, (1, fan_out), jnp.float32, -bound, bound)
        return w, b
    w1, b1 = lin(ks[0], ks[1], 1, HIDDEN)
    w2, b2 = lin(ks[2], ks[3], HIDDEN, HIDDEN)
    w3, b3 = lin(ks[4], ks[5], HIDDEN, 1)
    return w1, b1, w2, b2, w3, b3


def pack_params(params, pack):
    """Build block-diagonal (packed) weights: P copies of each layer on the diagonal."""
    w1, b1, w2, b2, w3, b3 = params
    eye = jnp.eye(pack, dtype=jnp.float32)
    w1e = jnp.kron(eye, w1)            # (P, P*H)
    b1t = jnp.tile(b1, (1, pack))      # (1, P*H)
    w2b = jnp.kron(eye, w2)            # (P*H, P*H)
    b2t = jnp.tile(b2, (1, pack))      # (1, P*H)
    w3b = jnp.kron(eye, w3)            # (P*H, P)
    return w1e, b1t, w2b, b2t, w3b, b3


def value_layer_forward(x, params, pack=None, rows=ROWS):
    if pack is None:
        pack = _pick_pack_factor()
    w1e, b1t, w2b, b2t, w3b, b3 = pack_params(params, pack)
    ph = pack * HIDDEN

    orig_shape = x.shape
    flat = x.reshape(-1).astype(jnp.float32)
    n = flat.shape[0]
    elems_per_step = rows * pack
    n_pad = ((n + elems_per_step - 1) // elems_per_step) * elems_per_step
    flat = jnp.pad(flat, (0, n_pad - n))
    xp = flat.reshape(n_pad // pack, pack)      # (n_rows, P); blocks are HBM-contiguous
    n_rows = xp.shape[0]

    def wspec(shape):
        return pl.BlockSpec(shape, lambda i: (0, 0))

    out = pl.pallas_call(
        value_layer_kernel,
        out_shape=jax.ShapeDtypeStruct((n_rows, pack), jnp.float32),
        grid=(n_rows // rows,),
        in_specs=[
            pl.BlockSpec((rows, pack), lambda i: (i, 0)),        # x tile
            wspec((pack, ph)),                                   # w1 (packed)
            wspec((1, ph)),                                      # b1 (tiled)
            wspec((ph, ph)),                                     # w2 (block-diag)
            wspec((1, ph)),                                      # b2 (tiled)
            wspec((ph, pack)),                                   # w3 (packed)
            pl.BlockSpec(memory_space=pltpu.MemorySpace.SMEM),   # b3 scalar in SMEM
        ],
        out_specs=pl.BlockSpec((rows, pack), lambda i: (i, 0)),
        compiler_params=pltpu.CompilerParams(
            dimension_semantics=("parallel",),
            vmem_limit_bytes=32 * 1024 * 1024,
        ),
    )(xp, w1e, b1t, w2b, b2t, w3b, b3)

    y = out.reshape(-1)[:n].reshape(orig_shape)
    # Match torch: x[None, ..., None] -> mlp -> squeeze() removes all size-1 dims.
    return jnp.squeeze(y)


def value_layer_reference(x, params):
    w1, b1, w2, b2, w3, b3 = params
    h = x.astype(jnp.float32)[None, ..., None]               # (1, ..., 1)
    h = jnp.maximum(h @ w1 + b1[0], 0.0)
    h = jnp.maximum(h @ w2 + b2[0], 0.0)
    h = h @ w3 + b3[0]
    return jnp.squeeze(h)


if __name__ == "__main__":
    key = jax.random.PRNGKey(0)
    k_param, k_x, k_x2 = jax.random.split(key, 3)
    params = init_params(k_param)

    # Timestamps in [-1, 1], like the trilinear-kernel training input.
    x = jax.random.uniform(k_x, (2, 512), jnp.float32, minval=-1.0, maxval=1.0)
    out = jax.block_until_ready(value_layer_forward(x, params))
    ref = value_layer_reference(x, params)
    np.testing.assert_allclose(np.asarray(out), np.asarray(ref), rtol=1e-5, atol=1e-5)
    assert out.shape == (2, 512)

    # Odd-sized input: exercises padding and a multi-step grid (rows=256 -> >1 steps).
    x2 = jax.random.uniform(k_x2, (3, 7, 129), jnp.float32, minval=-1.0, maxval=1.0)
    out2 = jax.block_until_ready(value_layer_forward(x2, params, rows=256))
    ref2 = value_layer_reference(x2, params)
    np.testing.assert_allclose(np.asarray(out2), np.asarray(ref2), rtol=1e-5, atol=1e-5)
    assert out2.shape == (3, 7, 129)

    print("KERNEL_OK")
</pallas_src>

<mosaic_0001>
module attributes {stable_mosaic.version = 11 : i64} {
  func.func @value_layer_kernel(%arg0: i32, %arg1: memref<2048x8xf32, #tpu.memory_space<vmem>>, %arg2: memref<8x256xf32, #tpu.memory_space<vmem>>, %arg3: memref<1x256xf32, #tpu.memory_space<vmem>>, %arg4: memref<256x256xf32, #tpu.memory_space<vmem>>, %arg5: memref<1x256xf32, #tpu.memory_space<vmem>>, %arg6: memref<256x8xf32, #tpu.memory_space<vmem>>, %arg7: memref<1x1xf32, #tpu.memory_space<smem>>, %arg8: memref<2048x8xf32, #tpu.memory_space<vmem>>) attributes {dimension_semantics = [#tpu.dimension_semantics<parallel>], iteration_bounds = array<i64: 1>, scalar_prefetch = 0 : i64, scratch_operands = 0 : i64, tpu.core_type = #tpu.core_type<tc>, window_params = [{transform_indices = @transform_0, window_bounds = array<i64: 2048, 8>}, {pipeline_mode = #tpu.pipeline_mode<synchronous>, transform_indices = @transform_1, window_bounds = array<i64: 8, 256>}, {pipeline_mode = #tpu.pipeline_mode<synchronous>, transform_indices = @transform_2, window_bounds = array<i64: 1, 256>}, {pipeline_mode = #tpu.pipeline_mode<synchronous>, transform_indices = @transform_3, window_bounds = array<i64: 256, 256>}, {pipeline_mode = #tpu.pipeline_mode<synchronous>, transform_indices = @transform_4, window_bounds = array<i64: 1, 256>}, {pipeline_mode = #tpu.pipeline_mode<synchronous>, transform_indices = @transform_5, window_bounds = array<i64: 256, 8>}, {transform_indices = @transform_6, window_bounds = array<i64: 1, 1>}, {transform_indices = @transform_7, window_bounds = array<i64: 2048, 8>}]} {
    %c0 = arith.constant 0 : index
    %c0_0 = arith.constant 0 : index
    %0 = vector.load %arg1[%c0, %c0_0] : memref<2048x8xf32, #tpu.memory_space<vmem>>, vector<2048x8xf32>
    %c0_1 = arith.constant 0 : index
    %c0_2 = arith.constant 0 : index
    %1 = vector.load %arg2[%c0_1, %c0_2] : memref<8x256xf32, #tpu.memory_space<vmem>>, vector<8x256xf32>
    %cst = arith.constant dense<0.000000e+00> : vector<2048x256xf32>
    %2 = tpu.matmul %0, %1, %cst {dimension_numbers = #tpu.dot_dimension_numbers<[1], [0], [0], [1], [0, 0, 1, 1], [], []>} : vector<2048x8xf32>, vector<8x256xf32>, vector<2048x256xf32> -> vector<2048x256xf32>
    %c0_3 = arith.constant 0 : index
    %c0_4 = arith.constant 0 : index
    %3 = vector.load %arg3[%c0_3, %c0_4] : memref<1x256xf32, #tpu.memory_space<vmem>>, vector<1x256xf32>
    %4 = vector.broadcast %3 : vector<1x256xf32> to vector<2048x256xf32>
    %5 = arith.addf %2, %4 : vector<2048x256xf32>
    %cst_5 = arith.constant 0.000000e+00 : f32
    %6 = vector.broadcast %cst_5 : f32 to vector<2048x256xf32>
    %7 = arith.maximumf %5, %6 : vector<2048x256xf32>
    %c0_6 = arith.constant 0 : index
    %c0_7 = arith.constant 0 : index
    %8 = vector.load %arg4[%c0_6, %c0_7] : memref<256x256xf32, #tpu.memory_space<vmem>>, vector<256x256xf32>
    %cst_8 = arith.constant dense<0.000000e+00> : vector<2048x256xf32>
    %9 = tpu.matmul %7, %8, %cst_8 {dimension_numbers = #tpu.dot_dimension_numbers<[1], [0], [0], [1], [0, 0, 1, 1], [], []>} : vector<2048x256xf32>, vector<256x256xf32>, vector<2048x256xf32> -> vector<2048x256xf32>
    %c0_9 = arith.constant 0 : index
    %c0_10 = arith.constant 0 : index
    %10 = vector.load %arg5[%c0_9, %c0_10] : memref<1x256xf32, #tpu.memory_space<vmem>>, vector<1x256xf32>
    %11 = vector.broadcast %10 : vector<1x256xf32> to vector<2048x256xf32>
    %12 = arith.addf %9, %11 : vector<2048x256xf32>
    %cst_11 = arith.constant 0.000000e+00 : f32
    %13 = vector.broadcast %cst_11 : f32 to vector<2048x256xf32>
    %14 = arith.maximumf %12, %13 : vector<2048x256xf32>
    %c0_12 = arith.constant 0 : index
    %c0_13 = arith.constant 0 : index
    %15 = vector.load %arg6[%c0_12, %c0_13] : memref<256x8xf32, #tpu.memory_space<vmem>>, vector<256x8xf32>
    %cst_14 = arith.constant dense<0.000000e+00> : vector<2048x8xf32>
    %16 = tpu.matmul %14, %15, %cst_14 {dimension_numbers = #tpu.dot_dimension_numbers<[1], [0], [0], [1], [0, 0, 1, 1], [], []>} : vector<2048x256xf32>, vector<256x8xf32>, vector<2048x8xf32> -> vector<2048x8xf32>
    %c0_15 = arith.constant 0 : index
    %c0_16 = arith.constant 0 : index
    %17 = memref.load %arg7[%c0_15, %c0_16] : memref<1x1xf32, #tpu.memory_space<smem>>
    %18 = vector.broadcast %17 : f32 to vector<2048x8xf32>
    %19 = arith.addf %16, %18 : vector<2048x8xf32>
    %c0_17 = arith.constant 0 : index
    %c0_18 = arith.constant 0 : index
    %20 = vector.load %arg8[%c0_17, %c0_18] : memref<2048x8xf32, #tpu.memory_space<vmem>>, vector<2048x8xf32>
    tpu.vector_store %arg8[%c0_17, %c0_18], %19 {strides = array<i32>} : memref<2048x8xf32, #tpu.memory_space<vmem>>, vector<2048x8xf32>,
    return
  }
  func.func @transform_0(%arg0: i32) -> (i32, i32) {
    %c0_i32 = arith.constant 0 : i32
    %c0_i32_0 = arith.constant 0 : i32
    return %arg0, %c0_i32 : i32, i32
  }
  func.func @transform_1(%arg0: i32) -> (i32, i32) {
    %c0_i32 = arith.constant 0 : i32
    %c0_i32_0 = arith.constant 0 : i32
    %c0_i32_1 = arith.constant 0 : i32
    return %c0_i32, %c0_i32_0 : i32, i32
  }
  func.func @transform_2(%arg0: i32) -> (i32, i32) {
    %c0_i32 = arith.constant 0 : i32
    %c0_i32_0 = arith.constant 0 : i32
    %c0_i32_1 = arith.constant 0 : i32
    return %c0_i32, %c0_i32_0 : i32, i32
  }
  func.func @transform_3(%arg0: i32) -> (i32, i32) {
    %c0_i32 = arith.constant 0 : i32
    %c0_i32_0 = arith.constant 0 : i32
    %c0_i32_1 = arith.constant 0 : i32
    return %c0_i32, %c0_i32_0 : i32, i32
  }
  func.func @transform_4(%arg0: i32) -> (i32, i32) {
    %c0_i32 = arith.constant 0 : i32
    %c0_i32_0 = arith.constant 0 : i32
    %c0_i32_1 = arith.constant 0 : i32
    return %c0_i32, %c0_i32_0 : i32, i32
  }
  func.func @transform_5(%arg0: i32) -> (i32, i32) {
    %c0_i32 = arith.constant 0 : i32
    %c0_i32_0 = arith.constant 0 : i32
    %c0_i32_1 = arith.constant 0 : i32
    return %c0_i32, %c0_i32_0 : i32, i32
  }
  func.func @transform_6(%arg0: i32) -> (i32, i32) {
    %c0_i32 = arith.constant 0 : i32
    %c0_i32_0 = arith.constant 0 : i32
    %c0_i32_1 = arith.constant 0 : i32
    return %c0_i32, %c0_i32_0 : i32, i32
  }
  func.func @transform_7(%arg0: i32) -> (i32, i32) {
    %c0_i32 = arith.constant 0 : i32
    %c0_i32_0 = arith.constant 0 : i32
    return %arg0, %c0_i32 : i32, i32
  }
}

</mosaic_0001>

<llo_original>
// kernel: tpu_custom_call.1
$region0: #{tpu_custom_call.1}
  #allocation0 [shape = 'u32[]', space=smem, size = 0x4, offset = 0x4, fixed_abs, tag = 'smem constant byte address 0x4 - core index']
  #allocation1 [shape = 'u32[144,128]{1,0:T(1,128)}', space=vmem, size = 0x12000, scoped, tag = 'internal scratch']
  #allocation2 [shape = 'f32[1,1]{1,0:T(1,128)S(6)}', space=smem, size = 0x200, scoped, tag = 'scoped memory for tpu_custom_call.1']
  %s0 = inlined_call_operand.vmem [shape: f32[2048,8], index: 0, kind: input, shape index: {}]
  %s1 = inlined_call_operand.vmem [shape: f32[8,256], index: 1, kind: input, shape index: {}]
  %s2 = inlined_call_operand.vmem [shape: f32[1,256], index: 2, kind: input, shape index: {}]
  %s3 = inlined_call_operand.vmem [shape: f32[256,256], index: 3, kind: input, shape index: {}]
  %s4 = inlined_call_operand.vmem [shape: f32[1,256], index: 4, kind: input, shape index: {}]
  %s5 = inlined_call_operand.vmem [shape: f32[256,8], index: 5, kind: input, shape index: {}]
  %s6 = inlined_call_operand.<no memory space> [shape: f32[1,1], index: 6, kind: input, shape index: {}]
  %s7 = inlined_call_operand.vmem [shape: f32[2048,8], index: 7, kind: output, shape index: {}]
  %s8 = sld [smem:[#allocation0]]
  $region38: #{tpu_custom_call.1} parent=0
    _
  %s10 = ssub.s32 1, %s8
  %s11 = scalar_select 0, %s10, %s8
  %12 = sst [smem:[#allocation2]] %s6
  // Predicated region
  $region2: #{tpu_custom_call.1} parent=0 // pred_check
    _
  $region3: #{tpu_custom_call.1} parent=0 // pred_check_branch
    %14 = sbr.rel (0) target = $region5
  $region4: #{tpu_custom_call.1} parent=0 // pred_region
    _
  $region5: #{tpu_custom_call.1} parent=0 // pred_fallthru
    _
  // Predicated region
  $region6: #{tpu_custom_call.1} parent=0 // pred_check
    _
  $region7: #{tpu_custom_call.1} parent=0 // pred_check_branch
    %16 = sbr.rel (0) target = $region9
  $region8: #{tpu_custom_call.1} parent=0 // pred_region
    _
  $region9: #{tpu_custom_call.1} parent=0 // pred_fallthru
    _
  // Predicated region
  $region10: #{tpu_custom_call.1} parent=0 // pred_check
    _
  $region11: #{tpu_custom_call.1} parent=0 // pred_check_branch
    %18 = sbr.rel (0) target = $region13
  $region12: #{tpu_custom_call.1} parent=0 // pred_region
    _
  $region13: #{tpu_custom_call.1} parent=0 // pred_fallthru
    _
  // Predicated region
  $region14: #{tpu_custom_call.1} parent=0 // pred_check
    _
  $region15: #{tpu_custom_call.1} parent=0 // pred_check_branch
    %20 = sbr.rel (0) target = $region17
  $region16: #{tpu_custom_call.1} parent=0 // pred_region
    _
  $region17: #{tpu_custom_call.1} parent=0 // pred_fallthru
    _
  // Predicated region
  $region18: #{tpu_custom_call.1} parent=0 // pred_check
    _
  $region19: #{tpu_custom_call.1} parent=0 // pred_check_branch
    %22 = sbr.rel (0) target = $region21
  $region20: #{tpu_custom_call.1} parent=0 // pred_region
    _
  $region21: #{tpu_custom_call.1} parent=0 // pred_fallthru
    _
  // Predicated region
  $region22: #{tpu_custom_call.1} parent=0 // pred_check
    _
  $region23: #{tpu_custom_call.1} parent=0 // pred_check_branch
    %24 = sbr.rel (0) target = $region25
  $region24: #{tpu_custom_call.1} parent=0 // pred_region
    _
  $region25: #{tpu_custom_call.1} parent=0 // pred_fallthru
    _
  // Predicated region
  $region26: #{tpu_custom_call.1} parent=0 // pred_check
    _
  $region27: #{tpu_custom_call.1} parent=0 // pred_check_branch
    %26 = sbr.rel (0) target = $region29
  $region28: #{tpu_custom_call.1} parent=0 // pred_region
    _
  $region29: #{tpu_custom_call.1} parent=0 // pred_fallthru
    _
  %v27 = vld [vmem:[%s0] sm:$0xff]
  %v28 = vld [vmem:[%s0 + $0x8] sm:$0xff]
  %v29 = vld [vmem:[%s0 + $0x10] sm:$0xff]
  %v30 = vld [vmem:[%s0 + $0x18] sm:$0xff]
  %v31 = vld [vmem:[%s0 + $0x20] sm:$0xff]
  %v32 = vld [vmem:[%s0 + $0x28] sm:$0xff]
  %v33 = vld [vmem:[%s0 + $0x30] sm:$0xff]
  %v34 = vld [vmem:[%s0 + $0x38] sm:$0xff]
  %v35 = vld [vmem:[%s0 + $0x40] sm:$0xff]
  %v36 = vld [vmem:[%s0 + $0x48] sm:$0xff]
  %v37 = vld [vmem:[%s0 + $0x50] sm:$0xff]
  %v38 = vld [vmem:[%s0 + $0x58] sm:$0xff]
  %v39 = vld [vmem:[%s0 + $0x60] sm:$0xff]
  %v40 = vld [vmem:[%s0 + $0x68] sm:$0xff]
  %v41 = vld [vmem:[%s0 + $0x70] sm:$0xff]
  %v42 = vld [vmem:[%s0 + $0x78] sm:$0xff]
  %v43 = vld [vmem:[%s0 + $0x80] sm:$0xff]
  %v44 = vld [vmem:[%s0 + $0x88] sm:$0xff]
  %v45 = vld [vmem:[%s0 + $0x90] sm:$0xff]
  %v46 = vld [vmem:[%s0 + $0x98] sm:$0xff]
  %v47 = vld [vmem:[%s0 + $0xa0] sm:$0xff]
  %v48 = vld [vmem:[%s0 + $0xa8] sm:$0xff]
  %v49 = vld [vmem:[%s0 + $0xb0] sm:$0xff]
  %v50 = vld [vmem:[%s0 + $0xb8] sm:$0xff]
  %v51 = vld [vmem:[%s0 + $0xc0] sm:$0xff]
  %v52 = vld [vmem:[%s0 + $0xc8] sm:$0xff]
  %v53 = vld [vmem:[%s0 + $0xd0] sm:$0xff]
  %v54 = vld [vmem:[%s0 + $0xd8] sm:$0xff]
  %v55 = vld [vmem:[%s0 + $0xe0] sm:$0xff]
  %v56 = vld [vmem:[%s0 + $0xe8] sm:$0xff]
  %v57 = vld [vmem:[%s0 + $0xf0] sm:$0xff]
  %v58 = vld [vmem:[%s0 + $0xf8] sm:$0xff]
  %v59 = vld [vmem:[%s0 + $0x100] sm:$0xff]
  %v60 = vld [vmem:[%s0 + $0x108] sm:$0xff]
  %v61 = vld [vmem:[%s0 + $0x110] sm:$0xff]
  %v62 = vld [vmem:[%s0 + $0x118] sm:$0xff]
  %v63 = vld [vmem:[%s0 + $0x120] sm:$0xff]
  %v64 = vld [vmem:[%s0 + $0x128] sm:$0xff]
  %v65 = vld [vmem:[%s0 + $0x130] sm:$0xff]
  %v66 = vld [vmem:[%s0 + $0x138] sm:$0xff]
  %v67 = vld [vmem:[%s0 + $0x140] sm:$0xff]
  %v68 = vld [vmem:[%s0 + $0x148] sm:$0xff]
  %v69 = vld [vmem:[%s0 + $0x150] sm:$0xff]
  %v70 = vld [vmem:[%s0 + $0x158] sm:$0xff]
  %v71 = vld [vmem:[%s0 + $0x160] sm:$0xff]
  %v72 = vld [vmem:[%s0 + $0x168] sm:$0xff]
  %v73 = vld [vmem:[%s0 + $0x170] sm:$0xff]
  %v74 = vld [vmem:[%s0 + $0x178] sm:$0xff]
  %v75 = vld [vmem:[%s0 + $0x180] sm:$0xff]
  %v76 = vld [vmem:[%s0 + $0x188] sm:$0xff]
  %v77 = vld [vmem:[%s0 + $0x190] sm:$0xff]
  %v78 = vld [vmem:[%s0 + $0x198] sm:$0xff]
  %v79 = vld [vmem:[%s0 + $0x1a0] sm:$0xff]
  %v80 = vld [vmem:[%s0 + $0x1a8] sm:$0xff]
  %v81 = vld [vmem:[%s0 + $0x1b0] sm:$0xff]
  %v82 = vld [vmem:[%s0 + $0x1b8] sm:$0xff]
  %v83 = vld [vmem:[%s0 + $0x1c0] sm:$0xff]
  %v84 = vld [vmem:[%s0 + $0x1c8] sm:$0xff]
  %v85 = vld [vmem:[%s0 + $0x1d0] sm:$0xff]
  %v86 = vld [vmem:[%s0 + $0x1d8] sm:$0xff]
  %v87 = vld [vmem:[%s0 + $0x1e0] sm:$0xff]
  %v88 = vld [vmem:[%s0 + $0x1e8] sm:$0xff]
  %v89 = vld [vmem:[%s0 + $0x1f0] sm:$0xff]
  %v90 = vld [vmem:[%s0 + $0x1f8] sm:$0xff]
  %v91 = vld [vmem:[%s0 + $0x200] sm:$0xff]
  %v92 = vld [vmem:[%s0 + $0x208] sm:$0xff]
  %v93 = vld [vmem:[%s0 + $0x210] sm:$0xff]
  %v94 = vld [vmem:[%s0 + $0x218] sm:$0xff]
  %v95 = vld [vmem:[%s0 + $0x220] sm:$0xff]
  %v96 = vld [vmem:[%s0 + $0x228] sm:$0xff]
  %v97 = vld [vmem:[%s0 + $0x230] sm:$0xff]
  %v98 = vld [vmem:[%s0 + $0x238] sm:$0xff]
  %v99 = vld [vmem:[%s0 + $0x240] sm:$0xff]
  %v100 = vld [vmem:[%s0 + $0x248] sm:$0xff]
  %v101 = vld [vmem:[%s0 + $0x250] sm:$0xff]
  %v102 = vld [vmem:[%s0 + $0x258] sm:$0xff]
  %v103 = vld [vmem:[%s0 + $0x260] sm:$0xff]
  %v104 = vld [vmem:[%s0 + $0x268] sm:$0xff]
  %v105 = vld [vmem:[%s0 + $0x270] sm:$0xff]
  %v106 = vld [vmem:[%s0 + $0x278] sm:$0xff]
  %v107 = vld [vmem:[%s0 + $0x280] sm:$0xff]
  %v108 = vld [vmem:[%s0 + $0x288] sm:$0xff]
  %v109 = vld [vmem:[%s0 + $0x290] sm:$0xff]
  %v110 = vld [vmem:[%s0 + $0x298] sm:$0xff]
  %v111 = vld [vmem:[%s0 + $0x2a0] sm:$0xff]
  %v112 = vld [vmem:[%s0 + $0x2a8] sm:$0xff]
  %v113 = vld [vmem:[%s0 + $0x2b0] sm:$0xff]
  %v114 = vld [vmem:[%s0 + $0x2b8] sm:$0xff]
  %v115 = vld [vmem:[%s0 + $0x2c0] sm:$0xff]
  %v116 = vld [vmem:[%s0 + $0x2c8] sm:$0xff]
  %v117 = vld [vmem:[%s0 + $0x2d0] sm:$0xff]
  %v118 = vld [vmem:[%s0 + $0x2d8] sm:$0xff]
  %v119 = vld [vmem:[%s0 + $0x2e0] sm:$0xff]
  %v120 = vld [vmem:[%s0 + $0x2e8] sm:$0xff]
  %v121 = vld [vmem:[%s0 + $0x2f0] sm:$0xff]
  %v122 = vld [vmem:[%s0 + $0x2f8] sm:$0xff]
  %v123 = vld [vmem:[%s0 + $0x300] sm:$0xff]
  %v124 = vld [vmem:[%s0 + $0x308] sm:$0xff]
  %v125 = vld [vmem:[%s0 + $0x310] sm:$0xff]
  %v126 = vld [vmem:[%s0 + $0x318] sm:$0xff]
  %v127 = vld [vmem:[%s0 + $0x320] sm:$0xff]
  %v128 = vld [vmem:[%s0 + $0x328] sm:$0xff]
  %v129 = vld [vmem:[%s0 + $0x330] sm:$0xff]
  %v130 = vld [vmem:[%s0 + $0x338] sm:$0xff]
  %v131 = vld [vmem:[%s0 + $0x340] sm:$0xff]
  %v132 = vld [vmem:[%s0 + $0x348] sm:$0xff]
  %v133 = vld [vmem:[%s0 + $0x350] sm:$0xff]
  %v134 = vld [vmem:[%s0 + $0x358] sm:$0xff]
  %v135 = vld [vmem:[%s0 + $0x360] sm:$0xff]
  %v136 = vld [vmem:[%s0 + $0x368] sm:$0xff]
  %v137 = vld [vmem:[%s0 + $0x370] sm:$0xff]
  %v138 = vld [vmem:[%s0 + $0x378] sm:$0xff]
  %v139 = vld [vmem:[%s0 + $0x380] sm:$0xff]
  %v140 = vld [vmem:[%s0 + $0x388] sm:$0xff]
  %v141 = vld [vmem:[%s0 + $0x390] sm:$0xff]
  %v142 = vld [vmem:[%s0 + $0x398] sm:$0xff]
  %v143 = vld [vmem:[%s0 + $0x3a0] sm:$0xff]
  %v144 = vld [vmem:[%s0 + $0x3a8] sm:$0xff]
  %v145 = vld [vmem:[%s0 + $0x3b0] sm:$0xff]
  %v146 = vld [vmem:[%s0 + $0x3b8] sm:$0xff]
  %v147 = vld [vmem:[%s0 + $0x3c0] sm:$0xff]
  %v148 = vld [vmem:[%s0 + $0x3c8] sm:$0xff]
  %v149 = vld [vmem:[%s0 + $0x3d0] sm:$0xff]
  %v150 = vld [vmem:[%s0 + $0x3d8] sm:$0xff]
  %v151 = vld [vmem:[%s0 + $0x3e0] sm:$0xff]
  %v152 = vld [vmem:[%s0 + $0x3e8] sm:$0xff]
  %v153 = vld [vmem:[%s0 + $0x3f0] sm:$0xff]
  %v154 = vld [vmem:[%s0 + $0x3f8] sm:$0xff]
  %v155 = vld [vmem:[%s0 + $0x400] sm:$0xff]
  %v156 = vld [vmem:[%s0 + $0x408] sm:$0xff]
  %v157 = vld [vmem:[%s0 + $0x410] sm:$0xff]
  %v158 = vld [vmem:[%s0 + $0x418] sm:$0xff]
  %v159 = vld [vmem:[%s0 + $0x420] sm:$0xff]
  %v160 = vld [vmem:[%s0 + $0x428] sm:$0xff]
  %v161 = vld [vmem:[%s0 + $0x430] sm:$0xff]
  %v162 = vld [vmem:[%s0 + $0x438] sm:$0xff]
  %v163 = vld [vmem:[%s0 + $0x440] sm:$0xff]
  %v164 = vld [vmem:[%s0 + $0x448] sm:$0xff]
  %v165 = vld [vmem:[%s0 + $0x450] sm:$0xff]
  %v166 = vld [vmem:[%s0 + $0x458] sm:$0xff]
  %v167 = vld [vmem:[%s0 + $0x460] sm:$0xff]
  %v168 = vld [vmem:[%s0 + $0x468] sm:$0xff]
  %v169 = vld [vmem:[%s0 + $0x470] sm:$0xff]
  %v170 = vld [vmem:[%s0 + $0x478] sm:$0xff]
  %v171 = vld [vmem:[%s0 + $0x480] sm:$0xff]
  %v172 = vld [vmem:[%s0 + $0x488] sm:$0xff]
  %v173 = vld [vmem:[%s0 + $0x490] sm:$0xff]
  %v174 = vld [vmem:[%s0 + $0x498] sm:$0xff]
  %v175 = vld [vmem:[%s0 + $0x4a0] sm:$0xff]
  %v176 = vld [vmem:[%s0 + $0x4a8] sm:$0xff]
  %v177 = vld [vmem:[%s0 + $0x4b0] sm:$0xff]
  %v178 = vld [vmem:[%s0 + $0x4b8] sm:$0xff]
  %v179 = vld [vmem:[%s0 + $0x4c0] sm:$0xff]
  %v180 = vld [vmem:[%s0 + $0x4c8] sm:$0xff]
  %v181 = vld [vmem:[%s0 + $0x4d0] sm:$0xff]
  %v182 = vld [vmem:[%s0 + $0x4d8] sm:$0xff]
  %v183 = vld [vmem:[%s0 + $0x4e0] sm:$0xff]
  %v184 = vld [vmem:[%s0 + $0x4e8] sm:$0xff]
  %v185 = vld [vmem:[%s0 + $0x4f0] sm:$0xff]
  %v186 = vld [vmem:[%s0 + $0x4f8] sm:$0xff]
  %v187 = vld [vmem:[%s0 + $0x500] sm:$0xff]
  %v188 = vld [vmem:[%s0 + $0x508] sm:$0xff]
  %v189 = vld [vmem:[%s0 + $0x510] sm:$0xff]
  %v190 = vld [vmem:[%s0 + $0x518] sm:$0xff]
  %v191 = vld [vmem:[%s0 + $0x520] sm:$0xff]
  %v192 = vld [vmem:[%s0 + $0x528] sm:$0xff]
  %v193 = vld [vmem:[%s0 + $0x530] sm:$0xff]
  %v194 = vld [vmem:[%s0 + $0x538] sm:$0xff]
  %v195 = vld [vmem:[%s0 + $0x540] sm:$0xff]
  %v196 = vld [vmem:[%s0 + $0x548] sm:$0xff]
  %v197 = vld [vmem:[%s0 + $0x550] sm:$0xff]
  %v198 = vld [vmem:[%s0 + $0x558] sm:$0xff]
  %v199 = vld [vmem:[%s0 + $0x560] sm:$0xff]
  %v200 = vld [vmem:[%s0 + $0x568] sm:$0xff]
  %v201 = vld [vmem:[%s0 + $0x570] sm:$0xff]
  %v202 = vld [vmem:[%s0 + $0x578] sm:$0xff]
  %v203 = vld [vmem:[%s0 + $0x580] sm:$0xff]
  %v204 = vld [vmem:[%s0 + $0x588] sm:$0xff]
  %v205 = vld [vmem:[%s0 + $0x590] sm:$0xff]
  %v206 = vld [vmem:[%s0 + $0x598] sm:$0xff]
  %v207 = vld [vmem:[%s0 + $0x5a0] sm:$0xff]
  %v208 = vld [vmem:[%s0 + $0x5a8] sm:$0xff]
  %v209 = vld [vmem:[%s0 + $0x5b0] sm:$0xff]
  %v210 = vld [vmem:[%s0 + $0x5b8] sm:$0xff]
  %v211 = vld [vmem:[%s0 + $0x5c0] sm:$0xff]
  %v212 = vld [vmem:[%s0 + $0x5c8] sm:$0xff]
  %v213 = vld [vmem:[%s0 + $0x5d0] sm:$0xff]
  %v214 = vld [vmem:[%s0 + $0x5d8] sm:$0xff]
  %v215 = vld [vmem:[%s0 + $0x5e0] sm:$0xff]
  %v216 = vld [vmem:[%s0 + $0x5e8] sm:$0xff]
  %v217 = vld [vmem:[%s0 + $0x5f0] sm:$0xff]
  %v218 = vld [vmem:[%s0 + $0x5f8] sm:$0xff]
  %v219 = vld [vmem:[%s0 + $0x600] sm:$0xff]
  %v220 = vld [vmem:[%s0 + $0x608] sm:$0xff]
  %v221 = vld [vmem:[%s0 + $0x610] sm:$0xff]
  %v222 = vld [vmem:[%s0 + $0x618] sm:$0xff]
  %v223 = vld [vmem:[%s0 + $0x620] sm:$0xff]
  %v224 = vld [vmem:[%s0 + $0x628] sm:$0xff]
  %v225 = vld [vmem:[%s0 + $0x630] sm:$0xff]
  %v226 = vld [vmem:[%s0 + $0x638] sm:$0xff]
  %v227 = vld [vmem:[%s0 + $0x640] sm:$0xff]
  %v228 = vld [vmem:[%s0 + $0x648] sm:$0xff]
  %v229 = vld [vmem:[%s0 + $0x650] sm:$0xff]
  %v230 = vld [vmem:[%s0 + $0x658] sm:$0xff]
  %v231 = vld [vmem:[%s0 + $0x660] sm:$0xff]
  %v232 = vld [vmem:[%s0 + $0x668] sm:$0xff]
  %v233 = vld [vmem:[%s0 + $0x670] sm:$0xff]
  %v234 = vld [vmem:[%s0 + $0x678] sm:$0xff]
  %v235 = vld [vmem:[%s0 + $0x680] sm:$0xff]
  %v236 = vld [vmem:[%s0 + $0x688] sm:$0xff]
  %v237 = vld [vmem:[%s0 + $0x690] sm:$0xff]
  %v238 = vld [vmem:[%s0 + $0x698] sm:$0xff]
  %v239 = vld [vmem:[%s0 + $0x6a0] sm:$0xff]
  %v240 = vld [vmem:[%s0 + $0x6a8] sm:$0xff]
  %v241 = vld [vmem:[%s0 + $0x6b0] sm:$0xff]
  %v242 = vld [vmem:[%s0 + $0x6b8] sm:$0xff]
  %v243 = vld [vmem:[%s0 + $0x6c0] sm:$0xff]
  %v244 = vld [vmem:[%s0 + $0x6c8] sm:$0xff]
  %v245 = vld [vmem:[%s0 + $0x6d0] sm:$0xff]
  %v246 = vld [vmem:[%s0 + $0x6d8] sm:$0xff]
  %v247 = vld [vmem:[%s0 + $0x6e0] sm:$0xff]
  %v248 = vld [vmem:[%s0 + $0x6e8] sm:$0xff]
  %v249 = vld [vmem:[%s0 + $0x6f0] sm:$0xff]
  %v250 = vld [vmem:[%s0 + $0x6f8] sm:$0xff]
  %v251 = vld [vmem:[%s0 + $0x700] sm:$0xff]
  %v252 = vld [vmem:[%s0 + $0x708] sm:$0xff]
  %v253 = vld [vmem:[%s0 + $0x710] sm:$0xff]
  %v254 = vld [vmem:[%s0 + $0x718] sm:$0xff]
  %v255 = vld [vmem:[%s0 + $0x720] sm:$0xff]
  %v256 = vld [vmem:[%s0 + $0x728] sm:$0xff]
  %v257 = vld [vmem:[%s0 + $0x730] sm:$0xff]
  %v258 = vld [vmem:[%s0 + $0x738] sm:$0xff]
  %v259 = vld [vmem:[%s0 + $0x740] sm:$0xff]
  %v260 = vld [vmem:[%s0 + $0x748] sm:$0xff]
  %v261 = vld [vmem:[%s0 + $0x750] sm:$0xff]
  %v262 = vld [vmem:[%s0 + $0x758] sm:$0xff]
  %v263 = vld [vmem:[%s0 + $0x760] sm:$0xff]
  %v264 = vld [vmem:[%s0 + $0x768] sm:$0xff]
  %v265 = vld [vmem:[%s0 + $0x770] sm:$0xff]
  %v266 = vld [vmem:[%s0 + $0x778] sm:$0xff]
  %v267 = vld [vmem:[%s0 + $0x780] sm:$0xff]
  %v268 = vld [vmem:[%s0 + $0x788] sm:$0xff]
  %v269 = vld [vmem:[%s0 + $0x790] sm:$0xff]
  %v270 = vld [vmem:[%s0 + $0x798] sm:$0xff]
  %v271 = vld [vmem:[%s0 + $0x7a0] sm:$0xff]
  %v272 = vld [vmem:[%s0 + $0x7a8] sm:$0xff]
  %v273 = vld [vmem:[%s0 + $0x7b0] sm:$0xff]
  %v274 = vld [vmem:[%s0 + $0x7b8] sm:$0xff]
  %v275 = vld [vmem:[%s0 + $0x7c0] sm:$0xff]
  %v276 = vld [vmem:[%s0 + $0x7c8] sm:$0xff]
  %v277 = vld [vmem:[%s0 + $0x7d0] sm:$0xff]
  %v278 = vld [vmem:[%s0 + $0x7d8] sm:$0xff]
  %v279 = vld [vmem:[%s0 + $0x7e0] sm:$0xff]
  %v280 = vld [vmem:[%s0 + $0x7e8] sm:$0xff]
  %v281 = vld [vmem:[%s0 + $0x7f0] sm:$0xff]
  %v282 = vld [vmem:[%s0 + $0x7f8] sm:$0xff]
  %v283 = vld [vmem:[%s1] sm:$0xff]
  %v284 = vld [vmem:[%s1 + $0x8] sm:$0xff]
  %v285 = vld [vmem:[%s2] sm:$0x3]
  %v287 = vlaneseq
  %v288 = vshrl.u32 %v287, 7
  %v289 = vsub.s32 0, %v288
  %v290 = vrot.slane %v285, %v289
  %v291 = vlaneseq
  %v292 = vshrl.u32 %v291, 7
  %v293 = vsub.s32 1, %v292
  %v294 = vrot.slane %v285, %v293
  %vm297 = vcmask 64512
  %v299 = vsel %vm297, %v27, 0
  %v302 = vsel %vm297, %v28, 0
  %v305 = vsel %vm297, %v29, 0
  %v308 = vsel %vm297, %v30, 0
  %v311 = vsel %vm297, %v31, 0
  %v314 = vsel %vm297, %v32, 0
  %v317 = vsel %vm297, %v33, 0
  %v320 = vsel %vm297, %v34, 0
  %v323 = vsel %vm297, %v35, 0
  %v326 = vsel %vm297, %v36, 0
  %v329 = vsel %vm297, %v37, 0
  %v332 = vsel %vm297, %v38, 0
  %v335 = vsel %vm297, %v39, 0
  %v338 = vsel %vm297, %v40, 0
  %v341 = vsel %vm297, %v41, 0
  %v344 = vsel %vm297, %v42, 0
  %v347 = vsel %vm297, %v43, 0
  %v350 = vsel %vm297, %v44, 0
  %v353 = vsel %vm297, %v45, 0
  %v356 = vsel %vm297, %v46, 0
  %v359 = vsel %vm297, %v47, 0
  %v362 = vsel %vm297, %v48, 0
  %v365 = vsel %vm297, %v49, 0
  %v368 = vsel %vm297, %v50, 0
  %v371 = vsel %vm297, %v51, 0
  %v374 = vsel %vm297, %v52, 0
  %v377 = vsel %vm297, %v53, 0
  %v380 = vsel %vm297, %v54, 0
  %v383 = vsel %vm297, %v55, 0
  %v386 = vsel %vm297, %v56, 0
  %v389 = vsel %vm297, %v57, 0
  %v392 = vsel %vm297, %v58, 0
  %v395 = vsel %vm297, %v59, 0
  %v398 = vsel %vm297, %v60, 0
  %v401 = vsel %vm297, %v61, 0
  %v404 = vsel %vm297, %v62, 0
  %v407 = vsel %vm297, %v63, 0
  %v410 = vsel %vm297, %v64, 0
  %v413 = vsel %vm297, %v65, 0
  %v416 = vsel %vm297, %v66, 0
  %v419 = vsel %vm297, %v67, 0
  %v422 = vsel %vm297, %v68, 0
  %v425 = vsel %vm297, %v69, 0
  %v428 = vsel %vm297, %v70, 0
  %v431 = vsel %vm297, %v71, 0
  %v434 = vsel %vm297, %v72, 0
  %v437 = vsel %vm297, %v73, 0
  %v440 = vsel %vm297, %v74, 0
  %v443 = vsel %vm297, %v75, 0
  %v446 = vsel %vm297, %v76, 0
  %v449 = vsel %vm297, %v77, 0
  %v452 = vsel %vm297, %v78, 0
  %v455 = vsel %vm297, %v79, 0
  %v458 = vsel %vm297, %v80, 0
  %v461 = vsel %vm297, %v81, 0
  %v464 = vsel %vm297, %v82, 0
  %v467 = vsel %vm297, %v83, 0
  %v470 = vsel %vm297, %v84, 0
  %v473 = vsel %vm297, %v85, 0
  %v476 = vsel %vm297, %v86, 0
  %v479 = vsel %vm297, %v87, 0
  %v482 = vsel %vm297, %v88, 0
  %v485 = vsel %vm297, %v89, 0
  %v488 = vsel %vm297, %v90, 0
  %v491 = vsel %vm297, %v91, 0
  %v494 = vsel %vm297, %v92, 0
  %v497 = vsel %vm297, %v93, 0
  %v500 = vsel %vm297, %v94, 0
  %v503 = vsel %vm297, %v95, 0
  %v506 = vsel %vm297, %v96, 0
  %v509 = vsel %vm297, %v97, 0
  %v512 = vsel %vm297, %v98, 0
  %v515 = vsel %vm297, %v99, 0
  %v518 = vsel %vm297, %v100, 0
  %v521 = vsel %vm297, %v101, 0
  %v524 = vsel %vm297, %v102, 0
  %v527 = vsel %vm297, %v103, 0
  %v530 = vsel %vm297, %v104, 0
  %v533 = vsel %vm297, %v105, 0
  %v536 = vsel %vm297, %v106, 0
  %v539 = vsel %vm297, %v107, 0
  %v542 = vsel %vm297, %v108, 0
  %v545 = vsel %vm297, %v109, 0
  %v548 = vsel %vm297, %v110, 0
  %v551 = vsel %vm297, %v111, 0
  %v554 = vsel %vm297, %v112, 0
  %v557 = vsel %vm297, %v113, 0
  %v560 = vsel %vm297, %v114, 0
  %v563 = vsel %vm297, %v115, 0
  %v566 = vsel %vm297, %v116, 0
  %v569 = vsel %vm297, %v117, 0
  %v572 = vsel %vm297, %v118, 0
  %v575 = vsel %vm297, %v119, 0
  %v578 = vsel %vm297, %v120, 0
  %v581 = vsel %vm297, %v121, 0
  %v584 = vsel %vm297, %v122, 0
  %v587 = vsel %vm297, %v123, 0
  %v590 = vsel %vm297, %v124, 0
  %v593 = vsel %vm297, %v125, 0
  %v596 = vsel %vm297, %v126, 0
  %v599 = vsel %vm297, %v127, 0
  %v602 = vsel %vm297, %v128, 0
  %v605 = vsel %vm297, %v129, 0
  %v608 = vsel %vm297, %v130, 0
  %v611 = vsel %vm297, %v131, 0
  %v614 = vsel %vm297, %v132, 0
  %v617 = vsel %vm297, %v133, 0
  %v620 = vsel %vm297, %v134, 0
  %v623 = vsel %vm297, %v135, 0
  %v626 = vsel %vm297, %v136, 0
  %v629 = vsel %vm297, %v137, 0
  %v632 = vsel %vm297, %v138, 0
  %v635 = vsel %vm297, %v139, 0
  %v638 = vsel %vm297, %v140, 0
  %v641 = vsel %vm297, %v141, 0
  %v644 = vsel %vm297, %v142, 0
  %v647 = vsel %vm297, %v143, 0
  %v650 = vsel %vm297, %v144, 0
  %v653 = vsel %vm297, %v145, 0
  %v656 = vsel %vm297, %v146, 0
  %v659 = vsel %vm297, %v147, 0
  %v662 = vsel %vm297, %v148, 0
  %v665 = vsel %vm297, %v149, 0
  %v668 = vsel %vm297, %v150, 0
  %v671 = vsel %vm297, %v151, 0
  %v674 = vsel %vm297, %v152, 0
  %v677 = vsel %vm297, %v153, 0
  %v680 = vsel %vm297, %v154, 0
  %v683 = vsel %vm297, %v155, 0
  %v686 = vsel %vm297, %v156, 0
  %v689 = vsel %vm297, %v157, 0
  %v692 = vsel %vm297, %v158, 0
  %v695 = vsel %vm297, %v159, 0
  %v698 = vsel %vm297, %v160, 0
  %v701 = vsel %vm297, %v161, 0
  %v704 = vsel %vm297, %v162, 0
  %v707 = vsel %vm297, %v163, 0
  %v710 = vsel %vm297, %v164, 0
  %v713 = vsel %vm297, %v165, 0
  %v716 = vsel %vm297, %v166, 0
  %v719 = vsel %vm297, %v167, 0
  %v722 = vsel %vm297, %v168, 0
  %v725 = vsel %vm297, %v169, 0
  %v728 = vsel %vm297, %v170, 0
  %v731 = vsel %vm297, %v171, 0
  %v734 = vsel %vm297, %v172, 0
  %v737 = vsel %vm297, %v173, 0
  %v740 = vsel %vm297, %v174, 0
  %v743 = vsel %vm297, %v175, 0
  %v746 = vsel %vm297, %v176, 0
  %v749 = vsel %vm297, %v177, 0
  %v752 = vsel %vm297, %v178, 0
  %v755 = vsel %vm297, %v179, 0
  %v758 = vsel %vm297, %v180, 0
  %v761 = vsel %vm297, %v181, 0
  %v764 = vsel %vm297, %v182, 0
  %v767 = vsel %vm297, %v183, 0
  %v770 = vsel %vm297, %v184, 0
  %v773 = vsel %vm297, %v185, 0
  %v776 = vsel %vm297, %v186, 0
  %v779 = vsel %vm297, %v187, 0
  %v782 = vsel %vm297, %v188, 0
  %v785 = vsel %vm297, %v189, 0
  %v788 = vsel %vm297, %v190, 0
  %v791 = vsel %vm297, %v191, 0
  %v794 = vsel %vm297, %v192, 0
  %v797 = vsel %vm297, %v193, 0
  %v800 = vsel %vm297, %v194, 0
  %v803 = vsel %vm297, %v195, 0
  %v806 = vsel %vm297, %v196, 0
  %v809 = vsel %vm297, %v197, 0
  %v812 = vsel %vm297, %v198, 0
  %v815 = vsel %vm297, %v199, 0
  %v818 = vsel %vm297, %v200, 0
  %v821 = vsel %vm297, %v201, 0
  %v824 = vsel %vm297, %v202, 0
  %v827 = vsel %vm297, %v203, 0
  %v830 = vsel %vm297, %v204, 0
  %v833 = vsel %vm297, %v205, 0
  %v836 = vsel %vm297, %v206, 0
  %v839 = vsel %vm297, %v207, 0
  %v842 = vsel %vm297, %v208, 0
  %v845 = vsel %vm297, %v209, 0
  %v848 = vsel %vm297, %v210, 0
  %v851 = vsel %vm297, %v211, 0
  %v854 = vsel %vm297, %v212, 0
  %v857 = vsel %vm297, %v213, 0
  %v860 = vsel %vm297, %v214, 0
  %v863 = vsel %vm297, %v215, 0
  %v866 = vsel %vm297, %v216, 0
  %v869 = vsel %vm297, %v217, 0
  %v872 = vsel %vm297, %v218, 0
  %v875 = vsel %vm297, %v219, 0
  %v878 = vsel %vm297, %v220, 0
  %v881 = vsel %vm297, %v221, 0
  %v884 = vsel %vm297, %v222, 0
  %v887 = vsel %vm297, %v223, 0
  %v890 = vsel %vm297, %v224, 0
  %v893 = vsel %vm297, %v225, 0
  %v896 = vsel %vm297, %v226, 0
  %v899 = vsel %vm297, %v227, 0
  %v902 = vsel %vm297, %v228, 0
  %v905 = vsel %vm297, %v229, 0
  %v908 = vsel %vm297, %v230, 0
  %v911 = vsel %vm297, %v231, 0
  %v914 = vsel %vm297, %v232, 0
  %v917 = vsel %vm297, %v233, 0
  %v920 = vsel %vm297, %v234, 0
  %v923 = vsel %vm297, %v235, 0
  %v926 = vsel %vm297, %v236, 0
  %v929 = vsel %vm297, %v237, 0
  %v932 = vsel %vm297, %v238, 0
  %v935 = vsel %vm297, %v239, 0
  %v938 = vsel %vm297, %v240, 0
  %v941 = vsel %vm297, %v241, 0
  %v944 = vsel %vm297, %v242, 0
  %v947 = vsel %vm297, %v243, 0
  %v950 = vsel %vm297, %v244, 0
  %v953 = vsel %vm297, %v245, 0
  %v956 = vsel %vm297, %v246, 0
  %v959 = vsel %vm297, %v247, 0
  %v962 = vsel %vm297, %v248, 0
  %v965 = vsel %vm297, %v249, 0
  %v968 = vsel %vm297, %v250, 0
  %v971 = vsel %vm297, %v251, 0
  %v974 = vsel %vm297, %v252, 0
  %v977 = vsel %vm297, %v253, 0
  %v980 = vsel %vm297, %v254, 0
  %v983 = vsel %vm297, %v255, 0
  %v986 = vsel %vm297, %v256, 0
  %v989 = vsel %vm297, %v257, 0
  %v992 = vsel %vm297, %v258, 0
  %v995 = vsel %vm297, %v259, 0
  %v998 = vsel %vm297, %v260, 0
  %v1001 = vsel %vm297, %v261, 0
  %v1004 = vsel %vm297, %v262, 0
  %v1007 = vsel %vm297, %v263, 0
  %v1010 = vsel %vm297, %v264, 0
  %v1013 = vsel %vm297, %v265, 0
  %v1016 = vsel %vm297, %v266, 0
  %v1019 = vsel %vm297, %v267, 0
  %v1022 = vsel %vm297, %v268, 0
  %v1025 = vsel %vm297, %v269, 0
  %v1028 = vsel %vm297, %v270, 0
  %v1031 = vsel %vm297, %v271, 0
  %v1034 = vsel %vm297, %v272, 0
  %v1037 = vsel %vm297, %v273, 0
  %v1040 = vsel %vm297, %v274, 0
  %v1043 = vsel %vm297, %v275, 0
  %v1046 = vsel %vm297, %v276, 0
  %v1049 = vsel %vm297, %v277, 0
  %v1052 = vsel %vm297, %v278, 0
  %v1055 = vsel %vm297, %v279, 0
  %v1058 = vsel %vm297, %v280, 0
  %v1061 = vsel %vm297, %v281, 0
  %v1064 = vsel %vm297, %v282, 0
  %1066 = vmatprep.subr.mxu0 %v284
  %1067 = vmatpush1.msra.mxu0 %v283
  %1068 = vmatprep.subr.mxu0 0.0
  %1069 = vmatpush1.msra.mxu0 0.0
  %1070 = vmatprep.subr.mxu0 0.0
  %1071 = vmatpush1.msra.mxu0 0.0
  %1072 = vmatprep.subr.mxu0 0.0
  %1073 = vmatpush1.msra.mxu0 0.0
  %1074 = vmatprep.subr.mxu0 0.0
  %1075 = vmatpush1.msra.mxu0 0.0
  %1076 = vmatprep.subr.mxu0 0.0
  %1077 = vmatpush1.msra.mxu0 0.0
  %1078 = vmatprep.subr.mxu0 0.0
  %1079 = vmatpush1.msra.mxu0 0.0
  %1080 = vmatprep.subr.mxu0 0.0
  %1081 = vmatpush1.msra.mxu0 0.0
  %1082 = vmatprep.subr.mxu0 0.0
  %1083 = vmatpush1.msra.mxu0 0.0
  %1084 = vmatprep.subr.mxu0 0.0
  %1085 = vmatpush1.msra.mxu0 0.0
  %1086 = vmatprep.subr.mxu0 0.0
  %1087 = vmatpush1.msra.mxu0 0.0
  %1088 = vmatprep.subr.mxu0 0.0
  %1089 = vmatpush1.msra.mxu0 0.0
  %1090 = vmatprep.subr.mxu0 0.0
  %1091 = vmatpush1.msra.mxu0 0.0
  %1092 = vmatprep.subr.mxu0 0.0
  %1093 = vmatpush1.msra.mxu0 0.0
  %1094 = vmatprep.subr.mxu0 0.0
  %1095 = vmatpush1.msra.mxu0 0.0
  %1096 = vmatprep.subr.mxu0 0.0
  %1097 = vmatpush1.msra.mxu0 0.0
  %1098 = vmatprep.subr.mxu0 0.0
  %1099 = vmatpush1.msra.mxu0 0.0
  %1100 = vmatprep.subr.mxu0 0.0
  %1101 = vmatpush1.msra.mxu0 0.0
  %1102 = vmatprep.subr.mxu0 0.0
  %1103 = vmatpush1.msra.mxu0 0.0
  %1104 = vmatprep.subr.mxu0 0.0
  %1105 = vmatpush1.msra.mxu0 0.0
  %1106 = vmatprep.subr.mxu0 0.0
  %1107 = vmatpush1.msra.mxu0 0.0
  %1108 = vmatprep.subr.mxu0 0.0
  %1109 = vmatpush1.msra.mxu0 0.0
  %1110 = vmatprep.subr.mxu0 0.0
  %1111 = vmatpush1.msra.mxu0 0.0
  %1112 = vmatprep.subr.mxu0 0.0
  %1113 = vmatpush1.msra.mxu0 0.0
  %1114 = vmatprep.subr.mxu0 0.0
  %1115 = vmatpush1.msra.mxu0 0.0
  %1116 = vmatprep.subr.mxu0 0.0
  %1117 = vmatpush1.msra.mxu0 0.0
  %1118 = vmatprep.subr.mxu0 0.0
  %1119 = vmatpush1.msra.mxu0 0.0
  %1120 = vmatprep.subr.mxu0 0.0
  %1121 = vmatpush1.msra.mxu0 0.0
  %1122 = vmatprep.subr.mxu0 0.0
  %1123 = vmatpush1.msra.mxu0 0.0
  %1124 = vmatprep.subr.mxu0 0.0
  %1125 = vmatpush1.msra.mxu0 0.0
  %1126 = vmatprep.subr.mxu0 0.0
  %1127 = vmatpush1.msra.mxu0 0.0
  %1128 = vmatprep.subr.mxu0 0.0
  %1129 = vmatpush1.msra.mxu0 0.0
  %1130 = vmatprep.mubr.f32.mxu0 0.0
  %1131 = vmatmul.mubr.f32.gmra.mrb[0].mxu0 %v299
  %v1132 = vpop.f32.mrb[0].mxu0
  %v1133 = vadd.f32 %v290, %v1132
  %v1134 = vpop.f32.mrb[0].mxu0
  %v1135 = vadd.f32 %v294, %v1134
  %1136 = vmatprep.mubr.f32.mxu0 0.0
  %1137 = vmatmul.mubr.f32.gmra.mrb[0].mxu0 %v302
  %v1138 = vpop.f32.mrb[0].mxu0
  %v1139 = vadd.f32 %v290, %v1138
  %v1140 = vpop.f32.mrb[0].mxu0
  %v1141 = vadd.f32 %v294, %v1140
  %1142 = vmatprep.mubr.f32.mxu0 0.0
  %1143 = vmatmul.mubr.f32.gmra.mrb[0].mxu0 %v305
  %v1144 = vpop.f32.mrb[0].mxu0
  %v1145 = vadd.f32 %v290, %v1144
  %v1146 = vpop.f32.mrb[0].mxu0
  %v1147 = vadd.f32 %v294, %v1146
  %1148 = vmatprep.mubr.f32.mxu0 0.0
  %1149 = vmatmul.mubr.f32.gmra.mrb[0].mxu0 %v308
  %v1150 = vpop.f32.mrb[0].mxu0
  %v1151 = vadd.f32 %v290, %v1150
  %v1152 = vpop.f32.mrb[0].mxu0
  %v1153 = vadd.f32 %v294, %v1152
  %1154 = vmatprep.mubr.f32.mxu0 0.0
  %1155 = vmatmul.mubr.f32.gmra.mrb[0].mxu0 %v311
  %v1156 = vpop.f32.mrb[0].mxu0
  %v1157 = vadd.f32 %v290, %v1156
  %v1158 = vpop.f32.mrb[0].mxu0
  %v1159 = vadd.f32 %v294, %v1158
  %1160 = vmatprep.mubr.f32.mxu0 0.0
  %1161 = vmatmul.mubr.f32.gmra.mrb[0].mxu0 %v314
  %v1162 = vpop.f32.mrb[0].mxu0
  %v1163 = vadd.f32 %v290, %v1162
  %v1164 = vpop.f32.mrb[0].mxu0
  %v1165 = vadd.f32 %v294, %v1164
  %1166 = vmatprep.mubr.f32.mxu0 0.0
  %1167 = vmatmul.mubr.f32.gmra.mrb[0].mxu0 %v317
  %v1168 = vpop.f32.mrb[0].mxu0
  %v1169 = vadd.f32 %v290, %v1168
  %v1170 = vpop.f32.mrb[0].mxu0
  %v1171 = vadd.f32 %v294, %v1170
  %1172 = vmatprep.mubr.f32.mxu0 0.0
  %1173 = vmatmul.mubr.f32.gmra.mrb[0].mxu0 %v320
  %v1174 = vpop.f32.mrb[0].mxu0
  %v1175 = vadd.f32 %v290, %v1174
  %v1176 = vpop.f32.mrb[0].mxu0
  %v1177 = vadd.f32 %v294, %v1176
  %1178 = vmatprep.mubr.f32.mxu0 0.0
  %1179 = vmatmul.mubr.f32.gmra.mrb[0].mxu0 %v323
  %v1180 = vpop.f32.mrb[0].mxu0
  %v1181 = vadd.f32 %v290, %v1180
  %v1182 = vpop.f32.mrb[0].mxu0
  %v1183 = vadd.f32 %v294, %v1182
  %1184 = vmatprep.mubr.f32.mxu0 0.0
  %1185 = vmatmul.mubr.f32.gmra.mrb[0].mxu0 %v326
  %v1186 = vpop.f32.mrb[0].mxu0
  %v1187 = vadd.f32 %v290, %v1186
  %v1188 = vpop.f32.mrb[0].mxu0
  %v1189 = vadd.f32 %v294, %v1188
  %1190 = vmatprep.mubr.f32.mxu0 0.0
  %1191 = vmatmul.mubr.f32.gmra.mrb[0].mxu0 %v329
  %v1192 = vpop.f32.mrb[0].mxu0
  %v1193 = vadd.f32 %v290, %v1192
  %v1194 = vpop.f32.mrb[0].mxu0
  %v1195 = vadd.f32 %v294, %v1194
  %1196 = vmatprep.mubr.f32.mxu0 0.0
  %1197 = vmatmul.mubr.f32.gmra.mrb[0].mxu0 %v332
  %v1198 = vpop.f32.mrb[0].mxu0
  %v1199 = vadd.f32 %v290, %v1198
  %v1200 = vpop.f32.mrb[0].mxu0
  %v1201 = vadd.f32 %v294, %v1200
  %1202 = vmatprep.mubr.f32.mxu0 0.0
  %1203 = vmatmul.mubr.f32.gmra.mrb[0].mxu0 %v335
  %v1204 = vpop.f32.mrb[0].mxu0
  %v1205 = vadd.f32 %v290, %v1204
  %v1206 = vpop.f32.mrb[0].mxu0
  %v1207 = vadd.f32 %v294, %v1206
  %1208 = vmatprep.mubr.f32.mxu0 0.0
  %1209 = vmatmul.mubr.f32.gmra.mrb[0].mxu0 %v338
  %v1210 = vpop.f32.mrb[0].mxu0
  %v1211 = vadd.f32 %v290, %v1210
  %v1212 = vpop.f32.mrb[0].mxu0
  %v1213 = vadd.f32 %v294, %v1212
  %1214 = vmatprep.mubr.f32.mxu0 0.0
  %1215 = vmatmul.mubr.f32.gmra.mrb[0].mxu0 %v341
  %v1216 = vpop.f32.mrb[0].mxu0
  %v1217 = vadd.f32 %v290, %v1216
  %v1218 = vpop.f32.mrb[0].mxu0
  %v1219 = vadd.f32 %v294, %v1218
  %1220 = vmatprep.mubr.f32.mxu0 0.0
  %1221 = vmatmul.mubr.f32.gmra.mrb[0].mxu0 %v344
  %v1222 = vpop.f32.mrb[0].mxu0
  %v1223 = vadd.f32 %v290, %v1222
  %v1224 = vpop.f32.mrb[0].mxu0
  %v1225 = vadd.f32 %v294, %v1224
  %1226 = vmatprep.mubr.f32.mxu0 0.0
  %1227 = vmatmul.mubr.f32.gmra.mrb[0].mxu0 %v347
  %v1228 = vpop.f32.mrb[0].mxu0
  %v1229 = vadd.f32 %v290, %v1228
  %v1230 = vpop.f32.mrb[0].mxu0
  %v1231 = vadd.f32 %v294, %v1230
  %1232 = vmatprep.mubr.f32.mxu0 0.0
  %1233 = vmatmul.mubr.f32.gmra.mrb[0].mxu0 %v350
  %v1234 = vpop.f32.mrb[0].mxu0
  %v1235 = vadd.f32 %v290, %v1234
  %v1236 = vpop.f32.mrb[0].mxu0
  %v1237 = vadd.f32 %v294, %v1236
  %1238 = vmatprep.mubr.f32.mxu0 0.0
  %1239 = vmatmul.mubr.f32.gmra.mrb[0].mxu0 %v353
  %v1240 = vpop.f32.mrb[0].mxu0
  %v1241 = vadd.f32 %v290, %v1240
  %v1242 = vpop.f32.mrb[0].mxu0
  %v1243 = vadd.f32 %v294, %v1242
  %1244 = vmatprep.mubr.f32.mxu0 0.0
  %1245 = vmatmul.mubr.f32.gmra.mrb[0].mxu0 %v356
  %v1246 = vpop.f32.mrb[0].mxu0
  %v1247 = vadd.f32 %v290, %v1246
  %v1248 = vpop.f32.mrb[0].mxu0
  %v1249 = vadd.f32 %v294, %v1248
  %1250 = vmatprep.mubr.f32.mxu0 0.0
  %1251 = vmatmul.mubr.f32.gmra.mrb[0].mxu0 %v359
  %v1252 = vpop.f32.mrb[0].mxu0
  %v1253 = vadd.f32 %v290, %v1252
  %v1254 = vpop.f32.mrb[0].mxu0
  %v1255 = vadd.f32 %v294, %v1254
  %1256 = vmatprep.mubr.f32.mxu0 0.0
  %1257 = vmatmul.mubr.f32.gmra.mrb[0].mxu0 %v362
  %v1258 = vpop.f32.mrb[0].mxu0
  %v1259 = vadd.f32 %v290, %v1258
  %v1260 = vpop.f32.mrb[0].mxu0
  %v1261 = vadd.f32 %v294, %v1260
  %1262 = vmatprep.mubr.f32.mxu0 0.0
  %1263 = vmatmul.mubr.f32.gmra.mrb[0].mxu0 %v365
  %v1264 = vpop.f32.mrb[0].mxu0
  %v1265 = vadd.f32 %v290, %v1264
  %v1266 = vpop.f32.mrb[0].mxu0
  %v1267 = vadd.f32 %v294, %v1266
  %1268 = vmatprep.mubr.f32.mxu0 0.0
  %1269 = vmatmul.mubr.f32.gmra.mrb[0].mxu0 %v368
  %v1270 = vpop.f32.mrb[0].mxu0
  %v1271 = vadd.f32 %v290, %v1270
  %v1272 = vpop.f32.mrb[0].mxu0
  %v1273 = vadd.f32 %v294, %v1272
  %1274 = vmatprep.mubr.f32.mxu0 0.0
  %1275 = vmatmul.mubr.f32.gmra.mrb[0].mxu0 %v371
  %v1276 = vpop.f32.mrb[0].mxu0
  %v1277 = vadd.f32 %v290, %v1276
  %v1278 = vpop.f32.mrb[0].mxu0
  %v1279 = vadd.f32 %v294, %v1278
  %1280 = vmatprep.mubr.f32.mxu0 0.0
  %1281 = vmatmul.mubr.f32.gmra.mrb[0].mxu0 %v374
  %v1282 = vpop.f32.mrb[0].mxu0
  %v1283 = vadd.f32 %v290, %v1282
  %v1284 = vpop.f32.mrb[0].mxu0
  %v1285 = vadd.f32 %v294, %v1284
  %1286 = vmatprep.mubr.f32.mxu0 0.0
  %1287 = vmatmul.mubr.f32.gmra.mrb[0].mxu0 %v377
  %v1288 = vpop.f32.mrb[0].mxu0
  %v1289 = vadd.f32 %v290, %v1288
  %v1290 = vpop.f32.mrb[0].mxu0
  %v1291 = vadd.f32 %v294, %v1290
  %1292 = vmatprep.mubr.f32.mxu0 0.0
  %1293 = vmatmul.mubr.f32.gmra.mrb[0].mxu0 %v380
  %v1294 = vpop.f32.mrb[0].mxu0
  %v1295 = vadd.f32 %v290, %v1294
  %v1296 = vpop.f32.mrb[0].mxu0
  %v1297 = vadd.f32 %v294, %v1296
  %1298 = vmatprep.mubr.f32.mxu0 0.0
  %1299 = vmatmul.mubr.f32.gmra.mrb[0].mxu0 %v383
  %v1300 = vpop.f32.mrb[0].mxu0
  %v1301 = vadd.f32 %v290, %v1300
  %v1302 = vpop.f32.mrb[0].mxu0
  %v1303 = vadd.f32 %v294, %v1302
  %1304 = vmatprep.mubr.f32.mxu0 0.0
  %1305 = vmatmul.mubr.f32.gmra.mrb[0].mxu0 %v386
  %v1306 = vpop.f32.mrb[0].mxu0
  %v1307 = vadd.f32 %v290, %v1306
  %v1308 = vpop.f32.mrb[0].mxu0
  %v1309 = vadd.f32 %v294, %v1308
  %1310 = vmatprep.mubr.f32.mxu0 0.0
  %1311 = vmatmul.mubr.f32.gmra.mrb[0].mxu0 %v389
  %v1312 = vpop.f32.mrb[0].mxu0
  %v1313 = vadd.f32 %v290, %v1312
  %v1314 = vpop.f32.mrb[0].mxu0
  %v1315 = vadd.f32 %v294, %v1314
  %1316 = vmatprep.mubr.f32.mxu0 0.0
  %1317 = vmatmul.mubr.f32.gmra.mrb[0].mxu0 %v392
  %v1318 = vpop.f32.mrb[0].mxu0
  %v1319 = vadd.f32 %v290, %v1318
  %v1320 = vpop.f32.mrb[0].mxu0
  %v1321 = vadd.f32 %v294, %v1320
  %1322 = vmatprep.mubr.f32.mxu0 0.0
  %1323 = vmatmul.mubr.f32.gmra.mrb[0].mxu0 %v395
  %v1324 = vpop.f32.mrb[0].mxu0
  %v1325 = vadd.f32 %v290, %v1324
  %v1326 = vpop.f32.mrb[0].mxu0
  %v1327 = vadd.f32 %v294, %v1326
  %1328 = vmatprep.mubr.f32.mxu0 0.0
  %1329 = vmatmul.mubr.f32.gmra.mrb[0].mxu0 %v398
  %v1330 = vpop.f32.mrb[0].mxu0
  %v1331 = vadd.f32 %v290, %v1330
  %v1332 = vpop.f32.mrb[0].mxu0
  %v1333 = vadd.f32 %v294, %v1332
  %1334 = vmatprep.mubr.f32.mxu0 0.0
  %1335 = vmatmul.mubr.f32.gmra.mrb[0].mxu0 %v401
  %v1336 = vpop.f32.mrb[0].mxu0
  %v1337 = vadd.f32 %v290, %v1336
  %v1338 = vpop.f32.mrb[0].mxu0
  %v1339 = vadd.f32 %v294, %v1338
  %1340 = vmatprep.mubr.f32.mxu0 0.0
  %1341 = vmatmul.mubr.f32.gmra.mrb[0].mxu0 %v404
  %v1342 = vpop.f32.mrb[0].mxu0
  %v1343 = vadd.f32 %v290, %v1342
  %v1344 = vpop.f32.mrb[0].mxu0
  %v1345 = vadd.f32 %v294, %v1344
  %1346 = vmatprep.mubr.f32.mxu0 0.0
  %1347 = vmatmul.mubr.f32.gmra.mrb[0].mxu0 %v407
  %v1348 = vpop.f32.mrb[0].mxu0
  %v1349 = vadd.f32 %v290, %v1348
  %v1350 = vpop.f32.mrb[0].mxu0
  %v1351 = vadd.f32 %v294, %v1350
  %1352 = vmatprep.mubr.f32.mxu0 0.0
  %1353 = vmatmul.mubr.f32.gmra.mrb[0].mxu0 %v410
  %v1354 = vpop.f32.mrb[0].mxu0
  %v1355 = vadd.f32 %v290, %v1354
  %v1356 = vpop.f32.mrb[0].mxu0
  %v1357 = vadd.f32 %v294, %v1356
  %1358 = vmatprep.mubr.f32.mxu0 0.0
  %1359 = vmatmul.mubr.f32.gmra.mrb[0].mxu0 %v413
  %v1360 = vpop.f32.mrb[0].mxu0
  %v1361 = vadd.f32 %v290, %v1360
  %v1362 = vpop.f32.mrb[0].mxu0
  %v1363 = vadd.f32 %v294, %v1362
  %1364 = vmatprep.mubr.f32.mxu0 0.0
  %1365 = vmatmul.mubr.f32.gmra.mrb[0].mxu0 %v416
  %v1366 = vpop.f32.mrb[0].mxu0
  %v1367 = vadd.f32 %v290, %v1366
  %v1368 = vpop.f32.mrb[0].mxu0
  %v1369 = vadd.f32 %v294, %v1368
  %1370 = vmatprep.mubr.f32.mxu0 0.0
  %1371 = vmatmul.mubr.f32.gmra.mrb[0].mxu0 %v419
  %v1372 = vpop.f32.mrb[0].mxu0
  %v1373 = vadd.f32 %v290, %v1372
  %v1374 = vpop.f32.mrb[0].mxu0
  %v1375 = vadd.f32 %v294, %v1374
  %1376 = vmatprep.mubr.f32.mxu0 0.0
  %1377 = vmatmul.mubr.f32.gmra.mrb[0].mxu0 %v422
  %v1378 = vpop.f32.mrb[0].mxu0
  %v1379 = vadd.f32 %v290, %v1378
  %v1380 = vpop.f32.mrb[0].mxu0
  %v1381 = vadd.f32 %v294, %v1380
  %1382 = vmatprep.mubr.f32.mxu0 0.0
  %1383 = vmatmul.mubr.f32.gmra.mrb[0].mxu0 %v425
  %v1384 = vpop.f32.mrb[0].mxu0
  %v1385 = vadd.f32 %v290, %v1384
  %v1386 = vpop.f32.mrb[0].mxu0
  %v1387 = vadd.f32 %v294, %v1386
  %1388 = vmatprep.mubr.f32.mxu0 0.0
  %1389 = vmatmul.mubr.f32.gmra.mrb[0].mxu0 %v428
  %v1390 = vpop.f32.mrb[0].mxu0
  %v1391 = vadd.f32 %v290, %v1390
  %v1392 = vpop.f32.mrb[0].mxu0
  %v1393 = vadd.f32 %v294, %v1392
  %1394 = vmatprep.mubr.f32.mxu0 0.0
  %1395 = vmatmul.mubr.f32.gmra.mrb[0].mxu0 %v431
  %v1396 = vpop.f32.mrb[0].mxu0
  %v1397 = vadd.f32 %v290, %v1396
  %v1398 = vpop.f32.mrb[0].mxu0
  %v1399 = vadd.f32 %v294, %v1398
  %1400 = vmatprep.mubr.f32.mxu0 0.0
  %1401 = vmatmul.mubr.f32.gmra.mrb[0].mxu0 %v434
  %v1402 = vpop.f32.mrb[0].mxu0
  %v1403 = vadd.f32 %v290, %v1402
  %v1404 = vpop.f32.mrb[0].mxu0
  %v1405 = vadd.f32 %v294, %v1404
  %1406 = vmatprep.mubr.f32.mxu0 0.0
  %1407 = vmatmul.mubr.f32.gmra.mrb[0].mxu0 %v437
  %v1408 = vpop.f32.mrb[0].mxu0
  %v1409 = vadd.f32 %v290, %v1408
  %v1410 = vpop.f32.mrb[0].mxu0
  %v1411 = vadd.f32 %v294, %v1410
  %1412 = vmatprep.mubr.f32.mxu0 0.0
  %1413 = vmatmul.mubr.f32.gmra.mrb[0].mxu0 %v440
  %v1414 = vpop.f32.mrb[0].mxu0
  %v1415 = vadd.f32 %v290, %v1414
  %v1416 = vpop.f32.mrb[0].mxu0
  %v1417 = vadd.f32 %v294, %v1416
  %1418 = vmatprep.mubr.f32.mxu0 0.0
  %1419 = vmatmul.mubr.f32.gmra.mrb[0].mxu0 %v443
  %v1420 = vpop.f32.mrb[0].mxu0
  %v1421 = vadd.f32 %v290, %v1420
  %v1422 = vpop.f32.mrb[0].mxu0
  %v1423 = vadd.f32 %v294, %v1422
  %1424 = vmatprep.mubr.f32.mxu0 0.0
  %1425 = vmatmul.mubr.f32.gmra.mrb[0].mxu0 %v446
  %v1426 = vpop.f32.mrb[0].mxu0
  %v1427 = vadd.f32 %v290, %v1426
  %v1428 = vpop.f32.mrb[0].mxu0
  %v1429 = vadd.f32 %v294, %v1428
  %1430 = vmatprep.mubr.f32.mxu0 0.0
  %1431 = vmatmul.mubr.f32.gmra.mrb[0].mxu0 %v449
  %v1432 = vpop.f32.mrb[0].mxu0
  %v1433 = vadd.f32 %v290, %v1432
  %v1434 = vpop.f32.mrb[0].mxu0
  %v1435 = vadd.f32 %v294, %v1434
  %1436 = vmatprep.mubr.f32.mxu0 0.0
  %1437 = vmatmul.mubr.f32.gmra.mrb[0].mxu0 %v452
  %v1438 = vpop.f32.mrb[0].mxu0
  %v1439 = vadd.f32 %v290, %v1438
  %v1440 = vpop.f32.mrb[0].mxu0
  %v1441 = vadd.f32 %v294, %v1440
  %1442 = vmatprep.mubr.f32.mxu0 0.0
  %1443 = vmatmul.mubr.f32.gmra.mrb[0].mxu0 %v455
  %v1444 = vpop.f32.mrb[0].mxu0
  %v1445 = vadd.f32 %v290, %v1444
  %v1446 = vpop.f32.mrb[0].mxu0
  %v1447 = vadd.f32 %v294, %v1446
  %1448 = vmatprep.mubr.f32.mxu0 0.0
  %1449 = vmatmul.mubr.f32.gmra.mrb[0].mxu0 %v458
  %v1450 = vpop.f32.mrb[0].mxu0
  %v1451 = vadd.f32 %v290, %v1450
  %v1452 = vpop.f32.mrb[0].mxu0
  %v1453 = vadd.f32 %v294, %v1452
  %1454 = vmatprep.mubr.f32.mxu0 0.0
  %1455 = vmatmul.mubr.f32.gmra.mrb[0].mxu0 %v461
  %v1456 = vpop.f32.mrb[0].mxu0
  %v1457 = vadd.f32 %v290, %v1456
  %v1458 = vpop.f32.mrb[0].mxu0
  %v1459 = vadd.f32 %v294, %v1458
  %1460 = vmatprep.mubr.f32.mxu0 0.0
  %1461 = vmatmul.mubr.f32.gmra.mrb[0].mxu0 %v464
  %v1462 = vpop.f32.mrb[0].mxu0
  %v1463 = vadd.f32 %v290, %v1462
  %v1464 = vpop.f32.mrb[0].mxu0
  %v1465 = vadd.f32 %v294, %v1464
  %1466 = vmatprep.mubr.f32.mxu0 0.0
  %1467 = vmatmul.mubr.f32.gmra.mrb[0].mxu0 %v467
  %v1468 = vpop.f32.mrb[0].mxu0
  %v1469 = vadd.f32 %v290, %v1468
  %v1470 = vpop.f32.mrb[0].mxu0
  %v1471 = vadd.f32 %v294, %v1470
  %1472 = vmatprep.mubr.f32.mxu0 0.0
  %1473 = vmatmul.mubr.f32.gmra.mrb[0].mxu0 %v470
  %v1474 = vpop.f32.mrb[0].mxu0
  %v1475 = vadd.f32 %v290, %v1474
  %v1476 = vpop.f32.mrb[0].mxu0
  %v1477 = vadd.f32 %v294, %v1476
  %1478 = vmatprep.mubr.f32.mxu0 0.0
  %1479 = vmatmul.mubr.f32.gmra.mrb[0].mxu0 %v473
  %v1480 = vpop.f32.mrb[0].mxu0
  %v1481 = vadd.f32 %v290, %v1480
  %v1482 = vpop.f32.mrb[0].mxu0
  %v1483 = vadd.f32 %v294, %v1482
  %1484 = vmatprep.mubr.f32.mxu0 0.0
  %1485 = vmatmul.mubr.f32.gmra.mrb[0].mxu0 %v476
  %v1486 = vpop.f32.mrb[0].mxu0
  %v1487 = vadd.f32 %v290, %v1486
  %v1488 = vpop.f32.mrb[0].mxu0
  %v1489 = vadd.f32 %v294, %v1488
  %1490 = vmatprep.mubr.f32.mxu0 0.0
  %1491 = vmatmul.mubr.f32.gmra.mrb[0].mxu0 %v479
  %v1492 = vpop.f32.mrb[0].mxu0
  %v1493 = vadd.f32 %v290, %v1492
  %v1494 = vpop.f32.mrb[0].mxu0
  %v1495 = vadd.f32 %v294, %v1494
  %1496 = vmatprep.mubr.f32.mxu0 0.0
  %1497 = vmatmul.mubr.f32.gmra.mrb[0].mxu0 %v482
  %v1498 = vpop.f32.mrb[0].mxu0
  %v1499 = vadd.f32 %v290, %v1498
  %v1500 = vpop.f32.mrb[0].mxu0
  %v1501 = vadd.f32 %v294, %v1500
  %1502 = vmatprep.mubr.f32.mxu0 0.0
  %1503 = vmatmul.mubr.f32.gmra.mrb[0].mxu0 %v485
  %v1504 = vpop.f32.mrb[0].mxu0
  %v1505 = vadd.f32 %v290, %v1504
  %v1506 = vpop.f32.mrb[0].mxu0
  %v1507 = vadd.f32 %v294, %v1506
  %1508 = vmatprep.mubr.f32.mxu0 0.0
  %1509 = vmatmul.mubr.f32.gmra.mrb[0].mxu0 %v488
  %v1510 = vpop.f32.mrb[0].mxu0
  %v1511 = vadd.f32 %v290, %v1510
  %v1512 = vpop.f32.mrb[0].mxu0
  %v1513 = vadd.f32 %v294, %v1512
  %1514 = vmatprep.mubr.f32.mxu0 0.0
  %1515 = vmatmul.mubr.f32.gmra.mrb[0].mxu0 %v491
  %v1516 = vpop.f32.mrb[0].mxu0
  %v1517 = vadd.f32 %v290, %v1516
  %v1518 = vpop.f32.mrb[0].mxu0
  %v1519 = vadd.f32 %v294, %v1518
  %1520 = vmatprep.mubr.f32.mxu0 0.0
  %1521 = vmatmul.mubr.f32.gmra.mrb[0].mxu0 %v494
  %v1522 = vpop.f32.mrb[0].mxu0
  %v1523 = vadd.f32 %v290, %v1522
  %v1524 = vpop.f32.mrb[0].mxu0
  %v1525 = vadd.f32 %v294, %v1524
  %1526 = vmatprep.mubr.f32.mxu0 0.0
  %1527 = vmatmul.mubr.f32.gmra.mrb[0].mxu0 %v497
  %v1528 = vpop.f32.mrb[0].mxu0
  %v1529 = vadd.f32 %v290, %v1528
  %v1530 = vpop.f32.mrb[0].mxu0
  %v1531 = vadd.f32 %v294, %v1530
  %1532 = vmatprep.mubr.f32.mxu0 0.0
  %1533 = vmatmul.mubr.f32.gmra.mrb[0].mxu0 %v500
  %v1534 = vpop.f32.mrb[0].mxu0
  %v1535 = vadd.f32 %v290, %v1534
  %v1536 = vpop.f32.mrb[0].mxu0
  %v1537 = vadd.f32 %v294, %v1536
  %1538 = vmatprep.mubr.f32.mxu0 0.0
  %1539 = vmatmul.mubr.f32.gmra.mrb[0].mxu0 %v503
  %v1540 = vpop.f32.mrb[0].mxu0
  %v1541 = vadd.f32 %v290, %v1540
  %v1542 = vpop.f32.mrb[0].mxu0
  %v1543 = vadd.f32 %v294, %v1542
  %1544 = vmatprep.mubr.f32.mxu0 0.0
  %1545 = vmatmul.mubr.f32.gmra.mrb[0].mxu0 %v506
  %v1546 = vpop.f32.mrb[0].mxu0
  %v1547 = vadd.f32 %v290, %v1546
  %v1548 = vpop.f32.mrb[0].mxu0
  %v1549 = vadd.f32 %v294, %v1548
  %1550 = vmatprep.mubr.f32.mxu0 0.0
  %1551 = vmatmul.mubr.f32.gmra.mrb[0].mxu0 %v509
  %v1552 = vpop.f32.mrb[0].mxu0
  %v1553 = vadd.f32 %v290, %v1552
  %v1554 = vpop.f32.mrb[0].mxu0
  %v1555 = vadd.f32 %v294, %v1554
  %1556 = vmatprep.mubr.f32.mxu0 0.0
  %1557 = vmatmul.mubr.f32.gmra.mrb[0].mxu0 %v512
  %v1558 = vpop.f32.mrb[0].mxu0
  %v1559 = vadd.f32 %v290, %v1558
  %v1560 = vpop.f32.mrb[0].mxu0
  %v1561 = vadd.f32 %v294, %v1560
  %1562 = vmatprep.mubr.f32.mxu0 0.0
  %1563 = vmatmul.mubr.f32.gmra.mrb[0].mxu0 %v515
  %v1564 = vpop.f32.mrb[0].mxu0
  %v1565 = vadd.f32 %v290, %v1564
  %v1566 = vpop.f32.mrb[0].mxu0
  %v1567 = vadd.f32 %v294, %v1566
  %1568 = vmatprep.mubr.f32.mxu0 0.0
  %1569 = vmatmul.mubr.f32.gmra.mrb[0].mxu0 %v518
  %v1570 = vpop.f32.mrb[0].mxu0
  %v1571 = vadd.f32 %v290, %v1570
  %v1572 = vpop.f32.mrb[0].mxu0
  %v1573 = vadd.f32 %v294, %v1572
  %1574 = vmatprep.mubr.f32.mxu0 0.0
  %1575 = vmatmul.mubr.f32.gmra.mrb[0].mxu0 %v521
  %v1576 = vpop.f32.mrb[0].mxu0
  %v1577 = vadd.f32 %v290, %v1576
  %v1578 = vpop.f32.mrb[0].mxu0
  %v1579 = vadd.f32 %v294, %v1578
  %1580 = vmatprep.mubr.f32.mxu0 0.0
  %1581 = vmatmul.mubr.f32.gmra.mrb[0].mxu0 %v524
  %v1582 = vpop.f32.mrb[0].mxu0
  %v1583 = vadd.f32 %v290, %v1582
  %v1584 = vpop.f32.mrb[0].mxu0
  %v1585 = vadd.f32 %v294, %v1584
  %1586 = vmatprep.mubr.f32.mxu0 0.0
  %1587 = vmatmul.mubr.f32.gmra.mrb[0].mxu0 %v527
  %v1588 = vpop.f32.mrb[0].mxu0
  %v1589 = vadd.f32 %v290, %v1588
  %v1590 = vpop.f32.mrb[0].mxu0
  %v1591 = vadd.f32 %v294, %v1590
  %1592 = vmatprep.mubr.f32.mxu0 0.0
  %1593 = vmatmul.mubr.f32.gmra.mrb[0].mxu0 %v530
  %v1594 = vpop.f32.mrb[0].mxu0
  %v1595 = vadd.f32 %v290, %v1594
  %v1596 = vpop.f32.mrb[0].mxu0
  %v1597 = vadd.f32 %v294, %v1596
  %1598 = vmatprep.mubr.f32.mxu0 0.0
  %1599 = vmatmul.mubr.f32.gmra.mrb[0].mxu0 %v533
  %v1600 = vpop.f32.mrb[0].mxu0
  %v1601 = vadd.f32 %v290, %v1600
  %v1602 = vpop.f32.mrb[0].mxu0
  %v1603 = vadd.f32 %v294, %v1602
  %1604 = vmatprep.mubr.f32.mxu0 0.0
  %1605 = vmatmul.mubr.f32.gmra.mrb[0].mxu0 %v536
  %v1606 = vpop.f32.mrb[0].mxu0
  %v1607 = vadd.f32 %v290, %v1606
  %v1608 = vpop.f32.mrb[0].mxu0
  %v1609 = vadd.f32 %v294, %v1608
  %1610 = vmatprep.mubr.f32.mxu0 0.0
  %1611 = vmatmul.mubr.f32.gmra.mrb[0].mxu0 %v539
  %v1612 = vpop.f32.mrb[0].mxu0
  %v1613 = vadd.f32 %v290, %v1612
  %v1614 = vpop.f32.mrb[0].mxu0
  %v1615 = vadd.f32 %v294, %v1614
  %1616 = vmatprep.mubr.f32.mxu0 0.0
  %1617 = vmatmul.mubr.f32.gmra.mrb[0].mxu0 %v542
  %v1618 = vpop.f32.mrb[0].mxu0
  %v1619 = vadd.f32 %v290, %v1618
  %v1620 = vpop.f32.mrb[0].mxu0
  %v1621 = vadd.f32 %v294, %v1620
  %1622 = vmatprep.mubr.f32.mxu0 0.0
  %1623 = vmatmul.mubr.f32.gmra.mrb[0].mxu0 %v545
  %v1624 = vpop.f32.mrb[0].mxu0
  %v1625 = vadd.f32 %v290, %v1624
  %v1626 = vpop.f32.mrb[0].mxu0
  %v1627 = vadd.f32 %v294, %v1626
  %1628 = vmatprep.mubr.f32.mxu0 0.0
  %1629 = vmatmul.mubr.f32.gmra.mrb[0].mxu0 %v548
  %v1630 = vpop.f32.mrb[0].mxu0
  %v1631 = vadd.f32 %v290, %v1630
  %v1632 = vpop.f32.mrb[0].mxu0
  %v1633 = vadd.f32 %v294, %v1632
  %1634 = vmatprep.mubr.f32.mxu0 0.0
  %1635 = vmatmul.mubr.f32.gmra.mrb[0].mxu0 %v551
  %v1636 = vpop.f32.mrb[0].mxu0
  %v1637 = vadd.f32 %v290, %v1636
  %v1638 = vpop.f32.mrb[0].mxu0
  %v1639 = vadd.f32 %v294, %v1638
  %1640 = vmatprep.mubr.f32.mxu0 0.0
  %1641 = vmatmul.mubr.f32.gmra.mrb[0].mxu0 %v554
  %v1642 = vpop.f32.mrb[0].mxu0
  %v1643 = vadd.f32 %v290, %v1642
  %v1644 = vpop.f32.mrb[0].mxu0
  %v1645 = vadd.f32 %v294, %v1644
  %1646 = vmatprep.mubr.f32.mxu0 0.0
  %1647 = vmatmul.mubr.f32.gmra.mrb[0].mxu0 %v557
  %v1648 = vpop.f32.mrb[0].mxu0
  %v1649 = vadd.f32 %v290, %v1648
  %v1650 = vpop.f32.mrb[0].mxu0
  %v1651 = vadd.f32 %v294, %v1650
  %1652 = vmatprep.mubr.f32.mxu0 0.0
  %1653 = vmatmul.mubr.f32.gmra.mrb[0].mxu0 %v560
  %v1654 = vpop.f32.mrb[0].mxu0
  %v1655 = vadd.f32 %v290, %v1654
  %v1656 = vpop.f32.mrb[0].mxu0
  %v1657 = vadd.f32 %v294, %v1656
  %1658 = vmatprep.mubr.f32.mxu0 0.0
  %1659 = vmatmul.mubr.f32.gmra.mrb[0].mxu0 %v563
  %v1660 = vpop.f32.mrb[0].mxu0
  %v1661 = vadd.f32 %v290, %v1660
  %v1662 = vpop.f32.mrb[0].mxu0
  %v1663 = vadd.f32 %v294, %v1662
  %1664 = vmatprep.mubr.f32.mxu0 0.0
  %1665 = vmatmul.mubr.f32.gmra.mrb[0].mxu0 %v566
  %v1666 = vpop.f32.mrb[0].mxu0
  %v1667 = vadd.f32 %v290, %v1666
  %v1668 = vpop.f32.mrb[0].mxu0
  %v1669 = vadd.f32 %v294, %v1668
  %1670 = vmatprep.mubr.f32.mxu0 0.0
  %1671 = vmatmul.mubr.f32.gmra.mrb[0].mxu0 %v569
  %v1672 = vpop.f32.mrb[0].mxu0
  %v1673 = vadd.f32 %v290, %v1672
  %v1674 = vpop.f32.mrb[0].mxu0
  %v1675 = vadd.f32 %v294, %v1674
  %1676 = vmatprep.mubr.f32.mxu0 0.0
  %1677 = vmatmul.mubr.f32.gmra.mrb[0].mxu0 %v572
  %v1678 = vpop.f32.mrb[0].mxu0
  %v1679 = vadd.f32 %v290, %v1678
  %v1680 = vpop.f32.mrb[0].mxu0
  %v1681 = vadd.f32 %v294, %v1680
  %1682 = vmatprep.mubr.f32.mxu0 0.0
  %1683 = vmatmul.mubr.f32.gmra.mrb[0].mxu0 %v575
  %v1684 = vpop.f32.mrb[0].mxu0
  %v1685 = vadd.f32 %v290, %v1684
  %v1686 = vpop.f32.mrb[0].mxu0
  %v1687 = vadd.f32 %v294, %v1686
  %1688 = vmatprep.mubr.f32.mxu0 0.0
  %1689 = vmatmul.mubr.f32.gmra.mrb[0].mxu0 %v578
  %v1690 = vpop.f32.mrb[0].mxu0
  %v1691 = vadd.f32 %v290, %v1690
  %v1692 = vpop.f32.mrb[0].mxu0
  %v1693 = vadd.f32 %v294, %v1692
  %1694 = vmatprep.mubr.f32.mxu0 0.0
  %1695 = vmatmul.mubr.f32.gmra.mrb[0].mxu0 %v581
  %v1696 = vpop.f32.mrb[0].mxu0
  %v1697 = vadd.f32 %v290, %v1696
  %v1698 = vpop.f32.mrb[0].mxu0
  %v1699 = vadd.f32 %v294, %v1698
  %1700 = vmatprep.mubr.f32.mxu0 0.0
  %1701 = vmatmul.mubr.f32.gmra.mrb[0].mxu0 %v584
  %v1702 = vpop.f32.mrb[0].mxu0
  %v1703 = vadd.f32 %v290, %v1702
  %v1704 = vpop.f32.mrb[0].mxu0
  %v1705 = vadd.f32 %v294, %v1704
  %1706 = vmatprep.mubr.f32.mxu0 0.0
  %1707 = vmatmul.mubr.f32.gmra.mrb[0].mxu0 %v587
  %v1708 = vpop.f32.mrb[0].mxu0
  %v1709 = vadd.f32 %v290, %v1708
  %v1710 = vpop.f32.mrb[0].mxu0
  %v1711 = vadd.f32 %v294, %v1710
  %1712 = vmatprep.mubr.f32.mxu0 0.0
  %1713 = vmatmul.mubr.f32.gmra.mrb[0].mxu0 %v590
  %v1714 = vpop.f32.mrb[0].mxu0
  %v1715 = vadd.f32 %v290, %v1714
  %v1716 = vpop.f32.mrb[0].mxu0
  %v1717 = vadd.f32 %v294, %v1716
  %1718 = vmatprep.mubr.f32.mxu0 0.0
  %1719 = vmatmul.mubr.f32.gmra.mrb[0].mxu0 %v593
  %v1720 = vpop.f32.mrb[0].mxu0
  %v1721 = vadd.f32 %v290, %v1720
  %v1722 = vpop.f32.mrb[0].mxu0
  %v1723 = vadd.f32 %v294, %v1722
  %1724 = vmatprep.mubr.f32.mxu0 0.0
  %1725 = vmatmul.mubr.f32.gmra.mrb[0].mxu0 %v596
  %v1726 = vpop.f32.mrb[0].mxu0
  %v1727 = vadd.f32 %v290, %v1726
  %v1728 = vpop.f32.mrb[0].mxu0
  %v1729 = vadd.f32 %v294, %v1728
  %1730 = vmatprep.mubr.f32.mxu0 0.0
  %1731 = vmatmul.mubr.f32.gmra.mrb[0].mxu0 %v599
  %v1732 = vpop.f32.mrb[0].mxu0
  %v1733 = vadd.f32 %v290, %v1732
  %v1734 = vpop.f32.mrb[0].mxu0
  %v1735 = vadd.f32 %v294, %v1734
  %1736 = vmatprep.mubr.f32.mxu0 0.0
  %1737 = vmatmul.mubr.f32.gmra.mrb[0].mxu0 %v602
  %v1738 = vpop.f32.mrb[0].mxu0
  %v1739 = vadd.f32 %v290, %v1738
  %v1740 = vpop.f32.mrb[0].mxu0
  %v1741 = vadd.f32 %v294, %v1740
  %1742 = vmatprep.mubr.f32.mxu0 0.0
  %1743 = vmatmul.mubr.f32.gmra.mrb[0].mxu0 %v605
  %v1744 = vpop.f32.mrb[0].mxu0
  %v1745 = vadd.f32 %v290, %v1744
  %v1746 = vpop.f32.mrb[0].mxu0
  %v1747 = vadd.f32 %v294, %v1746
  %1748 = vmatprep.mubr.f32.mxu0 0.0
  %1749 = vmatmul.mubr.f32.gmra.mrb[0].mxu0 %v608
  %v1750 = vpop.f32.mrb[0].mxu0
  %v1751 = vadd.f32 %v290, %v1750
  %v1752 = vpop.f32.mrb[0].mxu0
  %v1753 = vadd.f32 %v294, %v1752
  %1754 = vmatprep.mubr.f32.mxu0 0.0
  %1755 = vmatmul.mubr.f32.gmra.mrb[0].mxu0 %v611
  %v1756 = vpop.f32.mrb[0].mxu0
  %v1757 = vadd.f32 %v290, %v1756
  %v1758 = vpop.f32.mrb[0].mxu0
  %v1759 = vadd.f32 %v294, %v1758
  %1760 = vmatprep.mubr.f32.mxu0 0.0
  %1761 = vmatmul.mubr.f32.gmra.mrb[0].mxu0 %v614
  %v1762 = vpop.f32.mrb[0].mxu0
  %v1763 = vadd.f32 %v290, %v1762
  %v1764 = vpop.f32.mrb[0].mxu0
  %v1765 = vadd.f32 %v294, %v1764
  %1766 = vmatprep.mubr.f32.mxu0 0.0
  %1767 = vmatmul.mubr.f32.gmra.mrb[0].mxu0 %v617
  %v1768 = vpop.f32.mrb[0].mxu0
  %v1769 = vadd.f32 %v290, %v1768
  %v1770 = vpop.f32.mrb[0].mxu0
  %v1771 = vadd.f32 %v294, %v1770
  %1772 = vmatprep.mubr.f32.mxu0 0.0
  %1773 = vmatmul.mubr.f32.gmra.mrb[0].mxu0 %v620
  %v1774 = vpop.f32.mrb[0].mxu0
  %v1775 = vadd.f32 %v290, %v1774
  %v1776 = vpop.f32.mrb[0].mxu0
  %v1777 = vadd.f32 %v294, %v1776
  %1778 = vmatprep.mubr.f32.mxu0 0.0
  %1779 = vmatmul.mubr.f32.gmra.mrb[0].mxu0 %v623
  %v1780 = vpop.f32.mrb[0].mxu0
  %v1781 = vadd.f32 %v290, %v1780
  %v1782 = vpop.f32.mrb[0].mxu0
  %v1783 = vadd.f32 %v294, %v1782
  %1784 = vmatprep.mubr.f32.mxu0 0.0
  %1785 = vmatmul.mubr.f32.gmra.mrb[0].mxu0 %v626
  %v1786 = vpop.f32.mrb[0].mxu0
  %v1787 = vadd.f32 %v290, %v1786
  %v1788 = vpop.f32.mrb[0].mxu0
  %v1789 = vadd.f32 %v294, %v1788
  %1790 = vmatprep.mubr.f32.mxu0 0.0
  %1791 = vmatmul.mubr.f32.gmra.mrb[0].mxu0 %v629
  %v1792 = vpop.f32.mrb[0].mxu0
  %v1793 = vadd.f32 %v290, %v1792
  %v1794 = vpop.f32.mrb[0].mxu0
  %v1795 = vadd.f32 %v294, %v1794
  %1796 = vmatprep.mubr.f32.mxu0 0.0
  %1797 = vmatmul.mubr.f32.gmra.mrb[0].mxu0 %v632
  %v1798 = vpop.f32.mrb[0].mxu0
  %v1799 = vadd.f32 %v290, %v1798
  %v1800 = vpop.f32.mrb[0].mxu0
  %v1801 = vadd.f32 %v294, %v1800
  %1802 = vmatprep.mubr.f32.mxu0 0.0
  %1803 = vmatmul.mubr.f32.gmra.mrb[0].mxu0 %v635
  %v1804 = vpop.f32.mrb[0].mxu0
  %v1805 = vadd.f32 %v290, %v1804
  %v1806 = vpop.f32.mrb[0].mxu0
  %v1807 = vadd.f32 %v294, %v1806
  %1808 = vmatprep.mubr.f32.mxu0 0.0
  %1809 = vmatmul.mubr.f32.gmra.mrb[0].mxu0 %v638
  %v1810 = vpop.f32.mrb[0].mxu0
  %v1811 = vadd.f32 %v290, %v1810
  %v1812 = vpop.f32.mrb[0].mxu0
  %v1813 = vadd.f32 %v294, %v1812
  %1814 = vmatprep.mubr.f32.mxu0 0.0
  %1815 = vmatmul.mubr.f32.gmra.mrb[0].mxu0 %v641
  %v1816 = vpop.f32.mrb[0].mxu0
  %v1817 = vadd.f32 %v290, %v1816
  %v1818 = vpop.f32.mrb[0].mxu0
  %v1819 = vadd.f32 %v294, %v1818
  %1820 = vmatprep.mubr.f32.mxu0 0.0
  %1821 = vmatmul.mubr.f32.gmra.mrb[0].mxu0 %v644
  %v1822 = vpop.f32.mrb[0].mxu0
  %v1823 = vadd.f32 %v290, %v1822
  %v1824 = vpop.f32.mrb[0].mxu0
  %v1825 = vadd.f32 %v294, %v1824
  %1826 = vmatprep.mubr.f32.mxu0 0.0
  %1827 = vmatmul.mubr.f32.gmra.mrb[0].mxu0 %v647
  %v1828 = vpop.f32.mrb[0].mxu0
  %v1829 = vadd.f32 %v290, %v1828
  %v1830 = vpop.f32.mrb[0].mxu0
  %v1831 = vadd.f32 %v294, %v1830
  %1832 = vmatprep.mubr.f32.mxu0 0.0
  %1833 = vmatmul.mubr.f32.gmra.mrb[0].mxu0 %v650
  %v1834 = vpop.f32.mrb[0].mxu0
  %v1835 = vadd.f32 %v290, %v1834
  %v1836 = vpop.f32.mrb[0].mxu0
  %v1837 = vadd.f32 %v294, %v1836
  %1838 = vmatprep.mubr.f32.mxu0 0.0
  %1839 = vmatmul.mubr.f32.gmra.mrb[0].mxu0 %v653
  %v1840 = vpop.f32.mrb[0].mxu0
  %v1841 = vadd.f32 %v290, %v1840
  %v1842 = vpop.f32.mrb[0].mxu0
  %v1843 = vadd.f32 %v294, %v1842
  %1844 = vmatprep.mubr.f32.mxu0 0.0
  %1845 = vmatmul.mubr.f32.gmra.mrb[0].mxu0 %v656
  %v1846 = vpop.f32.mrb[0].mxu0
  %v1847 = vadd.f32 %v290, %v1846
  %v1848 = vpop.f32.mrb[0].mxu0
  %v1849 = vadd.f32 %v294, %v1848
  %1850 = vmatprep.mubr.f32.mxu0 0.0
  %1851 = vmatmul.mubr.f32.gmra.mrb[0].mxu0 %v659
  %v1852 = vpop.f32.mrb[0].mxu0
  %v1853 = vadd.f32 %v290, %v1852
  %v1854 = vpop.f32.mrb[0].mxu0
  %v1855 = vadd.f32 %v294, %v1854
  %1856 = vmatprep.mubr.f32.mxu0 0.0
  %1857 = vmatmul.mubr.f32.gmra.mrb[0].mxu0 %v662
  %v1858 = vpop.f32.mrb[0].mxu0
  %v1859 = vadd.f32 %v290, %v1858
  %v1860 = vpop.f32.mrb[0].mxu0
  %v1861 = vadd.f32 %v294, %v1860
  %1862 = vmatprep.mubr.f32.mxu0 0.0
  %1863 = vmatmul.mubr.f32.gmra.mrb[0].mxu0 %v665
  %v1864 = vpop.f32.mrb[0].mxu0
  %v1865 = vadd.f32 %v290, %v1864
  %v1866 = vpop.f32.mrb[0].mxu0
  %v1867 = vadd.f32 %v294, %v1866
  %1868 = vmatprep.mubr.f32.mxu0 0.0
  %1869 = vmatmul.mubr.f32.gmra.mrb[0].mxu0 %v668
  %v1870 = vpop.f32.mrb[0].mxu0
  %v1871 = vadd.f32 %v290, %v1870
  %v1872 = vpop.f32.mrb[0].mxu0
  %v1873 = vadd.f32 %v294, %v1872
  %1874 = vmatprep.mubr.f32.mxu0 0.0
  %1875 = vmatmul.mubr.f32.gmra.mrb[0].mxu0 %v671
  %v1876 = vpop.f32.mrb[0].mxu0
  %v1877 = vadd.f32 %v290, %v1876
  %v1878 = vpop.f32.mrb[0].mxu0
  %v1879 = vadd.f32 %v294, %v1878
  %1880 = vmatprep.mubr.f32.mxu0 0.0
  %1881 = vmatmul.mubr.f32.gmra.mrb[0].mxu0 %v674
  %v1882 = vpop.f32.mrb[0].mxu0
  %v1883 = vadd.f32 %v290, %v1882
  %v1884 = vpop.f32.mrb[0].mxu0
  %v1885 = vadd.f32 %v294, %v1884
  %1886 = vmatprep.mubr.f32.mxu0 0.0
  %1887 = vmatmul.mubr.f32.gmra.mrb[0].mxu0 %v677
  %v1888 = vpop.f32.mrb[0].mxu0
  %v1889 = vadd.f32 %v290, %v1888
  %v1890 = vpop.f32.mrb[0].mxu0
  %v1891 = vadd.f32 %v294, %v1890
  %1892 = vmatprep.mubr.f32.mxu0 0.0
  %1893 = vmatmul.mubr.f32.gmra.mrb[0].mxu0 %v680
  %v1894 = vpop.f32.mrb[0].mxu0
  %v1895 = vadd.f32 %v290, %v1894
  %v1896 = vpop.f32.mrb[0].mxu0
  %v1897 = vadd.f32 %v294, %v1896
  %1898 = vmatprep.mubr.f32.mxu0 0.0
  %1899 = vmatmul.mubr.f32.gmra.mrb[0].mxu0 %v683
  %v1900 = vpop.f32.mrb[0].mxu0
  %v1901 = vadd.f32 %v290, %v1900
  %v1902 = vpop.f32.mrb[0].mxu0
  %v1903 = vadd.f32 %v294, %v1902
  %1904 = vmatprep.mubr.f32.mxu0 0.0
  %1905 = vmatmul.mubr.f32.gmra.mrb[0].mxu0 %v686
  %v1906 = vpop.f32.mrb[0].mxu0
  %v1907 = vadd.f32 %v290, %v1906
  %v1908 = vpop.f32.mrb[0].mxu0
  %v1909 = vadd.f32 %v294, %v1908
  %1910 = vmatprep.mubr.f32.mxu0 0.0
  %1911 = vmatmul.mubr.f32.gmra.mrb[0].mxu0 %v689
  %v1912 = vpop.f32.mrb[0].mxu0
  %v1913 = vadd.f32 %v290, %v1912
  %v1914 = vpop.f32.mrb[0].mxu0
  %v1915 = vadd.f32 %v294, %v1914
  %1916 = vmatprep.mubr.f32.mxu0 0.0
  %1917 = vmatmul.mubr.f32.gmra.mrb[0].mxu0 %v692
  %v1918 = vpop.f32.mrb[0].mxu0
  %v1919 = vadd.f32 %v290, %v1918
  %v1920 = vpop.f32.mrb[0].mxu0
  %v1921 = vadd.f32 %v294, %v1920
  %1922 = vmatprep.mubr.f32.mxu0 0.0
  %1923 = vmatmul.mubr.f32.gmra.mrb[0].mxu0 %v695
  %v1924 = vpop.f32.mrb[0].mxu0
  %v1925 = vadd.f32 %v290, %v1924
  %v1926 = vpop.f32.mrb[0].mxu0
  %v1927 = vadd.f32 %v294, %v1926
  %1928 = vmatprep.mubr.f32.mxu0 0.0
  %1929 = vmatmul.mubr.f32.gmra.mrb[0].mxu0 %v698
  %v1930 = vpop.f32.mrb[0].mxu0
  %v1931 = vadd.f32 %v290, %v1930
  %v1932 = vpop.f32.mrb[0].mxu0
  %v1933 = vadd.f32 %v294, %v1932
  %1934 = vmatprep.mubr.f32.mxu0 0.0
  %1935 = vmatmul.mubr.f32.gmra.mrb[0].mxu0 %v701
  %v1936 = vpop.f32.mrb[0].mxu0
  %v1937 = vadd.f32 %v290, %v1936
  %v1938 = vpop.f32.mrb[0].mxu0
  %v1939 = vadd.f32 %v294, %v1938
  %1940 = vmatprep.mubr.f32.mxu0 0.0
  %1941 = vmatmul.mubr.f32.gmra.mrb[0].mxu0 %v704
  %v1942 = vpop.f32.mrb[0].mxu0
  %v1943 = vadd.f32 %v290, %v1942
  %v1944 = vpop.f32.mrb[0].mxu0
  %v1945 = vadd.f32 %v294, %v1944
  %1946 = vmatprep.mubr.f32.mxu0 0.0
  %1947 = vmatmul.mubr.f32.gmra.mrb[0].mxu0 %v707
  %v1948 = vpop.f32.mrb[0].mxu0
  %v1949 = vadd.f32 %v290, %v1948
  %v1950 = vpop.f32.mrb[0].mxu0
  %v1951 = vadd.f32 %v294, %v1950
  %1952 = vmatprep.mubr.f32.mxu0 0.0
  %1953 = vmatmul.mubr.f32.gmra.mrb[0].mxu0 %v710
  %v1954 = vpop.f32.mrb[0].mxu0
  %v1955 = vadd.f32 %v290, %v1954
  %v1956 = vpop.f32.mrb[0].mxu0
  %v1957 = vadd.f32 %v294, %v1956
  %1958 = vmatprep.mubr.f32.mxu0 0.0
  %1959 = vmatmul.mubr.f32.gmra.mrb[0].mxu0 %v713
  %v1960 = vpop.f32.mrb[0].mxu0
  %v1961 = vadd.f32 %v290, %v1960
  %v1962 = vpop.f32.mrb[0].mxu0
  %v1963 = vadd.f32 %v294, %v1962
  %1964 = vmatprep.mubr.f32.mxu0 0.0
  %1965 = vmatmul.mubr.f32.gmra.mrb[0].mxu0 %v716
  %v1966 = vpop.f32.mrb[0].mxu0
  %v1967 = vadd.f32 %v290, %v1966
  %v1968 = vpop.f32.mrb[0].mxu0
  %v1969 = vadd.f32 %v294, %v1968
  %1970 = vmatprep.mubr.f32.mxu0 0.0
  %1971 = vmatmul.mubr.f32.gmra.mrb[0].mxu0 %v719
  %v1972 = vpop.f32.mrb[0].mxu0
  %v1973 = vadd.f32 %v290, %v1972
  %v1974 = vpop.f32.mrb[0].mxu0
  %v1975 = vadd.f32 %v294, %v1974
  %1976 = vmatprep.mubr.f32.mxu0 0.0
  %1977 = vmatmul.mubr.f32.gmra.mrb[0].mxu0 %v722
  %v1978 = vpop.f32.mrb[0].mxu0
  %v1979 = vadd.f32 %v290, %v1978
  %v1980 = vpop.f32.mrb[0].mxu0
  %v1981 = vadd.f32 %v294, %v1980
  %1982 = vmatprep.mubr.f32.mxu0 0.0
  %1983 = vmatmul.mubr.f32.gmra.mrb[0].mxu0 %v725
  %v1984 = vpop.f32.mrb[0].mxu0
  %v1985 = vadd.f32 %v290, %v1984
  %v1986 = vpop.f32.mrb[0].mxu0
  %v1987 = vadd.f32 %v294, %v1986
  %1988 = vmatprep.mubr.f32.mxu0 0.0
  %1989 = vmatmul.mubr.f32.gmra.mrb[0].mxu0 %v728
  %v1990 = vpop.f32.mrb[0].mxu0
  %v1991 = vadd.f32 %v290, %v1990
  %v1992 = vpop.f32.mrb[0].mxu0
  %v1993 = vadd.f32 %v294, %v1992
  %1994 = vmatprep.mubr.f32.mxu0 0.0
  %1995 = vmatmul.mubr.f32.gmra.mrb[0].mxu0 %v731
  %v1996 = vpop.f32.mrb[0].mxu0
  %v1997 = vadd.f32 %v290, %v1996
  %v1998 = vpop.f32.mrb[0].mxu0
  %v1999 = vadd.f32 %v294, %v1998
  %2000 = vmatprep.mubr.f32.mxu0 0.0
  %2001 = vmatmul.mubr.f32.gmra.mrb[0].mxu0 %v734
  %v2002 = vpop.f32.mrb[0].mxu0
  %v2003 = vadd.f32 %v290, %v2002
  %v2004 = vpop.f32.mrb[0].mxu0
  %v2005 = vadd.f32 %v294, %v2004
  %2006 = vmatprep.mubr.f32.mxu0 0.0
  %2007 = vmatmul.mubr.f32.gmra.mrb[0].mxu0 %v737
  %v2008 = vpop.f32.mrb[0].mxu0
  %v2009 = vadd.f32 %v290, %v2008
  %v2010 = vpop.f32.mrb[0].mxu0
  %v2011 = vadd.f32 %v294, %v2010
  %2012 = vmatprep.mubr.f32.mxu0 0.0
  %2013 = vmatmul.mubr.f32.gmra.mrb[0].mxu0 %v740
  %v2014 = vpop.f32.mrb[0].mxu0
  %v2015 = vadd.f32 %v290, %v2014
  %v2016 = vpop.f32.mrb[0].mxu0
  %v2017 = vadd.f32 %v294, %v2016
  %2018 = vmatprep.mubr.f32.mxu0 0.0
  %2019 = vmatmul.mubr.f32.gmra.mrb[0].mxu0 %v743
  %v2020 = vpop.f32.mrb[0].mxu0
  %v2021 = vadd.f32 %v290, %v2020
  %v2022 = vpop.f32.mrb[0].mxu0
  %v2023 = vadd.f32 %v294, %v2022
  %2024 = vmatprep.mubr.f32.mxu0 0.0
  %2025 = vmatmul.mubr.f32.gmra.mrb[0].mxu0 %v746
  %v2026 = vpop.f32.mrb[0].mxu0
  %v2027 = vadd.f32 %v290, %v2026
  %v2028 = vpop.f32.mrb[0].mxu0
  %v2029 = vadd.f32 %v294, %v2028
  %2030 = vmatprep.mubr.f32.mxu0 0.0
  %2031 = vmatmul.mubr.f32.gmra.mrb[0].mxu0 %v749
  %v2032 = vpop.f32.mrb[0].mxu0
  %v2033 = vadd.f32 %v290, %v2032
  %v2034 = vpop.f32.mrb[0].mxu0
  %v2035 = vadd.f32 %v294, %v2034
  %2036 = vmatprep.mubr.f32.mxu0 0.0
  %2037 = vmatmul.mubr.f32.gmra.mrb[0].mxu0 %v752
  %v2038 = vpop.f32.mrb[0].mxu0
  %v2039 = vadd.f32 %v290, %v2038
  %v2040 = vpop.f32.mrb[0].mxu0
  %v2041 = vadd.f32 %v294, %v2040
  %2042 = vmatprep.mubr.f32.mxu0 0.0
  %2043 = vmatmul.mubr.f32.gmra.mrb[0].mxu0 %v755
  %v2044 = vpop.f32.mrb[0].mxu0
  %v2045 = vadd.f32 %v290, %v2044
  %v2046 = vpop.f32.mrb[0].mxu0
  %v2047 = vadd.f32 %v294, %v2046
  %2048 = vmatprep.mubr.f32.mxu0 0.0
  %2049 = vmatmul.mubr.f32.gmra.mrb[0].mxu0 %v758
  %v2050 = vpop.f32.mrb[0].mxu0
  %v2051 = vadd.f32 %v290, %v2050
  %v2052 = vpop.f32.mrb[0].mxu0
  %v2053 = vadd.f32 %v294, %v2052
  %2054 = vmatprep.mubr.f32.mxu0 0.0
  %2055 = vmatmul.mubr.f32.gmra.mrb[0].mxu0 %v761
  %v2056 = vpop.f32.mrb[0].mxu0
  %v2057 = vadd.f32 %v290, %v2056
  %v2058 = vpop.f32.mrb[0].mxu0
  %v2059 = vadd.f32 %v294, %v2058
  %2060 = vmatprep.mubr.f32.mxu0 0.0
  %2061 = vmatmul.mubr.f32.gmra.mrb[0].mxu0 %v764
  %v2062 = vpop.f32.mrb[0].mxu0
  %v2063 = vadd.f32 %v290, %v2062
  %v2064 = vpop.f32.mrb[0].mxu0
  %v2065 = vadd.f32 %v294, %v2064
  %2066 = vmatprep.mubr.f32.mxu0 0.0
  %2067 = vmatmul.mubr.f32.gmra.mrb[0].mxu0 %v767
  %v2068 = vpop.f32.mrb[0].mxu0
  %v2069 = vadd.f32 %v290, %v2068
  %v2070 = vpop.f32.mrb[0].mxu0
  %v2071 = vadd.f32 %v294, %v2070
  %2072 = vmatprep.mubr.f32.mxu0 0.0
  %2073 = vmatmul.mubr.f32.gmra.mrb[0].mxu0 %v770
  %v2074 = vpop.f32.mrb[0].mxu0
  %v2075 = vadd.f32 %v290, %v2074
  %v2076 = vpop.f32.mrb[0].mxu0
  %v2077 = vadd.f32 %v294, %v2076
  %2078 = vmatprep.mubr.f32.mxu0 0.0
  %2079 = vmatmul.mubr.f32.gmra.mrb[0].mxu0 %v773
  %v2080 = vpop.f32.mrb[0].mxu0
  %v2081 = vadd.f32 %v290, %v2080
  %v2082 = vpop.f32.mrb[0].mxu0
  %v2083 = vadd.f32 %v294, %v2082
  %2084 = vmatprep.mubr.f32.mxu0 0.0
  %2085 = vmatmul.mubr.f32.gmra.mrb[0].mxu0 %v776
  %v2086 = vpop.f32.mrb[0].mxu0
  %v2087 = vadd.f32 %v290, %v2086
  %v2088 = vpop.f32.mrb[0].mxu0
  %v2089 = vadd.f32 %v294, %v2088
  %2090 = vmatprep.mubr.f32.mxu0 0.0
  %2091 = vmatmul.mubr.f32.gmra.mrb[0].mxu0 %v779
  %v2092 = vpop.f32.mrb[0].mxu0
  %v2093 = vadd.f32 %v290, %v2092
  %v2094 = vpop.f32.mrb[0].mxu0
  %v2095 = vadd.f32 %v294, %v2094
  %2096 = vmatprep.mubr.f32.mxu0 0.0
  %2097 = vmatmul.mubr.f32.gmra.mrb[0].mxu0 %v782
  %v2098 = vpop.f32.mrb[0].mxu0
  %v2099 = vadd.f32 %v290, %v2098
  %v2100 = vpop.f32.mrb[0].mxu0
  %v2101 = vadd.f32 %v294, %v2100
  %2102 = vmatprep.mubr.f32.mxu0 0.0
  %2103 = vmatmul.mubr.f32.gmra.mrb[0].mxu0 %v785
  %v2104 = vpop.f32.mrb[0].mxu0
  %v2105 = vadd.f32 %v290, %v2104
  %v2106 = vpop.f32.mrb[0].mxu0
  %v2107 = vadd.f32 %v294, %v2106
  %2108 = vmatprep.mubr.f32.mxu0 0.0
  %2109 = vmatmul.mubr.f32.gmra.mrb[0].mxu0 %v788
  %v2110 = vpop.f32.mrb[0].mxu0
  %v2111 = vadd.f32 %v290, %v2110
  %v2112 = vpop.f32.mrb[0].mxu0
  %v2113 = vadd.f32 %v294, %v2112
  %2114 = vmatprep.mubr.f32.mxu0 0.0
  %2115 = vmatmul.mubr.f32.gmra.mrb[0].mxu0 %v791
  %v2116 = vpop.f32.mrb[0].mxu0
  %v2117 = vadd.f32 %v290, %v2116
  %v2118 = vpop.f32.mrb[0].mxu0
  %v2119 = vadd.f32 %v294, %v2118
  %2120 = vmatprep.mubr.f32.mxu0 0.0
  %2121 = vmatmul.mubr.f32.gmra.mrb[0].mxu0 %v794
  %v2122 = vpop.f32.mrb[0].mxu0
  %v2123 = vadd.f32 %v290, %v2122
  %v2124 = vpop.f32.mrb[0].mxu0
  %v2125 = vadd.f32 %v294, %v2124
  %2126 = vmatprep.mubr.f32.mxu0 0.0
  %2127 = vmatmul.mubr.f32.gmra.mrb[0].mxu0 %v797
  %v2128 = vpop.f32.mrb[0].mxu0
  %v2129 = vadd.f32 %v290, %v2128
  %v2130 = vpop.f32.mrb[0].mxu0
  %v2131 = vadd.f32 %v294, %v2130
  %2132 = vmatprep.mubr.f32.mxu0 0.0
  %2133 = vmatmul.mubr.f32.gmra.mrb[0].mxu0 %v800
  %v2134 = vpop.f32.mrb[0].mxu0
  %v2135 = vadd.f32 %v290, %v2134
  %v2136 = vpop.f32.mrb[0].mxu0
  %v2137 = vadd.f32 %v294, %v2136
  %2138 = vmatprep.mubr.f32.mxu0 0.0
  %2139 = vmatmul.mubr.f32.gmra.mrb[0].mxu0 %v803
  %v2140 = vpop.f32.mrb[0].mxu0
  %v2141 = vadd.f32 %v290, %v2140
  %v2142 = vpop.f32.mrb[0].mxu0
  %v2143 = vadd.f32 %v294, %v2142
  %2144 = vmatprep.mubr.f32.mxu0 0.0
  %2145 = vmatmul.mubr.f32.gmra.mrb[0].mxu0 %v806
  %v2146 = vpop.f32.mrb[0].mxu0
  %v2147 = vadd.f32 %v290, %v2146
  %v2148 = vpop.f32.mrb[0].mxu0
  %v2149 = vadd.f32 %v294, %v2148
  %2150 = vmatprep.mubr.f32.mxu0 0.0
  %2151 = vmatmul.mubr.f32.gmra.mrb[0].mxu0 %v809
  %v2152 = vpop.f32.mrb[0].mxu0
  %v2153 = vadd.f32 %v290, %v2152
  %v2154 = vpop.f32.mrb[0].mxu0
  %v2155 = vadd.f32 %v294, %v2154
  %2156 = vmatprep.mubr.f32.mxu0 0.0
  %2157 = vmatmul.mubr.f32.gmra.mrb[0].mxu0 %v812
  %v2158 = vpop.f32.mrb[0].mxu0
  %v2159 = vadd.f32 %v290, %v2158
  %v2160 = vpop.f32.mrb[0].mxu0
  %v2161 = vadd.f32 %v294, %v2160
  %2162 = vmatprep.mubr.f32.mxu0 0.0
  %2163 = vmatmul.mubr.f32.gmra.mrb[0].mxu0 %v815
  %v2164 = vpop.f32.mrb[0].mxu0
  %v2165 = vadd.f32 %v290, %v2164
  %v2166 = vpop.f32.mrb[0].mxu0
  %v2167 = vadd.f32 %v294, %v2166
  %2168 = vmatprep.mubr.f32.mxu0 0.0
  %2169 = vmatmul.mubr.f32.gmra.mrb[0].mxu0 %v818
  %v2170 = vpop.f32.mrb[0].mxu0
  %v2171 = vadd.f32 %v290, %v2170
  %v2172 = vpop.f32.mrb[0].mxu0
  %v2173 = vadd.f32 %v294, %v2172
  %2174 = vmatprep.mubr.f32.mxu0 0.0
  %2175 = vmatmul.mubr.f32.gmra.mrb[0].mxu0 %v821
  %v2176 = vpop.f32.mrb[0].mxu0
  %v2177 = vadd.f32 %v290, %v2176
  %v2178 = vpop.f32.mrb[0].mxu0
  %v2179 = vadd.f32 %v294, %v2178
  %2180 = vmatprep.mubr.f32.mxu0 0.0
  %2181 = vmatmul.mubr.f32.gmra.mrb[0].mxu0 %v824
  %v2182 = vpop.f32.mrb[0].mxu0
  %v2183 = vadd.f32 %v290, %v2182
  %v2184 = vpop.f32.mrb[0].mxu0
  %v2185 = vadd.f32 %v294, %v2184
  %2186 = vmatprep.mubr.f32.mxu0 0.0
  %2187 = vmatmul.mubr.f32.gmra.mrb[0].mxu0 %v827
  %v2188 = vpop.f32.mrb[0].mxu0
  %v2189 = vadd.f32 %v290, %v2188
  %v2190 = vpop.f32.mrb[0].mxu0
  %v2191 = vadd.f32 %v294, %v2190
  %2192 = vmatprep.mubr.f32.mxu0 0.0
  %2193 = vmatmul.mubr.f32.gmra.mrb[0].mxu0 %v830
  %v2194 = vpop.f32.mrb[0].mxu0
  %v2195 = vadd.f32 %v290, %v2194
  %v2196 = vpop.f32.mrb[0].mxu0
  %v2197 = vadd.f32 %v294, %v2196
  %2198 = vmatprep.mubr.f32.mxu0 0.0
  %2199 = vmatmul.mubr.f32.gmra.mrb[0].mxu0 %v833
  %v2200 = vpop.f32.mrb[0].mxu0
  %v2201 = vadd.f32 %v290, %v2200
  %v2202 = vpop.f32.mrb[0].mxu0
  %v2203 = vadd.f32 %v294, %v2202
  %2204 = vmatprep.mubr.f32.mxu0 0.0
  %2205 = vmatmul.mubr.f32.gmra.mrb[0].mxu0 %v836
  %v2206 = vpop.f32.mrb[0].mxu0
  %v2207 = vadd.f32 %v290, %v2206
  %v2208 = vpop.f32.mrb[0].mxu0
  %v2209 = vadd.f32 %v294, %v2208
  %2210 = vmatprep.mubr.f32.mxu0 0.0
  %2211 = vmatmul.mubr.f32.gmra.mrb[0].mxu0 %v839
  %v2212 = vpop.f32.mrb[0].mxu0
  %v2213 = vadd.f32 %v290, %v2212
  %v2214 = vpop.f32.mrb[0].mxu0
  %v2215 = vadd.f32 %v294, %v2214
  %2216 = vmatprep.mubr.f32.mxu0 0.0
  %2217 = vmatmul.mubr.f32.gmra.mrb[0].mxu0 %v842
  %v2218 = vpop.f32.mrb[0].mxu0
  %v2219 = vadd.f32 %v290, %v2218
  %v2220 = vpop.f32.mrb[0].mxu0
  %v2221 = vadd.f32 %v294, %v2220
  %2222 = vmatprep.mubr.f32.mxu0 0.0
  %2223 = vmatmul.mubr.f32.gmra.mrb[0].mxu0 %v845
  %v2224 = vpop.f32.mrb[0].mxu0
  %v2225 = vadd.f32 %v290, %v2224
  %v2226 = vpop.f32.mrb[0].mxu0
  %v2227 = vadd.f32 %v294, %v2226
  %2228 = vmatprep.mubr.f32.mxu0 0.0
  %2229 = vmatmul.mubr.f32.gmra.mrb[0].mxu0 %v848
  %v2230 = vpop.f32.mrb[0].mxu0
  %v2231 = vadd.f32 %v290, %v2230
  %v2232 = vpop.f32.mrb[0].mxu0
  %v2233 = vadd.f32 %v294, %v2232
  %2234 = vmatprep.mubr.f32.mxu0 0.0
  %2235 = vmatmul.mubr.f32.gmra.mrb[0].mxu0 %v851
  %v2236 = vpop.f32.mrb[0].mxu0
  %v2237 = vadd.f32 %v290, %v2236
  %v2238 = vpop.f32.mrb[0].mxu0
  %v2239 = vadd.f32 %v294, %v2238
  %2240 = vmatprep.mubr.f32.mxu0 0.0
  %2241 = vmatmul.mubr.f32.gmra.mrb[0].mxu0 %v854
  %v2242 = vpop.f32.mrb[0].mxu0
  %v2243 = vadd.f32 %v290, %v2242
  %v2244 = vpop.f32.mrb[0].mxu0
  %v2245 = vadd.f32 %v294, %v2244
  %2246 = vmatprep.mubr.f32.mxu0 0.0
  %2247 = vmatmul.mubr.f32.gmra.mrb[0].mxu0 %v857
  %v2248 = vpop.f32.mrb[0].mxu0
  %v2249 = vadd.f32 %v290, %v2248
  %v2250 = vpop.f32.mrb[0].mxu0
  %v2251 = vadd.f32 %v294, %v2250
  %2252 = vmatprep.mubr.f32.mxu0 0.0
  %2253 = vmatmul.mubr.f32.gmra.mrb[0].mxu0 %v860
  %v2254 = vpop.f32.mrb[0].mxu0
  %v2255 = vadd.f32 %v290, %v2254
  %v2256 = vpop.f32.mrb[0].mxu0
  %v2257 = vadd.f32 %v294, %v2256
  %2258 = vmatprep.mubr.f32.mxu0 0.0
  %2259 = vmatmul.mubr.f32.gmra.mrb[0].mxu0 %v863
  %v2260 = vpop.f32.mrb[0].mxu0
  %v2261 = vadd.f32 %v290, %v2260
  %v2262 = vpop.f32.mrb[0].mxu0
  %v2263 = vadd.f32 %v294, %v2262
  %2264 = vmatprep.mubr.f32.mxu0 0.0
  %2265 = vmatmul.mubr.f32.gmra.mrb[0].mxu0 %v866
  %v2266 = vpop.f32.mrb[0].mxu0
  %v2267 = vadd.f32 %v290, %v2266
  %v2268 = vpop.f32.mrb[0].mxu0
  %v2269 = vadd.f32 %v294, %v2268
  %2270 = vmatprep.mubr.f32.mxu0 0.0
  %2271 = vmatmul.mubr.f32.gmra.mrb[0].mxu0 %v869
  %v2272 = vpop.f32.mrb[0].mxu0
  %v2273 = vadd.f32 %v290, %v2272
  %v2274 = vpop.f32.mrb[0].mxu0
  %v2275 = vadd.f32 %v294, %v2274
  %2276 = vmatprep.mubr.f32.mxu0 0.0
  %2277 = vmatmul.mubr.f32.gmra.mrb[0].mxu0 %v872
  %v2278 = vpop.f32.mrb[0].mxu0
  %v2279 = vadd.f32 %v290, %v2278
  %v2280 = vpop.f32.mrb[0].mxu0
  %v2281 = vadd.f32 %v294, %v2280
  %2282 = vmatprep.mubr.f32.mxu0 0.0
  %2283 = vmatmul.mubr.f32.gmra.mrb[0].mxu0 %v875
  %v2284 = vpop.f32.mrb[0].mxu0
  %v2285 = vadd.f32 %v290, %v2284
  %v2286 = vpop.f32.mrb[0].mxu0
  %v2287 = vadd.f32 %v294, %v2286
  %2288 = vmatprep.mubr.f32.mxu0 0.0
  %2289 = vmatmul.mubr.f32.gmra.mrb[0].mxu0 %v878
  %v2290 = vpop.f32.mrb[0].mxu0
  %v2291 = vadd.f32 %v290, %v2290
  %v2292 = vpop.f32.mrb[0].mxu0
  %v2293 = vadd.f32 %v294, %v2292
  %2294 = vmatprep.mubr.f32.mxu0 0.0
  %2295 = vmatmul.mubr.f32.gmra.mrb[0].mxu0 %v881
  %v2296 = vpop.f32.mrb[0].mxu0
  %v2297 = vadd.f32 %v290, %v2296
  %v2298 = vpop.f32.mrb[0].mxu0
  %v2299 = vadd.f32 %v294, %v2298
  %2300 = vmatprep.mubr.f32.mxu0 0.0
  %2301 = vmatmul.mubr.f32.gmra.mrb[0].mxu0 %v884
  %v2302 = vpop.f32.mrb[0].mxu0
  %v2303 = vadd.f32 %v290, %v2302
  %v2304 = vpop.f32.mrb[0].mxu0
  %v2305 = vadd.f32 %v294, %v2304
  %2306 = vmatprep.mubr.f32.mxu0 0.0
  %2307 = vmatmul.mubr.f32.gmra.mrb[0].mxu0 %v887
  %v2308 = vpop.f32.mrb[0].mxu0
  %v2309 = vadd.f32 %v290, %v2308
  %v2310 = vpop.f32.mrb[0].mxu0
  %v2311 = vadd.f32 %v294, %v2310
  %2312 = vmatprep.mubr.f32.mxu0 0.0
  %2313 = vmatmul.mubr.f32.gmra.mrb[0].mxu0 %v890
  %v2314 = vpop.f32.mrb[0].mxu0
  %v2315 = vadd.f32 %v290, %v2314
  %v2316 = vpop.f32.mrb[0].mxu0
  %v2317 = vadd.f32 %v294, %v2316
  %2318 = vmatprep.mubr.f32.mxu0 0.0
  %2319 = vmatmul.mubr.f32.gmra.mrb[0].mxu0 %v893
  %v2320 = vpop.f32.mrb[0].mxu0
  %v2321 = vadd.f32 %v290, %v2320
  %v2322 = vpop.f32.mrb[0].mxu0
  %v2323 = vadd.f32 %v294, %v2322
  %2324 = vmatprep.mubr.f32.mxu0 0.0
  %2325 = vmatmul.mubr.f32.gmra.mrb[0].mxu0 %v896
  %v2326 = vpop.f32.mrb[0].mxu0
  %v2327 = vadd.f32 %v290, %v2326
  %v2328 = vpop.f32.mrb[0].mxu0
  %v2329 = vadd.f32 %v294, %v2328
  %2330 = vmatprep.mubr.f32.mxu0 0.0
  %2331 = vmatmul.mubr.f32.gmra.mrb[0].mxu0 %v899
  %v2332 = vpop.f32.mrb[0].mxu0
  %v2333 = vadd.f32 %v290, %v2332
  %v2334 = vpop.f32.mrb[0].mxu0
  %v2335 = vadd.f32 %v294, %v2334
  %2336 = vmatprep.mubr.f32.mxu0 0.0
  %2337 = vmatmul.mubr.f32.gmra.mrb[0].mxu0 %v902
  %v2338 = vpop.f32.mrb[0].mxu0
  %v2339 = vadd.f32 %v290, %v2338
  %v2340 = vpop.f32.mrb[0].mxu0
  %v2341 = vadd.f32 %v294, %v2340
  %2342 = vmatprep.mubr.f32.mxu0 0.0
  %2343 = vmatmul.mubr.f32.gmra.mrb[0].mxu0 %v905
  %v2344 = vpop.f32.mrb[0].mxu0
  %v2345 = vadd.f32 %v290, %v2344
  %v2346 = vpop.f32.mrb[0].mxu0
  %v2347 = vadd.f32 %v294, %v2346
  %2348 = vmatprep.mubr.f32.mxu0 0.0
  %2349 = vmatmul.mubr.f32.gmra.mrb[0].mxu0 %v908
  %v2350 = vpop.f32.mrb[0].mxu0
  %v2351 = vadd.f32 %v290, %v2350
  %v2352 = vpop.f32.mrb[0].mxu0
  %v2353 = vadd.f32 %v294, %v2352
  %2354 = vmatprep.mubr.f32.mxu0 0.0
  %2355 = vmatmul.mubr.f32.gmra.mrb[0].mxu0 %v911
  %v2356 = vpop.f32.mrb[0].mxu0
  %v2357 = vadd.f32 %v290, %v2356
  %v2358 = vpop.f32.mrb[0].mxu0
  %v2359 = vadd.f32 %v294, %v2358
  %2360 = vmatprep.mubr.f32.mxu0 0.0
  %2361 = vmatmul.mubr.f32.gmra.mrb[0].mxu0 %v914
  %v2362 = vpop.f32.mrb[0].mxu0
  %v2363 = vadd.f32 %v290, %v2362
  %v2364 = vpop.f32.mrb[0].mxu0
  %v2365 = vadd.f32 %v294, %v2364
  %2366 = vmatprep.mubr.f32.mxu0 0.0
  %2367 = vmatmul.mubr.f32.gmra.mrb[0].mxu0 %v917
  %v2368 = vpop.f32.mrb[0].mxu0
  %v2369 = vadd.f32 %v290, %v2368
  %v2370 = vpop.f32.mrb[0].mxu0
  %v2371 = vadd.f32 %v294, %v2370
  %2372 = vmatprep.mubr.f32.mxu0 0.0
  %2373 = vmatmul.mubr.f32.gmra.mrb[0].mxu0 %v920
  %v2374 = vpop.f32.mrb[0].mxu0
  %v2375 = vadd.f32 %v290, %v2374
  %v2376 = vpop.f32.mrb[0].mxu0
  %v2377 = vadd.f32 %v294, %v2376
  %2378 = vmatprep.mubr.f32.mxu0 0.0
  %2379 = vmatmul.mubr.f32.gmra.mrb[0].mxu0 %v923
  %v2380 = vpop.f32.mrb[0].mxu0
  %v2381 = vadd.f32 %v290, %v2380
  %v2382 = vpop.f32.mrb[0].mxu0
  %v2383 = vadd.f32 %v294, %v2382
  %2384 = vmatprep.mubr.f32.mxu0 0.0
  %2385 = vmatmul.mubr.f32.gmra.mrb[0].mxu0 %v926
  %v2386 = vpop.f32.mrb[0].mxu0
  %v2387 = vadd.f32 %v290, %v2386
  %v2388 = vpop.f32.mrb[0].mxu0
  %v2389 = vadd.f32 %v294, %v2388
  %2390 = vmatprep.mubr.f32.mxu0 0.0
  %2391 = vmatmul.mubr.f32.gmra.mrb[0].mxu0 %v929
  %v2392 = vpop.f32.mrb[0].mxu0
  %v2393 = vadd.f32 %v290, %v2392
  %v2394 = vpop.f32.mrb[0].mxu0
  %v2395 = vadd.f32 %v294, %v2394
  %2396 = vmatprep.mubr.f32.mxu0 0.0
  %2397 = vmatmul.mubr.f32.gmra.mrb[0].mxu0 %v932
  %v2398 = vpop.f32.mrb[0].mxu0
  %v2399 = vadd.f32 %v290, %v2398
  %v2400 = vpop.f32.mrb[0].mxu0
  %v2401 = vadd.f32 %v294, %v2400
  %2402 = vmatprep.mubr.f32.mxu0 0.0
  %2403 = vmatmul.mubr.f32.gmra.mrb[0].mxu0 %v935
  %v2404 = vpop.f32.mrb[0].mxu0
  %v2405 = vadd.f32 %v290, %v2404
  %v2406 = vpop.f32.mrb[0].mxu0
  %v2407 = vadd.f32 %v294, %v2406
  %2408 = vmatprep.mubr.f32.mxu0 0.0
  %2409 = vmatmul.mubr.f32.gmra.mrb[0].mxu0 %v938
  %v2410 = vpop.f32.mrb[0].mxu0
  %v2411 = vadd.f32 %v290, %v2410
  %v2412 = vpop.f32.mrb[0].mxu0
  %v2413 = vadd.f32 %v294, %v2412
  %2414 = vmatprep.mubr.f32.mxu0 0.0
  %2415 = vmatmul.mubr.f32.gmra.mrb[0].mxu0 %v941
  %v2416 = vpop.f32.mrb[0].mxu0
  %v2417 = vadd.f32 %v290, %v2416
  %v2418 = vpop.f32.mrb[0].mxu0
  %v2419 = vadd.f32 %v294, %v2418
  %2420 = vmatprep.mubr.f32.mxu0 0.0
  %2421 = vmatmul.mubr.f32.gmra.mrb[0].mxu0 %v944
  %v2422 = vpop.f32.mrb[0].mxu0
  %v2423 = vadd.f32 %v290, %v2422
  %v2424 = vpop.f32.mrb[0].mxu0
  %v2425 = vadd.f32 %v294, %v2424
  %2426 = vmatprep.mubr.f32.mxu0 0.0
  %2427 = vmatmul.mubr.f32.gmra.mrb[0].mxu0 %v947
  %v2428 = vpop.f32.mrb[0].mxu0
  %v2429 = vadd.f32 %v290, %v2428
  %v2430 = vpop.f32.mrb[0].mxu0
  %v2431 = vadd.f32 %v294, %v2430
  %2432 = vmatprep.mubr.f32.mxu0 0.0
  %2433 = vmatmul.mubr.f32.gmra.mrb[0].mxu0 %v950
  %v2434 = vpop.f32.mrb[0].mxu0
  %v2435 = vadd.f32 %v290, %v2434
  %v2436 = vpop.f32.mrb[0].mxu0
  %v2437 = vadd.f32 %v294, %v2436
  %2438 = vmatprep.mubr.f32.mxu0 0.0
  %2439 = vmatmul.mubr.f32.gmra.mrb[0].mxu0 %v953
  %v2440 = vpop.f32.mrb[0].mxu0
  %v2441 = vadd.f32 %v290, %v2440
  %v2442 = vpop.f32.mrb[0].mxu0
  %v2443 = vadd.f32 %v294, %v2442
  %2444 = vmatprep.mubr.f32.mxu0 0.0
  %2445 = vmatmul.mubr.f32.gmra.mrb[0].mxu0 %v956
  %v2446 = vpop.f32.mrb[0].mxu0
  %v2447 = vadd.f32 %v290, %v2446
  %v2448 = vpop.f32.mrb[0].mxu0
  %v2449 = vadd.f32 %v294, %v2448
  %2450 = vmatprep.mubr.f32.mxu0 0.0
  %2451 = vmatmul.mubr.f32.gmra.mrb[0].mxu0 %v959
  %v2452 = vpop.f32.mrb[0].mxu0
  %v2453 = vadd.f32 %v290, %v2452
  %v2454 = vpop.f32.mrb[0].mxu0
  %v2455 = vadd.f32 %v294, %v2454
  %2456 = vmatprep.mubr.f32.mxu0 0.0
  %2457 = vmatmul.mubr.f32.gmra.mrb[0].mxu0 %v962
  %v2458 = vpop.f32.mrb[0].mxu0
  %v2459 = vadd.f32 %v290, %v2458
  %v2460 = vpop.f32.mrb[0].mxu0
  %v2461 = vadd.f32 %v294, %v2460
  %2462 = vmatprep.mubr.f32.mxu0 0.0
  %2463 = vmatmul.mubr.f32.gmra.mrb[0].mxu0 %v965
  %v2464 = vpop.f32.mrb[0].mxu0
  %v2465 = vadd.f32 %v290, %v2464
  %v2466 = vpop.f32.mrb[0].mxu0
  %v2467 = vadd.f32 %v294, %v2466
  %2468 = vmatprep.mubr.f32.mxu0 0.0
  %2469 = vmatmul.mubr.f32.gmra.mrb[0].mxu0 %v968
  %v2470 = vpop.f32.mrb[0].mxu0
  %v2471 = vadd.f32 %v290, %v2470
  %v2472 = vpop.f32.mrb[0].mxu0
  %v2473 = vadd.f32 %v294, %v2472
  %2474 = vmatprep.mubr.f32.mxu0 0.0
  %2475 = vmatmul.mubr.f32.gmra.mrb[0].mxu0 %v971
  %v2476 = vpop.f32.mrb[0].mxu0
  %v2477 = vadd.f32 %v290, %v2476
  %v2478 = vpop.f32.mrb[0].mxu0
  %v2479 = vadd.f32 %v294, %v2478
  %2480 = vmatprep.mubr.f32.mxu0 0.0
  %2481 = vmatmul.mubr.f32.gmra.mrb[0].mxu0 %v974
  %v2482 = vpop.f32.mrb[0].mxu0
  %v2483 = vadd.f32 %v290, %v2482
  %v2484 = vpop.f32.mrb[0].mxu0
  %v2485 = vadd.f32 %v294, %v2484
  %2486 = vmatprep.mubr.f32.mxu0 0.0
  %2487 = vmatmul.mubr.f32.gmra.mrb[0].mxu0 %v977
  %v2488 = vpop.f32.mrb[0].mxu0
  %v2489 = vadd.f32 %v290, %v2488
  %v2490 = vpop.f32.mrb[0].mxu0
  %v2491 = vadd.f32 %v294, %v2490
  %2492 = vmatprep.mubr.f32.mxu0 0.0
  %2493 = vmatmul.mubr.f32.gmra.mrb[0].mxu0 %v980
  %v2494 = vpop.f32.mrb[0].mxu0
  %v2495 = vadd.f32 %v290, %v2494
  %v2496 = vpop.f32.mrb[0].mxu0
  %v2497 = vadd.f32 %v294, %v2496
  %2498 = vmatprep.mubr.f32.mxu0 0.0
  %2499 = vmatmul.mubr.f32.gmra.mrb[0].mxu0 %v983
  %v2500 = vpop.f32.mrb[0].mxu0
  %v2501 = vadd.f32 %v290, %v2500
  %v2502 = vpop.f32.mrb[0].mxu0
  %v2503 = vadd.f32 %v294, %v2502
  %2504 = vmatprep.mubr.f32.mxu0 0.0
  %2505 = vmatmul.mubr.f32.gmra.mrb[0].mxu0 %v986
  %v2506 = vpop.f32.mrb[0].mxu0
  %v2507 = vadd.f32 %v290, %v2506
  %v2508 = vpop.f32.mrb[0].mxu0
  %v2509 = vadd.f32 %v294, %v2508
  %2510 = vmatprep.mubr.f32.mxu0 0.0
  %2511 = vmatmul.mubr.f32.gmra.mrb[0].mxu0 %v989
  %v2512 = vpop.f32.mrb[0].mxu0
  %v2513 = vadd.f32 %v290, %v2512
  %v2514 = vpop.f32.mrb[0].mxu0
  %v2515 = vadd.f32 %v294, %v2514
  %2516 = vmatprep.mubr.f32.mxu0 0.0
  %2517 = vmatmul.mubr.f32.gmra.mrb[0].mxu0 %v992
  %v2518 = vpop.f32.mrb[0].mxu0
  %v2519 = vadd.f32 %v290, %v2518
  %v2520 = vpop.f32.mrb[0].mxu0
  %v2521 = vadd.f32 %v294, %v2520
  %2522 = vmatprep.mubr.f32.mxu0 0.0
  %2523 = vmatmul.mubr.f32.gmra.mrb[0].mxu0 %v995
  %v2524 = vpop.f32.mrb[0].mxu0
  %v2525 = vadd.f32 %v290, %v2524
  %v2526 = vpop.f32.mrb[0].mxu0
  %v2527 = vadd.f32 %v294, %v2526
  %2528 = vmatprep.mubr.f32.mxu0 0.0
  %2529 = vmatmul.mubr.f32.gmra.mrb[0].mxu0 %v998
  %v2530 = vpop.f32.mrb[0].mxu0
  %v2531 = vadd.f32 %v290, %v2530
  %v2532 = vpop.f32.mrb[0].mxu0
  %v2533 = vadd.f32 %v294, %v2532
  %2534 = vmatprep.mubr.f32.mxu0 0.0
  %2535 = vmatmul.mubr.f32.gmra.mrb[0].mxu0 %v1001
  %v2536 = vpop.f32.mrb[0].mxu0
  %v2537 = vadd.f32 %v290, %v2536
  %v2538 = vpop.f32.mrb[0].mxu0
  %v2539 = vadd.f32 %v294, %v2538
  %2540 = vmatprep.mubr.f32.mxu0 0.0
  %2541 = vmatmul.mubr.f32.gmra.mrb[0].mxu0 %v1004
  %v2542 = vpop.f32.mrb[0].mxu0
  %v2543 = vadd.f32 %v290, %v2542
  %v2544 = vpop.f32.mrb[0].mxu0
  %v2545 = vadd.f32 %v294, %v2544
  %2546 = vmatprep.mubr.f32.mxu0 0.0
  %2547 = vmatmul.mubr.f32.gmra.mrb[0].mxu0 %v1007
  %v2548 = vpop.f32.mrb[0].mxu0
  %v2549 = vadd.f32 %v290, %v2548
  %v2550 = vpop.f32.mrb[0].mxu0
  %v2551 = vadd.f32 %v294, %v2550
  %2552 = vmatprep.mubr.f32.mxu0 0.0
  %2553 = vmatmul.mubr.f32.gmra.mrb[0].mxu0 %v1010
  %v2554 = vpop.f32.mrb[0].mxu0
  %v2555 = vadd.f32 %v290, %v2554
  %v2556 = vpop.f32.mrb[0].mxu0
  %v2557 = vadd.f32 %v294, %v2556
  %2558 = vmatprep.mubr.f32.mxu0 0.0
  %2559 = vmatmul.mubr.f32.gmra.mrb[0].mxu0 %v1013
  %v2560 = vpop.f32.mrb[0].mxu0
  %v2561 = vadd.f32 %v290, %v2560
  %v2562 = vpop.f32.mrb[0].mxu0
  %v2563 = vadd.f32 %v294, %v2562
  %2564 = vmatprep.mubr.f32.mxu0 0.0
  %2565 = vmatmul.mubr.f32.gmra.mrb[0].mxu0 %v1016
  %v2566 = vpop.f32.mrb[0].mxu0
  %v2567 = vadd.f32 %v290, %v2566
  %v2568 = vpop.f32.mrb[0].mxu0
  %v2569 = vadd.f32 %v294, %v2568
  %2570 = vmatprep.mubr.f32.mxu0 0.0
  %2571 = vmatmul.mubr.f32.gmra.mrb[0].mxu0 %v1019
  %v2572 = vpop.f32.mrb[0].mxu0
  %v2573 = vadd.f32 %v290, %v2572
  %v2574 = vpop.f32.mrb[0].mxu0
  %v2575 = vadd.f32 %v294, %v2574
  %2576 = vmatprep.mubr.f32.mxu0 0.0
  %2577 = vmatmul.mubr.f32.gmra.mrb[0].mxu0 %v1022
  %v2578 = vpop.f32.mrb[0].mxu0
  %v2579 = vadd.f32 %v290, %v2578
  %v2580 = vpop.f32.mrb[0].mxu0
  %v2581 = vadd.f32 %v294, %v2580
  %2582 = vmatprep.mubr.f32.mxu0 0.0
  %2583 = vmatmul.mubr.f32.gmra.mrb[0].mxu0 %v1025
  %v2584 = vpop.f32.mrb[0].mxu0
  %v2585 = vadd.f32 %v290, %v2584
  %v2586 = vpop.f32.mrb[0].mxu0
  %v2587 = vadd.f32 %v294, %v2586
  %2588 = vmatprep.mubr.f32.mxu0 0.0
  %2589 = vmatmul.mubr.f32.gmra.mrb[0].mxu0 %v1028
  %v2590 = vpop.f32.mrb[0].mxu0
  %v2591 = vadd.f32 %v290, %v2590
  %v2592 = vpop.f32.mrb[0].mxu0
  %v2593 = vadd.f32 %v294, %v2592
  %2594 = vmatprep.mubr.f32.mxu0 0.0
  %2595 = vmatmul.mubr.f32.gmra.mrb[0].mxu0 %v1031
  %v2596 = vpop.f32.mrb[0].mxu0
  %v2597 = vadd.f32 %v290, %v2596
  %v2598 = vpop.f32.mrb[0].mxu0
  %v2599 = vadd.f32 %v294, %v2598
  %2600 = vmatprep.mubr.f32.mxu0 0.0
  %2601 = vmatmul.mubr.f32.gmra.mrb[0].mxu0 %v1034
  %v2602 = vpop.f32.mrb[0].mxu0
  %v2603 = vadd.f32 %v290, %v2602
  %v2604 = vpop.f32.mrb[0].mxu0
  %v2605 = vadd.f32 %v294, %v2604
  %2606 = vmatprep.mubr.f32.mxu0 0.0
  %2607 = vmatmul.mubr.f32.gmra.mrb[0].mxu0 %v1037
  %v2608 = vpop.f32.mrb[0].mxu0
  %v2609 = vadd.f32 %v290, %v2608
  %v2610 = vpop.f32.mrb[0].mxu0
  %v2611 = vadd.f32 %v294, %v2610
  %2612 = vmatprep.mubr.f32.mxu0 0.0
  %2613 = vmatmul.mubr.f32.gmra.mrb[0].mxu0 %v1040
  %v2614 = vpop.f32.mrb[0].mxu0
  %v2615 = vadd.f32 %v290, %v2614
  %v2616 = vpop.f32.mrb[0].mxu0
  %v2617 = vadd.f32 %v294, %v2616
  %2618 = vmatprep.mubr.f32.mxu0 0.0
  %2619 = vmatmul.mubr.f32.gmra.mrb[0].mxu0 %v1043
  %v2620 = vpop.f32.mrb[0].mxu0
  %v2621 = vadd.f32 %v290, %v2620
  %v2622 = vpop.f32.mrb[0].mxu0
  %v2623 = vadd.f32 %v294, %v2622
  %2624 = vmatprep.mubr.f32.mxu0 0.0
  %2625 = vmatmul.mubr.f32.gmra.mrb[0].mxu0 %v1046
  %v2626 = vpop.f32.mrb[0].mxu0
  %v2627 = vadd.f32 %v290, %v2626
  %v2628 = vpop.f32.mrb[0].mxu0
  %v2629 = vadd.f32 %v294, %v2628
  %2630 = vmatprep.mubr.f32.mxu0 0.0
  %2631 = vmatmul.mubr.f32.gmra.mrb[0].mxu0 %v1049
  %v2632 = vpop.f32.mrb[0].mxu0
  %v2633 = vadd.f32 %v290, %v2632
  %v2634 = vpop.f32.mrb[0].mxu0
  %v2635 = vadd.f32 %v294, %v2634
  %2636 = vmatprep.mubr.f32.mxu0 0.0
  %2637 = vmatmul.mubr.f32.gmra.mrb[0].mxu0 %v1052
  %v2638 = vpop.f32.mrb[0].mxu0
  %v2639 = vadd.f32 %v290, %v2638
  %v2640 = vpop.f32.mrb[0].mxu0
  %v2641 = vadd.f32 %v294, %v2640
  %2642 = vmatprep.mubr.f32.mxu0 0.0
  %2643 = vmatmul.mubr.f32.gmra.mrb[0].mxu0 %v1055
  %v2644 = vpop.f32.mrb[0].mxu0
  %v2645 = vadd.f32 %v290, %v2644
  %v2646 = vpop.f32.mrb[0].mxu0
  %v2647 = vadd.f32 %v294, %v2646
  %2648 = vmatprep.mubr.f32.mxu0 0.0
  %2649 = vmatmul.mubr.f32.gmra.mrb[0].mxu0 %v1058
  %v2650 = vpop.f32.mrb[0].mxu0
  %v2651 = vadd.f32 %v290, %v2650
  %v2652 = vpop.f32.mrb[0].mxu0
  %v2653 = vadd.f32 %v294, %v2652
  %2654 = vmatprep.mubr.f32.mxu0 0.0
  %2655 = vmatmul.mubr.f32.gmra.mrb[0].mxu0 %v1061
  %v2656 = vpop.f32.mrb[0].mxu0
  %v2657 = vadd.f32 %v290, %v2656
  %v2658 = vpop.f32.mrb[0].mxu0
  %v2659 = vadd.f32 %v294, %v2658
  %2660 = vmatprep.mubr.f32.mxu0 0.0
  %2661 = vmatmul.mubr.f32.gmra.mrb[0].mxu0 %v1064
  %v2662 = vpop.f32.mrb[0].mxu0
  %v2663 = vadd.f32 %v290, %v2662
  %v2664 = vpop.f32.mrb[0].mxu0
  %v2665 = vadd.f32 %v294, %v2664
  %2666 = vdwg.mxu0
  %v2667 = vmax.f32 %v1133, 0.0
  %v2668 = vmax.f32 %v1135, 0.0
  %v2669 = vmax.f32 %v1139, 0.0
  %v2670 = vmax.f32 %v1141, 0.0
  %v2671 = vmax.f32 %v1145, 0.0
  %v2672 = vmax.f32 %v1147, 0.0
  %v2673 = vmax.f32 %v1151, 0.0
  %v2674 = vmax.f32 %v1153, 0.0
  %v2675 = vmax.f32 %v1157, 0.0
  %v2676 = vmax.f32 %v1159, 0.0
  %v2677 = vmax.f32 %v1163, 0.0
  %v2678 = vmax.f32 %v1165, 0.0
  %v2679 = vmax.f32 %v1169, 0.0
  %v2680 = vmax.f32 %v1171, 0.0
  %v2681 = vmax.f32 %v1175, 0.0
  %v2682 = vmax.f32 %v1177, 0.0
  %v2683 = vmax.f32 %v1181, 0.0
  %v2684 = vmax.f32 %v1183, 0.0
  %v2685 = vmax.f32 %v1187, 0.0
  %v2686 = vmax.f32 %v1189, 0.0
  %v2687 = vmax.f32 %v1193, 0.0
  %v2688 = vmax.f32 %v1195, 0.0
  %v2689 = vmax.f32 %v1199, 0.0
  %v2690 = vmax.f32 %v1201, 0.0
  %v2691 = vmax.f32 %v1205, 0.0
  %v2692 = vmax.f32 %v1207, 0.0
  %v2693 = vmax.f32 %v1211, 0.0
  %v2694 = vmax.f32 %v1213, 0.0
  %v2695 = vmax.f32 %v1217, 0.0
  %v2696 = vmax.f32 %v1219, 0.0
  %v2697 = vmax.f32 %v1223, 0.0
  %v2698 = vmax.f32 %v1225, 0.0
  %v2699 = vmax.f32 %v1229, 0.0
  %v2700 = vmax.f32 %v1231, 0.0
  %v2701 = vmax.f32 %v1235, 0.0
  %v2702 = vmax.f32 %v1237, 0.0
  %v2703 = vmax.f32 %v1241, 0.0
  %v2704 = vmax.f32 %v1243, 0.0
  %v2705 = vmax.f32 %v1247, 0.0
  %v2706 = vmax.f32 %v1249, 0.0
  %v2707 = vmax.f32 %v1253, 0.0
  %v2708 = vmax.f32 %v1255, 0.0
  %v2709 = vmax.f32 %v1259, 0.0
  %v2710 = vmax.f32 %v1261, 0.0
  %v2711 = vmax.f32 %v1265, 0.0
  %v2712 = vmax.f32 %v1267, 0.0
  %v2713 = vmax.f32 %v1271, 0.0
  %v2714 = vmax.f32 %v1273, 0.0
  %v2715 = vmax.f32 %v1277, 0.0
  %v2716 = vmax.f32 %v1279, 0.0
  %v2717 = vmax.f32 %v1283, 0.0
  %v2718 = vmax.f32 %v1285, 0.0
  %v2719 = vmax.f32 %v1289, 0.0
  %v2720 = vmax.f32 %v1291, 0.0
  %v2721 = vmax.f32 %v1295, 0.0
  %v2722 = vmax.f32 %v1297, 0.0
  %v2723 = vmax.f32 %v1301, 0.0
  %v2724 = vmax.f32 %v1303, 0.0
  %v2725 = vmax.f32 %v1307, 0.0
  %v2726 = vmax.f32 %v1309, 0.0
  %v2727 = vmax.f32 %v1313, 0.0
  %v2728 = vmax.f32 %v1315, 0.0
  %v2729 = vmax.f32 %v1319, 0.0
  %v2730 = vmax.f32 %v1321, 0.0
  %v2731 = vmax.f32 %v1325, 0.0
  %v2732 = vmax.f32 %v1327, 0.0
  %v2733 = vmax.f32 %v1331, 0.0
  %v2734 = vmax.f32 %v1333, 0.0
  %v2735 = vmax.f32 %v1337, 0.0
  %v2736 = vmax.f32 %v1339, 0.0
  %v2737 = vmax.f32 %v1343, 0.0
  %v2738 = vmax.f32 %v1345, 0.0
  %v2739 = vmax.f32 %v1349, 0.0
  %v2740 = vmax.f32 %v1351, 0.0
  %v2741 = vmax.f32 %v1355, 0.0
  %v2742 = vmax.f32 %v1357, 0.0
  %v2743 = vmax.f32 %v1361, 0.0
  %v2744 = vmax.f32 %v1363, 0.0
  %v2745 = vmax.f32 %v1367, 0.0
  %v2746 = vmax.f32 %v1369, 0.0
  %v2747 = vmax.f32 %v1373, 0.0
  %v2748 = vmax.f32 %v1375, 0.0
  %v2749 = vmax.f32 %v1379, 0.0
  %v2750 = vmax.f32 %v1381, 0.0
  %v2751 = vmax.f32 %v1385, 0.0
  %v2752 = vmax.f32 %v1387, 0.0
  %v2753 = vmax.f32 %v1391, 0.0
  %v2754 = vmax.f32 %v1393, 0.0
  %v2755 = vmax.f32 %v1397, 0.0
  %v2756 = vmax.f32 %v1399, 0.0
  %v2757 = vmax.f32 %v1403, 0.0
  %v2758 = vmax.f32 %v1405, 0.0
  %v2759 = vmax.f32 %v1409, 0.0
  %v2760 = vmax.f32 %v1411, 0.0
  %v2761 = vmax.f32 %v1415, 0.0
  %v2762 = vmax.f32 %v1417, 0.0
  %v2763 = vmax.f32 %v1421, 0.0
  %v2764 = vmax.f32 %v1423, 0.0
  %v2765 = vmax.f32 %v1427, 0.0
  %v2766 = vmax.f32 %v1429, 0.0
  %v2767 = vmax.f32 %v1433, 0.0
  %v2768 = vmax.f32 %v1435, 0.0
  %v2769 = vmax.f32 %v1439, 0.0
  %v2770 = vmax.f32 %v1441, 0.0
  %v2771 = vmax.f32 %v1445, 0.0
  %v2772 = vmax.f32 %v1447, 0.0
  %v2773 = vmax.f32 %v1451, 0.0
  %v2774 = vmax.f32 %v1453, 0.0
  %v2775 = vmax.f32 %v1457, 0.0
  %v2776 = vmax.f32 %v1459, 0.0
  %v2777 = vmax.f32 %v1463, 0.0
  %v2778 = vmax.f32 %v1465, 0.0
  %v2779 = vmax.f32 %v1469, 0.0
  %v2780 = vmax.f32 %v1471, 0.0
  %v2781 = vmax.f32 %v1475, 0.0
  %v2782 = vmax.f32 %v1477, 0.0
  %v2783 = vmax.f32 %v1481, 0.0
  %v2784 = vmax.f32 %v1483, 0.0
  %v2785 = vmax.f32 %v1487, 0.0
  %v2786 = vmax.f32 %v1489, 0.0
  %v2787 = vmax.f32 %v1493, 0.0
  %v2788 = vmax.f32 %v1495, 0.0
  %v2789 = vmax.f32 %v1499, 0.0
  %v2790 = vmax.f32 %v1501, 0.0
  %v2791 = vmax.f32 %v1505, 0.0
  %v2792 = vmax.f32 %v1507, 0.0
  %v2793 = vmax.f32 %v1511, 0.0
  %v2794 = vmax.f32 %v1513, 0.0
  %v2795 = vmax.f32 %v1517, 0.0
  %v2796 = vmax.f32 %v1519, 0.0
  %v2797 = vmax.f32 %v1523, 0.0
  %v2798 = vmax.f32 %v1525, 0.0
  %v2799 = vmax.f32 %v1529, 0.0
  %v2800 = vmax.f32 %v1531, 0.0
  %v2801 = vmax.f32 %v1535, 0.0
  %v2802 = vmax.f32 %v1537, 0.0
  %v2803 = vmax.f32 %v1541, 0.0
  %v2804 = vmax.f32 %v1543, 0.0
  %v2805 = vmax.f32 %v1547, 0.0
  %v2806 = vmax.f32 %v1549, 0.0
  %v2807 = vmax.f32 %v1553, 0.0
  %v2808 = vmax.f32 %v1555, 0.0
  %v2809 = vmax.f32 %v1559, 0.0
  %v2810 = vmax.f32 %v1561, 0.0
  %v2811 = vmax.f32 %v1565, 0.0
  %v2812 = vmax.f32 %v1567, 0.0
  %v2813 = vmax.f32 %v1571, 0.0
  %v2814 = vmax.f32 %v1573, 0.0
  %v2815 = vmax.f32 %v1577, 0.0
  %v2816 = vmax.f32 %v1579, 0.0
  %v2817 = vmax.f32 %v1583, 0.0
  %v2818 = vmax.f32 %v1585, 0.0
  %v2819 = vmax.f32 %v1589, 0.0
  %v2820 = vmax.f32 %v1591, 0.0
  %v2821 = vmax.f32 %v1595, 0.0
  %v2822 = vmax.f32 %v1597, 0.0
  %v2823 = vmax.f32 %v1601, 0.0
  %v2824 = vmax.f32 %v1603, 0.0
  %v2825 = vmax.f32 %v1607, 0.0
  %v2826 = vmax.f32 %v1609, 0.0
  %v2827 = vmax.f32 %v1613, 0.0
  %v2828 = vmax.f32 %v1615, 0.0
  %v2829 = vmax.f32 %v1619, 0.0
  %v2830 = vmax.f32 %v1621, 0.0
  %v2831 = vmax.f32 %v1625, 0.0
  %v2832 = vmax.f32 %v1627, 0.0
  %v2833 = vmax.f32 %v1631, 0.0
  %v2834 = vmax.f32 %v1633, 0.0
  %v2835 = vmax.f32 %v1637, 0.0
  %v2836 = vmax.f32 %v1639, 0.0
  %v2837 = vmax.f32 %v1643, 0.0
  %v2838 = vmax.f32 %v1645, 0.0
  %v2839 = vmax.f32 %v1649, 0.0
  %v2840 = vmax.f32 %v1651, 0.0
  %v2841 = vmax.f32 %v1655, 0.0
  %v2842 = vmax.f32 %v1657, 0.0
  %v2843 = vmax.f32 %v1661, 0.0
  %v2844 = vmax.f32 %v1663, 0.0
  %v2845 = vmax.f32 %v1667, 0.0
  %v2846 = vmax.f32 %v1669, 0.0
  %v2847 = vmax.f32 %v1673, 0.0
  %v2848 = vmax.f32 %v1675, 0.0
  %v2849 = vmax.f32 %v1679, 0.0
  %v2850 = vmax.f32 %v1681, 0.0
  %v2851 = vmax.f32 %v1685, 0.0
  %v2852 = vmax.f32 %v1687, 0.0
  %v2853 = vmax.f32 %v1691, 0.0
  %v2854 = vmax.f32 %v1693, 0.0
  %v2855 = vmax.f32 %v1697, 0.0
  %v2856 = vmax.f32 %v1699, 0.0
  %v2857 = vmax.f32 %v1703, 0.0
  %v2858 = vmax.f32 %v1705, 0.0
  %v2859 = vmax.f32 %v1709, 0.0
  %v2860 = vmax.f32 %v1711, 0.0
  %v2861 = vmax.f32 %v1715, 0.0
  %v2862 = vmax.f32 %v1717, 0.0
  %v2863 = vmax.f32 %v1721, 0.0
  %v2864 = vmax.f32 %v1723, 0.0
  %v2865 = vmax.f32 %v1727, 0.0
  %v2866 = vmax.f32 %v1729, 0.0
  %v2867 = vmax.f32 %v1733, 0.0
  %v2868 = vmax.f32 %v1735, 0.0
  %v2869 = vmax.f32 %v1739, 0.0
  %v2870 = vmax.f32 %v1741, 0.0
  %v2871 = vmax.f32 %v1745, 0.0
  %v2872 = vmax.f32 %v1747, 0.0
  %v2873 = vmax.f32 %v1751, 0.0
  %v2874 = vmax.f32 %v1753, 0.0
  %v2875 = vmax.f32 %v1757, 0.0
  %v2876 = vmax.f32 %v1759, 0.0
  %v2877 = vmax.f32 %v1763, 0.0
  %v2878 = vmax.f32 %v1765, 0.0
  %v2879 = vmax.f32 %v1769, 0.0
  %v2880 = vmax.f32 %v1771, 0.0
  %v2881 = vmax.f32 %v1775, 0.0
  %v2882 = vmax.f32 %v1777, 0.0
  %v2883 = vmax.f32 %v1781, 0.0
  %v2884 = vmax.f32 %v1783, 0.0
  %v2885 = vmax.f32 %v1787, 0.0
  %v2886 = vmax.f32 %v1789, 0.0
  %v2887 = vmax.f32 %v1793, 0.0
  %v2888 = vmax.f32 %v1795, 0.0
  %v2889 = vmax.f32 %v1799, 0.0
  %v2890 = vmax.f32 %v1801, 0.0
  %v2891 = vmax.f32 %v1805, 0.0
  %v2892 = vmax.f32 %v1807, 0.0
  %v2893 = vmax.f32 %v1811, 0.0
  %v2894 = vmax.f32 %v1813, 0.0
  %v2895 = vmax.f32 %v1817, 0.0
  %v2896 = vmax.f32 %v1819, 0.0
  %v2897 = vmax.f32 %v1823, 0.0
  %v2898 = vmax.f32 %v1825, 0.0
  %v2899 = vmax.f32 %v1829, 0.0
  %v2900 = vmax.f32 %v1831, 0.0
  %v2901 = vmax.f32 %v1835, 0.0
  %v2902 = vmax.f32 %v1837, 0.0
  %v2903 = vmax.f32 %v1841, 0.0
  %v2904 = vmax.f32 %v1843, 0.0
  %v2905 = vmax.f32 %v1847, 0.0
  %v2906 = vmax.f32 %v1849, 0.0
  %v2907 = vmax.f32 %v1853, 0.0
  %v2908 = vmax.f32 %v1855, 0.0
  %v2909 = vmax.f32 %v1859, 0.0
  %v2910 = vmax.f32 %v1861, 0.0
  %v2911 = vmax.f32 %v1865, 0.0
  %v2912 = vmax.f32 %v1867, 0.0
  %v2913 = vmax.f32 %v1871, 0.0
  %v2914 = vmax.f32 %v1873, 0.0
  %v2915 = vmax.f32 %v1877, 0.0
  %v2916 = vmax.f32 %v1879, 0.0
  %v2917 = vmax.f32 %v1883, 0.0
  %v2918 = vmax.f32 %v1885, 0.0
  %v2919 = vmax.f32 %v1889, 0.0
  %v2920 = vmax.f32 %v1891, 0.0
  %v2921 = vmax.f32 %v1895, 0.0
  %v2922 = vmax.f32 %v1897, 0.0
  %v2923 = vmax.f32 %v1901, 0.0
  %v2924 = vmax.f32 %v1903, 0.0
  %v2925 = vmax.f32 %v1907, 0.0
  %v2926 = vmax.f32 %v1909, 0.0
  %v2927 = vmax.f32 %v1913, 0.0
  %v2928 = vmax.f32 %v1915, 0.0
  %v2929 = vmax.f32 %v1919, 0.0
  %v2930 = vmax.f32 %v1921, 0.0
  %v2931 = vmax.f32 %v1925, 0.0
  %v2932 = vmax.f32 %v1927, 0.0
  %v2933 = vmax.f32 %v1931, 0.0
  %v2934 = vmax.f32 %v1933, 0.0
  %v2935 = vmax.f32 %v1937, 0.0
  %v2936 = vmax.f32 %v1939, 0.0
  %v2937 = vmax.f32 %v1943, 0.0
  %v2938 = vmax.f32 %v1945, 0.0
  %v2939 = vmax.f32 %v1949, 0.0
  %v2940 = vmax.f32 %v1951, 0.0
  %v2941 = vmax.f32 %v1955, 0.0
  %v2942 = vmax.f32 %v1957, 0.0
  %v2943 = vmax.f32 %v1961, 0.0
  %v2944 = vmax.f32 %v1963, 0.0
  %v2945 = vmax.f32 %v1967, 0.0
  %v2946 = vmax.f32 %v1969, 0.0
  %v2947 = vmax.f32 %v1973, 0.0
  %v2948 = vmax.f32 %v1975, 0.0
  %v2949 = vmax.f32 %v1979, 0.0
  %v2950 = vmax.f32 %v1981, 0.0
  %v2951 = vmax.f32 %v1985, 0.0
  %v2952 = vmax.f32 %v1987, 0.0
  %v2953 = vmax.f32 %v1991, 0.0
  %v2954 = vmax.f32 %v1993, 0.0
  %v2955 = vmax.f32 %v1997, 0.0
  %v2956 = vmax.f32 %v1999, 0.0
  %v2957 = vmax.f32 %v2003, 0.0
  %v2958 = vmax.f32 %v2005, 0.0
  %v2959 = vmax.f32 %v2009, 0.0
  %v2960 = vmax.f32 %v2011, 0.0
  %v2961 = vmax.f32 %v2015, 0.0
  %v2962 = vmax.f32 %v2017, 0.0
  %v2963 = vmax.f32 %v2021, 0.0
  %v2964 = vmax.f32 %v2023, 0.0
  %v2965 = vmax.f32 %v2027, 0.0
  %v2966 = vmax.f32 %v2029, 0.0
  %v2967 = vmax.f32 %v2033, 0.0
  %v2968 = vmax.f32 %v2035, 0.0
  %v2969 = vmax.f32 %v2039, 0.0
  %v2970 = vmax.f32 %v2041, 0.0
  %v2971 = vmax.f32 %v2045, 0.0
  %v2972 = vmax.f32 %v2047, 0.0
  %v2973 = vmax.f32 %v2051, 0.0
  %v2974 = vmax.f32 %v2053, 0.0
  %v2975 = vmax.f32 %v2057, 0.0
  %v2976 = vmax.f32 %v2059, 0.0
  %v2977 = vmax.f32 %v2063, 0.0
  %v2978 = vmax.f32 %v2065, 0.0
  %v2979 = vmax.f32 %v2069, 0.0
  %v2980 = vmax.f32 %v2071, 0.0
  %v2981 = vmax.f32 %v2075, 0.0
  %v2982 = vmax.f32 %v2077, 0.0
  %v2983 = vmax.f32 %v2081, 0.0
  %v2984 = vmax.f32 %v2083, 0.0
  %v2985 = vmax.f32 %v2087, 0.0
  %v2986 = vmax.f32 %v2089, 0.0
  %v2987 = vmax.f32 %v2093, 0.0
  %v2988 = vmax.f32 %v2095, 0.0
  %v2989 = vmax.f32 %v2099, 0.0
  %v2990 = vmax.f32 %v2101, 0.0
  %v2991 = vmax.f32 %v2105, 0.0
  %v2992 = vmax.f32 %v2107, 0.0
  %v2993 = vmax.f32 %v2111, 0.0
  %v2994 = vmax.f32 %v2113, 0.0
  %v2995 = vmax.f32 %v2117, 0.0
  %v2996 = vmax.f32 %v2119, 0.0
  %v2997 = vmax.f32 %v2123, 0.0
  %v2998 = vmax.f32 %v2125, 0.0
  %v2999 = vmax.f32 %v2129, 0.0
  %v3000 = vmax.f32 %v2131, 0.0
  %v3001 = vmax.f32 %v2135, 0.0
  %v3002 = vmax.f32 %v2137, 0.0
  %v3003 = vmax.f32 %v2141, 0.0
  %v3004 = vmax.f32 %v2143, 0.0
  %v3005 = vmax.f32 %v2147, 0.0
  %v3006 = vmax.f32 %v2149, 0.0
  %v3007 = vmax.f32 %v2153, 0.0
  %v3008 = vmax.f32 %v2155, 0.0
  %v3009 = vmax.f32 %v2159, 0.0
  %v3010 = vmax.f32 %v2161, 0.0
  %v3011 = vmax.f32 %v2165, 0.0
  %v3012 = vmax.f32 %v2167, 0.0
  %v3013 = vmax.f32 %v2171, 0.0
  %v3014 = vmax.f32 %v2173, 0.0
  %v3015 = vmax.f32 %v2177, 0.0
  %v3016 = vmax.f32 %v2179, 0.0
  %v3017 = vmax.f32 %v2183, 0.0
  %v3018 = vmax.f32 %v2185, 0.0
  %v3019 = vmax.f32 %v2189, 0.0
  %v3020 = vmax.f32 %v2191, 0.0
  %v3021 = vmax.f32 %v2195, 0.0
  %v3022 = vmax.f32 %v2197, 0.0
  %v3023 = vmax.f32 %v2201, 0.0
  %v3024 = vmax.f32 %v2203, 0.0
  %v3025 = vmax.f32 %v2207, 0.0
  %v3026 = vmax.f32 %v2209, 0.0
  %v3027 = vmax.f32 %v2213, 0.0
  %v3028 = vmax.f32 %v2215, 0.0
  %v3029 = vmax.f32 %v2219, 0.0
  %v3030 = vmax.f32 %v2221, 0.0
  %v3031 = vmax.f32 %v2225, 0.0
  %v3032 = vmax.f32 %v2227, 0.0
  %v3033 = vmax.f32 %v2231, 0.0
  %v3034 = vmax.f32 %v2233, 0.0
  %v3035 = vmax.f32 %v2237, 0.0
  %v3036 = vmax.f32 %v2239, 0.0
  %v3037 = vmax.f32 %v2243, 0.0
  %v3038 = vmax.f32 %v2245, 0.0
  %v3039 = vmax.f32 %v2249, 0.0
  %v3040 = vmax.f32 %v2251, 0.0
  %v3041 = vmax.f32 %v2255, 0.0
  %v3042 = vmax.f32 %v2257, 0.0
  %v3043 = vmax.f32 %v2261, 0.0
  %v3044 = vmax.f32 %v2263, 0.0
  %v3045 = vmax.f32 %v2267, 0.0
  %v3046 = vmax.f32 %v2269, 0.0
  %v3047 = vmax.f32 %v2273, 0.0
  %v3048 = vmax.f32 %v2275, 0.0
  %v3049 = vmax.f32 %v2279, 0.0
  %v3050 = vmax.f32 %v2281, 0.0
  %v3051 = vmax.f32 %v2285, 0.0
  %v3052 = vmax.f32 %v2287, 0.0
  %v3053 = vmax.f32 %v2291, 0.0
  %v3054 = vmax.f32 %v2293, 0.0
  %v3055 = vmax.f32 %v2297, 0.0
  %v3056 = vmax.f32 %v2299, 0.0
  %v3057 = vmax.f32 %v2303, 0.0
  %v3058 = vmax.f32 %v2305, 0.0
  %v3059 = vmax.f32 %v2309, 0.0
  %v3060 = vmax.f32 %v2311, 0.0
  %v3061 = vmax.f32 %v2315, 0.0
  %v3062 = vmax.f32 %v2317, 0.0
  %v3063 = vmax.f32 %v2321, 0.0
  %v3064 = vmax.f32 %v2323, 0.0
  %v3065 = vmax.f32 %v2327, 0.0
  %v3066 = vmax.f32 %v2329, 0.0
  %v3067 = vmax.f32 %v2333, 0.0
  %v3068 = vmax.f32 %v2335, 0.0
  %v3069 = vmax.f32 %v2339, 0.0
  %v3070 = vmax.f32 %v2341, 0.0
  %v3071 = vmax.f32 %v2345, 0.0
  %v3072 = vmax.f32 %v2347, 0.0
  %v3073 = vmax.f32 %v2351, 0.0
  %v3074 = vmax.f32 %v2353, 0.0
  %v3075 = vmax.f32 %v2357, 0.0
  %v3076 = vmax.f32 %v2359, 0.0
  %v3077 = vmax.f32 %v2363, 0.0
  %v3078 = vmax.f32 %v2365, 0.0
  %v3079 = vmax.f32 %v2369, 0.0
  %v3080 = vmax.f32 %v2371, 0.0
  %v3081 = vmax.f32 %v2375, 0.0
  %v3082 = vmax.f32 %v2377, 0.0
  %v3083 = vmax.f32 %v2381, 0.0
  %v3084 = vmax.f32 %v2383, 0.0
  %v3085 = vmax.f32 %v2387, 0.0
  %v3086 = vmax.f32 %v2389, 0.0
  %v3087 = vmax.f32 %v2393, 0.0
  %v3088 = vmax.f32 %v2395, 0.0
  %v3089 = vmax.f32 %v2399, 0.0
  %v3090 = vmax.f32 %v2401, 0.0
  %v3091 = vmax.f32 %v2405, 0.0
  %v3092 = vmax.f32 %v2407, 0.0
  %v3093 = vmax.f32 %v2411, 0.0
  %v3094 = vmax.f32 %v2413, 0.0
  %v3095 = vmax.f32 %v2417, 0.0
  %v3096 = vmax.f32 %v2419, 0.0
  %v3097 = vmax.f32 %v2423, 0.0
  %v3098 = vmax.f32 %v2425, 0.0
  %v3099 = vmax.f32 %v2429, 0.0
  %v3100 = vmax.f32 %v2431, 0.0
  %v3101 = vmax.f32 %v2435, 0.0
  %v3102 = vmax.f32 %v2437, 0.0
  %v3103 = vmax.f32 %v2441, 0.0
  %v3104 = vmax.f32 %v2443, 0.0
  %v3105 = vmax.f32 %v2447, 0.0
  %v3106 = vmax.f32 %v2449, 0.0
  %v3107 = vmax.f32 %v2453, 0.0
  %v3108 = vmax.f32 %v2455, 0.0
  %v3109 = vmax.f32 %v2459, 0.0
  %v3110 = vmax.f32 %v2461, 0.0
  %v3111 = vmax.f32 %v2465, 0.0
  %v3112 = vmax.f32 %v2467, 0.0
  %v3113 = vmax.f32 %v2471, 0.0
  %v3114 = vmax.f32 %v2473, 0.0
  %v3115 = vmax.f32 %v2477, 0.0
  %v3116 = vmax.f32 %v2479, 0.0
  %v3117 = vmax.f32 %v2483, 0.0
  %v3118 = vmax.f32 %v2485, 0.0
  %v3119 = vmax.f32 %v2489, 0.0
  %v3120 = vmax.f32 %v2491, 0.0
  %v3121 = vmax.f32 %v2495, 0.0
  %v3122 = vmax.f32 %v2497, 0.0
  %v3123 = vmax.f32 %v2501, 0.0
  %v3124 = vmax.f32 %v2503, 0.0
  %v3125 = vmax.f32 %v2507, 0.0
  %v3126 = vmax.f32 %v2509, 0.0
  %v3127 = vmax.f32 %v2513, 0.0
  %v3128 = vmax.f32 %v2515, 0.0
  %v3129 = vmax.f32 %v2519, 0.0
  %v3130 = vmax.f32 %v2521, 0.0
  %v3131 = vmax.f32 %v2525, 0.0
  %v3132 = vmax.f32 %v2527, 0.0
  %v3133 = vmax.f32 %v2531, 0.0
  %v3134 = vmax.f32 %v2533, 0.0
  %v3135 = vmax.f32 %v2537, 0.0
  %v3136 = vmax.f32 %v2539, 0.0
  %v3137 = vmax.f32 %v2543, 0.0
  %v3138 = vmax.f32 %v2545, 0.0
  %v3139 = vmax.f32 %v2549, 0.0
  %v3140 = vmax.f32 %v2551, 0.0
  %v3141 = vmax.f32 %v2555, 0.0
  %v3142 = vmax.f32 %v2557, 0.0
  %v3143 = vmax.f32 %v2561, 0.0
  %v3144 = vmax.f32 %v2563, 0.0
  %v3145 = vmax.f32 %v2567, 0.0
  %v3146 = vmax.f32 %v2569, 0.0
  %v3147 = vmax.f32 %v2573, 0.0
  %v3148 = vmax.f32 %v2575, 0.0
  %v3149 = vmax.f32 %v2579, 0.0
  %v3150 = vmax.f32 %v2581, 0.0
  %v3151 = vmax.f32 %v2585, 0.0
  %v3152 = vmax.f32 %v2587, 0.0
  %v3153 = vmax.f32 %v2591, 0.0
  %v3154 = vmax.f32 %v2593, 0.0
  %v3155 = vmax.f32 %v2597, 0.0
  %v3156 = vmax.f32 %v2599, 0.0
  %v3157 = vmax.f32 %v2603, 0.0
  %v3158 = vmax.f32 %v2605, 0.0
  %v3159 = vmax.f32 %v2609, 0.0
  %v3160 = vmax.f32 %v2611, 0.0
  %v3161 = vmax.f32 %v2615, 0.0
  %v3162 = vmax.f32 %v2617, 0.0
  %v3163 = vmax.f32 %v2621, 0.0
  %v3164 = vmax.f32 %v2623, 0.0
  %v3165 = vmax.f32 %v2627, 0.0
  %v3166 = vmax.f32 %v2629, 0.0
  %v3167 = vmax.f32 %v2633, 0.0
  %v3168 = vmax.f32 %v2635, 0.0
  %v3169 = vmax.f32 %v2639, 0.0
  %v3170 = vmax.f32 %v2641, 0.0
  %v3171 = vmax.f32 %v2645, 0.0
  %v3172 = vmax.f32 %v2647, 0.0
  %v3173 = vmax.f32 %v2651, 0.0
  %v3174 = vmax.f32 %v2653, 0.0
  %v3175 = vmax.f32 %v2657, 0.0
  %v3176 = vmax.f32 %v2659, 0.0
  %v3177 = vmax.f32 %v2663, 0.0
  %v3178 = vmax.f32 %v2665, 0.0
  %v3179 = vld [vmem:[%s3] sm:$0xff]
  %v3180 = vld [vmem:[%s3 + $0x8] sm:$0xff]
  %v3181 = vld [vmem:[%s3 + $0x10] sm:$0xff]
  %v3182 = vld [vmem:[%s3 + $0x18] sm:$0xff]
  %v3183 = vld [vmem:[%s3 + $0x20] sm:$0xff]
  %v3184 = vld [vmem:[%s3 + $0x28] sm:$0xff]
  %v3185 = vld [vmem:[%s3 + $0x30] sm:$0xff]
  %v3186 = vld [vmem:[%s3 + $0x38] sm:$0xff]
  %v3187 = vld [vmem:[%s3 + $0x40] sm:$0xff]
  %v3188 = vld [vmem:[%s3 + $0x48] sm:$0xff]
  %v3189 = vld [vmem:[%s3 + $0x50] sm:$0xff]
  %v3190 = vld [vmem:[%s3 + $0x58] sm:$0xff]
  %v3191 = vld [vmem:[%s3 + $0x60] sm:$0xff]
  %v3192 = vld [vmem:[%s3 + $0x68] sm:$0xff]
  %v3193 = vld [vmem:[%s3 + $0x70] sm:$0xff]
  %v3194 = vld [vmem:[%s3 + $0x78] sm:$0xff]
  %v3195 = vld [vmem:[%s3 + $0x80] sm:$0xff]
  %v3196 = vld [vmem:[%s3 + $0x88] sm:$0xff]
  %v3197 = vld [vmem:[%s3 + $0x90] sm:$0xff]
  %v3198 = vld [vmem:[%s3 + $0x98] sm:$0xff]
  %v3199 = vld [vmem:[%s3 + $0xa0] sm:$0xff]
  %v3200 = vld [vmem:[%s3 + $0xa8] sm:$0xff]
  %v3201 = vld [vmem:[%s3 + $0xb0] sm:$0xff]
  %v3202 = vld [vmem:[%s3 + $0xb8] sm:$0xff]
  %v3203 = vld [vmem:[%s3 + $0xc0] sm:$0xff]
  %v3204 = vld [vmem:[%s3 + $0xc8] sm:$0xff]
  %v3205 = vld [vmem:[%s3 + $0xd0] sm:$0xff]
  %v3206 = vld [vmem:[%s3 + $0xd8] sm:$0xff]
  %v3207 = vld [vmem:[%s3 + $0xe0] sm:$0xff]
  %v3208 = vld [vmem:[%s3 + $0xe8] sm:$0xff]
  %v3209 = vld [vmem:[%s3 + $0xf0] sm:$0xff]
  %v3210 = vld [vmem:[%s3 + $0xf8] sm:$0xff]
  %v3211 = vld [vmem:[%s3 + $0x100] sm:$0xff]
  %v3212 = vld [vmem:[%s3 + $0x108] sm:$0xff]
  %v3213 = vld [vmem:[%s3 + $0x110] sm:$0xff]
  %v3214 = vld [vmem:[%s3 + $0x118] sm:$0xff]
  %v3215 = vld [vmem:[%s3 + $0x120] sm:$0xff]
  %v3216 = vld [vmem:[%s3 + $0x128] sm:$0xff]
  %v3217 = vld [vmem:[%s3 + $0x130] sm:$0xff]
  %v3218 = vld [vmem:[%s3 + $0x138] sm:$0xff]
  %v3219 = vld [vmem:[%s3 + $0x140] sm:$0xff]
  %v3220 = vld [vmem:[%s3 + $0x148] sm:$0xff]
  %v3221 = vld [vmem:[%s3 + $0x150] sm:$0xff]
  %v3222 = vld [vmem:[%s3 + $0x158] sm:$0xff]
  %v3223 = vld [vmem:[%s3 + $0x160] sm:$0xff]
  %v3224 = vld [vmem:[%s3 + $0x168] sm:$0xff]
  %v3225 = vld [vmem:[%s3 + $0x170] sm:$0xff]
  %v3226 = vld [vmem:[%s3 + $0x178] sm:$0xff]
  %v3227 = vld [vmem:[%s3 + $0x180] sm:$0xff]
  %v3228 = vld [vmem:[%s3 + $0x188] sm:$0xff]
  %v3229 = vld [vmem:[%s3 + $0x190] sm:$0xff]
  %v3230 = vld [vmem:[%s3 + $0x198] sm:$0xff]
  %v3231 = vld [vmem:[%s3 + $0x1a0] sm:$0xff]
  %v3232 = vld [vmem:[%s3 + $0x1a8] sm:$0xff]
  %v3233 = vld [vmem:[%s3 + $0x1b0] sm:$0xff]
  %v3234 = vld [vmem:[%s3 + $0x1b8] sm:$0xff]
  %v3235 = vld [vmem:[%s3 + $0x1c0] sm:$0xff]
  %v3236 = vld [vmem:[%s3 + $0x1c8] sm:$0xff]
  %v3237 = vld [vmem:[%s3 + $0x1d0] sm:$0xff]
  %v3238 = vld [vmem:[%s3 + $0x1d8] sm:$0xff]
  %v3239 = vld [vmem:[%s3 + $0x1e0] sm:$0xff]
  %v3240 = vld [vmem:[%s3 + $0x1e8] sm:$0xff]
  %v3241 = vld [vmem:[%s3 + $0x1f0] sm:$0xff]
  %v3242 = vld [vmem:[%s3 + $0x1f8] sm:$0xff]
  %v3243 = vld [vmem:[%s4] sm:$0x3]
  %v3245 = vlaneseq
  %v3246 = vshrl.u32 %v3245, 7
  %v3247 = vsub.s32 0, %v3246
  %v3248 = vrot.slane %v3243, %v3247
  %v3249 = vlaneseq
  %v3250 = vshrl.u32 %v3249, 7
  %v3251 = vsub.s32 1, %v3250
  %v3252 = vrot.slane %v3243, %v3251
  %3255 = vmatprep.subr.mxu0 %v3180
  %3256 = vmatpush1.msra.mxu0 %v3179
  %3257 = vmatprep.subr.mxu0 %v3182
  %3258 = vmatpush1.msra.mxu0 %v3181
  %3259 = vmatprep.subr.mxu0 %v3184
  %3260 = vmatpush1.msra.mxu0 %v3183
  %3261 = vmatprep.subr.mxu0 %v3186
  %3262 = vmatpush1.msra.mxu0 %v3185
  %3263 = vmatprep.subr.mxu0 %v3188
  %3264 = vmatpush1.msra.mxu0 %v3187
  %3265 = vmatprep.subr.mxu0 %v3190
  %3266 = vmatpush1.msra.mxu0 %v3189
  %3267 = vmatprep.subr.mxu0 %v3192
  %3268 = vmatpush1.msra.mxu0 %v3191
  %3269 = vmatprep.subr.mxu0 %v3194
  %3270 = vmatpush1.msra.mxu0 %v3193
  %3271 = vmatprep.subr.mxu0 %v3196
  %3272 = vmatpush1.msra.mxu0 %v3195
  %3273 = vmatprep.subr.mxu0 %v3198
  %3274 = vmatpush1.msra.mxu0 %v3197
  %3275 = vmatprep.subr.mxu0 %v3200
  %3276 = vmatpush1.msra.mxu0 %v3199
  %3277 = vmatprep.subr.mxu0 %v3202
  %3278 = vmatpush1.msra.mxu0 %v3201
  %3279 = vmatprep.subr.mxu0 %v3204
  %3280 = vmatpush1.msra.mxu0 %v3203
  %3281 = vmatprep.subr.mxu0 %v3206
  %3282 = vmatpush1.msra.mxu0 %v3205
  %3283 = vmatprep.subr.mxu0 %v3208
  %3284 = vmatpush1.msra.mxu0 %v3207
  %3285 = vmatprep.subr.mxu0 %v3210
  %3286 = vmatpush1.msra.mxu0 %v3209
  %3287 = vmatprep.subr.mxu0 %v3212
  %3288 = vmatpush1.msra.mxu0 %v3211
  %3289 = vmatprep.subr.mxu0 %v3214
  %3290 = vmatpush1.msra.mxu0 %v3213
  %3291 = vmatprep.subr.mxu0 %v3216
  %3292 = vmatpush1.msra.mxu0 %v3215
  %3293 = vmatprep.subr.mxu0 %v3218
  %3294 = vmatpush1.msra.mxu0 %v3217
  %3295 = vmatprep.subr.mxu0 %v3220
  %3296 = vmatpush1.msra.mxu0 %v3219
  %3297 = vmatprep.subr.mxu0 %v3222
  %3298 = vmatpush1.msra.mxu0 %v3221
  %3299 = vmatprep.subr.mxu0 %v3224
  %3300 = vmatpush1.msra.mxu0 %v3223
  %3301 = vmatprep.subr.mxu0 %v3226
  %3302 = vmatpush1.msra.mxu0 %v3225
  %3303 = vmatprep.subr.mxu0 %v3228
  %3304 = vmatpush1.msra.mxu0 %v3227
  %3305 = vmatprep.subr.mxu0 %v3230
  %3306 = vmatpush1.msra.mxu0 %v3229
  %3307 = vmatprep.subr.mxu0 %v3232
  %3308 = vmatpush1.msra.mxu0 %v3231
  %3309 = vmatprep.subr.mxu0 %v3234
  %3310 = vmatpush1.msra.mxu0 %v3233
  %3311 = vmatprep.subr.mxu0 %v3236
  %3312 = vmatpush1.msra.mxu0 %v3235
  %3313 = vmatprep.subr.mxu0 %v3238
  %3314 = vmatpush1.msra.mxu0 %v3237
  %3315 = vmatprep.subr.mxu0 %v3240
  %3316 = vmatpush1.msra.mxu0 %v3239
  %3317 = vmatprep.subr.mxu0 %v3242
  %3318 = vmatpush1.msra.mxu0 %v3241
  %3319 = vmatprep.mubr.f32.mxu0 %v2668
  %3320 = vmatmul.mubr.f32.gmra.mrb[0].mxu0 %v2667
  %v3321 = vpop.f32.mrb[0].mxu0
  %v3322 = vadd.f32 %v3248, %v3321
  %v3323 = vpop.f32.mrb[0].mxu0
  %v3324 = vadd.f32 %v3252, %v3323
  %3325 = vmatprep.mubr.f32.mxu0 %v2670
  %3326 = vmatmul.mubr.f32.gmra.mrb[0].mxu0 %v2669
  %v3327 = vpop.f32.mrb[0].mxu0
  %v3328 = vadd.f32 %v3248, %v3327
  %v3329 = vpop.f32.mrb[0].mxu0
  %v3330 = vadd.f32 %v3252, %v3329
  %3331 = vmatprep.mubr.f32.mxu0 %v2672
  %3332 = vmatmul.mubr.f32.gmra.mrb[0].mxu0 %v2671
  %v3333 = vpop.f32.mrb[0].mxu0
  %v3334 = vadd.f32 %v3248, %v3333
  %v3335 = vpop.f32.mrb[0].mxu0
  %v3336 = vadd.f32 %v3252, %v3335
  %3337 = vmatprep.mubr.f32.mxu0 %v2674
  %3338 = vmatmul.mubr.f32.gmra.mrb[0].mxu0 %v2673
  %v3339 = vpop.f32.mrb[0].mxu0
  %v3340 = vadd.f32 %v3248, %v3339
  %v3341 = vpop.f32.mrb[0].mxu0
  %v3342 = vadd.f32 %v3252, %v3341
  %3343 = vmatprep.mubr.f32.mxu0 %v2676
  %3344 = vmatmul.mubr.f32.gmra.mrb[0].mxu0 %v2675
  %v3345 = vpop.f32.mrb[0].mxu0
  %v3346 = vadd.f32 %v3248, %v3345
  %v3347 = vpop.f32.mrb[0].mxu0
  %v3348 = vadd.f32 %v3252, %v3347
  %3349 = vmatprep.mubr.f32.mxu0 %v2678
  %3350 = vmatmul.mubr.f32.gmra.mrb[0].mxu0 %v2677
  %v3351 = vpop.f32.mrb[0].mxu0
  %v3352 = vadd.f32 %v3248, %v3351
  %v3353 = vpop.f32.mrb[0].mxu0
  %v3354 = vadd.f32 %v3252, %v3353
  %3355 = vmatprep.mubr.f32.mxu0 %v2680
  %3356 = vmatmul.mubr.f32.gmra.mrb[0].mxu0 %v2679
  %v3357 = vpop.f32.mrb[0].mxu0
  %v3358 = vadd.f32 %v3248, %v3357
  %v3359 = vpop.f32.mrb[0].mxu0
  %v3360 = vadd.f32 %v3252, %v3359
  %3361 = vmatprep.mubr.f32.mxu0 %v2682
  %3362 = vmatmul.mubr.f32.gmra.mrb[0].mxu0 %v2681
  %v3363 = vpop.f32.mrb[0].mxu0
  %v3364 = vadd.f32 %v3248, %v3363
  %v3365 = vpop.f32.mrb[0].mxu0
  %v3366 = vadd.f32 %v3252, %v3365
  %3367 = vmatprep.mubr.f32.mxu0 %v2684
  %3368 = vmatmul.mubr.f32.gmra.mrb[0].mxu0 %v2683
  %v3369 = vpop.f32.mrb[0].mxu0
  %v3370 = vadd.f32 %v3248, %v3369
  %v3371 = vpop.f32.mrb[0].mxu0
  %v3372 = vadd.f32 %v3252, %v3371
  %3373 = vmatprep.mubr.f32.mxu0 %v2686
  %3374 = vmatmul.mubr.f32.gmra.mrb[0].mxu0 %v2685
  %v3375 = vpop.f32.mrb[0].mxu0
  %v3376 = vadd.f32 %v3248, %v3375
  %v3377 = vpop.f32.mrb[0].mxu0
  %v3378 = vadd.f32 %v3252, %v3377
  %3379 = vmatprep.mubr.f32.mxu0 %v2688
  %3380 = vmatmul.mubr.f32.gmra.mrb[0].mxu0 %v2687
  %v3381 = vpop.f32.mrb[0].mxu0
  %v3382 = vadd.f32 %v3248, %v3381
  %v3383 = vpop.f32.mrb[0].mxu0
  %v3384 = vadd.f32 %v3252, %v3383
  %3385 = vmatprep.mubr.f32.mxu0 %v2690
  %3386 = vmatmul.mubr.f32.gmra.mrb[0].mxu0 %v2689
  %v3387 = vpop.f32.mrb[0].mxu0
  %v3388 = vadd.f32 %v3248, %v3387
  %v3389 = vpop.f32.mrb[0].mxu0
  %v3390 = vadd.f32 %v3252, %v3389
  %3391 = vmatprep.mubr.f32.mxu0 %v2692
  %3392 = vmatmul.mubr.f32.gmra.mrb[0].mxu0 %v2691
  %v3393 = vpop.f32.mrb[0].mxu0
  %v3394 = vadd.f32 %v3248, %v3393
  %v3395 = vpop.f32.mrb[0].mxu0
  %v3396 = vadd.f32 %v3252, %v3395
  %3397 = vmatprep.mubr.f32.mxu0 %v2694
  %3398 = vmatmul.mubr.f32.gmra.mrb[0].mxu0 %v2693
  %v3399 = vpop.f32.mrb[0].mxu0
  %v3400 = vadd.f32 %v3248, %v3399
  %v3401 = vpop.f32.mrb[0].mxu0
  %v3402 = vadd.f32 %v3252, %v3401
  %3403 = vmatprep.mubr.f32.mxu0 %v2696
  %3404 = vmatmul.mubr.f32.gmra.mrb[0].mxu0 %v2695
  %v3405 = vpop.f32.mrb[0].mxu0
  %v3406 = vadd.f32 %v3248, %v3405
  %v3407 = vpop.f32.mrb[0].mxu0
  %v3408 = vadd.f32 %v3252, %v3407
  %3409 = vmatprep.mubr.f32.mxu0 %v2698
  %3410 = vmatmul.mubr.f32.gmra.mrb[0].mxu0 %v2697
  %v3411 = vpop.f32.mrb[0].mxu0
  %v3412 = vadd.f32 %v3248, %v3411
  %v3413 = vpop.f32.mrb[0].mxu0
  %v3414 = vadd.f32 %v3252, %v3413
  %3415 = vmatprep.mubr.f32.mxu0 %v2700
  %3416 = vmatmul.mubr.f32.gmra.mrb[0].mxu0 %v2699
  %v3417 = vpop.f32.mrb[0].mxu0
  %v3418 = vadd.f32 %v3248, %v3417
  %v3419 = vpop.f32.mrb[0].mxu0
  %v3420 = vadd.f32 %v3252, %v3419
  %3421 = vmatprep.mubr.f32.mxu0 %v2702
  %3422 = vmatmul.mubr.f32.gmra.mrb[0].mxu0 %v2701
  %v3423 = vpop.f32.mrb[0].mxu0
  %v3424 = vadd.f32 %v3248, %v3423
  %v3425 = vpop.f32.mrb[0].mxu0
  %v3426 = vadd.f32 %v3252, %v3425
  %3427 = vmatprep.mubr.f32.mxu0 %v2704
  %3428 = vmatmul.mubr.f32.gmra.mrb[0].mxu0 %v2703
  %v3429 = vpop.f32.mrb[0].mxu0
  %v3430 = vadd.f32 %v3248, %v3429
  %v3431 = vpop.f32.mrb[0].mxu0
  %v3432 = vadd.f32 %v3252, %v3431
  %3433 = vmatprep.mubr.f32.mxu0 %v2706
  %3434 = vmatmul.mubr.f32.gmra.mrb[0].mxu0 %v2705
  %v3435 = vpop.f32.mrb[0].mxu0
  %v3436 = vadd.f32 %v3248, %v3435
  %v3437 = vpop.f32.mrb[0].mxu0
  %v3438 = vadd.f32 %v3252, %v3437
  %3439 = vmatprep.mubr.f32.mxu0 %v2708
  %3440 = vmatmul.mubr.f32.gmra.mrb[0].mxu0 %v2707
  %v3441 = vpop.f32.mrb[0].mxu0
  %v3442 = vadd.f32 %v3248, %v3441
  %v3443 = vpop.f32.mrb[0].mxu0
  %v3444 = vadd.f32 %v3252, %v3443
  %3445 = vmatprep.mubr.f32.mxu0 %v2710
  %3446 = vmatmul.mubr.f32.gmra.mrb[0].mxu0 %v2709
  %v3447 = vpop.f32.mrb[0].mxu0
  %v3448 = vadd.f32 %v3248, %v3447
  %v3449 = vpop.f32.mrb[0].mxu0
  %v3450 = vadd.f32 %v3252, %v3449
  %3451 = vmatprep.mubr.f32.mxu0 %v2712
  %3452 = vmatmul.mubr.f32.gmra.mrb[0].mxu0 %v2711
  %v3453 = vpop.f32.mrb[0].mxu0
  %v3454 = vadd.f32 %v3248, %v3453
  %v3455 = vpop.f32.mrb[0].mxu0
  %v3456 = vadd.f32 %v3252, %v3455
  %3457 = vmatprep.mubr.f32.mxu0 %v2714
  %3458 = vmatmul.mubr.f32.gmra.mrb[0].mxu0 %v2713
  %v3459 = vpop.f32.mrb[0].mxu0
  %v3460 = vadd.f32 %v3248, %v3459
  %v3461 = vpop.f32.mrb[0].mxu0
  %v3462 = vadd.f32 %v3252, %v3461
  %3463 = vmatprep.mubr.f32.mxu0 %v2716
  %3464 = vmatmul.mubr.f32.gmra.mrb[0].mxu0 %v2715
  %v3465 = vpop.f32.mrb[0].mxu0
  %v3466 = vadd.f32 %v3248, %v3465
  %v3467 = vpop.f32.mrb[0].mxu0
  %v3468 = vadd.f32 %v3252, %v3467
  %3469 = vmatprep.mubr.f32.mxu0 %v2718
  %3470 = vmatmul.mubr.f32.gmra.mrb[0].mxu0 %v2717
  %v3471 = vpop.f32.mrb[0].mxu0
  %v3472 = vadd.f32 %v3248, %v3471
  %v3473 = vpop.f32.mrb[0].mxu0
  %v3474 = vadd.f32 %v3252, %v3473
  %3475 = vmatprep.mubr.f32.mxu0 %v2720
  %3476 = vmatmul.mubr.f32.gmra.mrb[0].mxu0 %v2719
  %v3477 = vpop.f32.mrb[0].mxu0
  %v3478 = vadd.f32 %v3248, %v3477
  %v3479 = vpop.f32.mrb[0].mxu0
  %v3480 = vadd.f32 %v3252, %v3479
  %3481 = vmatprep.mubr.f32.mxu0 %v2722
  %3482 = vmatmul.mubr.f32.gmra.mrb[0].mxu0 %v2721
  %v3483 = vpop.f32.mrb[0].mxu0
  %v3484 = vadd.f32 %v3248, %v3483
  %v3485 = vpop.f32.mrb[0].mxu0
  %v3486 = vadd.f32 %v3252, %v3485
  %3487 = vmatprep.mubr.f32.mxu0 %v2724
  %3488 = vmatmul.mubr.f32.gmra.mrb[0].mxu0 %v2723
  %v3489 = vpop.f32.mrb[0].mxu0
  %v3490 = vadd.f32 %v3248, %v3489
  %v3491 = vpop.f32.mrb[0].mxu0
  %v3492 = vadd.f32 %v3252, %v3491
  %3493 = vmatprep.mubr.f32.mxu0 %v2726
  %3494 = vmatmul.mubr.f32.gmra.mrb[0].mxu0 %v2725
  %v3495 = vpop.f32.mrb[0].mxu0
  %v3496 = vadd.f32 %v3248, %v3495
  %v3497 = vpop.f32.mrb[0].mxu0
  %v3498 = vadd.f32 %v3252, %v3497
  %3499 = vmatprep.mubr.f32.mxu0 %v2728
  %3500 = vmatmul.mubr.f32.gmra.mrb[0].mxu0 %v2727
  %v3501 = vpop.f32.mrb[0].mxu0
  %v3502 = vadd.f32 %v3248, %v3501
  %v3503 = vpop.f32.mrb[0].mxu0
  %v3504 = vadd.f32 %v3252, %v3503
  %3505 = vmatprep.mubr.f32.mxu0 %v2730
  %3506 = vmatmul.mubr.f32.gmra.mrb[0].mxu0 %v2729
  %v3507 = vpop.f32.mrb[0].mxu0
  %v3508 = vadd.f32 %v3248, %v3507
  %v3509 = vpop.f32.mrb[0].mxu0
  %v3510 = vadd.f32 %v3252, %v3509
  %3511 = vmatprep.mubr.f32.mxu0 %v2732
  %3512 = vmatmul.mubr.f32.gmra.mrb[0].mxu0 %v2731
  %v3513 = vpop.f32.mrb[0].mxu0
  %v3514 = vadd.f32 %v3248, %v3513
  %v3515 = vpop.f32.mrb[0].mxu0
  %v3516 = vadd.f32 %v3252, %v3515
  %3517 = vmatprep.mubr.f32.mxu0 %v2734
  %3518 = vmatmul.mubr.f32.gmra.mrb[0].mxu0 %v2733
  %v3519 = vpop.f32.mrb[0].mxu0
  %v3520 = vadd.f32 %v3248, %v3519
  %v3521 = vpop.f32.mrb[0].mxu0
  %v3522 = vadd.f32 %v3252, %v3521
  %3523 = vmatprep.mubr.f32.mxu0 %v2736
  %3524 = vmatmul.mubr.f32.gmra.mrb[0].mxu0 %v2735
  %v3525 = vpop.f32.mrb[0].mxu0
  %v3526 = vadd.f32 %v3248, %v3525
  %v3527 = vpop.f32.mrb[0].mxu0
  %v3528 = vadd.f32 %v3252, %v3527
  %3529 = vmatprep.mubr.f32.mxu0 %v2738
  %3530 = vmatmul.mubr.f32.gmra.mrb[0].mxu0 %v2737
  %v3531 = vpop.f32.mrb[0].mxu0
  %v3532 = vadd.f32 %v3248, %v3531
  %v3533 = vpop.f32.mrb[0].mxu0
  %v3534 = vadd.f32 %v3252, %v3533
  %3535 = vmatprep.mubr.f32.mxu0 %v2740
  %3536 = vmatmul.mubr.f32.gmra.mrb[0].mxu0 %v2739
  %v3537 = vpop.f32.mrb[0].mxu0
  %v3538 = vadd.f32 %v3248, %v3537
  %v3539 = vpop.f32.mrb[0].mxu0
  %v3540 = vadd.f32 %v3252, %v3539
  %3541 = vmatprep.mubr.f32.mxu0 %v2742
  %3542 = vmatmul.mubr.f32.gmra.mrb[0].mxu0 %v2741
  %v3543 = vpop.f32.mrb[0].mxu0
  %v3544 = vadd.f32 %v3248, %v3543
  %v3545 = vpop.f32.mrb[0].mxu0
  %v3546 = vadd.f32 %v3252, %v3545
  %3547 = vmatprep.mubr.f32.mxu0 %v2744
  %3548 = vmatmul.mubr.f32.gmra.mrb[0].mxu0 %v2743
  %v3549 = vpop.f32.mrb[0].mxu0
  %v3550 = vadd.f32 %v3248, %v3549
  %v3551 = vpop.f32.mrb[0].mxu0
  %v3552 = vadd.f32 %v3252, %v3551
  %3553 = vmatprep.mubr.f32.mxu0 %v2746
  %3554 = vmatmul.mubr.f32.gmra.mrb[0].mxu0 %v2745
  %v3555 = vpop.f32.mrb[0].mxu0
  %v3556 = vadd.f32 %v3248, %v3555
  %v3557 = vpop.f32.mrb[0].mxu0
  %v3558 = vadd.f32 %v3252, %v3557
  %3559 = vmatprep.mubr.f32.mxu0 %v2748
  %3560 = vmatmul.mubr.f32.gmra.mrb[0].mxu0 %v2747
  %v3561 = vpop.f32.mrb[0].mxu0
  %v3562 = vadd.f32 %v3248, %v3561
  %v3563 = vpop.f32.mrb[0].mxu0
  %v3564 = vadd.f32 %v3252, %v3563
  %3565 = vmatprep.mubr.f32.mxu0 %v2750
  %3566 = vmatmul.mubr.f32.gmra.mrb[0].mxu0 %v2749
  %v3567 = vpop.f32.mrb[0].mxu0
  %v3568 = vadd.f32 %v3248, %v3567
  %v3569 = vpop.f32.mrb[0].mxu0
  %v3570 = vadd.f32 %v3252, %v3569
  %3571 = vmatprep.mubr.f32.mxu0 %v2752
  %3572 = vmatmul.mubr.f32.gmra.mrb[0].mxu0 %v2751
  %v3573 = vpop.f32.mrb[0].mxu0
  %v3574 = vadd.f32 %v3248, %v3573
  %v3575 = vpop.f32.mrb[0].mxu0
  %v3576 = vadd.f32 %v3252, %v3575
  %3577 = vmatprep.mubr.f32.mxu0 %v2754
  %3578 = vmatmul.mubr.f32.gmra.mrb[0].mxu0 %v2753
  %v3579 = vpop.f32.mrb[0].mxu0
  %v3580 = vadd.f32 %v3248, %v3579
  %v3581 = vpop.f32.mrb[0].mxu0
  %v3582 = vadd.f32 %v3252, %v3581
  %3583 = vmatprep.mubr.f32.mxu0 %v2756
  %3584 = vmatmul.mubr.f32.gmra.mrb[0].mxu0 %v2755
  %v3585 = vpop.f32.mrb[0].mxu0
  %v3586 = vadd.f32 %v3248, %v3585
  %v3587 = vpop.f32.mrb[0].mxu0
  %v3588 = vadd.f32 %v3252, %v3587
  %3589 = vmatprep.mubr.f32.mxu0 %v2758
  %3590 = vmatmul.mubr.f32.gmra.mrb[0].mxu0 %v2757
  %v3591 = vpop.f32.mrb[0].mxu0
  %v3592 = vadd.f32 %v3248, %v3591
  %v3593 = vpop.f32.mrb[0].mxu0
  %v3594 = vadd.f32 %v3252, %v3593
  %3595 = vmatprep.mubr.f32.mxu0 %v2760
  %3596 = vmatmul.mubr.f32.gmra.mrb[0].mxu0 %v2759
  %v3597 = vpop.f32.mrb[0].mxu0
  %v3598 = vadd.f32 %v3248, %v3597
  %v3599 = vpop.f32.mrb[0].mxu0
  %v3600 = vadd.f32 %v3252, %v3599
  %3601 = vmatprep.mubr.f32.mxu0 %v2762
  %3602 = vmatmul.mubr.f32.gmra.mrb[0].mxu0 %v2761
  %v3603 = vpop.f32.mrb[0].mxu0
  %v3604 = vadd.f32 %v3248, %v3603
  %v3605 = vpop.f32.mrb[0].mxu0
  %v3606 = vadd.f32 %v3252, %v3605
  %3607 = vmatprep.mubr.f32.mxu0 %v2764
  %3608 = vmatmul.mubr.f32.gmra.mrb[0].mxu0 %v2763
  %v3609 = vpop.f32.mrb[0].mxu0
  %v3610 = vadd.f32 %v3248, %v3609
  %v3611 = vpop.f32.mrb[0].mxu0
  %v3612 = vadd.f32 %v3252, %v3611
  %3613 = vmatprep.mubr.f32.mxu0 %v2766
  %3614 = vmatmul.mubr.f32.gmra.mrb[0].mxu0 %v2765
  %v3615 = vpop.f32.mrb[0].mxu0
  %v3616 = vadd.f32 %v3248, %v3615
  %v3617 = vpop.f32.mrb[0].mxu0
  %v3618 = vadd.f32 %v3252, %v3617
  %3619 = vmatprep.mubr.f32.mxu0 %v2768
  %3620 = vmatmul.mubr.f32.gmra.mrb[0].mxu0 %v2767
  %v3621 = vpop.f32.mrb[0].mxu0
  %v3622 = vadd.f32 %v3248, %v3621
  %v3623 = vpop.f32.mrb[0].mxu0
  %v3624 = vadd.f32 %v3252, %v3623
  %3625 = vmatprep.mubr.f32.mxu0 %v2770
  %3626 = vmatmul.mubr.f32.gmra.mrb[0].mxu0 %v2769
  %v3627 = vpop.f32.mrb[0].mxu0
  %v3628 = vadd.f32 %v3248, %v3627
  %v3629 = vpop.f32.mrb[0].mxu0
  %v3630 = vadd.f32 %v3252, %v3629
  %3631 = vmatprep.mubr.f32.mxu0 %v2772
  %3632 = vmatmul.mubr.f32.gmra.mrb[0].mxu0 %v2771
  %v3633 = vpop.f32.mrb[0].mxu0
  %v3634 = vadd.f32 %v3248, %v3633
  %v3635 = vpop.f32.mrb[0].mxu0
  %v3636 = vadd.f32 %v3252, %v3635
  %3637 = vmatprep.mubr.f32.mxu0 %v2774
  %3638 = vmatmul.mubr.f32.gmra.mrb[0].mxu0 %v2773
  %v3639 = vpop.f32.mrb[0].mxu0
  %v3640 = vadd.f32 %v3248, %v3639
  %v3641 = vpop.f32.mrb[0].mxu0
  %v3642 = vadd.f32 %v3252, %v3641
  %3643 = vmatprep.mubr.f32.mxu0 %v2776
  %3644 = vmatmul.mubr.f32.gmra.mrb[0].mxu0 %v2775
  %v3645 = vpop.f32.mrb[0].mxu0
  %v3646 = vadd.f32 %v3248, %v3645
  %v3647 = vpop.f32.mrb[0].mxu0
  %v3648 = vadd.f32 %v3252, %v3647
  %3649 = vmatprep.mubr.f32.mxu0 %v2778
  %3650 = vmatmul.mubr.f32.gmra.mrb[0].mxu0 %v2777
  %v3651 = vpop.f32.mrb[0].mxu0
  %v3652 = vadd.f32 %v3248, %v3651
  %v3653 = vpop.f32.mrb[0].mxu0
  %v3654 = vadd.f32 %v3252, %v3653
  %3655 = vmatprep.mubr.f32.mxu0 %v2780
  %3656 = vmatmul.mubr.f32.gmra.mrb[0].mxu0 %v2779
  %v3657 = vpop.f32.mrb[0].mxu0
  %v3658 = vadd.f32 %v3248, %v3657
  %v3659 = vpop.f32.mrb[0].mxu0
  %v3660 = vadd.f32 %v3252, %v3659
  %3661 = vmatprep.mubr.f32.mxu0 %v2782
  %3662 = vmatmul.mubr.f32.gmra.mrb[0].mxu0 %v2781
  %v3663 = vpop.f32.mrb[0].mxu0
  %v3664 = vadd.f32 %v3248, %v3663
  %v3665 = vpop.f32.mrb[0].mxu0
  %v3666 = vadd.f32 %v3252, %v3665
  %3667 = vmatprep.mubr.f32.mxu0 %v2784
  %3668 = vmatmul.mubr.f32.gmra.mrb[0].mxu0 %v2783
  %v3669 = vpop.f32.mrb[0].mxu0
  %v3670 = vadd.f32 %v3248, %v3669
  %v3671 = vpop.f32.mrb[0].mxu0
  %v3672 = vadd.f32 %v3252, %v3671
  %3673 = vmatprep.mubr.f32.mxu0 %v2786
  %3674 = vmatmul.mubr.f32.gmra.mrb[0].mxu0 %v2785
  %v3675 = vpop.f32.mrb[0].mxu0
  %v3676 = vadd.f32 %v3248, %v3675
  %v3677 = vpop.f32.mrb[0].mxu0
  %v3678 = vadd.f32 %v3252, %v3677
  %3679 = vmatprep.mubr.f32.mxu0 %v2788
  %3680 = vmatmul.mubr.f32.gmra.mrb[0].mxu0 %v2787
  %v3681 = vpop.f32.mrb[0].mxu0
  %v3682 = vadd.f32 %v3248, %v3681
  %v3683 = vpop.f32.mrb[0].mxu0
  %v3684 = vadd.f32 %v3252, %v3683
  %3685 = vmatprep.mubr.f32.mxu0 %v2790
  %3686 = vmatmul.mubr.f32.gmra.mrb[0].mxu0 %v2789
  %v3687 = vpop.f32.mrb[0].mxu0
  %v3688 = vadd.f32 %v3248, %v3687
  %v3689 = vpop.f32.mrb[0].mxu0
  %v3690 = vadd.f32 %v3252, %v3689
  %3691 = vmatprep.mubr.f32.mxu0 %v2792
  %3692 = vmatmul.mubr.f32.gmra.mrb[0].mxu0 %v2791
  %v3693 = vpop.f32.mrb[0].mxu0
  %v3694 = vadd.f32 %v3248, %v3693
  %v3695 = vpop.f32.mrb[0].mxu0
  %v3696 = vadd.f32 %v3252, %v3695
  %3697 = vmatprep.mubr.f32.mxu0 %v2794
  %3698 = vmatmul.mubr.f32.gmra.mrb[0].mxu0 %v2793
  %v3699 = vpop.f32.mrb[0].mxu0
  %v3700 = vadd.f32 %v3248, %v3699
  %v3701 = vpop.f32.mrb[0].mxu0
  %v3702 = vadd.f32 %v3252, %v3701
  %3703 = vmatprep.mubr.f32.mxu0 %v2796
  %3704 = vmatmul.mubr.f32.gmra.mrb[0].mxu0 %v2795
  %v3705 = vpop.f32.mrb[0].mxu0
  %v3706 = vadd.f32 %v3248, %v3705
  %v3707 = vpop.f32.mrb[0].mxu0
  %v3708 = vadd.f32 %v3252, %v3707
  %3709 = vmatprep.mubr.f32.mxu0 %v2798
  %3710 = vmatmul.mubr.f32.gmra.mrb[0].mxu0 %v2797
  %v3711 = vpop.f32.mrb[0].mxu0
  %v3712 = vadd.f32 %v3248, %v3711
  %v3713 = vpop.f32.mrb[0].mxu0
  %v3714 = vadd.f32 %v3252, %v3713
  %3715 = vmatprep.mubr.f32.mxu0 %v2800
  %3716 = vmatmul.mubr.f32.gmra.mrb[0].mxu0 %v2799
  %v3717 = vpop.f32.mrb[0].mxu0
  %v3718 = vadd.f32 %v3248, %v3717
  %v3719 = vpop.f32.mrb[0].mxu0
  %v3720 = vadd.f32 %v3252, %v3719
  %3721 = vmatprep.mubr.f32.mxu0 %v2802
  %3722 = vmatmul.mubr.f32.gmra.mrb[0].mxu0 %v2801
  %v3723 = vpop.f32.mrb[0].mxu0
  %v3724 = vadd.f32 %v3248, %v3723
  %v3725 = vpop.f32.mrb[0].mxu0
  %v3726 = vadd.f32 %v3252, %v3725
  %3727 = vmatprep.mubr.f32.mxu0 %v2804
  %3728 = vmatmul.mubr.f32.gmra.mrb[0].mxu0 %v2803
  %v3729 = vpop.f32.mrb[0].mxu0
  %v3730 = vadd.f32 %v3248, %v3729
  %v3731 = vpop.f32.mrb[0].mxu0
  %v3732 = vadd.f32 %v3252, %v3731
  %3733 = vmatprep.mubr.f32.mxu0 %v2806
  %3734 = vmatmul.mubr.f32.gmra.mrb[0].mxu0 %v2805
  %v3735 = vpop.f32.mrb[0].mxu0
  %v3736 = vadd.f32 %v3248, %v3735
  %v3737 = vpop.f32.mrb[0].mxu0
  %v3738 = vadd.f32 %v3252, %v3737
  %3739 = vmatprep.mubr.f32.mxu0 %v2808
  %3740 = vmatmul.mubr.f32.gmra.mrb[0].mxu0 %v2807
  %v3741 = vpop.f32.mrb[0].mxu0
  %v3742 = vadd.f32 %v3248, %v3741
  %v3743 = vpop.f32.mrb[0].mxu0
  %v3744 = vadd.f32 %v3252, %v3743
  %3745 = vmatprep.mubr.f32.mxu0 %v2810
  %3746 = vmatmul.mubr.f32.gmra.mrb[0].mxu0 %v2809
  %v3747 = vpop.f32.mrb[0].mxu0
  %v3748 = vadd.f32 %v3248, %v3747
  %v3749 = vpop.f32.mrb[0].mxu0
  %v3750 = vadd.f32 %v3252, %v3749
  %3751 = vmatprep.mubr.f32.mxu0 %v2812
  %3752 = vmatmul.mubr.f32.gmra.mrb[0].mxu0 %v2811
  %v3753 = vpop.f32.mrb[0].mxu0
  %v3754 = vadd.f32 %v3248, %v3753
  %v3755 = vpop.f32.mrb[0].mxu0
  %v3756 = vadd.f32 %v3252, %v3755
  %3757 = vmatprep.mubr.f32.mxu0 %v2814
  %3758 = vmatmul.mubr.f32.gmra.mrb[0].mxu0 %v2813
  %v3759 = vpop.f32.mrb[0].mxu0
  %v3760 = vadd.f32 %v3248, %v3759
  %v3761 = vpop.f32.mrb[0].mxu0
  %v3762 = vadd.f32 %v3252, %v3761
  %3763 = vmatprep.mubr.f32.mxu0 %v2816
  %3764 = vmatmul.mubr.f32.gmra.mrb[0].mxu0 %v2815
  %v3765 = vpop.f32.mrb[0].mxu0
  %v3766 = vadd.f32 %v3248, %v3765
  %v3767 = vpop.f32.mrb[0].mxu0
  %v3768 = vadd.f32 %v3252, %v3767
  %3769 = vmatprep.mubr.f32.mxu0 %v2818
  %3770 = vmatmul.mubr.f32.gmra.mrb[0].mxu0 %v2817
  %v3771 = vpop.f32.mrb[0].mxu0
  %v3772 = vadd.f32 %v3248, %v3771
  %v3773 = vpop.f32.mrb[0].mxu0
  %v3774 = vadd.f32 %v3252, %v3773
  %3775 = vmatprep.mubr.f32.mxu0 %v2820
  %3776 = vmatmul.mubr.f32.gmra.mrb[0].mxu0 %v2819
  %v3777 = vpop.f32.mrb[0].mxu0
  %v3778 = vadd.f32 %v3248, %v3777
  %v3779 = vpop.f32.mrb[0].mxu0
  %v3780 = vadd.f32 %v3252, %v3779
  %3781 = vmatprep.mubr.f32.mxu0 %v2822
  %3782 = vmatmul.mubr.f32.gmra.mrb[0].mxu0 %v2821
  %v3783 = vpop.f32.mrb[0].mxu0
  %v3784 = vadd.f32 %v3248, %v3783
  %v3785 = vpop.f32.mrb[0].mxu0
  %v3786 = vadd.f32 %v3252, %v3785
  %3787 = vmatprep.mubr.f32.mxu0 %v2824
  %3788 = vmatmul.mubr.f32.gmra.mrb[0].mxu0 %v2823
  %v3789 = vpop.f32.mrb[0].mxu0
  %v3790 = vadd.f32 %v3248, %v3789
  %v3791 = vpop.f32.mrb[0].mxu0
  %v3792 = vadd.f32 %v3252, %v3791
  %3793 = vmatprep.mubr.f32.mxu0 %v2826
  %3794 = vmatmul.mubr.f32.gmra.mrb[0].mxu0 %v2825
  %v3795 = vpop.f32.mrb[0].mxu0
  %v3796 = vadd.f32 %v3248, %v3795
  %v3797 = vpop.f32.mrb[0].mxu0
  %v3798 = vadd.f32 %v3252, %v3797
  %3799 = vmatprep.mubr.f32.mxu0 %v2828
  %3800 = vmatmul.mubr.f32.gmra.mrb[0].mxu0 %v2827
  %v3801 = vpop.f32.mrb[0].mxu0
  %v3802 = vadd.f32 %v3248, %v3801
  %v3803 = vpop.f32.mrb[0].mxu0
  %v3804 = vadd.f32 %v3252, %v3803
  %3805 = vmatprep.mubr.f32.mxu0 %v2830
  %3806 = vmatmul.mubr.f32.gmra.mrb[0].mxu0 %v2829
  %v3807 = vpop.f32.mrb[0].mxu0
  %v3808 = vadd.f32 %v3248, %v3807
  %v3809 = vpop.f32.mrb[0].mxu0
  %v3810 = vadd.f32 %v3252, %v3809
  %3811 = vmatprep.mubr.f32.mxu0 %v2832
  %3812 = vmatmul.mubr.f32.gmra.mrb[0].mxu0 %v2831
  %v3813 = vpop.f32.mrb[0].mxu0
  %v3814 = vadd.f32 %v3248, %v3813
  %v3815 = vpop.f32.mrb[0].mxu0
  %v3816 = vadd.f32 %v3252, %v3815
  %3817 = vmatprep.mubr.f32.mxu0 %v2834
  %3818 = vmatmul.mubr.f32.gmra.mrb[0].mxu0 %v2833
  %v3819 = vpop.f32.mrb[0].mxu0
  %v3820 = vadd.f32 %v3248, %v3819
  %v3821 = vpop.f32.mrb[0].mxu0
  %v3822 = vadd.f32 %v3252, %v3821
  %3823 = vmatprep.mubr.f32.mxu0 %v2836
  %3824 = vmatmul.mubr.f32.gmra.mrb[0].mxu0 %v2835
  %v3825 = vpop.f32.mrb[0].mxu0
  %v3826 = vadd.f32 %v3248, %v3825
  %v3827 = vpop.f32.mrb[0].mxu0
  %v3828 = vadd.f32 %v3252, %v3827
  %3829 = vmatprep.mubr.f32.mxu0 %v2838
  %3830 = vmatmul.mubr.f32.gmra.mrb[0].mxu0 %v2837
  %v3831 = vpop.f32.mrb[0].mxu0
  %v3832 = vadd.f32 %v3248, %v3831
  %v3833 = vpop.f32.mrb[0].mxu0
  %v3834 = vadd.f32 %v3252, %v3833
  %3835 = vmatprep.mubr.f32.mxu0 %v2840
  %3836 = vmatmul.mubr.f32.gmra.mrb[0].mxu0 %v2839
  %v3837 = vpop.f32.mrb[0].mxu0
  %v3838 = vadd.f32 %v3248, %v3837
  %v3839 = vpop.f32.mrb[0].mxu0
  %v3840 = vadd.f32 %v3252, %v3839
  %3841 = vmatprep.mubr.f32.mxu0 %v2842
  %3842 = vmatmul.mubr.f32.gmra.mrb[0].mxu0 %v2841
  %v3843 = vpop.f32.mrb[0].mxu0
  %v3844 = vadd.f32 %v3248, %v3843
  %v3845 = vpop.f32.mrb[0].mxu0
  %v3846 = vadd.f32 %v3252, %v3845
  %3847 = vmatprep.mubr.f32.mxu0 %v2844
  %3848 = vmatmul.mubr.f32.gmra.mrb[0].mxu0 %v2843
  %v3849 = vpop.f32.mrb[0].mxu0
  %v3850 = vadd.f32 %v3248, %v3849
  %v3851 = vpop.f32.mrb[0].mxu0
  %v3852 = vadd.f32 %v3252, %v3851
  %3853 = vmatprep.mubr.f32.mxu0 %v2846
  %3854 = vmatmul.mubr.f32.gmra.mrb[0].mxu0 %v2845
  %v3855 = vpop.f32.mrb[0].mxu0
  %v3856 = vadd.f32 %v3248, %v3855
  %v3857 = vpop.f32.mrb[0].mxu0
  %v3858 = vadd.f32 %v3252, %v3857
  %3859 = vmatprep.mubr.f32.mxu0 %v2848
  %3860 = vmatmul.mubr.f32.gmra.mrb[0].mxu0 %v2847
  %v3861 = vpop.f32.mrb[0].mxu0
  %v3862 = vadd.f32 %v3248, %v3861
  %v3863 = vpop.f32.mrb[0].mxu0
  %v3864 = vadd.f32 %v3252, %v3863
  %3865 = vmatprep.mubr.f32.mxu0 %v2850
  %3866 = vmatmul.mubr.f32.gmra.mrb[0].mxu0 %v2849
  %v3867 = vpop.f32.mrb[0].mxu0
  %v3868 = vadd.f32 %v3248, %v3867
  %v3869 = vpop.f32.mrb[0].mxu0
  %v3870 = vadd.f32 %v3252, %v3869
  %3871 = vmatprep.mubr.f32.mxu0 %v2852
  %3872 = vmatmul.mubr.f32.gmra.mrb[0].mxu0 %v2851
  %v3873 = vpop.f32.mrb[0].mxu0
  %v3874 = vadd.f32 %v3248, %v3873
  %v3875 = vpop.f32.mrb[0].mxu0
  %v3876 = vadd.f32 %v3252, %v3875
  %3877 = vmatprep.mubr.f32.mxu0 %v2854
  %3878 = vmatmul.mubr.f32.gmra.mrb[0].mxu0 %v2853
  %v3879 = vpop.f32.mrb[0].mxu0
  %v3880 = vadd.f32 %v3248, %v3879
  %v3881 = vpop.f32.mrb[0].mxu0
  %v3882 = vadd.f32 %v3252, %v3881
  %3883 = vmatprep.mubr.f32.mxu0 %v2856
  %3884 = vmatmul.mubr.f32.gmra.mrb[0].mxu0 %v2855
  %v3885 = vpop.f32.mrb[0].mxu0
  %v3886 = vadd.f32 %v3248, %v3885
  %v3887 = vpop.f32.mrb[0].mxu0
  %v3888 = vadd.f32 %v3252, %v3887
  %3889 = vmatprep.mubr.f32.mxu0 %v2858
  %3890 = vmatmul.mubr.f32.gmra.mrb[0].mxu0 %v2857
  %v3891 = vpop.f32.mrb[0].mxu0
  %v3892 = vadd.f32 %v3248, %v3891
  %v3893 = vpop.f32.mrb[0].mxu0
  %v3894 = vadd.f32 %v3252, %v3893
  %3895 = vmatprep.mubr.f32.mxu0 %v2860
  %3896 = vmatmul.mubr.f32.gmra.mrb[0].mxu0 %v2859
  %v3897 = vpop.f32.mrb[0].mxu0
  %v3898 = vadd.f32 %v3248, %v3897
  %v3899 = vpop.f32.mrb[0].mxu0
  %v3900 = vadd.f32 %v3252, %v3899
  %3901 = vmatprep.mubr.f32.mxu0 %v2862
  %3902 = vmatmul.mubr.f32.gmra.mrb[0].mxu0 %v2861
  %v3903 = vpop.f32.mrb[0].mxu0
  %v3904 = vadd.f32 %v3248, %v3903
  %v3905 = vpop.f32.mrb[0].mxu0
  %v3906 = vadd.f32 %v3252, %v3905
  %3907 = vmatprep.mubr.f32.mxu0 %v2864
  %3908 = vmatmul.mubr.f32.gmra.mrb[0].mxu0 %v2863
  %v3909 = vpop.f32.mrb[0].mxu0
  %v3910 = vadd.f32 %v3248, %v3909
  %v3911 = vpop.f32.mrb[0].mxu0
  %v3912 = vadd.f32 %v3252, %v3911
  %3913 = vmatprep.mubr.f32.mxu0 %v2866
  %3914 = vmatmul.mubr.f32.gmra.mrb[0].mxu0 %v2865
  %v3915 = vpop.f32.mrb[0].mxu0
  %v3916 = vadd.f32 %v3248, %v3915
  %v3917 = vpop.f32.mrb[0].mxu0
  %v3918 = vadd.f32 %v3252, %v3917
  %3919 = vmatprep.mubr.f32.mxu0 %v2868
  %3920 = vmatmul.mubr.f32.gmra.mrb[0].mxu0 %v2867
  %v3921 = vpop.f32.mrb[0].mxu0
  %v3922 = vadd.f32 %v3248, %v3921
  %v3923 = vpop.f32.mrb[0].mxu0
  %v3924 = vadd.f32 %v3252, %v3923
  %3925 = vmatprep.mubr.f32.mxu0 %v2870
  %3926 = vmatmul.mubr.f32.gmra.mrb[0].mxu0 %v2869
  %v3927 = vpop.f32.mrb[0].mxu0
  %v3928 = vadd.f32 %v3248, %v3927
  %v3929 = vpop.f32.mrb[0].mxu0
  %v3930 = vadd.f32 %v3252, %v3929
  %3931 = vmatprep.mubr.f32.mxu0 %v2872
  %3932 = vmatmul.mubr.f32.gmra.mrb[0].mxu0 %v2871
  %v3933 = vpop.f32.mrb[0].mxu0
  %v3934 = vadd.f32 %v3248, %v3933
  %v3935 = vpop.f32.mrb[0].mxu0
  %v3936 = vadd.f32 %v3252, %v3935
  %3937 = vmatprep.mubr.f32.mxu0 %v2874
  %3938 = vmatmul.mubr.f32.gmra.mrb[0].mxu0 %v2873
  %v3939 = vpop.f32.mrb[0].mxu0
  %v3940 = vadd.f32 %v3248, %v3939
  %v3941 = vpop.f32.mrb[0].mxu0
  %v3942 = vadd.f32 %v3252, %v3941
  %3943 = vmatprep.mubr.f32.mxu0 %v2876
  %3944 = vmatmul.mubr.f32.gmra.mrb[0].mxu0 %v2875
  %v3945 = vpop.f32.mrb[0].mxu0
  %v3946 = vadd.f32 %v3248, %v3945
  %v3947 = vpop.f32.mrb[0].mxu0
  %v3948 = vadd.f32 %v3252, %v3947
  %3949 = vmatprep.mubr.f32.mxu0 %v2878
  %3950 = vmatmul.mubr.f32.gmra.mrb[0].mxu0 %v2877
  %v3951 = vpop.f32.mrb[0].mxu0
  %v3952 = vadd.f32 %v3248, %v3951
  %v3953 = vpop.f32.mrb[0].mxu0
  %v3954 = vadd.f32 %v3252, %v3953
  %3955 = vmatprep.mubr.f32.mxu0 %v2880
  %3956 = vmatmul.mubr.f32.gmra.mrb[0].mxu0 %v2879
  %v3957 = vpop.f32.mrb[0].mxu0
  %v3958 = vadd.f32 %v3248, %v3957
  %v3959 = vpop.f32.mrb[0].mxu0
  %v3960 = vadd.f32 %v3252, %v3959
  %3961 = vmatprep.mubr.f32.mxu0 %v2882
  %3962 = vmatmul.mubr.f32.gmra.mrb[0].mxu0 %v2881
  %v3963 = vpop.f32.mrb[0].mxu0
  %v3964 = vadd.f32 %v3248, %v3963
  %v3965 = vpop.f32.mrb[0].mxu0
  %v3966 = vadd.f32 %v3252, %v3965
  %3967 = vmatprep.mubr.f32.mxu0 %v2884
  %3968 = vmatmul.mubr.f32.gmra.mrb[0].mxu0 %v2883
  %v3969 = vpop.f32.mrb[0].mxu0
  %v3970 = vadd.f32 %v3248, %v3969
  %v3971 = vpop.f32.mrb[0].mxu0
  %v3972 = vadd.f32 %v3252, %v3971
  %3973 = vmatprep.mubr.f32.mxu0 %v2886
  %3974 = vmatmul.mubr.f32.gmra.mrb[0].mxu0 %v2885
  %v3975 = vpop.f32.mrb[0].mxu0
  %v3976 = vadd.f32 %v3248, %v3975
  %v3977 = vpop.f32.mrb[0].mxu0
  %v3978 = vadd.f32 %v3252, %v3977
  %3979 = vmatprep.mubr.f32.mxu0 %v2888
  %3980 = vmatmul.mubr.f32.gmra.mrb[0].mxu0 %v2887
  %v3981 = vpop.f32.mrb[0].mxu0
  %v3982 = vadd.f32 %v3248, %v3981
  %v3983 = vpop.f32.mrb[0].mxu0
  %v3984 = vadd.f32 %v3252, %v3983
  %3985 = vmatprep.mubr.f32.mxu0 %v2890
  %3986 = vmatmul.mubr.f32.gmra.mrb[0].mxu0 %v2889
  %v3987 = vpop.f32.mrb[0].mxu0
  %v3988 = vadd.f32 %v3248, %v3987
  %v3989 = vpop.f32.mrb[0].mxu0
  %v3990 = vadd.f32 %v3252, %v3989
  %3991 = vmatprep.mubr.f32.mxu0 %v2892
  %3992 = vmatmul.mubr.f32.gmra.mrb[0].mxu0 %v2891
  %v3993 = vpop.f32.mrb[0].mxu0
  %v3994 = vadd.f32 %v3248, %v3993
  %v3995 = vpop.f32.mrb[0].mxu0
  %v3996 = vadd.f32 %v3252, %v3995
  %3997 = vmatprep.mubr.f32.mxu0 %v2894
  %3998 = vmatmul.mubr.f32.gmra.mrb[0].mxu0 %v2893
  %v3999 = vpop.f32.mrb[0].mxu0
  %v4000 = vadd.f32 %v3248, %v3999
  %v4001 = vpop.f32.mrb[0].mxu0
  %v4002 = vadd.f32 %v3252, %v4001
  %4003 = vmatprep.mubr.f32.mxu0 %v2896
  %4004 = vmatmul.mubr.f32.gmra.mrb[0].mxu0 %v2895
  %v4005 = vpop.f32.mrb[0].mxu0
  %v4006 = vadd.f32 %v3248, %v4005
  %v4007 = vpop.f32.mrb[0].mxu0
  %v4008 = vadd.f32 %v3252, %v4007
  %4009 = vmatprep.mubr.f32.mxu0 %v2898
  %4010 = vmatmul.mubr.f32.gmra.mrb[0].mxu0 %v2897
  %v4011 = vpop.f32.mrb[0].mxu0
  %v4012 = vadd.f32 %v3248, %v4011
  %v4013 = vpop.f32.mrb[0].mxu0
  %v4014 = vadd.f32 %v3252, %v4013
  %4015 = vmatprep.mubr.f32.mxu0 %v2900
  %4016 = vmatmul.mubr.f32.gmra.mrb[0].mxu0 %v2899
  %v4017 = vpop.f32.mrb[0].mxu0
  %v4018 = vadd.f32 %v3248, %v4017
  %v4019 = vpop.f32.mrb[0].mxu0
  %v4020 = vadd.f32 %v3252, %v4019
  %4021 = vmatprep.mubr.f32.mxu0 %v2902
  %4022 = vmatmul.mubr.f32.gmra.mrb[0].mxu0 %v2901
  %v4023 = vpop.f32.mrb[0].mxu0
  %v4024 = vadd.f32 %v3248, %v4023
  %v4025 = vpop.f32.mrb[0].mxu0
  %v4026 = vadd.f32 %v3252, %v4025
  %4027 = vmatprep.mubr.f32.mxu0 %v2904
  %4028 = vmatmul.mubr.f32.gmra.mrb[0].mxu0 %v2903
  %v4029 = vpop.f32.mrb[0].mxu0
  %v4030 = vadd.f32 %v3248, %v4029
  %v4031 = vpop.f32.mrb[0].mxu0
  %v4032 = vadd.f32 %v3252, %v4031
  %4033 = vmatprep.mubr.f32.mxu0 %v2906
  %4034 = vmatmul.mubr.f32.gmra.mrb[0].mxu0 %v2905
  %v4035 = vpop.f32.mrb[0].mxu0
  %v4036 = vadd.f32 %v3248, %v4035
  %v4037 = vpop.f32.mrb[0].mxu0
  %v4038 = vadd.f32 %v3252, %v4037
  %4039 = vmatprep.mubr.f32.mxu0 %v2908
  %4040 = vmatmul.mubr.f32.gmra.mrb[0].mxu0 %v2907
  %v4041 = vpop.f32.mrb[0].mxu0
  %v4042 = vadd.f32 %v3248, %v4041
  %v4043 = vpop.f32.mrb[0].mxu0
  %v4044 = vadd.f32 %v3252, %v4043
  %4045 = vmatprep.mubr.f32.mxu0 %v2910
  %4046 = vmatmul.mubr.f32.gmra.mrb[0].mxu0 %v2909
  %v4047 = vpop.f32.mrb[0].mxu0
  %v4048 = vadd.f32 %v3248, %v4047
  %v4049 = vpop.f32.mrb[0].mxu0
  %v4050 = vadd.f32 %v3252, %v4049
  %4051 = vmatprep.mubr.f32.mxu0 %v2912
  %4052 = vmatmul.mubr.f32.gmra.mrb[0].mxu0 %v2911
  %v4053 = vpop.f32.mrb[0].mxu0
  %v4054 = vadd.f32 %v3248, %v4053
  %v4055 = vpop.f32.mrb[0].mxu0
  %v4056 = vadd.f32 %v3252, %v4055
  %4057 = vmatprep.mubr.f32.mxu0 %v2914
  %4058 = vmatmul.mubr.f32.gmra.mrb[0].mxu0 %v2913
  %v4059 = vpop.f32.mrb[0].mxu0
  %v4060 = vadd.f32 %v3248, %v4059
  %v4061 = vpop.f32.mrb[0].mxu0
  %v4062 = vadd.f32 %v3252, %v4061
  %4063 = vmatprep.mubr.f32.mxu0 %v2916
  %4064 = vmatmul.mubr.f32.gmra.mrb[0].mxu0 %v2915
  %v4065 = vpop.f32.mrb[0].mxu0
  %v4066 = vadd.f32 %v3248, %v4065
  %v4067 = vpop.f32.mrb[0].mxu0
  %v4068 = vadd.f32 %v3252, %v4067
  %4069 = vmatprep.mubr.f32.mxu0 %v2918
  %4070 = vmatmul.mubr.f32.gmra.mrb[0].mxu0 %v2917
  %v4071 = vpop.f32.mrb[0].mxu0
  %v4072 = vadd.f32 %v3248, %v4071
  %v4073 = vpop.f32.mrb[0].mxu0
  %v4074 = vadd.f32 %v3252, %v4073
  %4075 = vmatprep.mubr.f32.mxu0 %v2920
  %4076 = vmatmul.mubr.f32.gmra.mrb[0].mxu0 %v2919
  %v4077 = vpop.f32.mrb[0].mxu0
  %v4078 = vadd.f32 %v3248, %v4077
  %v4079 = vpop.f32.mrb[0].mxu0
  %v4080 = vadd.f32 %v3252, %v4079
  %4081 = vmatprep.mubr.f32.mxu0 %v2922
  %4082 = vmatmul.mubr.f32.gmra.mrb[0].mxu0 %v2921
  %v4083 = vpop.f32.mrb[0].mxu0
  %v4084 = vadd.f32 %v3248, %v4083
  %v4085 = vpop.f32.mrb[0].mxu0
  %v4086 = vadd.f32 %v3252, %v4085
  %4087 = vmatprep.mubr.f32.mxu0 %v2924
  %4088 = vmatmul.mubr.f32.gmra.mrb[0].mxu0 %v2923
  %v4089 = vpop.f32.mrb[0].mxu0
  %v4090 = vadd.f32 %v3248, %v4089
  %v4091 = vpop.f32.mrb[0].mxu0
  %v4092 = vadd.f32 %v3252, %v4091
  %4093 = vmatprep.mubr.f32.mxu0 %v2926
  %4094 = vmatmul.mubr.f32.gmra.mrb[0].mxu0 %v2925
  %v4095 = vpop.f32.mrb[0].mxu0
  %v4096 = vadd.f32 %v3248, %v4095
  %v4097 = vpop.f32.mrb[0].mxu0
  %v4098 = vadd.f32 %v3252, %v4097
  %4099 = vmatprep.mubr.f32.mxu0 %v2928
  %4100 = vmatmul.mubr.f32.gmra.mrb[0].mxu0 %v2927
  %v4101 = vpop.f32.mrb[0].mxu0
  %v4102 = vadd.f32 %v3248, %v4101
  %v4103 = vpop.f32.mrb[0].mxu0
  %v4104 = vadd.f32 %v3252, %v4103
  %4105 = vmatprep.mubr.f32.mxu0 %v2930
  %4106 = vmatmul.mubr.f32.gmra.mrb[0].mxu0 %v2929
  %v4107 = vpop.f32.mrb[0].mxu0
  %v4108 = vadd.f32 %v3248, %v4107
  %v4109 = vpop.f32.mrb[0].mxu0
  %v4110 = vadd.f32 %v3252, %v4109
  %4111 = vmatprep.mubr.f32.mxu0 %v2932
  %4112 = vmatmul.mubr.f32.gmra.mrb[0].mxu0 %v2931
  %v4113 = vpop.f32.mrb[0].mxu0
  %v4114 = vadd.f32 %v3248, %v4113
  %v4115 = vpop.f32.mrb[0].mxu0
  %v4116 = vadd.f32 %v3252, %v4115
  %4117 = vmatprep.mubr.f32.mxu0 %v2934
  %4118 = vmatmul.mubr.f32.gmra.mrb[0].mxu0 %v2933
  %v4119 = vpop.f32.mrb[0].mxu0
  %v4120 = vadd.f32 %v3248, %v4119
  %v4121 = vpop.f32.mrb[0].mxu0
  %v4122 = vadd.f32 %v3252, %v4121
  %4123 = vmatprep.mubr.f32.mxu0 %v2936
  %4124 = vmatmul.mubr.f32.gmra.mrb[0].mxu0 %v2935
  %v4125 = vpop.f32.mrb[0].mxu0
  %v4126 = vadd.f32 %v3248, %v4125
  %v4127 = vpop.f32.mrb[0].mxu0
  %v4128 = vadd.f32 %v3252, %v4127
  %4129 = vmatprep.mubr.f32.mxu0 %v2938
  %4130 = vmatmul.mubr.f32.gmra.mrb[0].mxu0 %v2937
  %v4131 = vpop.f32.mrb[0].mxu0
  %v4132 = vadd.f32 %v3248, %v4131
  %v4133 = vpop.f32.mrb[0].mxu0
  %v4134 = vadd.f32 %v3252, %v4133
  %4135 = vmatprep.mubr.f32.mxu0 %v2940
  %4136 = vmatmul.mubr.f32.gmra.mrb[0].mxu0 %v2939
  %v4137 = vpop.f32.mrb[0].mxu0
  %v4138 = vadd.f32 %v3248, %v4137
  %v4139 = vpop.f32.mrb[0].mxu0
  %v4140 = vadd.f32 %v3252, %v4139
  %4141 = vmatprep.mubr.f32.mxu0 %v2942
  %4142 = vmatmul.mubr.f32.gmra.mrb[0].mxu0 %v2941
  %v4143 = vpop.f32.mrb[0].mxu0
  %v4144 = vadd.f32 %v3248, %v4143
  %v4145 = vpop.f32.mrb[0].mxu0
  %v4146 = vadd.f32 %v3252, %v4145
  %4147 = vmatprep.mubr.f32.mxu0 %v2944
  %4148 = vmatmul.mubr.f32.gmra.mrb[0].mxu0 %v2943
  %v4149 = vpop.f32.mrb[0].mxu0
  %v4150 = vadd.f32 %v3248, %v4149
  %v4151 = vpop.f32.mrb[0].mxu0
  %v4152 = vadd.f32 %v3252, %v4151
  %4153 = vmatprep.mubr.f32.mxu0 %v2946
  %4154 = vmatmul.mubr.f32.gmra.mrb[0].mxu0 %v2945
  %v4155 = vpop.f32.mrb[0].mxu0
  %v4156 = vadd.f32 %v3248, %v4155
  %v4157 = vpop.f32.mrb[0].mxu0
  %v4158 = vadd.f32 %v3252, %v4157
  %4159 = vmatprep.mubr.f32.mxu0 %v2948
  %4160 = vmatmul.mubr.f32.gmra.mrb[0].mxu0 %v2947
  %v4161 = vpop.f32.mrb[0].mxu0
  %v4162 = vadd.f32 %v3248, %v4161
  %v4163 = vpop.f32.mrb[0].mxu0
  %v4164 = vadd.f32 %v3252, %v4163
  %4165 = vmatprep.mubr.f32.mxu0 %v2950
  %4166 = vmatmul.mubr.f32.gmra.mrb[0].mxu0 %v2949
  %v4167 = vpop.f32.mrb[0].mxu0
  %v4168 = vadd.f32 %v3248, %v4167
  %v4169 = vpop.f32.mrb[0].mxu0
  %v4170 = vadd.f32 %v3252, %v4169
  %4171 = vmatprep.mubr.f32.mxu0 %v2952
  %4172 = vmatmul.mubr.f32.gmra.mrb[0].mxu0 %v2951
  %v4173 = vpop.f32.mrb[0].mxu0
  %v4174 = vadd.f32 %v3248, %v4173
  %v4175 = vpop.f32.mrb[0].mxu0
  %v4176 = vadd.f32 %v3252, %v4175
  %4177 = vmatprep.mubr.f32.mxu0 %v2954
  %4178 = vmatmul.mubr.f32.gmra.mrb[0].mxu0 %v2953
  %v4179 = vpop.f32.mrb[0].mxu0
  %v4180 = vadd.f32 %v3248, %v4179
  %v4181 = vpop.f32.mrb[0].mxu0
  %v4182 = vadd.f32 %v3252, %v4181
  %4183 = vmatprep.mubr.f32.mxu0 %v2956
  %4184 = vmatmul.mubr.f32.gmra.mrb[0].mxu0 %v2955
  %v4185 = vpop.f32.mrb[0].mxu0
  %v4186 = vadd.f32 %v3248, %v4185
  %v4187 = vpop.f32.mrb[0].mxu0
  %v4188 = vadd.f32 %v3252, %v4187
  %4189 = vmatprep.mubr.f32.mxu0 %v2958
  %4190 = vmatmul.mubr.f32.gmra.mrb[0].mxu0 %v2957
  %v4191 = vpop.f32.mrb[0].mxu0
  %v4192 = vadd.f32 %v3248, %v4191
  %v4193 = vpop.f32.mrb[0].mxu0
  %v4194 = vadd.f32 %v3252, %v4193
  %4195 = vmatprep.mubr.f32.mxu0 %v2960
  %4196 = vmatmul.mubr.f32.gmra.mrb[0].mxu0 %v2959
  %v4197 = vpop.f32.mrb[0].mxu0
  %v4198 = vadd.f32 %v3248, %v4197
  %v4199 = vpop.f32.mrb[0].mxu0
  %v4200 = vadd.f32 %v3252, %v4199
  %4201 = vmatprep.mubr.f32.mxu0 %v2962
  %4202 = vmatmul.mubr.f32.gmra.mrb[0].mxu0 %v2961
  %v4203 = vpop.f32.mrb[0].mxu0
  %v4204 = vadd.f32 %v3248, %v4203
  %v4205 = vpop.f32.mrb[0].mxu0
  %v4206 = vadd.f32 %v3252, %v4205
  %4207 = vmatprep.mubr.f32.mxu0 %v2964
  %4208 = vmatmul.mubr.f32.gmra.mrb[0].mxu0 %v2963
  %v4209 = vpop.f32.mrb[0].mxu0
  %v4210 = vadd.f32 %v3248, %v4209
  %v4211 = vpop.f32.mrb[0].mxu0
  %v4212 = vadd.f32 %v3252, %v4211
  %4213 = vmatprep.mubr.f32.mxu0 %v2966
  %4214 = vmatmul.mubr.f32.gmra.mrb[0].mxu0 %v2965
  %v4215 = vpop.f32.mrb[0].mxu0
  %v4216 = vadd.f32 %v3248, %v4215
  %v4217 = vpop.f32.mrb[0].mxu0
  %v4218 = vadd.f32 %v3252, %v4217
  %4219 = vmatprep.mubr.f32.mxu0 %v2968
  %4220 = vmatmul.mubr.f32.gmra.mrb[0].mxu0 %v2967
  %v4221 = vpop.f32.mrb[0].mxu0
  %v4222 = vadd.f32 %v3248, %v4221
  %v4223 = vpop.f32.mrb[0].mxu0
  %v4224 = vadd.f32 %v3252, %v4223
  %4225 = vmatprep.mubr.f32.mxu0 %v2970
  %4226 = vmatmul.mubr.f32.gmra.mrb[0].mxu0 %v2969
  %v4227 = vpop.f32.mrb[0].mxu0
  %v4228 = vadd.f32 %v3248, %v4227
  %v4229 = vpop.f32.mrb[0].mxu0
  %v4230 = vadd.f32 %v3252, %v4229
  %4231 = vmatprep.mubr.f32.mxu0 %v2972
  %4232 = vmatmul.mubr.f32.gmra.mrb[0].mxu0 %v2971
  %v4233 = vpop.f32.mrb[0].mxu0
  %v4234 = vadd.f32 %v3248, %v4233
  %v4235 = vpop.f32.mrb[0].mxu0
  %v4236 = vadd.f32 %v3252, %v4235
  %4237 = vmatprep.mubr.f32.mxu0 %v2974
  %4238 = vmatmul.mubr.f32.gmra.mrb[0].mxu0 %v2973
  %v4239 = vpop.f32.mrb[0].mxu0
  %v4240 = vadd.f32 %v3248, %v4239
  %v4241 = vpop.f32.mrb[0].mxu0
  %v4242 = vadd.f32 %v3252, %v4241
  %4243 = vmatprep.mubr.f32.mxu0 %v2976
  %4244 = vmatmul.mubr.f32.gmra.mrb[0].mxu0 %v2975
  %v4245 = vpop.f32.mrb[0].mxu0
  %v4246 = vadd.f32 %v3248, %v4245
  %v4247 = vpop.f32.mrb[0].mxu0
  %v4248 = vadd.f32 %v3252, %v4247
  %4249 = vmatprep.mubr.f32.mxu0 %v2978
  %4250 = vmatmul.mubr.f32.gmra.mrb[0].mxu0 %v2977
  %v4251 = vpop.f32.mrb[0].mxu0
  %v4252 = vadd.f32 %v3248, %v4251
  %v4253 = vpop.f32.mrb[0].mxu0
  %v4254 = vadd.f32 %v3252, %v4253
  %4255 = vmatprep.mubr.f32.mxu0 %v2980
  %4256 = vmatmul.mubr.f32.gmra.mrb[0].mxu0 %v2979
  %v4257 = vpop.f32.mrb[0].mxu0
  %v4258 = vadd.f32 %v3248, %v4257
  %v4259 = vpop.f32.mrb[0].mxu0
  %v4260 = vadd.f32 %v3252, %v4259
  %4261 = vmatprep.mubr.f32.mxu0 %v2982
  %4262 = vmatmul.mubr.f32.gmra.mrb[0].mxu0 %v2981
  %v4263 = vpop.f32.mrb[0].mxu0
  %v4264 = vadd.f32 %v3248, %v4263
  %v4265 = vpop.f32.mrb[0].mxu0
  %v4266 = vadd.f32 %v3252, %v4265
  %4267 = vmatprep.mubr.f32.mxu0 %v2984
  %4268 = vmatmul.mubr.f32.gmra.mrb[0].mxu0 %v2983
  %v4269 = vpop.f32.mrb[0].mxu0
  %v4270 = vadd.f32 %v3248, %v4269
  %v4271 = vpop.f32.mrb[0].mxu0
  %v4272 = vadd.f32 %v3252, %v4271
  %4273 = vmatprep.mubr.f32.mxu0 %v2986
  %4274 = vmatmul.mubr.f32.gmra.mrb[0].mxu0 %v2985
  %v4275 = vpop.f32.mrb[0].mxu0
  %v4276 = vadd.f32 %v3248, %v4275
  %v4277 = vpop.f32.mrb[0].mxu0
  %v4278 = vadd.f32 %v3252, %v4277
  %4279 = vmatprep.mubr.f32.mxu0 %v2988
  %4280 = vmatmul.mubr.f32.gmra.mrb[0].mxu0 %v2987
  %v4281 = vpop.f32.mrb[0].mxu0
  %v4282 = vadd.f32 %v3248, %v4281
  %v4283 = vpop.f32.mrb[0].mxu0
  %v4284 = vadd.f32 %v3252, %v4283
  %4285 = vmatprep.mubr.f32.mxu0 %v2990
  %4286 = vmatmul.mubr.f32.gmra.mrb[0].mxu0 %v2989
  %v4287 = vpop.f32.mrb[0].mxu0
  %v4288 = vadd.f32 %v3248, %v4287
  %v4289 = vpop.f32.mrb[0].mxu0
  %v4290 = vadd.f32 %v3252, %v4289
  %4291 = vmatprep.mubr.f32.mxu0 %v2992
  %4292 = vmatmul.mubr.f32.gmra.mrb[0].mxu0 %v2991
  %v4293 = vpop.f32.mrb[0].mxu0
  %v4294 = vadd.f32 %v3248, %v4293
  %v4295 = vpop.f32.mrb[0].mxu0
  %v4296 = vadd.f32 %v3252, %v4295
  %4297 = vmatprep.mubr.f32.mxu0 %v2994
  %4298 = vmatmul.mubr.f32.gmra.mrb[0].mxu0 %v2993
  %v4299 = vpop.f32.mrb[0].mxu0
  %v4300 = vadd.f32 %v3248, %v4299
  %v4301 = vpop.f32.mrb[0].mxu0
  %v4302 = vadd.f32 %v3252, %v4301
  %4303 = vmatprep.mubr.f32.mxu0 %v2996
  %4304 = vmatmul.mubr.f32.gmra.mrb[0].mxu0 %v2995
  %v4305 = vpop.f32.mrb[0].mxu0
  %v4306 = vadd.f32 %v3248, %v4305
  %v4307 = vpop.f32.mrb[0].mxu0
  %v4308 = vadd.f32 %v3252, %v4307
  %4309 = vmatprep.mubr.f32.mxu0 %v2998
  %4310 = vmatmul.mubr.f32.gmra.mrb[0].mxu0 %v2997
  %v4311 = vpop.f32.mrb[0].mxu0
  %v4312 = vadd.f32 %v3248, %v4311
  %v4313 = vpop.f32.mrb[0].mxu0
  %v4314 = vadd.f32 %v3252, %v4313
  %4315 = vmatprep.mubr.f32.mxu0 %v3000
  %4316 = vmatmul.mubr.f32.gmra.mrb[0].mxu0 %v2999
  %v4317 = vpop.f32.mrb[0].mxu0
  %v4318 = vadd.f32 %v3248, %v4317
  %v4319 = vpop.f32.mrb[0].mxu0
  %v4320 = vadd.f32 %v3252, %v4319
  %4321 = vmatprep.mubr.f32.mxu0 %v3002
  %4322 = vmatmul.mubr.f32.gmra.mrb[0].mxu0 %v3001
  %v4323 = vpop.f32.mrb[0].mxu0
  %v4324 = vadd.f32 %v3248, %v4323
  %v4325 = vpop.f32.mrb[0].mxu0
  %v4326 = vadd.f32 %v3252, %v4325
  %4327 = vmatprep.mubr.f32.mxu0 %v3004
  %4328 = vmatmul.mubr.f32.gmra.mrb[0].mxu0 %v3003
  %v4329 = vpop.f32.mrb[0].mxu0
  %v4330 = vadd.f32 %v3248, %v4329
  %v4331 = vpop.f32.mrb[0].mxu0
  %v4332 = vadd.f32 %v3252, %v4331
  %4333 = vmatprep.mubr.f32.mxu0 %v3006
  %4334 = vmatmul.mubr.f32.gmra.mrb[0].mxu0 %v3005
  %v4335 = vpop.f32.mrb[0].mxu0
  %v4336 = vadd.f32 %v3248, %v4335
  %v4337 = vpop.f32.mrb[0].mxu0
  %v4338 = vadd.f32 %v3252, %v4337
  %4339 = vmatprep.mubr.f32.mxu0 %v3008
  %4340 = vmatmul.mubr.f32.gmra.mrb[0].mxu0 %v3007
  %v4341 = vpop.f32.mrb[0].mxu0
  %v4342 = vadd.f32 %v3248, %v4341
  %v4343 = vpop.f32.mrb[0].mxu0
  %v4344 = vadd.f32 %v3252, %v4343
  %4345 = vmatprep.mubr.f32.mxu0 %v3010
  %4346 = vmatmul.mubr.f32.gmra.mrb[0].mxu0 %v3009
  %v4347 = vpop.f32.mrb[0].mxu0
  %v4348 = vadd.f32 %v3248, %v4347
  %v4349 = vpop.f32.mrb[0].mxu0
  %v4350 = vadd.f32 %v3252, %v4349
  %4351 = vmatprep.mubr.f32.mxu0 %v3012
  %4352 = vmatmul.mubr.f32.gmra.mrb[0].mxu0 %v3011
  %v4353 = vpop.f32.mrb[0].mxu0
  %v4354 = vadd.f32 %v3248, %v4353
  %v4355 = vpop.f32.mrb[0].mxu0
  %v4356 = vadd.f32 %v3252, %v4355
  %4357 = vmatprep.mubr.f32.mxu0 %v3014
  %4358 = vmatmul.mubr.f32.gmra.mrb[0].mxu0 %v3013
  %v4359 = vpop.f32.mrb[0].mxu0
  %v4360 = vadd.f32 %v3248, %v4359
  %v4361 = vpop.f32.mrb[0].mxu0
  %v4362 = vadd.f32 %v3252, %v4361
  %4363 = vmatprep.mubr.f32.mxu0 %v3016
  %4364 = vmatmul.mubr.f32.gmra.mrb[0].mxu0 %v3015
  %v4365 = vpop.f32.mrb[0].mxu0
  %v4366 = vadd.f32 %v3248, %v4365
  %v4367 = vpop.f32.mrb[0].mxu0
  %v4368 = vadd.f32 %v3252, %v4367
  %4369 = vmatprep.mubr.f32.mxu0 %v3018
  %4370 = vmatmul.mubr.f32.gmra.mrb[0].mxu0 %v3017
  %v4371 = vpop.f32.mrb[0].mxu0
  %v4372 = vadd.f32 %v3248, %v4371
  %v4373 = vpop.f32.mrb[0].mxu0
  %v4374 = vadd.f32 %v3252, %v4373
  %4375 = vmatprep.mubr.f32.mxu0 %v3020
  %4376 = vmatmul.mubr.f32.gmra.mrb[0].mxu0 %v3019
  %v4377 = vpop.f32.mrb[0].mxu0
  %v4378 = vadd.f32 %v3248, %v4377
  %v4379 = vpop.f32.mrb[0].mxu0
  %v4380 = vadd.f32 %v3252, %v4379
  %4381 = vmatprep.mubr.f32.mxu0 %v3022
  %4382 = vmatmul.mubr.f32.gmra.mrb[0].mxu0 %v3021
  %v4383 = vpop.f32.mrb[0].mxu0
  %v4384 = vadd.f32 %v3248, %v4383
  %v4385 = vpop.f32.mrb[0].mxu0
  %v4386 = vadd.f32 %v3252, %v4385
  %4387 = vmatprep.mubr.f32.mxu0 %v3024
  %4388 = vmatmul.mubr.f32.gmra.mrb[0].mxu0 %v3023
  %v4389 = vpop.f32.mrb[0].mxu0
  %v4390 = vadd.f32 %v3248, %v4389
  %v4391 = vpop.f32.mrb[0].mxu0
  %v4392 = vadd.f32 %v3252, %v4391
  %4393 = vmatprep.mubr.f32.mxu0 %v3026
  %4394 = vmatmul.mubr.f32.gmra.mrb[0].mxu0 %v3025
  %v4395 = vpop.f32.mrb[0].mxu0
  %v4396 = vadd.f32 %v3248, %v4395
  %v4397 = vpop.f32.mrb[0].mxu0
  %v4398 = vadd.f32 %v3252, %v4397
  %4399 = vmatprep.mubr.f32.mxu0 %v3028
  %4400 = vmatmul.mubr.f32.gmra.mrb[0].mxu0 %v3027
  %v4401 = vpop.f32.mrb[0].mxu0
  %v4402 = vadd.f32 %v3248, %v4401
  %v4403 = vpop.f32.mrb[0].mxu0
  %v4404 = vadd.f32 %v3252, %v4403
  %4405 = vmatprep.mubr.f32.mxu0 %v3030
  %4406 = vmatmul.mubr.f32.gmra.mrb[0].mxu0 %v3029
  %v4407 = vpop.f32.mrb[0].mxu0
  %v4408 = vadd.f32 %v3248, %v4407
  %v4409 = vpop.f32.mrb[0].mxu0
  %v4410 = vadd.f32 %v3252, %v4409
  %4411 = vmatprep.mubr.f32.mxu0 %v3032
  %4412 = vmatmul.mubr.f32.gmra.mrb[0].mxu0 %v3031
  %v4413 = vpop.f32.mrb[0].mxu0
  %v4414 = vadd.f32 %v3248, %v4413
  %v4415 = vpop.f32.mrb[0].mxu0
  %v4416 = vadd.f32 %v3252, %v4415
  %4417 = vmatprep.mubr.f32.mxu0 %v3034
  %4418 = vmatmul.mubr.f32.gmra.mrb[0].mxu0 %v3033
  %v4419 = vpop.f32.mrb[0].mxu0
  %v4420 = vadd.f32 %v3248, %v4419
  %v4421 = vpop.f32.mrb[0].mxu0
  %v4422 = vadd.f32 %v3252, %v4421
  %4423 = vmatprep.mubr.f32.mxu0 %v3036
  %4424 = vmatmul.mubr.f32.gmra.mrb[0].mxu0 %v3035
  %v4425 = vpop.f32.mrb[0].mxu0
  %v4426 = vadd.f32 %v3248, %v4425
  %v4427 = vpop.f32.mrb[0].mxu0
  %v4428 = vadd.f32 %v3252, %v4427
  %4429 = vmatprep.mubr.f32.mxu0 %v3038
  %4430 = vmatmul.mubr.f32.gmra.mrb[0].mxu0 %v3037
  %v4431 = vpop.f32.mrb[0].mxu0
  %v4432 = vadd.f32 %v3248, %v4431
  %v4433 = vpop.f32.mrb[0].mxu0
  %v4434 = vadd.f32 %v3252, %v4433
  %4435 = vmatprep.mubr.f32.mxu0 %v3040
  %4436 = vmatmul.mubr.f32.gmra.mrb[0].mxu0 %v3039
  %v4437 = vpop.f32.mrb[0].mxu0
  %v4438 = vadd.f32 %v3248, %v4437
  %v4439 = vpop.f32.mrb[0].mxu0
  %v4440 = vadd.f32 %v3252, %v4439
  %4441 = vmatprep.mubr.f32.mxu0 %v3042
  %4442 = vmatmul.mubr.f32.gmra.mrb[0].mxu0 %v3041
  %v4443 = vpop.f32.mrb[0].mxu0
  %v4444 = vadd.f32 %v3248, %v4443
  %v4445 = vpop.f32.mrb[0].mxu0
  %v4446 = vadd.f32 %v3252, %v4445
  %4447 = vmatprep.mubr.f32.mxu0 %v3044
  %4448 = vmatmul.mubr.f32.gmra.mrb[0].mxu0 %v3043
  %v4449 = vpop.f32.mrb[0].mxu0
  %v4450 = vadd.f32 %v3248, %v4449
  %v4451 = vpop.f32.mrb[0].mxu0
  %v4452 = vadd.f32 %v3252, %v4451
  %4453 = vmatprep.mubr.f32.mxu0 %v3046
  %4454 = vmatmul.mubr.f32.gmra.mrb[0].mxu0 %v3045
  %v4455 = vpop.f32.mrb[0].mxu0
  %v4456 = vadd.f32 %v3248, %v4455
  %v4457 = vpop.f32.mrb[0].mxu0
  %v4458 = vadd.f32 %v3252, %v4457
  %4459 = vmatprep.mubr.f32.mxu0 %v3048
  %4460 = vmatmul.mubr.f32.gmra.mrb[0].mxu0 %v3047
  %v4461 = vpop.f32.mrb[0].mxu0
  %v4462 = vadd.f32 %v3248, %v4461
  %v4463 = vpop.f32.mrb[0].mxu0
  %v4464 = vadd.f32 %v3252, %v4463
  %4465 = vmatprep.mubr.f32.mxu0 %v3050
  %4466 = vmatmul.mubr.f32.gmra.mrb[0].mxu0 %v3049
  %v4467 = vpop.f32.mrb[0].mxu0
  %v4468 = vadd.f32 %v3248, %v4467
  %v4469 = vpop.f32.mrb[0].mxu0
  %v4470 = vadd.f32 %v3252, %v4469
  %4471 = vmatprep.mubr.f32.mxu0 %v3052
  %4472 = vmatmul.mubr.f32.gmra.mrb[0].mxu0 %v3051
  %v4473 = vpop.f32.mrb[0].mxu0
  %v4474 = vadd.f32 %v3248, %v4473
  %v4475 = vpop.f32.mrb[0].mxu0
  %v4476 = vadd.f32 %v3252, %v4475
  %4477 = vmatprep.mubr.f32.mxu0 %v3054
  %4478 = vmatmul.mubr.f32.gmra.mrb[0].mxu0 %v3053
  %v4479 = vpop.f32.mrb[0].mxu0
  %v4480 = vadd.f32 %v3248, %v4479
  %v4481 = vpop.f32.mrb[0].mxu0
  %v4482 = vadd.f32 %v3252, %v4481
  %4483 = vmatprep.mubr.f32.mxu0 %v3056
  %4484 = vmatmul.mubr.f32.gmra.mrb[0].mxu0 %v3055
  %v4485 = vpop.f32.mrb[0].mxu0
  %v4486 = vadd.f32 %v3248, %v4485
  %v4487 = vpop.f32.mrb[0].mxu0
  %v4488 = vadd.f32 %v3252, %v4487
  %4489 = vmatprep.mubr.f32.mxu0 %v3058
  %4490 = vmatmul.mubr.f32.gmra.mrb[0].mxu0 %v3057
  %v4491 = vpop.f32.mrb[0].mxu0
  %v4492 = vadd.f32 %v3248, %v4491
  %v4493 = vpop.f32.mrb[0].mxu0
  %v4494 = vadd.f32 %v3252, %v4493
  %4495 = vmatprep.mubr.f32.mxu0 %v3060
  %4496 = vmatmul.mubr.f32.gmra.mrb[0].mxu0 %v3059
  %v4497 = vpop.f32.mrb[0].mxu0
  %v4498 = vadd.f32 %v3248, %v4497
  %v4499 = vpop.f32.mrb[0].mxu0
  %v4500 = vadd.f32 %v3252, %v4499
  %4501 = vmatprep.mubr.f32.mxu0 %v3062
  %4502 = vmatmul.mubr.f32.gmra.mrb[0].mxu0 %v3061
  %v4503 = vpop.f32.mrb[0].mxu0
  %v4504 = vadd.f32 %v3248, %v4503
  %v4505 = vpop.f32.mrb[0].mxu0
  %v4506 = vadd.f32 %v3252, %v4505
  %4507 = vmatprep.mubr.f32.mxu0 %v3064
  %4508 = vmatmul.mubr.f32.gmra.mrb[0].mxu0 %v3063
  %v4509 = vpop.f32.mrb[0].mxu0
  %v4510 = vadd.f32 %v3248, %v4509
  %v4511 = vpop.f32.mrb[0].mxu0
  %v4512 = vadd.f32 %v3252, %v4511
  %4513 = vmatprep.mubr.f32.mxu0 %v3066
  %4514 = vmatmul.mubr.f32.gmra.mrb[0].mxu0 %v3065
  %v4515 = vpop.f32.mrb[0].mxu0
  %v4516 = vadd.f32 %v3248, %v4515
  %v4517 = vpop.f32.mrb[0].mxu0
  %v4518 = vadd.f32 %v3252, %v4517
  %4519 = vmatprep.mubr.f32.mxu0 %v3068
  %4520 = vmatmul.mubr.f32.gmra.mrb[0].mxu0 %v3067
  %v4521 = vpop.f32.mrb[0].mxu0
  %v4522 = vadd.f32 %v3248, %v4521
  %v4523 = vpop.f32.mrb[0].mxu0
  %v4524 = vadd.f32 %v3252, %v4523
  %4525 = vmatprep.mubr.f32.mxu0 %v3070
  %4526 = vmatmul.mubr.f32.gmra.mrb[0].mxu0 %v3069
  %v4527 = vpop.f32.mrb[0].mxu0
  %v4528 = vadd.f32 %v3248, %v4527
  %v4529 = vpop.f32.mrb[0].mxu0
  %v4530 = vadd.f32 %v3252, %v4529
  %4531 = vmatprep.mubr.f32.mxu0 %v3072
  %4532 = vmatmul.mubr.f32.gmra.mrb[0].mxu0 %v3071
  %v4533 = vpop.f32.mrb[0].mxu0
  %v4534 = vadd.f32 %v3248, %v4533
  %v4535 = vpop.f32.mrb[0].mxu0
  %v4536 = vadd.f32 %v3252, %v4535
  %4537 = vmatprep.mubr.f32.mxu0 %v3074
  %4538 = vmatmul.mubr.f32.gmra.mrb[0].mxu0 %v3073
  %v4539 = vpop.f32.mrb[0].mxu0
  %v4540 = vadd.f32 %v3248, %v4539
  %v4541 = vpop.f32.mrb[0].mxu0
  %v4542 = vadd.f32 %v3252, %v4541
  %4543 = vmatprep.mubr.f32.mxu0 %v3076
  %4544 = vmatmul.mubr.f32.gmra.mrb[0].mxu0 %v3075
  %v4545 = vpop.f32.mrb[0].mxu0
  %v4546 = vadd.f32 %v3248, %v4545
  %v4547 = vpop.f32.mrb[0].mxu0
  %v4548 = vadd.f32 %v3252, %v4547
  %4549 = vmatprep.mubr.f32.mxu0 %v3078
  %4550 = vmatmul.mubr.f32.gmra.mrb[0].mxu0 %v3077
  %v4551 = vpop.f32.mrb[0].mxu0
  %v4552 = vadd.f32 %v3248, %v4551
  %v4553 = vpop.f32.mrb[0].mxu0
  %v4554 = vadd.f32 %v3252, %v4553
  %4555 = vmatprep.mubr.f32.mxu0 %v3080
  %4556 = vmatmul.mubr.f32.gmra.mrb[0].mxu0 %v3079
  %v4557 = vpop.f32.mrb[0].mxu0
  %v4558 = vadd.f32 %v3248, %v4557
  %v4559 = vpop.f32.mrb[0].mxu0
  %v4560 = vadd.f32 %v3252, %v4559
  %4561 = vmatprep.mubr.f32.mxu0 %v3082
  %4562 = vmatmul.mubr.f32.gmra.mrb[0].mxu0 %v3081
  %v4563 = vpop.f32.mrb[0].mxu0
  %v4564 = vadd.f32 %v3248, %v4563
  %v4565 = vpop.f32.mrb[0].mxu0
  %v4566 = vadd.f32 %v3252, %v4565
  %4567 = vmatprep.mubr.f32.mxu0 %v3084
  %4568 = vmatmul.mubr.f32.gmra.mrb[0].mxu0 %v3083
  %v4569 = vpop.f32.mrb[0].mxu0
  %v4570 = vadd.f32 %v3248, %v4569
  %v4571 = vpop.f32.mrb[0].mxu0
  %v4572 = vadd.f32 %v3252, %v4571
  %4573 = vmatprep.mubr.f32.mxu0 %v3086
  %4574 = vmatmul.mubr.f32.gmra.mrb[0].mxu0 %v3085
  %v4575 = vpop.f32.mrb[0].mxu0
  %v4576 = vadd.f32 %v3248, %v4575
  %v4577 = vpop.f32.mrb[0].mxu0
  %v4578 = vadd.f32 %v3252, %v4577
  %4579 = vmatprep.mubr.f32.mxu0 %v3088
  %4580 = vmatmul.mubr.f32.gmra.mrb[0].mxu0 %v3087
  %v4581 = vpop.f32.mrb[0].mxu0
  %v4582 = vadd.f32 %v3248, %v4581
  %v4583 = vpop.f32.mrb[0].mxu0
  %v4584 = vadd.f32 %v3252, %v4583
  %4585 = vmatprep.mubr.f32.mxu0 %v3090
  %4586 = vmatmul.mubr.f32.gmra.mrb[0].mxu0 %v3089
  %v4587 = vpop.f32.mrb[0].mxu0
  %v4588 = vadd.f32 %v3248, %v4587
  %v4589 = vpop.f32.mrb[0].mxu0
  %v4590 = vadd.f32 %v3252, %v4589
  %4591 = vmatprep.mubr.f32.mxu0 %v3092
  %4592 = vmatmul.mubr.f32.gmra.mrb[0].mxu0 %v3091
  %v4593 = vpop.f32.mrb[0].mxu0
  %v4594 = vadd.f32 %v3248, %v4593
  %v4595 = vpop.f32.mrb[0].mxu0
  %v4596 = vadd.f32 %v3252, %v4595
  %4597 = vmatprep.mubr.f32.mxu0 %v3094
  %4598 = vmatmul.mubr.f32.gmra.mrb[0].mxu0 %v3093
  %v4599 = vpop.f32.mrb[0].mxu0
  %v4600 = vadd.f32 %v3248, %v4599
  %v4601 = vpop.f32.mrb[0].mxu0
  %v4602 = vadd.f32 %v3252, %v4601
  %4603 = vmatprep.mubr.f32.mxu0 %v3096
  %4604 = vmatmul.mubr.f32.gmra.mrb[0].mxu0 %v3095
  %v4605 = vpop.f32.mrb[0].mxu0
  %v4606 = vadd.f32 %v3248, %v4605
  %v4607 = vpop.f32.mrb[0].mxu0
  %v4608 = vadd.f32 %v3252, %v4607
  %4609 = vmatprep.mubr.f32.mxu0 %v3098
  %4610 = vmatmul.mubr.f32.gmra.mrb[0].mxu0 %v3097
  %v4611 = vpop.f32.mrb[0].mxu0
  %v4612 = vadd.f32 %v3248, %v4611
  %v4613 = vpop.f32.mrb[0].mxu0
  %v4614 = vadd.f32 %v3252, %v4613
  %4615 = vmatprep.mubr.f32.mxu0 %v3100
  %4616 = vmatmul.mubr.f32.gmra.mrb[0].mxu0 %v3099
  %v4617 = vpop.f32.mrb[0].mxu0
  %v4618 = vadd.f32 %v3248, %v4617
  %v4619 = vpop.f32.mrb[0].mxu0
  %v4620 = vadd.f32 %v3252, %v4619
  %4621 = vmatprep.mubr.f32.mxu0 %v3102
  %4622 = vmatmul.mubr.f32.gmra.mrb[0].mxu0 %v3101
  %v4623 = vpop.f32.mrb[0].mxu0
  %v4624 = vadd.f32 %v3248, %v4623
  %v4625 = vpop.f32.mrb[0].mxu0
  %v4626 = vadd.f32 %v3252, %v4625
  %4627 = vmatprep.mubr.f32.mxu0 %v3104
  %4628 = vmatmul.mubr.f32.gmra.mrb[0].mxu0 %v3103
  %v4629 = vpop.f32.mrb[0].mxu0
  %v4630 = vadd.f32 %v3248, %v4629
  %v4631 = vpop.f32.mrb[0].mxu0
  %v4632 = vadd.f32 %v3252, %v4631
  %4633 = vmatprep.mubr.f32.mxu0 %v3106
  %4634 = vmatmul.mubr.f32.gmra.mrb[0].mxu0 %v3105
  %v4635 = vpop.f32.mrb[0].mxu0
  %v4636 = vadd.f32 %v3248, %v4635
  %v4637 = vpop.f32.mrb[0].mxu0
  %v4638 = vadd.f32 %v3252, %v4637
  %4639 = vmatprep.mubr.f32.mxu0 %v3108
  %4640 = vmatmul.mubr.f32.gmra.mrb[0].mxu0 %v3107
  %v4641 = vpop.f32.mrb[0].mxu0
  %v4642 = vadd.f32 %v3248, %v4641
  %v4643 = vpop.f32.mrb[0].mxu0
  %v4644 = vadd.f32 %v3252, %v4643
  %4645 = vmatprep.mubr.f32.mxu0 %v3110
  %4646 = vmatmul.mubr.f32.gmra.mrb[0].mxu0 %v3109
  %v4647 = vpop.f32.mrb[0].mxu0
  %v4648 = vadd.f32 %v3248, %v4647
  %v4649 = vpop.f32.mrb[0].mxu0
  %v4650 = vadd.f32 %v3252, %v4649
  %4651 = vmatprep.mubr.f32.mxu0 %v3112
  %4652 = vmatmul.mubr.f32.gmra.mrb[0].mxu0 %v3111
  %v4653 = vpop.f32.mrb[0].mxu0
  %v4654 = vadd.f32 %v3248, %v4653
  %v4655 = vpop.f32.mrb[0].mxu0
  %v4656 = vadd.f32 %v3252, %v4655
  %4657 = vmatprep.mubr.f32.mxu0 %v3114
  %4658 = vmatmul.mubr.f32.gmra.mrb[0].mxu0 %v3113
  %v4659 = vpop.f32.mrb[0].mxu0
  %v4660 = vadd.f32 %v3248, %v4659
  %v4661 = vpop.f32.mrb[0].mxu0
  %v4662 = vadd.f32 %v3252, %v4661
  %4663 = vmatprep.mubr.f32.mxu0 %v3116
  %4664 = vmatmul.mubr.f32.gmra.mrb[0].mxu0 %v3115
  %v4665 = vpop.f32.mrb[0].mxu0
  %v4666 = vadd.f32 %v3248, %v4665
  %v4667 = vpop.f32.mrb[0].mxu0
  %v4668 = vadd.f32 %v3252, %v4667
  %4669 = vmatprep.mubr.f32.mxu0 %v3118
  %4670 = vmatmul.mubr.f32.gmra.mrb[0].mxu0 %v3117
  %v4671 = vpop.f32.mrb[0].mxu0
  %v4672 = vadd.f32 %v3248, %v4671
  %v4673 = vpop.f32.mrb[0].mxu0
  %v4674 = vadd.f32 %v3252, %v4673
  %4675 = vmatprep.mubr.f32.mxu0 %v3120
  %4676 = vmatmul.mubr.f32.gmra.mrb[0].mxu0 %v3119
  %v4677 = vpop.f32.mrb[0].mxu0
  %v4678 = vadd.f32 %v3248, %v4677
  %v4679 = vpop.f32.mrb[0].mxu0
  %v4680 = vadd.f32 %v3252, %v4679
  %4681 = vmatprep.mubr.f32.mxu0 %v3122
  %4682 = vmatmul.mubr.f32.gmra.mrb[0].mxu0 %v3121
  %v4683 = vpop.f32.mrb[0].mxu0
  %v4684 = vadd.f32 %v3248, %v4683
  %v4685 = vpop.f32.mrb[0].mxu0
  %v4686 = vadd.f32 %v3252, %v4685
  %4687 = vmatprep.mubr.f32.mxu0 %v3124
  %4688 = vmatmul.mubr.f32.gmra.mrb[0].mxu0 %v3123
  %v4689 = vpop.f32.mrb[0].mxu0
  %v4690 = vadd.f32 %v3248, %v4689
  %v4691 = vpop.f32.mrb[0].mxu0
  %v4692 = vadd.f32 %v3252, %v4691
  %4693 = vmatprep.mubr.f32.mxu0 %v3126
  %4694 = vmatmul.mubr.f32.gmra.mrb[0].mxu0 %v3125
  %v4695 = vpop.f32.mrb[0].mxu0
  %v4696 = vadd.f32 %v3248, %v4695
  %v4697 = vpop.f32.mrb[0].mxu0
  %v4698 = vadd.f32 %v3252, %v4697
  %4699 = vmatprep.mubr.f32.mxu0 %v3128
  %4700 = vmatmul.mubr.f32.gmra.mrb[0].mxu0 %v3127
  %v4701 = vpop.f32.mrb[0].mxu0
  %v4702 = vadd.f32 %v3248, %v4701
  %v4703 = vpop.f32.mrb[0].mxu0
  %v4704 = vadd.f32 %v3252, %v4703
  %4705 = vmatprep.mubr.f32.mxu0 %v3130
  %4706 = vmatmul.mubr.f32.gmra.mrb[0].mxu0 %v3129
  %v4707 = vpop.f32.mrb[0].mxu0
  %v4708 = vadd.f32 %v3248, %v4707
  %v4709 = vpop.f32.mrb[0].mxu0
  %v4710 = vadd.f32 %v3252, %v4709
  %4711 = vmatprep.mubr.f32.mxu0 %v3132
  %4712 = vmatmul.mubr.f32.gmra.mrb[0].mxu0 %v3131
  %v4713 = vpop.f32.mrb[0].mxu0
  %v4714 = vadd.f32 %v3248, %v4713
  %v4715 = vpop.f32.mrb[0].mxu0
  %v4716 = vadd.f32 %v3252, %v4715
  %4717 = vmatprep.mubr.f32.mxu0 %v3134
  %4718 = vmatmul.mubr.f32.gmra.mrb[0].mxu0 %v3133
  %v4719 = vpop.f32.mrb[0].mxu0
  %v4720 = vadd.f32 %v3248, %v4719
  %v4721 = vpop.f32.mrb[0].mxu0
  %v4722 = vadd.f32 %v3252, %v4721
  %4723 = vmatprep.mubr.f32.mxu0 %v3136
  %4724 = vmatmul.mubr.f32.gmra.mrb[0].mxu0 %v3135
  %v4725 = vpop.f32.mrb[0].mxu0
  %v4726 = vadd.f32 %v3248, %v4725
  %v4727 = vpop.f32.mrb[0].mxu0
  %v4728 = vadd.f32 %v3252, %v4727
  %4729 = vmatprep.mubr.f32.mxu0 %v3138
  %4730 = vmatmul.mubr.f32.gmra.mrb[0].mxu0 %v3137
  %v4731 = vpop.f32.mrb[0].mxu0
  %v4732 = vadd.f32 %v3248, %v4731
  %v4733 = vpop.f32.mrb[0].mxu0
  %v4734 = vadd.f32 %v3252, %v4733
  %4735 = vmatprep.mubr.f32.mxu0 %v3140
  %4736 = vmatmul.mubr.f32.gmra.mrb[0].mxu0 %v3139
  %v4737 = vpop.f32.mrb[0].mxu0
  %v4738 = vadd.f32 %v3248, %v4737
  %v4739 = vpop.f32.mrb[0].mxu0
  %v4740 = vadd.f32 %v3252, %v4739
  %4741 = vmatprep.mubr.f32.mxu0 %v3142
  %4742 = vmatmul.mubr.f32.gmra.mrb[0].mxu0 %v3141
  %v4743 = vpop.f32.mrb[0].mxu0
  %v4744 = vadd.f32 %v3248, %v4743
  %v4745 = vpop.f32.mrb[0].mxu0
  %v4746 = vadd.f32 %v3252, %v4745
  %4747 = vmatprep.mubr.f32.mxu0 %v3144
  %4748 = vmatmul.mubr.f32.gmra.mrb[0].mxu0 %v3143
  %v4749 = vpop.f32.mrb[0].mxu0
  %v4750 = vadd.f32 %v3248, %v4749
  %v4751 = vpop.f32.mrb[0].mxu0
  %v4752 = vadd.f32 %v3252, %v4751
  %4753 = vmatprep.mubr.f32.mxu0 %v3146
  %4754 = vmatmul.mubr.f32.gmra.mrb[0].mxu0 %v3145
  %v4755 = vpop.f32.mrb[0].mxu0
  %v4756 = vadd.f32 %v3248, %v4755
  %v4757 = vpop.f32.mrb[0].mxu0
  %v4758 = vadd.f32 %v3252, %v4757
  %4759 = vmatprep.mubr.f32.mxu0 %v3148
  %4760 = vmatmul.mubr.f32.gmra.mrb[0].mxu0 %v3147
  %v4761 = vpop.f32.mrb[0].mxu0
  %v4762 = vadd.f32 %v3248, %v4761
  %v4763 = vpop.f32.mrb[0].mxu0
  %v4764 = vadd.f32 %v3252, %v4763
  %4765 = vmatprep.mubr.f32.mxu0 %v3150
  %4766 = vmatmul.mubr.f32.gmra.mrb[0].mxu0 %v3149
  %v4767 = vpop.f32.mrb[0].mxu0
  %v4768 = vadd.f32 %v3248, %v4767
  %v4769 = vpop.f32.mrb[0].mxu0
  %v4770 = vadd.f32 %v3252, %v4769
  %4771 = vmatprep.mubr.f32.mxu0 %v3152
  %4772 = vmatmul.mubr.f32.gmra.mrb[0].mxu0 %v3151
  %v4773 = vpop.f32.mrb[0].mxu0
  %v4774 = vadd.f32 %v3248, %v4773
  %v4775 = vpop.f32.mrb[0].mxu0
  %v4776 = vadd.f32 %v3252, %v4775
  %4777 = vmatprep.mubr.f32.mxu0 %v3154
  %4778 = vmatmul.mubr.f32.gmra.mrb[0].mxu0 %v3153
  %v4779 = vpop.f32.mrb[0].mxu0
  %v4780 = vadd.f32 %v3248, %v4779
  %v4781 = vpop.f32.mrb[0].mxu0
  %v4782 = vadd.f32 %v3252, %v4781
  %4783 = vmatprep.mubr.f32.mxu0 %v3156
  %4784 = vmatmul.mubr.f32.gmra.mrb[0].mxu0 %v3155
  %v4785 = vpop.f32.mrb[0].mxu0
  %v4786 = vadd.f32 %v3248, %v4785
  %v4787 = vpop.f32.mrb[0].mxu0
  %v4788 = vadd.f32 %v3252, %v4787
  %4789 = vmatprep.mubr.f32.mxu0 %v3158
  %4790 = vmatmul.mubr.f32.gmra.mrb[0].mxu0 %v3157
  %v4791 = vpop.f32.mrb[0].mxu0
  %v4792 = vadd.f32 %v3248, %v4791
  %v4793 = vpop.f32.mrb[0].mxu0
  %v4794 = vadd.f32 %v3252, %v4793
  %4795 = vmatprep.mubr.f32.mxu0 %v3160
  %4796 = vmatmul.mubr.f32.gmra.mrb[0].mxu0 %v3159
  %v4797 = vpop.f32.mrb[0].mxu0
  %v4798 = vadd.f32 %v3248, %v4797
  %v4799 = vpop.f32.mrb[0].mxu0
  %v4800 = vadd.f32 %v3252, %v4799
  %4801 = vmatprep.mubr.f32.mxu0 %v3162
  %4802 = vmatmul.mubr.f32.gmra.mrb[0].mxu0 %v3161
  %v4803 = vpop.f32.mrb[0].mxu0
  %v4804 = vadd.f32 %v3248, %v4803
  %v4805 = vpop.f32.mrb[0].mxu0
  %v4806 = vadd.f32 %v3252, %v4805
  %4807 = vmatprep.mubr.f32.mxu0 %v3164
  %4808 = vmatmul.mubr.f32.gmra.mrb[0].mxu0 %v3163
  %v4809 = vpop.f32.mrb[0].mxu0
  %v4810 = vadd.f32 %v3248, %v4809
  %v4811 = vpop.f32.mrb[0].mxu0
  %v4812 = vadd.f32 %v3252, %v4811
  %4813 = vmatprep.mubr.f32.mxu0 %v3166
  %4814 = vmatmul.mubr.f32.gmra.mrb[0].mxu0 %v3165
  %v4815 = vpop.f32.mrb[0].mxu0
  %v4816 = vadd.f32 %v3248, %v4815
  %v4817 = vpop.f32.mrb[0].mxu0
  %v4818 = vadd.f32 %v3252, %v4817
  %4819 = vmatprep.mubr.f32.mxu0 %v3168
  %4820 = vmatmul.mubr.f32.gmra.mrb[0].mxu0 %v3167
  %v4821 = vpop.f32.mrb[0].mxu0
  %v4822 = vadd.f32 %v3248, %v4821
  %v4823 = vpop.f32.mrb[0].mxu0
  %v4824 = vadd.f32 %v3252, %v4823
  %4825 = vmatprep.mubr.f32.mxu0 %v3170
  %4826 = vmatmul.mubr.f32.gmra.mrb[0].mxu0 %v3169
  %v4827 = vpop.f32.mrb[0].mxu0
  %v4828 = vadd.f32 %v3248, %v4827
  %v4829 = vpop.f32.mrb[0].mxu0
  %v4830 = vadd.f32 %v3252, %v4829
  %4831 = vmatprep.mubr.f32.mxu0 %v3172
  %4832 = vmatmul.mubr.f32.gmra.mrb[0].mxu0 %v3171
  %v4833 = vpop.f32.mrb[0].mxu0
  %v4834 = vadd.f32 %v3248, %v4833
  %v4835 = vpop.f32.mrb[0].mxu0
  %v4836 = vadd.f32 %v3252, %v4835
  %4837 = vmatprep.mubr.f32.mxu0 %v3174
  %4838 = vmatmul.mubr.f32.gmra.mrb[0].mxu0 %v3173
  %v4839 = vpop.f32.mrb[0].mxu0
  %v4840 = vadd.f32 %v3248, %v4839
  %v4841 = vpop.f32.mrb[0].mxu0
  %v4842 = vadd.f32 %v3252, %v4841
  %4843 = vmatprep.mubr.f32.mxu0 %v3176
  %4844 = vmatmul.mubr.f32.gmra.mrb[0].mxu0 %v3175
  %v4845 = vpop.f32.mrb[0].mxu0
  %v4846 = vadd.f32 %v3248, %v4845
  %v4847 = vpop.f32.mrb[0].mxu0
  %v4848 = vadd.f32 %v3252, %v4847
  %4849 = vmatprep.mubr.f32.mxu0 %v3178
  %4850 = vmatmul.mubr.f32.gmra.mrb[0].mxu0 %v3177
  %v4851 = vpop.f32.mrb[0].mxu0
  %v4852 = vadd.f32 %v3248, %v4851
  %v4853 = vpop.f32.mrb[0].mxu0
  %v4854 = vadd.f32 %v3252, %v4853
  %4855 = vdwg.mxu0
  %v4856 = vmax.f32 %v3322, 0.0
  %v4857 = vmax.f32 %v3324, 0.0
  %v4858 = vmax.f32 %v3328, 0.0
  %v4859 = vmax.f32 %v3330, 0.0
  %v4860 = vmax.f32 %v3334, 0.0
  %v4861 = vmax.f32 %v3336, 0.0
  %v4862 = vmax.f32 %v3340, 0.0
  %v4863 = vmax.f32 %v3342, 0.0
  %v4864 = vmax.f32 %v3346, 0.0
  %v4865 = vmax.f32 %v3348, 0.0
  %v4866 = vmax.f32 %v3352, 0.0
  %v4867 = vmax.f32 %v3354, 0.0
  %v4868 = vmax.f32 %v3358, 0.0
  %v4869 = vmax.f32 %v3360, 0.0
  %v4870 = vmax.f32 %v3364, 0.0
  %v4871 = vmax.f32 %v3366, 0.0
  %v4872 = vmax.f32 %v3370, 0.0
  %v4873 = vmax.f32 %v3372, 0.0
  %v4874 = vmax.f32 %v3376, 0.0
  %v4875 = vmax.f32 %v3378, 0.0
  %v4876 = vmax.f32 %v3382, 0.0
  %v4877 = vmax.f32 %v3384, 0.0
  %v4878 = vmax.f32 %v3388, 0.0
  %v4879 = vmax.f32 %v3390, 0.0
  %v4880 = vmax.f32 %v3394, 0.0
  %v4881 = vmax.f32 %v3396, 0.0
  %v4882 = vmax.f32 %v3400, 0.0
  %v4883 = vmax.f32 %v3402, 0.0
  %v4884 = vmax.f32 %v3406, 0.0
  %v4885 = vmax.f32 %v3408, 0.0
  %v4886 = vmax.f32 %v3412, 0.0
  %v4887 = vmax.f32 %v3414, 0.0
  %v4888 = vmax.f32 %v3418, 0.0
  %v4889 = vmax.f32 %v3420, 0.0
  %v4890 = vmax.f32 %v3424, 0.0
  %v4891 = vmax.f32 %v3426, 0.0
  %v4892 = vmax.f32 %v3430, 0.0
  %v4893 = vmax.f32 %v3432, 0.0
  %v4894 = vmax.f32 %v3436, 0.0
  %v4895 = vmax.f32 %v3438, 0.0
  %v4896 = vmax.f32 %v3442, 0.0
  %v4897 = vmax.f32 %v3444, 0.0
  %v4898 = vmax.f32 %v3448, 0.0
  %v4899 = vmax.f32 %v3450, 0.0
  %v4900 = vmax.f32 %v3454, 0.0
  %v4901 = vmax.f32 %v3456, 0.0
  %v4902 = vmax.f32 %v3460, 0.0
  %v4903 = vmax.f32 %v3462, 0.0
  %v4904 = vmax.f32 %v3466, 0.0
  %v4905 = vmax.f32 %v3468, 0.0
  %v4906 = vmax.f32 %v3472, 0.0
  %v4907 = vmax.f32 %v3474, 0.0
  %v4908 = vmax.f32 %v3478, 0.0
  %v4909 = vmax.f32 %v3480, 0.0
  %v4910 = vmax.f32 %v3484, 0.0
  %v4911 = vmax.f32 %v3486, 0.0
  %v4912 = vmax.f32 %v3490, 0.0
  %v4913 = vmax.f32 %v3492, 0.0
  %v4914 = vmax.f32 %v3496, 0.0
  %v4915 = vmax.f32 %v3498, 0.0
  %v4916 = vmax.f32 %v3502, 0.0
  %v4917 = vmax.f32 %v3504, 0.0
  %v4918 = vmax.f32 %v3508, 0.0
  %v4919 = vmax.f32 %v3510, 0.0
  %v4920 = vmax.f32 %v3514, 0.0
  %v4921 = vmax.f32 %v3516, 0.0
  %v4922 = vmax.f32 %v3520, 0.0
  %v4923 = vmax.f32 %v3522, 0.0
  %v4924 = vmax.f32 %v3526, 0.0
  %v4925 = vmax.f32 %v3528, 0.0
  %v4926 = vmax.f32 %v3532, 0.0
  %v4927 = vmax.f32 %v3534, 0.0
  %v4928 = vmax.f32 %v3538, 0.0
  %v4929 = vmax.f32 %v3540, 0.0
  %v4930 = vmax.f32 %v3544, 0.0
  %v4931 = vmax.f32 %v3546, 0.0
  %v4932 = vmax.f32 %v3550, 0.0
  %v4933 = vmax.f32 %v3552, 0.0
  %v4934 = vmax.f32 %v3556, 0.0
  %v4935 = vmax.f32 %v3558, 0.0
  %v4936 = vmax.f32 %v3562, 0.0
  %v4937 = vmax.f32 %v3564, 0.0
  %v4938 = vmax.f32 %v3568, 0.0
  %v4939 = vmax.f32 %v3570, 0.0
  %v4940 = vmax.f32 %v3574, 0.0
  %v4941 = vmax.f32 %v3576, 0.0
  %v4942 = vmax.f32 %v3580, 0.0
  %v4943 = vmax.f32 %v3582, 0.0
  %v4944 = vmax.f32 %v3586, 0.0
  %v4945 = vmax.f32 %v3588, 0.0
  %v4946 = vmax.f32 %v3592, 0.0
  %v4947 = vmax.f32 %v3594, 0.0
  %v4948 = vmax.f32 %v3598, 0.0
  %v4949 = vmax.f32 %v3600, 0.0
  %v4950 = vmax.f32 %v3604, 0.0
  %v4951 = vmax.f32 %v3606, 0.0
  %v4952 = vmax.f32 %v3610, 0.0
  %v4953 = vmax.f32 %v3612, 0.0
  %v4954 = vmax.f32 %v3616, 0.0
  %v4955 = vmax.f32 %v3618, 0.0
  %v4956 = vmax.f32 %v3622, 0.0
  %v4957 = vmax.f32 %v3624, 0.0
  %v4958 = vmax.f32 %v3628, 0.0
  %v4959 = vmax.f32 %v3630, 0.0
  %v4960 = vmax.f32 %v3634, 0.0
  %v4961 = vmax.f32 %v3636, 0.0
  %v4962 = vmax.f32 %v3640, 0.0
  %v4963 = vmax.f32 %v3642, 0.0
  %v4964 = vmax.f32 %v3646, 0.0
  %v4965 = vmax.f32 %v3648, 0.0
  %v4966 = vmax.f32 %v3652, 0.0
  %v4967 = vmax.f32 %v3654, 0.0
  %v4968 = vmax.f32 %v3658, 0.0
  %v4969 = vmax.f32 %v3660, 0.0
  %v4970 = vmax.f32 %v3664, 0.0
  %v4971 = vmax.f32 %v3666, 0.0
  %v4972 = vmax.f32 %v3670, 0.0
  %v4973 = vmax.f32 %v3672, 0.0
  %v4974 = vmax.f32 %v3676, 0.0
  %v4975 = vmax.f32 %v3678, 0.0
  %v4976 = vmax.f32 %v3682, 0.0
  %v4977 = vmax.f32 %v3684, 0.0
  %v4978 = vmax.f32 %v3688, 0.0
  %v4979 = vmax.f32 %v3690, 0.0
  %v4980 = vmax.f32 %v3694, 0.0
  %v4981 = vmax.f32 %v3696, 0.0
  %v4982 = vmax.f32 %v3700, 0.0
  %v4983 = vmax.f32 %v3702, 0.0
  %v4984 = vmax.f32 %v3706, 0.0
  %v4985 = vmax.f32 %v3708, 0.0
  %v4986 = vmax.f32 %v3712, 0.0
  %v4987 = vmax.f32 %v3714, 0.0
  %v4988 = vmax.f32 %v3718, 0.0
  %v4989 = vmax.f32 %v3720, 0.0
  %v4990 = vmax.f32 %v3724, 0.0
  %v4991 = vmax.f32 %v3726, 0.0
  %v4992 = vmax.f32 %v3730, 0.0
  %v4993 = vmax.f32 %v3732, 0.0
  %v4994 = vmax.f32 %v3736, 0.0
  %v4995 = vmax.f32 %v3738, 0.0
  %v4996 = vmax.f32 %v3742, 0.0
  %v4997 = vmax.f32 %v3744, 0.0
  %v4998 = vmax.f32 %v3748, 0.0
  %v4999 = vmax.f32 %v3750, 0.0
  %v5000 = vmax.f32 %v3754, 0.0
  %v5001 = vmax.f32 %v3756, 0.0
  %v5002 = vmax.f32 %v3760, 0.0
  %v5003 = vmax.f32 %v3762, 0.0
  %v5004 = vmax.f32 %v3766, 0.0
  %v5005 = vmax.f32 %v3768, 0.0
  %v5006 = vmax.f32 %v3772, 0.0
  %v5007 = vmax.f32 %v3774, 0.0
  %v5008 = vmax.f32 %v3778, 0.0
  %v5009 = vmax.f32 %v3780, 0.0
  %v5010 = vmax.f32 %v3784, 0.0
  %v5011 = vmax.f32 %v3786, 0.0
  %v5012 = vmax.f32 %v3790, 0.0
  %v5013 = vmax.f32 %v3792, 0.0
  %v5014 = vmax.f32 %v3796, 0.0
  %v5015 = vmax.f32 %v3798, 0.0
  %v5016 = vmax.f32 %v3802, 0.0
  %v5017 = vmax.f32 %v3804, 0.0
  %v5018 = vmax.f32 %v3808, 0.0
  %v5019 = vmax.f32 %v3810, 0.0
  %v5020 = vmax.f32 %v3814, 0.0
  %v5021 = vmax.f32 %v3816, 0.0
  %v5022 = vmax.f32 %v3820, 0.0
  %v5023 = vmax.f32 %v3822, 0.0
  %v5024 = vmax.f32 %v3826, 0.0
  %v5025 = vmax.f32 %v3828, 0.0
  %v5026 = vmax.f32 %v3832, 0.0
  %v5027 = vmax.f32 %v3834, 0.0
  %v5028 = vmax.f32 %v3838, 0.0
  %v5029 = vmax.f32 %v3840, 0.0
  %v5030 = vmax.f32 %v3844, 0.0
  %v5031 = vmax.f32 %v3846, 0.0
  %v5032 = vmax.f32 %v3850, 0.0
  %v5033 = vmax.f32 %v3852, 0.0
  %v5034 = vmax.f32 %v3856, 0.0
  %v5035 = vmax.f32 %v3858, 0.0
  %v5036 = vmax.f32 %v3862, 0.0
  %v5037 = vmax.f32 %v3864, 0.0
  %v5038 = vmax.f32 %v3868, 0.0
  %v5039 = vmax.f32 %v3870, 0.0
  %v5040 = vmax.f32 %v3874, 0.0
  %v5041 = vmax.f32 %v3876, 0.0
  %v5042 = vmax.f32 %v3880, 0.0
  %v5043 = vmax.f32 %v3882, 0.0
  %v5044 = vmax.f32 %v3886, 0.0
  %v5045 = vmax.f32 %v3888, 0.0
  %v5046 = vmax.f32 %v3892, 0.0
  %v5047 = vmax.f32 %v3894, 0.0
  %v5048 = vmax.f32 %v3898, 0.0
  %v5049 = vmax.f32 %v3900, 0.0
  %v5050 = vmax.f32 %v3904, 0.0
  %v5051 = vmax.f32 %v3906, 0.0
  %v5052 = vmax.f32 %v3910, 0.0
  %v5053 = vmax.f32 %v3912, 0.0
  %v5054 = vmax.f32 %v3916, 0.0
  %v5055 = vmax.f32 %v3918, 0.0
  %v5056 = vmax.f32 %v3922, 0.0
  %v5057 = vmax.f32 %v3924, 0.0
  %v5058 = vmax.f32 %v3928, 0.0
  %v5059 = vmax.f32 %v3930, 0.0
  %v5060 = vmax.f32 %v3934, 0.0
  %v5061 = vmax.f32 %v3936, 0.0
  %v5062 = vmax.f32 %v3940, 0.0
  %v5063 = vmax.f32 %v3942, 0.0
  %v5064 = vmax.f32 %v3946, 0.0
  %v5065 = vmax.f32 %v3948, 0.0
  %v5066 = vmax.f32 %v3952, 0.0
  %v5067 = vmax.f32 %v3954, 0.0
  %v5068 = vmax.f32 %v3958, 0.0
  %v5069 = vmax.f32 %v3960, 0.0
  %v5070 = vmax.f32 %v3964, 0.0
  %v5071 = vmax.f32 %v3966, 0.0
  %v5072 = vmax.f32 %v3970, 0.0
  %v5073 = vmax.f32 %v3972, 0.0
  %v5074 = vmax.f32 %v3976, 0.0
  %v5075 = vmax.f32 %v3978, 0.0
  %v5076 = vmax.f32 %v3982, 0.0
  %v5077 = vmax.f32 %v3984, 0.0
  %v5078 = vmax.f32 %v3988, 0.0
  %v5079 = vmax.f32 %v3990, 0.0
  %v5080 = vmax.f32 %v3994, 0.0
  %v5081 = vmax.f32 %v3996, 0.0
  %v5082 = vmax.f32 %v4000, 0.0
  %v5083 = vmax.f32 %v4002, 0.0
  %v5084 = vmax.f32 %v4006, 0.0
  %v5085 = vmax.f32 %v4008, 0.0
  %v5086 = vmax.f32 %v4012, 0.0
  %v5087 = vmax.f32 %v4014, 0.0
  %v5088 = vmax.f32 %v4018, 0.0
  %v5089 = vmax.f32 %v4020, 0.0
  %v5090 = vmax.f32 %v4024, 0.0
  %v5091 = vmax.f32 %v4026, 0.0
  %v5092 = vmax.f32 %v4030, 0.0
  %v5093 = vmax.f32 %v4032, 0.0
  %v5094 = vmax.f32 %v4036, 0.0
  %v5095 = vmax.f32 %v4038, 0.0
  %v5096 = vmax.f32 %v4042, 0.0
  %v5097 = vmax.f32 %v4044, 0.0
  %v5098 = vmax.f32 %v4048, 0.0
  %v5099 = vmax.f32 %v4050, 0.0
  %v5100 = vmax.f32 %v4054, 0.0
  %v5101 = vmax.f32 %v4056, 0.0
  %v5102 = vmax.f32 %v4060, 0.0
  %v5103 = vmax.f32 %v4062, 0.0
  %v5104 = vmax.f32 %v4066, 0.0
  %v5105 = vmax.f32 %v4068, 0.0
  %v5106 = vmax.f32 %v4072, 0.0
  %v5107 = vmax.f32 %v4074, 0.0
  %v5108 = vmax.f32 %v4078, 0.0
  %v5109 = vmax.f32 %v4080, 0.0
  %v5110 = vmax.f32 %v4084, 0.0
  %v5111 = vmax.f32 %v4086, 0.0
  %v5112 = vmax.f32 %v4090, 0.0
  %v5113 = vmax.f32 %v4092, 0.0
  %v5114 = vmax.f32 %v4096, 0.0
  %v5115 = vmax.f32 %v4098, 0.0
  %v5116 = vmax.f32 %v4102, 0.0
  %v5117 = vmax.f32 %v4104, 0.0
  %v5118 = vmax.f32 %v4108, 0.0
  %v5119 = vmax.f32 %v4110, 0.0
  %v5120 = vmax.f32 %v4114, 0.0
  %v5121 = vmax.f32 %v4116, 0.0
  %v5122 = vmax.f32 %v4120, 0.0
  %v5123 = vmax.f32 %v4122, 0.0
  %v5124 = vmax.f32 %v4126, 0.0
  %v5125 = vmax.f32 %v4128, 0.0
  %v5126 = vmax.f32 %v4132, 0.0
  %v5127 = vmax.f32 %v4134, 0.0
  %v5128 = vmax.f32 %v4138, 0.0
  %v5129 = vmax.f32 %v4140, 0.0
  %v5130 = vmax.f32 %v4144, 0.0
  %v5131 = vmax.f32 %v4146, 0.0
  %v5132 = vmax.f32 %v4150, 0.0
  %v5133 = vmax.f32 %v4152, 0.0
  %v5134 = vmax.f32 %v4156, 0.0
  %v5135 = vmax.f32 %v4158, 0.0
  %v5136 = vmax.f32 %v4162, 0.0
  %v5137 = vmax.f32 %v4164, 0.0
  %v5138 = vmax.f32 %v4168, 0.0
  %v5139 = vmax.f32 %v4170, 0.0
  %v5140 = vmax.f32 %v4174, 0.0
  %v5141 = vmax.f32 %v4176, 0.0
  %v5142 = vmax.f32 %v4180, 0.0
  %v5143 = vmax.f32 %v4182, 0.0
  %v5144 = vmax.f32 %v4186, 0.0
  %v5145 = vmax.f32 %v4188, 0.0
  %v5146 = vmax.f32 %v4192, 0.0
  %v5147 = vmax.f32 %v4194, 0.0
  %v5148 = vmax.f32 %v4198, 0.0
  %v5149 = vmax.f32 %v4200, 0.0
  %v5150 = vmax.f32 %v4204, 0.0
  %v5151 = vmax.f32 %v4206, 0.0
  %v5152 = vmax.f32 %v4210, 0.0
  %v5153 = vmax.f32 %v4212, 0.0
  %v5154 = vmax.f32 %v4216, 0.0
  %v5155 = vmax.f32 %v4218, 0.0
  %v5156 = vmax.f32 %v4222, 0.0
  %v5157 = vmax.f32 %v4224, 0.0
  %v5158 = vmax.f32 %v4228, 0.0
  %v5159 = vmax.f32 %v4230, 0.0
  %v5160 = vmax.f32 %v4234, 0.0
  %v5161 = vmax.f32 %v4236, 0.0
  %v5162 = vmax.f32 %v4240, 0.0
  %v5163 = vmax.f32 %v4242, 0.0
  %v5164 = vmax.f32 %v4246, 0.0
  %v5165 = vmax.f32 %v4248, 0.0
  %v5166 = vmax.f32 %v4252, 0.0
  %v5167 = vmax.f32 %v4254, 0.0
  %v5168 = vmax.f32 %v4258, 0.0
  %v5169 = vmax.f32 %v4260, 0.0
  %v5170 = vmax.f32 %v4264, 0.0
  %v5171 = vmax.f32 %v4266, 0.0
  %v5172 = vmax.f32 %v4270, 0.0
  %v5173 = vmax.f32 %v4272, 0.0
  %v5174 = vmax.f32 %v4276, 0.0
  %v5175 = vmax.f32 %v4278, 0.0
  %v5176 = vmax.f32 %v4282, 0.0
  %v5177 = vmax.f32 %v4284, 0.0
  %v5178 = vmax.f32 %v4288, 0.0
  %v5179 = vmax.f32 %v4290, 0.0
  %v5180 = vmax.f32 %v4294, 0.0
  %v5181 = vmax.f32 %v4296, 0.0
  %v5182 = vmax.f32 %v4300, 0.0
  %v5183 = vmax.f32 %v4302, 0.0
  %v5184 = vmax.f32 %v4306, 0.0
  %v5185 = vmax.f32 %v4308, 0.0
  %v5186 = vmax.f32 %v4312, 0.0
  %v5187 = vmax.f32 %v4314, 0.0
  %v5188 = vmax.f32 %v4318, 0.0
  %v5189 = vmax.f32 %v4320, 0.0
  %v5190 = vmax.f32 %v4324, 0.0
  %v5191 = vmax.f32 %v4326, 0.0
  %v5192 = vmax.f32 %v4330, 0.0
  %v5193 = vmax.f32 %v4332, 0.0
  %v5194 = vmax.f32 %v4336, 0.0
  %v5195 = vmax.f32 %v4338, 0.0
  %v5196 = vmax.f32 %v4342, 0.0
  %v5197 = vmax.f32 %v4344, 0.0
  %v5198 = vmax.f32 %v4348, 0.0
  %v5199 = vmax.f32 %v4350, 0.0
  %v5200 = vmax.f32 %v4354, 0.0
  %v5201 = vmax.f32 %v4356, 0.0
  %v5202 = vmax.f32 %v4360, 0.0
  %v5203 = vmax.f32 %v4362, 0.0
  %v5204 = vmax.f32 %v4366, 0.0
  %v5205 = vmax.f32 %v4368, 0.0
  %v5206 = vmax.f32 %v4372, 0.0
  %v5207 = vmax.f32 %v4374, 0.0
  %v5208 = vmax.f32 %v4378, 0.0
  %v5209 = vmax.f32 %v4380, 0.0
  %v5210 = vmax.f32 %v4384, 0.0
  %v5211 = vmax.f32 %v4386, 0.0
  %v5212 = vmax.f32 %v4390, 0.0
  %v5213 = vmax.f32 %v4392, 0.0
  %v5214 = vmax.f32 %v4396, 0.0
  %v5215 = vmax.f32 %v4398, 0.0
  %v5216 = vmax.f32 %v4402, 0.0
  %v5217 = vmax.f32 %v4404, 0.0
  %v5218 = vmax.f32 %v4408, 0.0
  %v5219 = vmax.f32 %v4410, 0.0
  %v5220 = vmax.f32 %v4414, 0.0
  %v5221 = vmax.f32 %v4416, 0.0
  %v5222 = vmax.f32 %v4420, 0.0
  %v5223 = vmax.f32 %v4422, 0.0
  %v5224 = vmax.f32 %v4426, 0.0
  %v5225 = vmax.f32 %v4428, 0.0
  %v5226 = vmax.f32 %v4432, 0.0
  %v5227 = vmax.f32 %v4434, 0.0
  %v5228 = vmax.f32 %v4438, 0.0
  %v5229 = vmax.f32 %v4440, 0.0
  %v5230 = vmax.f32 %v4444, 0.0
  %v5231 = vmax.f32 %v4446, 0.0
  %v5232 = vmax.f32 %v4450, 0.0
  %v5233 = vmax.f32 %v4452, 0.0
  %v5234 = vmax.f32 %v4456, 0.0
  %v5235 = vmax.f32 %v4458, 0.0
  %v5236 = vmax.f32 %v4462, 0.0
  %v5237 = vmax.f32 %v4464, 0.0
  %v5238 = vmax.f32 %v4468, 0.0
  %v5239 = vmax.f32 %v4470, 0.0
  %v5240 = vmax.f32 %v4474, 0.0
  %v5241 = vmax.f32 %v4476, 0.0
  %v5242 = vmax.f32 %v4480, 0.0
  %v5243 = vmax.f32 %v4482, 0.0
  %v5244 = vmax.f32 %v4486, 0.0
  %v5245 = vmax.f32 %v4488, 0.0
  %v5246 = vmax.f32 %v4492, 0.0
  %v5247 = vmax.f32 %v4494, 0.0
  %v5248 = vmax.f32 %v4498, 0.0
  %v5249 = vmax.f32 %v4500, 0.0
  %v5250 = vmax.f32 %v4504, 0.0
  %v5251 = vmax.f32 %v4506, 0.0
  %v5252 = vmax.f32 %v4510, 0.0
  %v5253 = vmax.f32 %v4512, 0.0
  %v5254 = vmax.f32 %v4516, 0.0
  %v5255 = vmax.f32 %v4518, 0.0
  %v5256 = vmax.f32 %v4522, 0.0
  %v5257 = vmax.f32 %v4524, 0.0
  %v5258 = vmax.f32 %v4528, 0.0
  %v5259 = vmax.f32 %v4530, 0.0
  %v5260 = vmax.f32 %v4534, 0.0
  %v5261 = vmax.f32 %v4536, 0.0
  %v5262 = vmax.f32 %v4540, 0.0
  %v5263 = vmax.f32 %v4542, 0.0
  %v5264 = vmax.f32 %v4546, 0.0
  %v5265 = vmax.f32 %v4548, 0.0
  %v5266 = vmax.f32 %v4552, 0.0
  %v5267 = vmax.f32 %v4554, 0.0
  %v5268 = vmax.f32 %v4558, 0.0
  %v5269 = vmax.f32 %v4560, 0.0
  %v5270 = vmax.f32 %v4564, 0.0
  %v5271 = vmax.f32 %v4566, 0.0
  %v5272 = vmax.f32 %v4570, 0.0
  %v5273 = vmax.f32 %v4572, 0.0
  %v5274 = vmax.f32 %v4576, 0.0
  %v5275 = vmax.f32 %v4578, 0.0
  %v5276 = vmax.f32 %v4582, 0.0
  %v5277 = vmax.f32 %v4584, 0.0
  %v5278 = vmax.f32 %v4588, 0.0
  %v5279 = vmax.f32 %v4590, 0.0
  %v5280 = vmax.f32 %v4594, 0.0
  %v5281 = vmax.f32 %v4596, 0.0
  %v5282 = vmax.f32 %v4600, 0.0
  %v5283 = vmax.f32 %v4602, 0.0
  %v5284 = vmax.f32 %v4606, 0.0
  %v5285 = vmax.f32 %v4608, 0.0
  %v5286 = vmax.f32 %v4612, 0.0
  %v5287 = vmax.f32 %v4614, 0.0
  %v5288 = vmax.f32 %v4618, 0.0
  %v5289 = vmax.f32 %v4620, 0.0
  %v5290 = vmax.f32 %v4624, 0.0
  %v5291 = vmax.f32 %v4626, 0.0
  %v5292 = vmax.f32 %v4630, 0.0
  %v5293 = vmax.f32 %v4632, 0.0
  %v5294 = vmax.f32 %v4636, 0.0
  %v5295 = vmax.f32 %v4638, 0.0
  %v5296 = vmax.f32 %v4642, 0.0
  %v5297 = vmax.f32 %v4644, 0.0
  %v5298 = vmax.f32 %v4648, 0.0
  %v5299 = vmax.f32 %v4650, 0.0
  %v5300 = vmax.f32 %v4654, 0.0
  %v5301 = vmax.f32 %v4656, 0.0
  %v5302 = vmax.f32 %v4660, 0.0
  %v5303 = vmax.f32 %v4662, 0.0
  %v5304 = vmax.f32 %v4666, 0.0
  %v5305 = vmax.f32 %v4668, 0.0
  %v5306 = vmax.f32 %v4672, 0.0
  %v5307 = vmax.f32 %v4674, 0.0
  %v5308 = vmax.f32 %v4678, 0.0
  %v5309 = vmax.f32 %v4680, 0.0
  %v5310 = vmax.f32 %v4684, 0.0
  %v5311 = vmax.f32 %v4686, 0.0
  %v5312 = vmax.f32 %v4690, 0.0
  %v5313 = vmax.f32 %v4692, 0.0
  %v5314 = vmax.f32 %v4696, 0.0
  %v5315 = vmax.f32 %v4698, 0.0
  %v5316 = vmax.f32 %v4702, 0.0
  %v5317 = vmax.f32 %v4704, 0.0
  %v5318 = vmax.f32 %v4708, 0.0
  %v5319 = vmax.f32 %v4710, 0.0
  %v5320 = vmax.f32 %v4714, 0.0
  %v5321 = vmax.f32 %v4716, 0.0
  %v5322 = vmax.f32 %v4720, 0.0
  %v5323 = vmax.f32 %v4722, 0.0
  %v5324 = vmax.f32 %v4726, 0.0
  %v5325 = vmax.f32 %v4728, 0.0
  %v5326 = vmax.f32 %v4732, 0.0
  %v5327 = vmax.f32 %v4734, 0.0
  %v5328 = vmax.f32 %v4738, 0.0
  %v5329 = vmax.f32 %v4740, 0.0
  %v5330 = vmax.f32 %v4744, 0.0
  %v5331 = vmax.f32 %v4746, 0.0
  %v5332 = vmax.f32 %v4750, 0.0
  %v5333 = vmax.f32 %v4752, 0.0
  %v5334 = vmax.f32 %v4756, 0.0
  %v5335 = vmax.f32 %v4758, 0.0
  %v5336 = vmax.f32 %v4762, 0.0
  %v5337 = vmax.f32 %v4764, 0.0
  %v5338 = vmax.f32 %v4768, 0.0
  %v5339 = vmax.f32 %v4770, 0.0
  %v5340 = vmax.f32 %v4774, 0.0
  %v5341 = vmax.f32 %v4776, 0.0
  %v5342 = vmax.f32 %v4780, 0.0
  %v5343 = vmax.f32 %v4782, 0.0
  %v5344 = vmax.f32 %v4786, 0.0
  %v5345 = vmax.f32 %v4788, 0.0
  %v5346 = vmax.f32 %v4792, 0.0
  %v5347 = vmax.f32 %v4794, 0.0
  %v5348 = vmax.f32 %v4798, 0.0
  %v5349 = vmax.f32 %v4800, 0.0
  %v5350 = vmax.f32 %v4804, 0.0
  %v5351 = vmax.f32 %v4806, 0.0
  %v5352 = vmax.f32 %v4810, 0.0
  %v5353 = vmax.f32 %v4812, 0.0
  %v5354 = vmax.f32 %v4816, 0.0
  %v5355 = vmax.f32 %v4818, 0.0
  %v5356 = vmax.f32 %v4822, 0.0
  %v5357 = vmax.f32 %v4824, 0.0
  %v5358 = vmax.f32 %v4828, 0.0
  %v5359 = vmax.f32 %v4830, 0.0
  %v5360 = vmax.f32 %v4834, 0.0
  %v5361 = vmax.f32 %v4836, 0.0
  %v5362 = vmax.f32 %v4840, 0.0
  %v5363 = vmax.f32 %v4842, 0.0
  %v5364 = vmax.f32 %v4846, 0.0
  %v5365 = vmax.f32 %v4848, 0.0
  %v5366 = vmax.f32 %v4852, 0.0
  %v5367 = vmax.f32 %v4854, 0.0
  %v5368 = vld [vmem:[%s5] sm:$0xff]
  %v5369 = vld [vmem:[%s5 + $0x8] sm:$0xff]
  %v5370 = vld [vmem:[%s5 + $0x10] sm:$0xff]
  %v5371 = vld [vmem:[%s5 + $0x18] sm:$0xff]
  %v5372 = vld [vmem:[%s5 + $0x20] sm:$0xff]
  %v5373 = vld [vmem:[%s5 + $0x28] sm:$0xff]
  %v5374 = vld [vmem:[%s5 + $0x30] sm:$0xff]
  %v5375 = vld [vmem:[%s5 + $0x38] sm:$0xff]
  %v5376 = vld [vmem:[%s5 + $0x40] sm:$0xff]
  %v5377 = vld [vmem:[%s5 + $0x48] sm:$0xff]
  %v5378 = vld [vmem:[%s5 + $0x50] sm:$0xff]
  %v5379 = vld [vmem:[%s5 + $0x58] sm:$0xff]
  %v5380 = vld [vmem:[%s5 + $0x60] sm:$0xff]
  %v5381 = vld [vmem:[%s5 + $0x68] sm:$0xff]
  %v5382 = vld [vmem:[%s5 + $0x70] sm:$0xff]
  %v5383 = vld [vmem:[%s5 + $0x78] sm:$0xff]
  %v5384 = vld [vmem:[%s5 + $0x80] sm:$0xff]
  %v5385 = vld [vmem:[%s5 + $0x88] sm:$0xff]
  %v5386 = vld [vmem:[%s5 + $0x90] sm:$0xff]
  %v5387 = vld [vmem:[%s5 + $0x98] sm:$0xff]
  %v5388 = vld [vmem:[%s5 + $0xa0] sm:$0xff]
  %v5389 = vld [vmem:[%s5 + $0xa8] sm:$0xff]
  %v5390 = vld [vmem:[%s5 + $0xb0] sm:$0xff]
  %v5391 = vld [vmem:[%s5 + $0xb8] sm:$0xff]
  %v5392 = vld [vmem:[%s5 + $0xc0] sm:$0xff]
  %v5393 = vld [vmem:[%s5 + $0xc8] sm:$0xff]
  %v5394 = vld [vmem:[%s5 + $0xd0] sm:$0xff]
  %v5395 = vld [vmem:[%s5 + $0xd8] sm:$0xff]
  %v5396 = vld [vmem:[%s5 + $0xe0] sm:$0xff]
  %v5397 = vld [vmem:[%s5 + $0xe8] sm:$0xff]
  %v5398 = vld [vmem:[%s5 + $0xf0] sm:$0xff]
  %v5399 = vld [vmem:[%s5 + $0xf8] sm:$0xff]
  %s5400 = sld [smem:[#allocation2]]
  %v5401 = vstv %s5400
  %5402 = vmatprep.subr.mxu0 0.0
  %5403 = vmatpush1.msra.mxu0 %v5368
  %5404 = vmatprep.subr.mxu0 0.0
  %5405 = vmatpush1.msra.mxu0 %v5369
  %5406 = vmatprep.subr.mxu0 0.0
  %5407 = vmatpush1.msra.mxu0 %v5370
  %5408 = vmatprep.subr.mxu0 0.0
  %5409 = vmatpush1.msra.mxu0 %v5371
  %5410 = vmatprep.subr.mxu0 0.0
  %5411 = vmatpush1.msra.mxu0 %v5372
  %5412 = vmatprep.subr.mxu0 0.0
  %5413 = vmatpush1.msra.mxu0 %v5373
  %5414 = vmatprep.subr.mxu0 0.0
  %5415 = vmatpush1.msra.mxu0 %v5374
  %5416 = vmatprep.subr.mxu0 0.0
  %5417 = vmatpush1.msra.mxu0 %v5375
  %5418 = vmatprep.subr.mxu0 0.0
  %5419 = vmatpush1.msra.mxu0 %v5376
  %5420 = vmatprep.subr.mxu0 0.0
  %5421 = vmatpush1.msra.mxu0 %v5377
  %5422 = vmatprep.subr.mxu0 0.0
  %5423 = vmatpush1.msra.mxu0 %v5378
  %5424 = vmatprep.subr.mxu0 0.0
  %5425 = vmatpush1.msra.mxu0 %v5379
  %5426 = vmatprep.subr.mxu0 0.0
  %5427 = vmatpush1.msra.mxu0 %v5380
  %5428 = vmatprep.subr.mxu0 0.0
  %5429 = vmatpush1.msra.mxu0 %v5381
  %5430 = vmatprep.subr.mxu0 0.0
  %5431 = vmatpush1.msra.mxu0 %v5382
  %5432 = vmatprep.subr.mxu0 0.0
  %5433 = vmatpush1.msra.mxu0 %v5383
  %5434 = vmatprep.subr.mxu0 0.0
  %5435 = vmatpush1.msra.mxu0 %v5384
  %5436 = vmatprep.subr.mxu0 0.0
  %5437 = vmatpush1.msra.mxu0 %v5385
  %5438 = vmatprep.subr.mxu0 0.0
  %5439 = vmatpush1.msra.mxu0 %v5386
  %5440 = vmatprep.subr.mxu0 0.0
  %5441 = vmatpush1.msra.mxu0 %v5387
  %5442 = vmatprep.subr.mxu0 0.0
  %5443 = vmatpush1.msra.mxu0 %v5388
  %5444 = vmatprep.subr.mxu0 0.0
  %5445 = vmatpush1.msra.mxu0 %v5389
  %5446 = vmatprep.subr.mxu0 0.0
  %5447 = vmatpush1.msra.mxu0 %v5390
  %5448 = vmatprep.subr.mxu0 0.0
  %5449 = vmatpush1.msra.mxu0 %v5391
  %5450 = vmatprep.subr.mxu0 0.0
  %5451 = vmatpush1.msra.mxu0 %v5392
  %5452 = vmatprep.subr.mxu0 0.0
  %5453 = vmatpush1.msra.mxu0 %v5393
  %5454 = vmatprep.subr.mxu0 0.0
  %5455 = vmatpush1.msra.mxu0 %v5394
  %5456 = vmatprep.subr.mxu0 0.0
  %5457 = vmatpush1.msra.mxu0 %v5395
  %5458 = vmatprep.subr.mxu0 0.0
  %5459 = vmatpush1.msra.mxu0 %v5396
  %5460 = vmatprep.subr.mxu0 0.0
  %5461 = vmatpush1.msra.mxu0 %v5397
  %5462 = vmatprep.subr.mxu0 0.0
  %5463 = vmatpush1.msra.mxu0 %v5398
  %5464 = vmatprep.subr.mxu0 0.0
  %5465 = vmatpush1.msra.mxu0 %v5399
  %5466 = vmatprep.mubr.f32.mxu0 %v4857
  %5467 = vmatmul.mubr.f32.gmra.mrb[0].mxu0 %v4856
  %v5468 = vpop.f32.mrb[0].mxu0
  %v5469 = vadd.f32 %v5401, %v5468
  %v5470 = vpop.f32.mrb[0].mxu0
  %5471 = vmatprep.mubr.f32.mxu0 %v4859
  %5472 = vmatmul.mubr.f32.gmra.mrb[0].mxu0 %v4858
  %v5473 = vpop.f32.mrb[0].mxu0
  %v5474 = vadd.f32 %v5401, %v5473
  %v5475 = vpop.f32.mrb[0].mxu0
  %5476 = vmatprep.mubr.f32.mxu0 %v4861
  %5477 = vmatmul.mubr.f32.gmra.mrb[0].mxu0 %v4860
  %v5478 = vpop.f32.mrb[0].mxu0
  %v5479 = vadd.f32 %v5401, %v5478
  %v5480 = vpop.f32.mrb[0].mxu0
  %5481 = vmatprep.mubr.f32.mxu0 %v4863
  %5482 = vmatmul.mubr.f32.gmra.mrb[0].mxu0 %v4862
  %v5483 = vpop.f32.mrb[0].mxu0
  %v5484 = vadd.f32 %v5401, %v5483
  %v5485 = vpop.f32.mrb[0].mxu0
  %5486 = vmatprep.mubr.f32.mxu0 %v4865
  %5487 = vmatmul.mubr.f32.gmra.mrb[0].mxu0 %v4864
  %v5488 = vpop.f32.mrb[0].mxu0
  %v5489 = vadd.f32 %v5401, %v5488
  %v5490 = vpop.f32.mrb[0].mxu0
  %5491 = vmatprep.mubr.f32.mxu0 %v4867
  %5492 = vmatmul.mubr.f32.gmra.mrb[0].mxu0 %v4866
  %v5493 = vpop.f32.mrb[0].mxu0
  %v5494 = vadd.f32 %v5401, %v5493
  %v5495 = vpop.f32.mrb[0].mxu0
  %5496 = vmatprep.mubr.f32.mxu0 %v4869
  %5497 = vmatmul.mubr.f32.gmra.mrb[0].mxu0 %v4868
  %v5498 = vpop.f32.mrb[0].mxu0
  %v5499 = vadd.f32 %v5401, %v5498
  %v5500 = vpop.f32.mrb[0].mxu0
  %5501 = vmatprep.mubr.f32.mxu0 %v4871
  %5502 = vmatmul.mubr.f32.gmra.mrb[0].mxu0 %v4870
  %v5503 = vpop.f32.mrb[0].mxu0
  %v5504 = vadd.f32 %v5401, %v5503
  %v5505 = vpop.f32.mrb[0].mxu0
  %5506 = vmatprep.mubr.f32.mxu0 %v4873
  %5507 = vmatmul.mubr.f32.gmra.mrb[0].mxu0 %v4872
  %v5508 = vpop.f32.mrb[0].mxu0
  %v5509 = vadd.f32 %v5401, %v5508
  %v5510 = vpop.f32.mrb[0].mxu0
  %5511 = vmatprep.mubr.f32.mxu0 %v4875
  %5512 = vmatmul.mubr.f32.gmra.mrb[0].mxu0 %v4874
  %v5513 = vpop.f32.mrb[0].mxu0
  %v5514 = vadd.f32 %v5401, %v5513
  %v5515 = vpop.f32.mrb[0].mxu0
  %5516 = vmatprep.mubr.f32.mxu0 %v4877
  %5517 = vmatmul.mubr.f32.gmra.mrb[0].mxu0 %v4876
  %v5518 = vpop.f32.mrb[0].mxu0
  %v5519 = vadd.f32 %v5401, %v5518
  %v5520 = vpop.f32.mrb[0].mxu0
  %5521 = vmatprep.mubr.f32.mxu0 %v4879
  %5522 = vmatmul.mubr.f32.gmra.mrb[0].mxu0 %v4878
  %v5523 = vpop.f32.mrb[0].mxu0
  %v5524 = vadd.f32 %v5401, %v5523
  %v5525 = vpop.f32.mrb[0].mxu0
  %5526 = vmatprep.mubr.f32.mxu0 %v4881
  %5527 = vmatmul.mubr.f32.gmra.mrb[0].mxu0 %v4880
  %v5528 = vpop.f32.mrb[0].mxu0
  %v5529 = vadd.f32 %v5401, %v5528
  %v5530 = vpop.f32.mrb[0].mxu0
  %5531 = vmatprep.mubr.f32.mxu0 %v4883
  %5532 = vmatmul.mubr.f32.gmra.mrb[0].mxu0 %v4882
  %v5533 = vpop.f32.mrb[0].mxu0
  %v5534 = vadd.f32 %v5401, %v5533
  %v5535 = vpop.f32.mrb[0].mxu0
  %5536 = vmatprep.mubr.f32.mxu0 %v4885
  %5537 = vmatmul.mubr.f32.gmra.mrb[0].mxu0 %v4884
  %v5538 = vpop.f32.mrb[0].mxu0
  %v5539 = vadd.f32 %v5401, %v5538
  %v5540 = vpop.f32.mrb[0].mxu0
  %5541 = vmatprep.mubr.f32.mxu0 %v4887
  %5542 = vmatmul.mubr.f32.gmra.mrb[0].mxu0 %v4886
  %v5543 = vpop.f32.mrb[0].mxu0
  %v5544 = vadd.f32 %v5401, %v5543
  %v5545 = vpop.f32.mrb[0].mxu0
  %5546 = vmatprep.mubr.f32.mxu0 %v4889
  %5547 = vmatmul.mubr.f32.gmra.mrb[0].mxu0 %v4888
  %v5548 = vpop.f32.mrb[0].mxu0
  %v5549 = vadd.f32 %v5401, %v5548
  %v5550 = vpop.f32.mrb[0].mxu0
  %5551 = vmatprep.mubr.f32.mxu0 %v4891
  %5552 = vmatmul.mubr.f32.gmra.mrb[0].mxu0 %v4890
  %v5553 = vpop.f32.mrb[0].mxu0
  %v5554 = vadd.f32 %v5401, %v5553
  %v5555 = vpop.f32.mrb[0].mxu0
  %5556 = vmatprep.mubr.f32.mxu0 %v4893
  %5557 = vmatmul.mubr.f32.gmra.mrb[0].mxu0 %v4892
  %v5558 = vpop.f32.mrb[0].mxu0
  %v5559 = vadd.f32 %v5401, %v5558
  %v5560 = vpop.f32.mrb[0].mxu0
  %5561 = vmatprep.mubr.f32.mxu0 %v4895
  %5562 = vmatmul.mubr.f32.gmra.mrb[0].mxu0 %v4894
  %v5563 = vpop.f32.mrb[0].mxu0
  %v5564 = vadd.f32 %v5401, %v5563
  %v5565 = vpop.f32.mrb[0].mxu0
  %5566 = vmatprep.mubr.f32.mxu0 %v4897
  %5567 = vmatmul.mubr.f32.gmra.mrb[0].mxu0 %v4896
  %v5568 = vpop.f32.mrb[0].mxu0
  %v5569 = vadd.f32 %v5401, %v5568
  %v5570 = vpop.f32.mrb[0].mxu0
  %5571 = vmatprep.mubr.f32.mxu0 %v4899
  %5572 = vmatmul.mubr.f32.gmra.mrb[0].mxu0 %v4898
  %v5573 = vpop.f32.mrb[0].mxu0
  %v5574 = vadd.f32 %v5401, %v5573
  %v5575 = vpop.f32.mrb[0].mxu0
  %5576 = vmatprep.mubr.f32.mxu0 %v4901
  %5577 = vmatmul.mubr.f32.gmra.mrb[0].mxu0 %v4900
  %v5578 = vpop.f32.mrb[0].mxu0
  %v5579 = vadd.f32 %v5401, %v5578
  %v5580 = vpop.f32.mrb[0].mxu0
  %5581 = vmatprep.mubr.f32.mxu0 %v4903
  %5582 = vmatmul.mubr.f32.gmra.mrb[0].mxu0 %v4902
  %v5583 = vpop.f32.mrb[0].mxu0
  %v5584 = vadd.f32 %v5401, %v5583
  %v5585 = vpop.f32.mrb[0].mxu0
  %5586 = vmatprep.mubr.f32.mxu0 %v4905
  %5587 = vmatmul.mubr.f32.gmra.mrb[0].mxu0 %v4904
  %v5588 = vpop.f32.mrb[0].mxu0
  %v5589 = vadd.f32 %v5401, %v5588
  %v5590 = vpop.f32.mrb[0].mxu0
  %5591 = vmatprep.mubr.f32.mxu0 %v4907
  %5592 = vmatmul.mubr.f32.gmra.mrb[0].mxu0 %v4906
  %v5593 = vpop.f32.mrb[0].mxu0
  %v5594 = vadd.f32 %v5401, %v5593
  %v5595 = vpop.f32.mrb[0].mxu0
  %5596 = vmatprep.mubr.f32.mxu0 %v4909
  %5597 = vmatmul.mubr.f32.gmra.mrb[0].mxu0 %v4908
  %v5598 = vpop.f32.mrb[0].mxu0
  %v5599 = vadd.f32 %v5401, %v5598
  %v5600 = vpop.f32.mrb[0].mxu0
  %5601 = vmatprep.mubr.f32.mxu0 %v4911
  %5602 = vmatmul.mubr.f32.gmra.mrb[0].mxu0 %v4910
  %v5603 = vpop.f32.mrb[0].mxu0
  %v5604 = vadd.f32 %v5401, %v5603
  %v5605 = vpop.f32.mrb[0].mxu0
  %5606 = vmatprep.mubr.f32.mxu0 %v4913
  %5607 = vmatmul.mubr.f32.gmra.mrb[0].mxu0 %v4912
  %v5608 = vpop.f32.mrb[0].mxu0
  %v5609 = vadd.f32 %v5401, %v5608
  %v5610 = vpop.f32.mrb[0].mxu0
  %5611 = vmatprep.mubr.f32.mxu0 %v4915
  %5612 = vmatmul.mubr.f32.gmra.mrb[0].mxu0 %v4914
  %v5613 = vpop.f32.mrb[0].mxu0
  %v5614 = vadd.f32 %v5401, %v5613
  %v5615 = vpop.f32.mrb[0].mxu0
  %5616 = vmatprep.mubr.f32.mxu0 %v4917
  %5617 = vmatmul.mubr.f32.gmra.mrb[0].mxu0 %v4916
  %v5618 = vpop.f32.mrb[0].mxu0
  %v5619 = vadd.f32 %v5401, %v5618
  %v5620 = vpop.f32.mrb[0].mxu0
  %5621 = vmatprep.mubr.f32.mxu0 %v4919
  %5622 = vmatmul.mubr.f32.gmra.mrb[0].mxu0 %v4918
  %v5623 = vpop.f32.mrb[0].mxu0
  %v5624 = vadd.f32 %v5401, %v5623
  %v5625 = vpop.f32.mrb[0].mxu0
  %5626 = vmatprep.mubr.f32.mxu0 %v4921
  %5627 = vmatmul.mubr.f32.gmra.mrb[0].mxu0 %v4920
  %v5628 = vpop.f32.mrb[0].mxu0
  %v5629 = vadd.f32 %v5401, %v5628
  %v5630 = vpop.f32.mrb[0].mxu0
  %5631 = vmatprep.mubr.f32.mxu0 %v4923
  %5632 = vmatmul.mubr.f32.gmra.mrb[0].mxu0 %v4922
  %v5633 = vpop.f32.mrb[0].mxu0
  %v5634 = vadd.f32 %v5401, %v5633
  %v5635 = vpop.f32.mrb[0].mxu0
  %5636 = vmatprep.mubr.f32.mxu0 %v4925
  %5637 = vmatmul.mubr.f32.gmra.mrb[0].mxu0 %v4924
  %v5638 = vpop.f32.mrb[0].mxu0
  %v5639 = vadd.f32 %v5401, %v5638
  %v5640 = vpop.f32.mrb[0].mxu0
  %5641 = vmatprep.mubr.f32.mxu0 %v4927
  %5642 = vmatmul.mubr.f32.gmra.mrb[0].mxu0 %v4926
  %v5643 = vpop.f32.mrb[0].mxu0
  %v5644 = vadd.f32 %v5401, %v5643
  %v5645 = vpop.f32.mrb[0].mxu0
  %5646 = vmatprep.mubr.f32.mxu0 %v4929
  %5647 = vmatmul.mubr.f32.gmra.mrb[0].mxu0 %v4928
  %v5648 = vpop.f32.mrb[0].mxu0
  %v5649 = vadd.f32 %v5401, %v5648
  %v5650 = vpop.f32.mrb[0].mxu0
  %5651 = vmatprep.mubr.f32.mxu0 %v4931
  %5652 = vmatmul.mubr.f32.gmra.mrb[0].mxu0 %v4930
  %v5653 = vpop.f32.mrb[0].mxu0
  %v5654 = vadd.f32 %v5401, %v5653
  %v5655 = vpop.f32.mrb[0].mxu0
  %5656 = vmatprep.mubr.f32.mxu0 %v4933
  %5657 = vmatmul.mubr.f32.gmra.mrb[0].mxu0 %v4932
  %v5658 = vpop.f32.mrb[0].mxu0
  %v5659 = vadd.f32 %v5401, %v5658
  %v5660 = vpop.f32.mrb[0].mxu0
  %5661 = vmatprep.mubr.f32.mxu0 %v4935
  %5662 = vmatmul.mubr.f32.gmra.mrb[0].mxu0 %v4934
  %v5663 = vpop.f32.mrb[0].mxu0
  %v5664 = vadd.f32 %v5401, %v5663
  %v5665 = vpop.f32.mrb[0].mxu0
  %5666 = vmatprep.mubr.f32.mxu0 %v4937
  %5667 = vmatmul.mubr.f32.gmra.mrb[0].mxu0 %v4936
  %v5668 = vpop.f32.mrb[0].mxu0
  %v5669 = vadd.f32 %v5401, %v5668
  %v5670 = vpop.f32.mrb[0].mxu0
  %5671 = vmatprep.mubr.f32.mxu0 %v4939
  %5672 = vmatmul.mubr.f32.gmra.mrb[0].mxu0 %v4938
  %v5673 = vpop.f32.mrb[0].mxu0
  %v5674 = vadd.f32 %v5401, %v5673
  %v5675 = vpop.f32.mrb[0].mxu0
  %5676 = vmatprep.mubr.f32.mxu0 %v4941
  %5677 = vmatmul.mubr.f32.gmra.mrb[0].mxu0 %v4940
  %v5678 = vpop.f32.mrb[0].mxu0
  %v5679 = vadd.f32 %v5401, %v5678
  %v5680 = vpop.f32.mrb[0].mxu0
  %5681 = vmatprep.mubr.f32.mxu0 %v4943
  %5682 = vmatmul.mubr.f32.gmra.mrb[0].mxu0 %v4942
  %v5683 = vpop.f32.mrb[0].mxu0
  %v5684 = vadd.f32 %v5401, %v5683
  %v5685 = vpop.f32.mrb[0].mxu0
  %5686 = vmatprep.mubr.f32.mxu0 %v4945
  %5687 = vmatmul.mubr.f32.gmra.mrb[0].mxu0 %v4944
  %v5688 = vpop.f32.mrb[0].mxu0
  %v5689 = vadd.f32 %v5401, %v5688
  %v5690 = vpop.f32.mrb[0].mxu0
  %5691 = vmatprep.mubr.f32.mxu0 %v4947
  %5692 = vmatmul.mubr.f32.gmra.mrb[0].mxu0 %v4946
  %v5693 = vpop.f32.mrb[0].mxu0
  %v5694 = vadd.f32 %v5401, %v5693
  %v5695 = vpop.f32.mrb[0].mxu0
  %5696 = vmatprep.mubr.f32.mxu0 %v4949
  %5697 = vmatmul.mubr.f32.gmra.mrb[0].mxu0 %v4948
  %v5698 = vpop.f32.mrb[0].mxu0
  %v5699 = vadd.f32 %v5401, %v5698
  %v5700 = vpop.f32.mrb[0].mxu0
  %5701 = vmatprep.mubr.f32.mxu0 %v4951
  %5702 = vmatmul.mubr.f32.gmra.mrb[0].mxu0 %v4950
  %v5703 = vpop.f32.mrb[0].mxu0
  %v5704 = vadd.f32 %v5401, %v5703
  %v5705 = vpop.f32.mrb[0].mxu0
  %5706 = vmatprep.mubr.f32.mxu0 %v4953
  %5707 = vmatmul.mubr.f32.gmra.mrb[0].mxu0 %v4952
  %v5708 = vpop.f32.mrb[0].mxu0
  %v5709 = vadd.f32 %v5401, %v5708
  %v5710 = vpop.f32.mrb[0].mxu0
  %5711 = vmatprep.mubr.f32.mxu0 %v4955
  %5712 = vmatmul.mubr.f32.gmra.mrb[0].mxu0 %v4954
  %v5713 = vpop.f32.mrb[0].mxu0
  %v5714 = vadd.f32 %v5401, %v5713
  %v5715 = vpop.f32.mrb[0].mxu0
  %5716 = vmatprep.mubr.f32.mxu0 %v4957
  %5717 = vmatmul.mubr.f32.gmra.mrb[0].mxu0 %v4956
  %v5718 = vpop.f32.mrb[0].mxu0
  %v5719 = vadd.f32 %v5401, %v5718
  %v5720 = vpop.f32.mrb[0].mxu0
  %5721 = vmatprep.mubr.f32.mxu0 %v4959
  %5722 = vmatmul.mubr.f32.gmra.mrb[0].mxu0 %v4958
  %v5723 = vpop.f32.mrb[0].mxu0
  %v5724 = vadd.f32 %v5401, %v5723
  %v5725 = vpop.f32.mrb[0].mxu0
  %5726 = vmatprep.mubr.f32.mxu0 %v4961
  %5727 = vmatmul.mubr.f32.gmra.mrb[0].mxu0 %v4960
  %v5728 = vpop.f32.mrb[0].mxu0
  %v5729 = vadd.f32 %v5401, %v5728
  %v5730 = vpop.f32.mrb[0].mxu0
  %5731 = vmatprep.mubr.f32.mxu0 %v4963
  %5732 = vmatmul.mubr.f32.gmra.mrb[0].mxu0 %v4962
  %v5733 = vpop.f32.mrb[0].mxu0
  %v5734 = vadd.f32 %v5401, %v5733
  %v5735 = vpop.f32.mrb[0].mxu0
  %5736 = vmatprep.mubr.f32.mxu0 %v4965
  %5737 = vmatmul.mubr.f32.gmra.mrb[0].mxu0 %v4964
  %v5738 = vpop.f32.mrb[0].mxu0
  %v5739 = vadd.f32 %v5401, %v5738
  %v5740 = vpop.f32.mrb[0].mxu0
  %5741 = vmatprep.mubr.f32.mxu0 %v4967
  %5742 = vmatmul.mubr.f32.gmra.mrb[0].mxu0 %v4966
  %v5743 = vpop.f32.mrb[0].mxu0
  %v5744 = vadd.f32 %v5401, %v5743
  %v5745 = vpop.f32.mrb[0].mxu0
  %5746 = vmatprep.mubr.f32.mxu0 %v4969
  %5747 = vmatmul.mubr.f32.gmra.mrb[0].mxu0 %v4968
  %v5748 = vpop.f32.mrb[0].mxu0
  %v5749 = vadd.f32 %v5401, %v5748
  %v5750 = vpop.f32.mrb[0].mxu0
  %5751 = vmatprep.mubr.f32.mxu0 %v4971
  %5752 = vmatmul.mubr.f32.gmra.mrb[0].mxu0 %v4970
  %v5753 = vpop.f32.mrb[0].mxu0
  %v5754 = vadd.f32 %v5401, %v5753
  %v5755 = vpop.f32.mrb[0].mxu0
  %5756 = vmatprep.mubr.f32.mxu0 %v4973
  %5757 = vmatmul.mubr.f32.gmra.mrb[0].mxu0 %v4972
  %v5758 = vpop.f32.mrb[0].mxu0
  %v5759 = vadd.f32 %v5401, %v5758
  %v5760 = vpop.f32.mrb[0].mxu0
  %5761 = vmatprep.mubr.f32.mxu0 %v4975
  %5762 = vmatmul.mubr.f32.gmra.mrb[0].mxu0 %v4974
  %v5763 = vpop.f32.mrb[0].mxu0
  %v5764 = vadd.f32 %v5401, %v5763
  %v5765 = vpop.f32.mrb[0].mxu0
  %5766 = vmatprep.mubr.f32.mxu0 %v4977
  %5767 = vmatmul.mubr.f32.gmra.mrb[0].mxu0 %v4976
  %v5768 = vpop.f32.mrb[0].mxu0
  %v5769 = vadd.f32 %v5401, %v5768
  %v5770 = vpop.f32.mrb[0].mxu0
  %5771 = vmatprep.mubr.f32.mxu0 %v4979
  %5772 = vmatmul.mubr.f32.gmra.mrb[0].mxu0 %v4978
  %v5773 = vpop.f32.mrb[0].mxu0
  %v5774 = vadd.f32 %v5401, %v5773
  %v5775 = vpop.f32.mrb[0].mxu0
  %5776 = vmatprep.mubr.f32.mxu0 %v4981
  %5777 = vmatmul.mubr.f32.gmra.mrb[0].mxu0 %v4980
  %v5778 = vpop.f32.mrb[0].mxu0
  %v5779 = vadd.f32 %v5401, %v5778
  %v5780 = vpop.f32.mrb[0].mxu0
  %5781 = vmatprep.mubr.f32.mxu0 %v4983
  %5782 = vmatmul.mubr.f32.gmra.mrb[0].mxu0 %v4982
  %v5783 = vpop.f32.mrb[0].mxu0
  %v5784 = vadd.f32 %v5401, %v5783
  %v5785 = vpop.f32.mrb[0].mxu0
  %5786 = vmatprep.mubr.f32.mxu0 %v4985
  %5787 = vmatmul.mubr.f32.gmra.mrb[0].mxu0 %v4984
  %v5788 = vpop.f32.mrb[0].mxu0
  %v5789 = vadd.f32 %v5401, %v5788
  %v5790 = vpop.f32.mrb[0].mxu0
  %5791 = vmatprep.mubr.f32.mxu0 %v4987
  %5792 = vmatmul.mubr.f32.gmra.mrb[0].mxu0 %v4986
  %v5793 = vpop.f32.mrb[0].mxu0
  %v5794 = vadd.f32 %v5401, %v5793
  %v5795 = vpop.f32.mrb[0].mxu0
  %5796 = vmatprep.mubr.f32.mxu0 %v4989
  %5797 = vmatmul.mubr.f32.gmra.mrb[0].mxu0 %v4988
  %v5798 = vpop.f32.mrb[0].mxu0
  %v5799 = vadd.f32 %v5401, %v5798
  %v5800 = vpop.f32.mrb[0].mxu0
  %5801 = vmatprep.mubr.f32.mxu0 %v4991
  %5802 = vmatmul.mubr.f32.gmra.mrb[0].mxu0 %v4990
  %v5803 = vpop.f32.mrb[0].mxu0
  %v5804 = vadd.f32 %v5401, %v5803
  %v5805 = vpop.f32.mrb[0].mxu0
  %5806 = vmatprep.mubr.f32.mxu0 %v4993
  %5807 = vmatmul.mubr.f32.gmra.mrb[0].mxu0 %v4992
  %v5808 = vpop.f32.mrb[0].mxu0
  %v5809 = vadd.f32 %v5401, %v5808
  %v5810 = vpop.f32.mrb[0].mxu0
  %5811 = vmatprep.mubr.f32.mxu0 %v4995
  %5812 = vmatmul.mubr.f32.gmra.mrb[0].mxu0 %v4994
  %v5813 = vpop.f32.mrb[0].mxu0
  %v5814 = vadd.f32 %v5401, %v5813
  %v5815 = vpop.f32.mrb[0].mxu0
  %5816 = vmatprep.mubr.f32.mxu0 %v4997
  %5817 = vmatmul.mubr.f32.gmra.mrb[0].mxu0 %v4996
  %v5818 = vpop.f32.mrb[0].mxu0
  %v5819 = vadd.f32 %v5401, %v5818
  %v5820 = vpop.f32.mrb[0].mxu0
  %5821 = vmatprep.mubr.f32.mxu0 %v4999
  %5822 = vmatmul.mubr.f32.gmra.mrb[0].mxu0 %v4998
  %v5823 = vpop.f32.mrb[0].mxu0
  %v5824 = vadd.f32 %v5401, %v5823
  %v5825 = vpop.f32.mrb[0].mxu0
  %5826 = vmatprep.mubr.f32.mxu0 %v5001
  %5827 = vmatmul.mubr.f32.gmra.mrb[0].mxu0 %v5000
  %v5828 = vpop.f32.mrb[0].mxu0
  %v5829 = vadd.f32 %v5401, %v5828
  %v5830 = vpop.f32.mrb[0].mxu0
  %5831 = vmatprep.mubr.f32.mxu0 %v5003
  %5832 = vmatmul.mubr.f32.gmra.mrb[0].mxu0 %v5002
  %v5833 = vpop.f32.mrb[0].mxu0
  %v5834 = vadd.f32 %v5401, %v5833
  %v5835 = vpop.f32.mrb[0].mxu0
  %5836 = vmatprep.mubr.f32.mxu0 %v5005
  %5837 = vmatmul.mubr.f32.gmra.mrb[0].mxu0 %v5004
  %v5838 = vpop.f32.mrb[0].mxu0
  %v5839 = vadd.f32 %v5401, %v5838
  %v5840 = vpop.f32.mrb[0].mxu0
  %5841 = vmatprep.mubr.f32.mxu0 %v5007
  %5842 = vmatmul.mubr.f32.gmra.mrb[0].mxu0 %v5006
  %v5843 = vpop.f32.mrb[0].mxu0
  %v5844 = vadd.f32 %v5401, %v5843
  %v5845 = vpop.f32.mrb[0].mxu0
  %5846 = vmatprep.mubr.f32.mxu0 %v5009
  %5847 = vmatmul.mubr.f32.gmra.mrb[0].mxu0 %v5008
  %v5848 = vpop.f32.mrb[0].mxu0
  %v5849 = vadd.f32 %v5401, %v5848
  %v5850 = vpop.f32.mrb[0].mxu0
  %5851 = vmatprep.mubr.f32.mxu0 %v5011
  %5852 = vmatmul.mubr.f32.gmra.mrb[0].mxu0 %v5010
  %v5853 = vpop.f32.mrb[0].mxu0
  %v5854 = vadd.f32 %v5401, %v5853
  %v5855 = vpop.f32.mrb[0].mxu0
  %5856 = vmatprep.mubr.f32.mxu0 %v5013
  %5857 = vmatmul.mubr.f32.gmra.mrb[0].mxu0 %v5012
  %v5858 = vpop.f32.mrb[0].mxu0
  %v5859 = vadd.f32 %v5401, %v5858
  %v5860 = vpop.f32.mrb[0].mxu0
  %5861 = vmatprep.mubr.f32.mxu0 %v5015
  %5862 = vmatmul.mubr.f32.gmra.mrb[0].mxu0 %v5014
  %v5863 = vpop.f32.mrb[0].mxu0
  %v5864 = vadd.f32 %v5401, %v5863
  %v5865 = vpop.f32.mrb[0].mxu0
  %5866 = vmatprep.mubr.f32.mxu0 %v5017
  %5867 = vmatmul.mubr.f32.gmra.mrb[0].mxu0 %v5016
  %v5868 = vpop.f32.mrb[0].mxu0
  %v5869 = vadd.f32 %v5401, %v5868
  %v5870 = vpop.f32.mrb[0].mxu0
  %5871 = vmatprep.mubr.f32.mxu0 %v5019
  %5872 = vmatmul.mubr.f32.gmra.mrb[0].mxu0 %v5018
  %v5873 = vpop.f32.mrb[0].mxu0
  %v5874 = vadd.f32 %v5401, %v5873
  %v5875 = vpop.f32.mrb[0].mxu0
  %5876 = vmatprep.mubr.f32.mxu0 %v5021
  %5877 = vmatmul.mubr.f32.gmra.mrb[0].mxu0 %v5020
  %v5878 = vpop.f32.mrb[0].mxu0
  %v5879 = vadd.f32 %v5401, %v5878
  %v5880 = vpop.f32.mrb[0].mxu0
  %5881 = vmatprep.mubr.f32.mxu0 %v5023
  %5882 = vmatmul.mubr.f32.gmra.mrb[0].mxu0 %v5022
  %v5883 = vpop.f32.mrb[0].mxu0
  %v5884 = vadd.f32 %v5401, %v5883
  %v5885 = vpop.f32.mrb[0].mxu0
  %5886 = vmatprep.mubr.f32.mxu0 %v5025
  %5887 = vmatmul.mubr.f32.gmra.mrb[0].mxu0 %v5024
  %v5888 = vpop.f32.mrb[0].mxu0
  %v5889 = vadd.f32 %v5401, %v5888
  %v5890 = vpop.f32.mrb[0].mxu0
  %5891 = vmatprep.mubr.f32.mxu0 %v5027
  %5892 = vmatmul.mubr.f32.gmra.mrb[0].mxu0 %v5026
  %v5893 = vpop.f32.mrb[0].mxu0
  %v5894 = vadd.f32 %v5401, %v5893
  %v5895 = vpop.f32.mrb[0].mxu0
  %5896 = vmatprep.mubr.f32.mxu0 %v5029
  %5897 = vmatmul.mubr.f32.gmra.mrb[0].mxu0 %v5028
  %v5898 = vpop.f32.mrb[0].mxu0
  %v5899 = vadd.f32 %v5401, %v5898
  %v5900 = vpop.f32.mrb[0].mxu0
  %5901 = vmatprep.mubr.f32.mxu0 %v5031
  %5902 = vmatmul.mubr.f32.gmra.mrb[0].mxu0 %v5030
  %v5903 = vpop.f32.mrb[0].mxu0
  %v5904 = vadd.f32 %v5401, %v5903
  %v5905 = vpop.f32.mrb[0].mxu0
  %5906 = vmatprep.mubr.f32.mxu0 %v5033
  %5907 = vmatmul.mubr.f32.gmra.mrb[0].mxu0 %v5032
  %v5908 = vpop.f32.mrb[0].mxu0
  %v5909 = vadd.f32 %v5401, %v5908
  %v5910 = vpop.f32.mrb[0].mxu0
  %5911 = vmatprep.mubr.f32.mxu0 %v5035
  %5912 = vmatmul.mubr.f32.gmra.mrb[0].mxu0 %v5034
  %v5913 = vpop.f32.mrb[0].mxu0
  %v5914 = vadd.f32 %v5401, %v5913
  %v5915 = vpop.f32.mrb[0].mxu0
  %5916 = vmatprep.mubr.f32.mxu0 %v5037
  %5917 = vmatmul.mubr.f32.gmra.mrb[0].mxu0 %v5036
  %v5918 = vpop.f32.mrb[0].mxu0
  %v5919 = vadd.f32 %v5401, %v5918
  %v5920 = vpop.f32.mrb[0].mxu0
  %5921 = vmatprep.mubr.f32.mxu0 %v5039
  %5922 = vmatmul.mubr.f32.gmra.mrb[0].mxu0 %v5038
  %v5923 = vpop.f32.mrb[0].mxu0
  %v5924 = vadd.f32 %v5401, %v5923
  %v5925 = vpop.f32.mrb[0].mxu0
  %5926 = vmatprep.mubr.f32.mxu0 %v5041
  %5927 = vmatmul.mubr.f32.gmra.mrb[0].mxu0 %v5040
  %v5928 = vpop.f32.mrb[0].mxu0
  %v5929 = vadd.f32 %v5401, %v5928
  %v5930 = vpop.f32.mrb[0].mxu0
  %5931 = vmatprep.mubr.f32.mxu0 %v5043
  %5932 = vmatmul.mubr.f32.gmra.mrb[0].mxu0 %v5042
  %v5933 = vpop.f32.mrb[0].mxu0
  %v5934 = vadd.f32 %v5401, %v5933
  %v5935 = vpop.f32.mrb[0].mxu0
  %5936 = vmatprep.mubr.f32.mxu0 %v5045
  %5937 = vmatmul.mubr.f32.gmra.mrb[0].mxu0 %v5044
  %v5938 = vpop.f32.mrb[0].mxu0
  %v5939 = vadd.f32 %v5401, %v5938
  %v5940 = vpop.f32.mrb[0].mxu0
  %5941 = vmatprep.mubr.f32.mxu0 %v5047
  %5942 = vmatmul.mubr.f32.gmra.mrb[0].mxu0 %v5046
  %v5943 = vpop.f32.mrb[0].mxu0
  %v5944 = vadd.f32 %v5401, %v5943
  %v5945 = vpop.f32.mrb[0].mxu0
  %5946 = vmatprep.mubr.f32.mxu0 %v5049
  %5947 = vmatmul.mubr.f32.gmra.mrb[0].mxu0 %v5048
  %v5948 = vpop.f32.mrb[0].mxu0
  %v5949 = vadd.f32 %v5401, %v5948
  %v5950 = vpop.f32.mrb[0].mxu0
  %5951 = vmatprep.mubr.f32.mxu0 %v5051
  %5952 = vmatmul.mubr.f32.gmra.mrb[0].mxu0 %v5050
  %v5953 = vpop.f32.mrb[0].mxu0
  %v5954 = vadd.f32 %v5401, %v5953
  %v5955 = vpop.f32.mrb[0].mxu0
  %5956 = vmatprep.mubr.f32.mxu0 %v5053
  %5957 = vmatmul.mubr.f32.gmra.mrb[0].mxu0 %v5052
  %v5958 = vpop.f32.mrb[0].mxu0
  %v5959 = vadd.f32 %v5401, %v5958
  %v5960 = vpop.f32.mrb[0].mxu0
  %5961 = vmatprep.mubr.f32.mxu0 %v5055
  %5962 = vmatmul.mubr.f32.gmra.mrb[0].mxu0 %v5054
  %v5963 = vpop.f32.mrb[0].mxu0
  %v5964 = vadd.f32 %v5401, %v5963
  %v5965 = vpop.f32.mrb[0].mxu0
  %5966 = vmatprep.mubr.f32.mxu0 %v5057
  %5967 = vmatmul.mubr.f32.gmra.mrb[0].mxu0 %v5056
  %v5968 = vpop.f32.mrb[0].mxu0
  %v5969 = vadd.f32 %v5401, %v5968
  %v5970 = vpop.f32.mrb[0].mxu0
  %5971 = vmatprep.mubr.f32.mxu0 %v5059
  %5972 = vmatmul.mubr.f32.gmra.mrb[0].mxu0 %v5058
  %v5973 = vpop.f32.mrb[0].mxu0
  %v5974 = vadd.f32 %v5401, %v5973
  %v5975 = vpop.f32.mrb[0].mxu0
  %5976 = vmatprep.mubr.f32.mxu0 %v5061
  %5977 = vmatmul.mubr.f32.gmra.mrb[0].mxu0 %v5060
  %v5978 = vpop.f32.mrb[0].mxu0
  %v5979 = vadd.f32 %v5401, %v5978
  %v5980 = vpop.f32.mrb[0].mxu0
  %5981 = vmatprep.mubr.f32.mxu0 %v5063
  %5982 = vmatmul.mubr.f32.gmra.mrb[0].mxu0 %v5062
  %v5983 = vpop.f32.mrb[0].mxu0
  %v5984 = vadd.f32 %v5401, %v5983
  %v5985 = vpop.f32.mrb[0].mxu0
  %5986 = vmatprep.mubr.f32.mxu0 %v5065
  %5987 = vmatmul.mubr.f32.gmra.mrb[0].mxu0 %v5064
  %v5988 = vpop.f32.mrb[0].mxu0
  %v5989 = vadd.f32 %v5401, %v5988
  %v5990 = vpop.f32.mrb[0].mxu0
  %5991 = vmatprep.mubr.f32.mxu0 %v5067
  %5992 = vmatmul.mubr.f32.gmra.mrb[0].mxu0 %v5066
  %v5993 = vpop.f32.mrb[0].mxu0
  %v5994 = vadd.f32 %v5401, %v5993
  %v5995 = vpop.f32.mrb[0].mxu0
  %5996 = vmatprep.mubr.f32.mxu0 %v5069
  %5997 = vmatmul.mubr.f32.gmra.mrb[0].mxu0 %v5068
  %v5998 = vpop.f32.mrb[0].mxu0
  %v5999 = vadd.f32 %v5401, %v5998
  %v6000 = vpop.f32.mrb[0].mxu0
  %6001 = vmatprep.mubr.f32.mxu0 %v5071
  %6002 = vmatmul.mubr.f32.gmra.mrb[0].mxu0 %v5070
  %v6003 = vpop.f32.mrb[0].mxu0
  %v6004 = vadd.f32 %v5401, %v6003
  %v6005 = vpop.f32.mrb[0].mxu0
  %6006 = vmatprep.mubr.f32.mxu0 %v5073
  %6007 = vmatmul.mubr.f32.gmra.mrb[0].mxu0 %v5072
  %v6008 = vpop.f32.mrb[0].mxu0
  %v6009 = vadd.f32 %v5401, %v6008
  %v6010 = vpop.f32.mrb[0].mxu0
  %6011 = vmatprep.mubr.f32.mxu0 %v5075
  %6012 = vmatmul.mubr.f32.gmra.mrb[0].mxu0 %v5074
  %v6013 = vpop.f32.mrb[0].mxu0
  %v6014 = vadd.f32 %v5401, %v6013
  %v6015 = vpop.f32.mrb[0].mxu0
  %6016 = vmatprep.mubr.f32.mxu0 %v5077
  %6017 = vmatmul.mubr.f32.gmra.mrb[0].mxu0 %v5076
  %v6018 = vpop.f32.mrb[0].mxu0
  %v6019 = vadd.f32 %v5401, %v6018
  %v6020 = vpop.f32.mrb[0].mxu0
  %6021 = vmatprep.mubr.f32.mxu0 %v5079
  %6022 = vmatmul.mubr.f32.gmra.mrb[0].mxu0 %v5078
  %v6023 = vpop.f32.mrb[0].mxu0
  %v6024 = vadd.f32 %v5401, %v6023
  %v6025 = vpop.f32.mrb[0].mxu0
  %6026 = vmatprep.mubr.f32.mxu0 %v5081
  %6027 = vmatmul.mubr.f32.gmra.mrb[0].mxu0 %v5080
  %v6028 = vpop.f32.mrb[0].mxu0
  %v6029 = vadd.f32 %v5401, %v6028
  %v6030 = vpop.f32.mrb[0].mxu0
  %6031 = vmatprep.mubr.f32.mxu0 %v5083
  %6032 = vmatmul.mubr.f32.gmra.mrb[0].mxu0 %v5082
  %v6033 = vpop.f32.mrb[0].mxu0
  %v6034 = vadd.f32 %v5401, %v6033
  %v6035 = vpop.f32.mrb[0].mxu0
  %6036 = vmatprep.mubr.f32.mxu0 %v5085
  %6037 = vmatmul.mubr.f32.gmra.mrb[0].mxu0 %v5084
  %v6038 = vpop.f32.mrb[0].mxu0
  %v6039 = vadd.f32 %v5401, %v6038
  %v6040 = vpop.f32.mrb[0].mxu0
  %6041 = vmatprep.mubr.f32.mxu0 %v5087
  %6042 = vmatmul.mubr.f32.gmra.mrb[0].mxu0 %v5086
  %v6043 = vpop.f32.mrb[0].mxu0
  %v6044 = vadd.f32 %v5401, %v6043
  %v6045 = vpop.f32.mrb[0].mxu0
  %6046 = vmatprep.mubr.f32.mxu0 %v5089
  %6047 = vmatmul.mubr.f32.gmra.mrb[0].mxu0 %v5088
  %v6048 = vpop.f32.mrb[0].mxu0
  %v6049 = vadd.f32 %v5401, %v6048
  %v6050 = vpop.f32.mrb[0].mxu0
  %6051 = vmatprep.mubr.f32.mxu0 %v5091
  %6052 = vmatmul.mubr.f32.gmra.mrb[0].mxu0 %v5090
  %v6053 = vpop.f32.mrb[0].mxu0
  %v6054 = vadd.f32 %v5401, %v6053
  %v6055 = vpop.f32.mrb[0].mxu0
  %6056 = vmatprep.mubr.f32.mxu0 %v5093
  %6057 = vmatmul.mubr.f32.gmra.mrb[0].mxu0 %v5092
  %v6058 = vpop.f32.mrb[0].mxu0
  %v6059 = vadd.f32 %v5401, %v6058
  %v6060 = vpop.f32.mrb[0].mxu0
  %6061 = vmatprep.mubr.f32.mxu0 %v5095
  %6062 = vmatmul.mubr.f32.gmra.mrb[0].mxu0 %v5094
  %v6063 = vpop.f32.mrb[0].mxu0
  %v6064 = vadd.f32 %v5401, %v6063
  %v6065 = vpop.f32.mrb[0].mxu0
  %6066 = vmatprep.mubr.f32.mxu0 %v5097
  %6067 = vmatmul.mubr.f32.gmra.mrb[0].mxu0 %v5096
  %v6068 = vpop.f32.mrb[0].mxu0
  %v6069 = vadd.f32 %v5401, %v6068
  %v6070 = vpop.f32.mrb[0].mxu0
  %6071 = vmatprep.mubr.f32.mxu0 %v5099
  %6072 = vmatmul.mubr.f32.gmra.mrb[0].mxu0 %v5098
  %v6073 = vpop.f32.mrb[0].mxu0
  %v6074 = vadd.f32 %v5401, %v6073
  %v6075 = vpop.f32.mrb[0].mxu0
  %6076 = vmatprep.mubr.f32.mxu0 %v5101
  %6077 = vmatmul.mubr.f32.gmra.mrb[0].mxu0 %v5100
  %v6078 = vpop.f32.mrb[0].mxu0
  %v6079 = vadd.f32 %v5401, %v6078
  %v6080 = vpop.f32.mrb[0].mxu0
  %6081 = vmatprep.mubr.f32.mxu0 %v5103
  %6082 = vmatmul.mubr.f32.gmra.mrb[0].mxu0 %v5102
  %v6083 = vpop.f32.mrb[0].mxu0
  %v6084 = vadd.f32 %v5401, %v6083
  %v6085 = vpop.f32.mrb[0].mxu0
  %6086 = vmatprep.mubr.f32.mxu0 %v5105
  %6087 = vmatmul.mubr.f32.gmra.mrb[0].mxu0 %v5104
  %v6088 = vpop.f32.mrb[0].mxu0
  %v6089 = vadd.f32 %v5401, %v6088
  %v6090 = vpop.f32.mrb[0].mxu0
  %6091 = vmatprep.mubr.f32.mxu0 %v5107
  %6092 = vmatmul.mubr.f32.gmra.mrb[0].mxu0 %v5106
  %v6093 = vpop.f32.mrb[0].mxu0
  %v6094 = vadd.f32 %v5401, %v6093
  %v6095 = vpop.f32.mrb[0].mxu0
  %6096 = vmatprep.mubr.f32.mxu0 %v5109
  %6097 = vmatmul.mubr.f32.gmra.mrb[0].mxu0 %v5108
  %v6098 = vpop.f32.mrb[0].mxu0
  %v6099 = vadd.f32 %v5401, %v6098
  %v6100 = vpop.f32.mrb[0].mxu0
  %6101 = vmatprep.mubr.f32.mxu0 %v5111
  %6102 = vmatmul.mubr.f32.gmra.mrb[0].mxu0 %v5110
  %v6103 = vpop.f32.mrb[0].mxu0
  %v6104 = vadd.f32 %v5401, %v6103
  %v6105 = vpop.f32.mrb[0].mxu0
  %6106 = vmatprep.mubr.f32.mxu0 %v5113
  %6107 = vmatmul.mubr.f32.gmra.mrb[0].mxu0 %v5112
  %v6108 = vpop.f32.mrb[0].mxu0
  %v6109 = vadd.f32 %v5401, %v6108
  %v6110 = vpop.f32.mrb[0].mxu0
  %6111 = vmatprep.mubr.f32.mxu0 %v5115
  %6112 = vmatmul.mubr.f32.gmra.mrb[0].mxu0 %v5114
  %v6113 = vpop.f32.mrb[0].mxu0
  %v6114 = vadd.f32 %v5401, %v6113
  %v6115 = vpop.f32.mrb[0].mxu0
  %6116 = vmatprep.mubr.f32.mxu0 %v5117
  %6117 = vmatmul.mubr.f32.gmra.mrb[0].mxu0 %v5116
  %v6118 = vpop.f32.mrb[0].mxu0
  %v6119 = vadd.f32 %v5401, %v6118
  %v6120 = vpop.f32.mrb[0].mxu0
  %6121 = vmatprep.mubr.f32.mxu0 %v5119
  %6122 = vmatmul.mubr.f32.gmra.mrb[0].mxu0 %v5118
  %v6123 = vpop.f32.mrb[0].mxu0
  %v6124 = vadd.f32 %v5401, %v6123
  %v6125 = vpop.f32.mrb[0].mxu0
  %6126 = vmatprep.mubr.f32.mxu0 %v5121
  %6127 = vmatmul.mubr.f32.gmra.mrb[0].mxu0 %v5120
  %v6128 = vpop.f32.mrb[0].mxu0
  %v6129 = vadd.f32 %v5401, %v6128
  %v6130 = vpop.f32.mrb[0].mxu0
  %6131 = vmatprep.mubr.f32.mxu0 %v5123
  %6132 = vmatmul.mubr.f32.gmra.mrb[0].mxu0 %v5122
  %v6133 = vpop.f32.mrb[0].mxu0
  %v6134 = vadd.f32 %v5401, %v6133
  %v6135 = vpop.f32.mrb[0].mxu0
  %6136 = vmatprep.mubr.f32.mxu0 %v5125
  %6137 = vmatmul.mubr.f32.gmra.mrb[0].mxu0 %v5124
  %v6138 = vpop.f32.mrb[0].mxu0
  %v6139 = vadd.f32 %v5401, %v6138
  %v6140 = vpop.f32.mrb[0].mxu0
  %6141 = vmatprep.mubr.f32.mxu0 %v5127
  %6142 = vmatmul.mubr.f32.gmra.mrb[0].mxu0 %v5126
  %v6143 = vpop.f32.mrb[0].mxu0
  %v6144 = vadd.f32 %v5401, %v6143
  %v6145 = vpop.f32.mrb[0].mxu0
  %6146 = vmatprep.mubr.f32.mxu0 %v5129
  %6147 = vmatmul.mubr.f32.gmra.mrb[0].mxu0 %v5128
  %v6148 = vpop.f32.mrb[0].mxu0
  %v6149 = vadd.f32 %v5401, %v6148
  %v6150 = vpop.f32.mrb[0].mxu0
  %6151 = vmatprep.mubr.f32.mxu0 %v5131
  %6152 = vmatmul.mubr.f32.gmra.mrb[0].mxu0 %v5130
  %v6153 = vpop.f32.mrb[0].mxu0
  %v6154 = vadd.f32 %v5401, %v6153
  %v6155 = vpop.f32.mrb[0].mxu0
  %6156 = vmatprep.mubr.f32.mxu0 %v5133
  %6157 = vmatmul.mubr.f32.gmra.mrb[0].mxu0 %v5132
  %v6158 = vpop.f32.mrb[0].mxu0
  %v6159 = vadd.f32 %v5401, %v6158
  %v6160 = vpop.f32.mrb[0].mxu0
  %6161 = vmatprep.mubr.f32.mxu0 %v5135
  %6162 = vmatmul.mubr.f32.gmra.mrb[0].mxu0 %v5134
  %v6163 = vpop.f32.mrb[0].mxu0
  %v6164 = vadd.f32 %v5401, %v6163
  %v6165 = vpop.f32.mrb[0].mxu0
  %6166 = vmatprep.mubr.f32.mxu0 %v5137
  %6167 = vmatmul.mubr.f32.gmra.mrb[0].mxu0 %v5136
  %v6168 = vpop.f32.mrb[0].mxu0
  %v6169 = vadd.f32 %v5401, %v6168
  %v6170 = vpop.f32.mrb[0].mxu0
  %6171 = vmatprep.mubr.f32.mxu0 %v5139
  %6172 = vmatmul.mubr.f32.gmra.mrb[0].mxu0 %v5138
  %v6173 = vpop.f32.mrb[0].mxu0
  %v6174 = vadd.f32 %v5401, %v6173
  %v6175 = vpop.f32.mrb[0].mxu0
  %6176 = vmatprep.mubr.f32.mxu0 %v5141
  %6177 = vmatmul.mubr.f32.gmra.mrb[0].mxu0 %v5140
  %v6178 = vpop.f32.mrb[0].mxu0
  %v6179 = vadd.f32 %v5401, %v6178
  %v6180 = vpop.f32.mrb[0].mxu0
  %6181 = vmatprep.mubr.f32.mxu0 %v5143
  %6182 = vmatmul.mubr.f32.gmra.mrb[0].mxu0 %v5142
  %v6183 = vpop.f32.mrb[0].mxu0
  %v6184 = vadd.f32 %v5401, %v6183
  %v6185 = vpop.f32.mrb[0].mxu0
  %6186 = vmatprep.mubr.f32.mxu0 %v5145
  %6187 = vmatmul.mubr.f32.gmra.mrb[0].mxu0 %v5144
  %v6188 = vpop.f32.mrb[0].mxu0
  %v6189 = vadd.f32 %v5401, %v6188
  %v6190 = vpop.f32.mrb[0].mxu0
  %6191 = vmatprep.mubr.f32.mxu0 %v5147
  %6192 = vmatmul.mubr.f32.gmra.mrb[0].mxu0 %v5146
  %v6193 = vpop.f32.mrb[0].mxu0
  %v6194 = vadd.f32 %v5401, %v6193
  %v6195 = vpop.f32.mrb[0].mxu0
  %6196 = vmatprep.mubr.f32.mxu0 %v5149
  %6197 = vmatmul.mubr.f32.gmra.mrb[0].mxu0 %v5148
  %v6198 = vpop.f32.mrb[0].mxu0
  %v6199 = vadd.f32 %v5401, %v6198
  %v6200 = vpop.f32.mrb[0].mxu0
  %6201 = vmatprep.mubr.f32.mxu0 %v5151
  %6202 = vmatmul.mubr.f32.gmra.mrb[0].mxu0 %v5150
  %v6203 = vpop.f32.mrb[0].mxu0
  %v6204 = vadd.f32 %v5401, %v6203
  %v6205 = vpop.f32.mrb[0].mxu0
  %6206 = vmatprep.mubr.f32.mxu0 %v5153
  %6207 = vmatmul.mubr.f32.gmra.mrb[0].mxu0 %v5152
  %v6208 = vpop.f32.mrb[0].mxu0
  %v6209 = vadd.f32 %v5401, %v6208
  %v6210 = vpop.f32.mrb[0].mxu0
  %6211 = vmatprep.mubr.f32.mxu0 %v5155
  %6212 = vmatmul.mubr.f32.gmra.mrb[0].mxu0 %v5154
  %v6213 = vpop.f32.mrb[0].mxu0
  %v6214 = vadd.f32 %v5401, %v6213
  %v6215 = vpop.f32.mrb[0].mxu0
  %6216 = vmatprep.mubr.f32.mxu0 %v5157
  %6217 = vmatmul.mubr.f32.gmra.mrb[0].mxu0 %v5156
  %v6218 = vpop.f32.mrb[0].mxu0
  %v6219 = vadd.f32 %v5401, %v6218
  %v6220 = vpop.f32.mrb[0].mxu0
  %6221 = vmatprep.mubr.f32.mxu0 %v5159
  %6222 = vmatmul.mubr.f32.gmra.mrb[0].mxu0 %v5158
  %v6223 = vpop.f32.mrb[0].mxu0
  %v6224 = vadd.f32 %v5401, %v6223
  %v6225 = vpop.f32.mrb[0].mxu0
  %6226 = vmatprep.mubr.f32.mxu0 %v5161
  %6227 = vmatmul.mubr.f32.gmra.mrb[0].mxu0 %v5160
  %v6228 = vpop.f32.mrb[0].mxu0
  %v6229 = vadd.f32 %v5401, %v6228
  %v6230 = vpop.f32.mrb[0].mxu0
  %6231 = vmatprep.mubr.f32.mxu0 %v5163
  %6232 = vmatmul.mubr.f32.gmra.mrb[0].mxu0 %v5162
  %v6233 = vpop.f32.mrb[0].mxu0
  %v6234 = vadd.f32 %v5401, %v6233
  %v6235 = vpop.f32.mrb[0].mxu0
  %6236 = vmatprep.mubr.f32.mxu0 %v5165
  %6237 = vmatmul.mubr.f32.gmra.mrb[0].mxu0 %v5164
  %v6238 = vpop.f32.mrb[0].mxu0
  %v6239 = vadd.f32 %v5401, %v6238
  %v6240 = vpop.f32.mrb[0].mxu0
  %6241 = vmatprep.mubr.f32.mxu0 %v5167
  %6242 = vmatmul.mubr.f32.gmra.mrb[0].mxu0 %v5166
  %v6243 = vpop.f32.mrb[0].mxu0
  %v6244 = vadd.f32 %v5401, %v6243
  %v6245 = vpop.f32.mrb[0].mxu0
  %6246 = vmatprep.mubr.f32.mxu0 %v5169
  %6247 = vmatmul.mubr.f32.gmra.mrb[0].mxu0 %v5168
  %v6248 = vpop.f32.mrb[0].mxu0
  %v6249 = vadd.f32 %v5401, %v6248
  %v6250 = vpop.f32.mrb[0].mxu0
  %6251 = vmatprep.mubr.f32.mxu0 %v5171
  %6252 = vmatmul.mubr.f32.gmra.mrb[0].mxu0 %v5170
  %v6253 = vpop.f32.mrb[0].mxu0
  %v6254 = vadd.f32 %v5401, %v6253
  %v6255 = vpop.f32.mrb[0].mxu0
  %6256 = vmatprep.mubr.f32.mxu0 %v5173
  %6257 = vmatmul.mubr.f32.gmra.mrb[0].mxu0 %v5172
  %v6258 = vpop.f32.mrb[0].mxu0
  %v6259 = vadd.f32 %v5401, %v6258
  %v6260 = vpop.f32.mrb[0].mxu0
  %6261 = vmatprep.mubr.f32.mxu0 %v5175
  %6262 = vmatmul.mubr.f32.gmra.mrb[0].mxu0 %v5174
  %v6263 = vpop.f32.mrb[0].mxu0
  %v6264 = vadd.f32 %v5401, %v6263
  %v6265 = vpop.f32.mrb[0].mxu0
  %6266 = vmatprep.mubr.f32.mxu0 %v5177
  %6267 = vmatmul.mubr.f32.gmra.mrb[0].mxu0 %v5176
  %v6268 = vpop.f32.mrb[0].mxu0
  %v6269 = vadd.f32 %v5401, %v6268
  %v6270 = vpop.f32.mrb[0].mxu0
  %6271 = vmatprep.mubr.f32.mxu0 %v5179
  %6272 = vmatmul.mubr.f32.gmra.mrb[0].mxu0 %v5178
  %v6273 = vpop.f32.mrb[0].mxu0
  %v6274 = vadd.f32 %v5401, %v6273
  %v6275 = vpop.f32.mrb[0].mxu0
  %6276 = vmatprep.mubr.f32.mxu0 %v5181
  %6277 = vmatmul.mubr.f32.gmra.mrb[0].mxu0 %v5180
  %v6278 = vpop.f32.mrb[0].mxu0
  %v6279 = vadd.f32 %v5401, %v6278
  %v6280 = vpop.f32.mrb[0].mxu0
  %6281 = vmatprep.mubr.f32.mxu0 %v5183
  %6282 = vmatmul.mubr.f32.gmra.mrb[0].mxu0 %v5182
  %v6283 = vpop.f32.mrb[0].mxu0
  %v6284 = vadd.f32 %v5401, %v6283
  %v6285 = vpop.f32.mrb[0].mxu0
  %6286 = vmatprep.mubr.f32.mxu0 %v5185
  %6287 = vmatmul.mubr.f32.gmra.mrb[0].mxu0 %v5184
  %v6288 = vpop.f32.mrb[0].mxu0
  %v6289 = vadd.f32 %v5401, %v6288
  %v6290 = vpop.f32.mrb[0].mxu0
  %6291 = vmatprep.mubr.f32.mxu0 %v5187
  %6292 = vmatmul.mubr.f32.gmra.mrb[0].mxu0 %v5186
  %v6293 = vpop.f32.mrb[0].mxu0
  %v6294 = vadd.f32 %v5401, %v6293
  %v6295 = vpop.f32.mrb[0].mxu0
  %6296 = vmatprep.mubr.f32.mxu0 %v5189
  %6297 = vmatmul.mubr.f32.gmra.mrb[0].mxu0 %v5188
  %v6298 = vpop.f32.mrb[0].mxu0
  %v6299 = vadd.f32 %v5401, %v6298
  %v6300 = vpop.f32.mrb[0].mxu0
  %6301 = vmatprep.mubr.f32.mxu0 %v5191
  %6302 = vmatmul.mubr.f32.gmra.mrb[0].mxu0 %v5190
  %v6303 = vpop.f32.mrb[0].mxu0
  %v6304 = vadd.f32 %v5401, %v6303
  %v6305 = vpop.f32.mrb[0].mxu0
  %6306 = vmatprep.mubr.f32.mxu0 %v5193
  %6307 = vmatmul.mubr.f32.gmra.mrb[0].mxu0 %v5192
  %v6308 = vpop.f32.mrb[0].mxu0
  %v6309 = vadd.f32 %v5401, %v6308
  %v6310 = vpop.f32.mrb[0].mxu0
  %6311 = vmatprep.mubr.f32.mxu0 %v5195
  %6312 = vmatmul.mubr.f32.gmra.mrb[0].mxu0 %v5194
  %v6313 = vpop.f32.mrb[0].mxu0
  %v6314 = vadd.f32 %v5401, %v6313
  %v6315 = vpop.f32.mrb[0].mxu0
  %6316 = vmatprep.mubr.f32.mxu0 %v5197
  %6317 = vmatmul.mubr.f32.gmra.mrb[0].mxu0 %v5196
  %v6318 = vpop.f32.mrb[0].mxu0
  %v6319 = vadd.f32 %v5401, %v6318
  %v6320 = vpop.f32.mrb[0].mxu0
  %6321 = vmatprep.mubr.f32.mxu0 %v5199
  %6322 = vmatmul.mubr.f32.gmra.mrb[0].mxu0 %v5198
  %v6323 = vpop.f32.mrb[0].mxu0
  %v6324 = vadd.f32 %v5401, %v6323
  %v6325 = vpop.f32.mrb[0].mxu0
  %6326 = vmatprep.mubr.f32.mxu0 %v5201
  %6327 = vmatmul.mubr.f32.gmra.mrb[0].mxu0 %v5200
  %v6328 = vpop.f32.mrb[0].mxu0
  %v6329 = vadd.f32 %v5401, %v6328
  %v6330 = vpop.f32.mrb[0].mxu0
  %6331 = vmatprep.mubr.f32.mxu0 %v5203
  %6332 = vmatmul.mubr.f32.gmra.mrb[0].mxu0 %v5202
  %v6333 = vpop.f32.mrb[0].mxu0
  %v6334 = vadd.f32 %v5401, %v6333
  %v6335 = vpop.f32.mrb[0].mxu0
  %6336 = vmatprep.mubr.f32.mxu0 %v5205
  %6337 = vmatmul.mubr.f32.gmra.mrb[0].mxu0 %v5204
  %v6338 = vpop.f32.mrb[0].mxu0
  %v6339 = vadd.f32 %v5401, %v6338
  %v6340 = vpop.f32.mrb[0].mxu0
  %6341 = vmatprep.mubr.f32.mxu0 %v5207
  %6342 = vmatmul.mubr.f32.gmra.mrb[0].mxu0 %v5206
  %v6343 = vpop.f32.mrb[0].mxu0
  %v6344 = vadd.f32 %v5401, %v6343
  %v6345 = vpop.f32.mrb[0].mxu0
  %6346 = vmatprep.mubr.f32.mxu0 %v5209
  %6347 = vmatmul.mubr.f32.gmra.mrb[0].mxu0 %v5208
  %v6348 = vpop.f32.mrb[0].mxu0
  %v6349 = vadd.f32 %v5401, %v6348
  %v6350 = vpop.f32.mrb[0].mxu0
  %6351 = vmatprep.mubr.f32.mxu0 %v5211
  %6352 = vmatmul.mubr.f32.gmra.mrb[0].mxu0 %v5210
  %v6353 = vpop.f32.mrb[0].mxu0
  %v6354 = vadd.f32 %v5401, %v6353
  %v6355 = vpop.f32.mrb[0].mxu0
  %6356 = vmatprep.mubr.f32.mxu0 %v5213
  %6357 = vmatmul.mubr.f32.gmra.mrb[0].mxu0 %v5212
  %v6358 = vpop.f32.mrb[0].mxu0
  %v6359 = vadd.f32 %v5401, %v6358
  %v6360 = vpop.f32.mrb[0].mxu0
  %6361 = vmatprep.mubr.f32.mxu0 %v5215
  %6362 = vmatmul.mubr.f32.gmra.mrb[0].mxu0 %v5214
  %v6363 = vpop.f32.mrb[0].mxu0
  %v6364 = vadd.f32 %v5401, %v6363
  %v6365 = vpop.f32.mrb[0].mxu0
  %6366 = vmatprep.mubr.f32.mxu0 %v5217
  %6367 = vmatmul.mubr.f32.gmra.mrb[0].mxu0 %v5216
  %v6368 = vpop.f32.mrb[0].mxu0
  %v6369 = vadd.f32 %v5401, %v6368
  %v6370 = vpop.f32.mrb[0].mxu0
  %6371 = vmatprep.mubr.f32.mxu0 %v5219
  %6372 = vmatmul.mubr.f32.gmra.mrb[0].mxu0 %v5218
  %v6373 = vpop.f32.mrb[0].mxu0
  %v6374 = vadd.f32 %v5401, %v6373
  %v6375 = vpop.f32.mrb[0].mxu0
  %6376 = vmatprep.mubr.f32.mxu0 %v5221
  %6377 = vmatmul.mubr.f32.gmra.mrb[0].mxu0 %v5220
  %v6378 = vpop.f32.mrb[0].mxu0
  %v6379 = vadd.f32 %v5401, %v6378
  %v6380 = vpop.f32.mrb[0].mxu0
  %6381 = vmatprep.mubr.f32.mxu0 %v5223
  %6382 = vmatmul.mubr.f32.gmra.mrb[0].mxu0 %v5222
  %v6383 = vpop.f32.mrb[0].mxu0
  %v6384 = vadd.f32 %v5401, %v6383
  %v6385 = vpop.f32.mrb[0].mxu0
  %6386 = vmatprep.mubr.f32.mxu0 %v5225
  %6387 = vmatmul.mubr.f32.gmra.mrb[0].mxu0 %v5224
  %v6388 = vpop.f32.mrb[0].mxu0
  %v6389 = vadd.f32 %v5401, %v6388
  %v6390 = vpop.f32.mrb[0].mxu0
  %6391 = vmatprep.mubr.f32.mxu0 %v5227
  %6392 = vmatmul.mubr.f32.gmra.mrb[0].mxu0 %v5226
  %v6393 = vpop.f32.mrb[0].mxu0
  %v6394 = vadd.f32 %v5401, %v6393
  %v6395 = vpop.f32.mrb[0].mxu0
  %6396 = vmatprep.mubr.f32.mxu0 %v5229
  %6397 = vmatmul.mubr.f32.gmra.mrb[0].mxu0 %v5228
  %v6398 = vpop.f32.mrb[0].mxu0
  %v6399 = vadd.f32 %v5401, %v6398
  %v6400 = vpop.f32.mrb[0].mxu0
  %6401 = vmatprep.mubr.f32.mxu0 %v5231
  %6402 = vmatmul.mubr.f32.gmra.mrb[0].mxu0 %v5230
  %v6403 = vpop.f32.mrb[0].mxu0
  %v6404 = vadd.f32 %v5401, %v6403
  %v6405 = vpop.f32.mrb[0].mxu0
  %6406 = vmatprep.mubr.f32.mxu0 %v5233
  %6407 = vmatmul.mubr.f32.gmra.mrb[0].mxu0 %v5232
  %v6408 = vpop.f32.mrb[0].mxu0
  %v6409 = vadd.f32 %v5401, %v6408
  %v6410 = vpop.f32.mrb[0].mxu0
  %6411 = vmatprep.mubr.f32.mxu0 %v5235
  %6412 = vmatmul.mubr.f32.gmra.mrb[0].mxu0 %v5234
  %v6413 = vpop.f32.mrb[0].mxu0
  %v6414 = vadd.f32 %v5401, %v6413
  %v6415 = vpop.f32.mrb[0].mxu0
  %6416 = vmatprep.mubr.f32.mxu0 %v5237
  %6417 = vmatmul.mubr.f32.gmra.mrb[0].mxu0 %v5236
  %v6418 = vpop.f32.mrb[0].mxu0
  %v6419 = vadd.f32 %v5401, %v6418
  %v6420 = vpop.f32.mrb[0].mxu0
  %6421 = vmatprep.mubr.f32.mxu0 %v5239
  %6422 = vmatmul.mubr.f32.gmra.mrb[0].mxu0 %v5238
  %v6423 = vpop.f32.mrb[0].mxu0
  %v6424 = vadd.f32 %v5401, %v6423
  %v6425 = vpop.f32.mrb[0].mxu0
  %6426 = vmatprep.mubr.f32.mxu0 %v5241
  %6427 = vmatmul.mubr.f32.gmra.mrb[0].mxu0 %v5240
  %v6428 = vpop.f32.mrb[0].mxu0
  %v6429 = vadd.f32 %v5401, %v6428
  %v6430 = vpop.f32.mrb[0].mxu0
  %6431 = vmatprep.mubr.f32.mxu0 %v5243
  %6432 = vmatmul.mubr.f32.gmra.mrb[0].mxu0 %v5242
  %v6433 = vpop.f32.mrb[0].mxu0
  %v6434 = vadd.f32 %v5401, %v6433
  %v6435 = vpop.f32.mrb[0].mxu0
  %6436 = vmatprep.mubr.f32.mxu0 %v5245
  %6437 = vmatmul.mubr.f32.gmra.mrb[0].mxu0 %v5244
  %v6438 = vpop.f32.mrb[0].mxu0
  %v6439 = vadd.f32 %v5401, %v6438
  %v6440 = vpop.f32.mrb[0].mxu0
  %6441 = vmatprep.mubr.f32.mxu0 %v5247
  %6442 = vmatmul.mubr.f32.gmra.mrb[0].mxu0 %v5246
  %v6443 = vpop.f32.mrb[0].mxu0
  %v6444 = vadd.f32 %v5401, %v6443
  %v6445 = vpop.f32.mrb[0].mxu0
  %6446 = vmatprep.mubr.f32.mxu0 %v5249
  %6447 = vmatmul.mubr.f32.gmra.mrb[0].mxu0 %v5248
  %v6448 = vpop.f32.mrb[0].mxu0
  %v6449 = vadd.f32 %v5401, %v6448
  %v6450 = vpop.f32.mrb[0].mxu0
  %6451 = vmatprep.mubr.f32.mxu0 %v5251
  %6452 = vmatmul.mubr.f32.gmra.mrb[0].mxu0 %v5250
  %v6453 = vpop.f32.mrb[0].mxu0
  %v6454 = vadd.f32 %v5401, %v6453
  %v6455 = vpop.f32.mrb[0].mxu0
  %6456 = vmatprep.mubr.f32.mxu0 %v5253
  %6457 = vmatmul.mubr.f32.gmra.mrb[0].mxu0 %v5252
  %v6458 = vpop.f32.mrb[0].mxu0
  %v6459 = vadd.f32 %v5401, %v6458
  %v6460 = vpop.f32.mrb[0].mxu0
  %6461 = vmatprep.mubr.f32.mxu0 %v5255
  %6462 = vmatmul.mubr.f32.gmra.mrb[0].mxu0 %v5254
  %v6463 = vpop.f32.mrb[0].mxu0
  %v6464 = vadd.f32 %v5401, %v6463
  %v6465 = vpop.f32.mrb[0].mxu0
  %6466 = vmatprep.mubr.f32.mxu0 %v5257
  %6467 = vmatmul.mubr.f32.gmra.mrb[0].mxu0 %v5256
  %v6468 = vpop.f32.mrb[0].mxu0
  %v6469 = vadd.f32 %v5401, %v6468
  %v6470 = vpop.f32.mrb[0].mxu0
  %6471 = vmatprep.mubr.f32.mxu0 %v5259
  %6472 = vmatmul.mubr.f32.gmra.mrb[0].mxu0 %v5258
  %v6473 = vpop.f32.mrb[0].mxu0
  %v6474 = vadd.f32 %v5401, %v6473
  %v6475 = vpop.f32.mrb[0].mxu0
  %6476 = vmatprep.mubr.f32.mxu0 %v5261
  %6477 = vmatmul.mubr.f32.gmra.mrb[0].mxu0 %v5260
  %v6478 = vpop.f32.mrb[0].mxu0
  %v6479 = vadd.f32 %v5401, %v6478
  %v6480 = vpop.f32.mrb[0].mxu0
  %6481 = vmatprep.mubr.f32.mxu0 %v5263
  %6482 = vmatmul.mubr.f32.gmra.mrb[0].mxu0 %v5262
  %v6483 = vpop.f32.mrb[0].mxu0
  %v6484 = vadd.f32 %v5401, %v6483
  %v6485 = vpop.f32.mrb[0].mxu0
  %6486 = vmatprep.mubr.f32.mxu0 %v5265
  %6487 = vmatmul.mubr.f32.gmra.mrb[0].mxu0 %v5264
  %v6488 = vpop.f32.mrb[0].mxu0
  %v6489 = vadd.f32 %v5401, %v6488
  %v6490 = vpop.f32.mrb[0].mxu0
  %6491 = vmatprep.mubr.f32.mxu0 %v5267
  %6492 = vmatmul.mubr.f32.gmra.mrb[0].mxu0 %v5266
  %v6493 = vpop.f32.mrb[0].mxu0
  %v6494 = vadd.f32 %v5401, %v6493
  %v6495 = vpop.f32.mrb[0].mxu0
  %6496 = vmatprep.mubr.f32.mxu0 %v5269
  %6497 = vmatmul.mubr.f32.gmra.mrb[0].mxu0 %v5268
  %v6498 = vpop.f32.mrb[0].mxu0
  %v6499 = vadd.f32 %v5401, %v6498
  %v6500 = vpop.f32.mrb[0].mxu0
  %6501 = vmatprep.mubr.f32.mxu0 %v5271
  %6502 = vmatmul.mubr.f32.gmra.mrb[0].mxu0 %v5270
  %v6503 = vpop.f32.mrb[0].mxu0
  %v6504 = vadd.f32 %v5401, %v6503
  %v6505 = vpop.f32.mrb[0].mxu0
  %6506 = vmatprep.mubr.f32.mxu0 %v5273
  %6507 = vmatmul.mubr.f32.gmra.mrb[0].mxu0 %v5272
  %v6508 = vpop.f32.mrb[0].mxu0
  %v6509 = vadd.f32 %v5401, %v6508
  %v6510 = vpop.f32.mrb[0].mxu0
  %6511 = vmatprep.mubr.f32.mxu0 %v5275
  %6512 = vmatmul.mubr.f32.gmra.mrb[0].mxu0 %v5274
  %v6513 = vpop.f32.mrb[0].mxu0
  %v6514 = vadd.f32 %v5401, %v6513
  %v6515 = vpop.f32.mrb[0].mxu0
  %6516 = vmatprep.mubr.f32.mxu0 %v5277
  %6517 = vmatmul.mubr.f32.gmra.mrb[0].mxu0 %v5276
  %v6518 = vpop.f32.mrb[0].mxu0
  %v6519 = vadd.f32 %v5401, %v6518
  %v6520 = vpop.f32.mrb[0].mxu0
  %6521 = vmatprep.mubr.f32.mxu0 %v5279
  %6522 = vmatmul.mubr.f32.gmra.mrb[0].mxu0 %v5278
  %v6523 = vpop.f32.mrb[0].mxu0
  %v6524 = vadd.f32 %v5401, %v6523
  %v6525 = vpop.f32.mrb[0].mxu0
  %6526 = vmatprep.mubr.f32.mxu0 %v5281
  %6527 = vmatmul.mubr.f32.gmra.mrb[0].mxu0 %v5280
  %v6528 = vpop.f32.mrb[0].mxu0
  %v6529 = vadd.f32 %v5401, %v6528
  %v6530 = vpop.f32.mrb[0].mxu0
  %6531 = vmatprep.mubr.f32.mxu0 %v5283
  %6532 = vmatmul.mubr.f32.gmra.mrb[0].mxu0 %v5282
  %v6533 = vpop.f32.mrb[0].mxu0
  %v6534 = vadd.f32 %v5401, %v6533
  %v6535 = vpop.f32.mrb[0].mxu0
  %6536 = vmatprep.mubr.f32.mxu0 %v5285
  %6537 = vmatmul.mubr.f32.gmra.mrb[0].mxu0 %v5284
  %v6538 = vpop.f32.mrb[0].mxu0
  %v6539 = vadd.f32 %v5401, %v6538
  %v6540 = vpop.f32.mrb[0].mxu0
  %6541 = vmatprep.mubr.f32.mxu0 %v5287
  %6542 = vmatmul.mubr.f32.gmra.mrb[0].mxu0 %v5286
  %v6543 = vpop.f32.mrb[0].mxu0
  %v6544 = vadd.f32 %v5401, %v6543
  %v6545 = vpop.f32.mrb[0].mxu0
  %6546 = vmatprep.mubr.f32.mxu0 %v5289
  %6547 = vmatmul.mubr.f32.gmra.mrb[0].mxu0 %v5288
  %v6548 = vpop.f32.mrb[0].mxu0
  %v6549 = vadd.f32 %v5401, %v6548
  %v6550 = vpop.f32.mrb[0].mxu0
  %6551 = vmatprep.mubr.f32.mxu0 %v5291
  %6552 = vmatmul.mubr.f32.gmra.mrb[0].mxu0 %v5290
  %v6553 = vpop.f32.mrb[0].mxu0
  %v6554 = vadd.f32 %v5401, %v6553
  %v6555 = vpop.f32.mrb[0].mxu0
  %6556 = vmatprep.mubr.f32.mxu0 %v5293
  %6557 = vmatmul.mubr.f32.gmra.mrb[0].mxu0 %v5292
  %v6558 = vpop.f32.mrb[0].mxu0
  %v6559 = vadd.f32 %v5401, %v6558
  %v6560 = vpop.f32.mrb[0].mxu0
  %6561 = vmatprep.mubr.f32.mxu0 %v5295
  %6562 = vmatmul.mubr.f32.gmra.mrb[0].mxu0 %v5294
  %v6563 = vpop.f32.mrb[0].mxu0
  %v6564 = vadd.f32 %v5401, %v6563
  %v6565 = vpop.f32.mrb[0].mxu0
  %6566 = vmatprep.mubr.f32.mxu0 %v5297
  %6567 = vmatmul.mubr.f32.gmra.mrb[0].mxu0 %v5296
  %v6568 = vpop.f32.mrb[0].mxu0
  %v6569 = vadd.f32 %v5401, %v6568
  %v6570 = vpop.f32.mrb[0].mxu0
  %6571 = vmatprep.mubr.f32.mxu0 %v5299
  %6572 = vmatmul.mubr.f32.gmra.mrb[0].mxu0 %v5298
  %v6573 = vpop.f32.mrb[0].mxu0
  %v6574 = vadd.f32 %v5401, %v6573
  %v6575 = vpop.f32.mrb[0].mxu0
  %6576 = vmatprep.mubr.f32.mxu0 %v5301
  %6577 = vmatmul.mubr.f32.gmra.mrb[0].mxu0 %v5300
  %v6578 = vpop.f32.mrb[0].mxu0
  %v6579 = vadd.f32 %v5401, %v6578
  %v6580 = vpop.f32.mrb[0].mxu0
  %6581 = vmatprep.mubr.f32.mxu0 %v5303
  %6582 = vmatmul.mubr.f32.gmra.mrb[0].mxu0 %v5302
  %v6583 = vpop.f32.mrb[0].mxu0
  %v6584 = vadd.f32 %v5401, %v6583
  %v6585 = vpop.f32.mrb[0].mxu0
  %6586 = vmatprep.mubr.f32.mxu0 %v5305
  %6587 = vmatmul.mubr.f32.gmra.mrb[0].mxu0 %v5304
  %v6588 = vpop.f32.mrb[0].mxu0
  %v6589 = vadd.f32 %v5401, %v6588
  %v6590 = vpop.f32.mrb[0].mxu0
  %6591 = vmatprep.mubr.f32.mxu0 %v5307
  %6592 = vmatmul.mubr.f32.gmra.mrb[0].mxu0 %v5306
  %v6593 = vpop.f32.mrb[0].mxu0
  %v6594 = vadd.f32 %v5401, %v6593
  %v6595 = vpop.f32.mrb[0].mxu0
  %6596 = vmatprep.mubr.f32.mxu0 %v5309
  %6597 = vmatmul.mubr.f32.gmra.mrb[0].mxu0 %v5308
  %v6598 = vpop.f32.mrb[0].mxu0
  %v6599 = vadd.f32 %v5401, %v6598
  %v6600 = vpop.f32.mrb[0].mxu0
  %6601 = vmatprep.mubr.f32.mxu0 %v5311
  %6602 = vmatmul.mubr.f32.gmra.mrb[0].mxu0 %v5310
  %v6603 = vpop.f32.mrb[0].mxu0
  %v6604 = vadd.f32 %v5401, %v6603
  %v6605 = vpop.f32.mrb[0].mxu0
  %6606 = vmatprep.mubr.f32.mxu0 %v5313
  %6607 = vmatmul.mubr.f32.gmra.mrb[0].mxu0 %v5312
  %v6608 = vpop.f32.mrb[0].mxu0
  %v6609 = vadd.f32 %v5401, %v6608
  %v6610 = vpop.f32.mrb[0].mxu0
  %6611 = vmatprep.mubr.f32.mxu0 %v5315
  %6612 = vmatmul.mubr.f32.gmra.mrb[0].mxu0 %v5314
  %v6613 = vpop.f32.mrb[0].mxu0
  %v6614 = vadd.f32 %v5401, %v6613
  %v6615 = vpop.f32.mrb[0].mxu0
  %6616 = vmatprep.mubr.f32.mxu0 %v5317
  %6617 = vmatmul.mubr.f32.gmra.mrb[0].mxu0 %v5316
  %v6618 = vpop.f32.mrb[0].mxu0
  %v6619 = vadd.f32 %v5401, %v6618
  %v6620 = vpop.f32.mrb[0].mxu0
  %6621 = vmatprep.mubr.f32.mxu0 %v5319
  %6622 = vmatmul.mubr.f32.gmra.mrb[0].mxu0 %v5318
  %v6623 = vpop.f32.mrb[0].mxu0
  %v6624 = vadd.f32 %v5401, %v6623
  %v6625 = vpop.f32.mrb[0].mxu0
  %6626 = vmatprep.mubr.f32.mxu0 %v5321
  %6627 = vmatmul.mubr.f32.gmra.mrb[0].mxu0 %v5320
  %v6628 = vpop.f32.mrb[0].mxu0
  %v6629 = vadd.f32 %v5401, %v6628
  %v6630 = vpop.f32.mrb[0].mxu0
  %6631 = vmatprep.mubr.f32.mxu0 %v5323
  %6632 = vmatmul.mubr.f32.gmra.mrb[0].mxu0 %v5322
  %v6633 = vpop.f32.mrb[0].mxu0
  %v6634 = vadd.f32 %v5401, %v6633
  %v6635 = vpop.f32.mrb[0].mxu0
  %6636 = vmatprep.mubr.f32.mxu0 %v5325
  %6637 = vmatmul.mubr.f32.gmra.mrb[0].mxu0 %v5324
  %v6638 = vpop.f32.mrb[0].mxu0
  %v6639 = vadd.f32 %v5401, %v6638
  %v6640 = vpop.f32.mrb[0].mxu0
  %6641 = vmatprep.mubr.f32.mxu0 %v5327
  %6642 = vmatmul.mubr.f32.gmra.mrb[0].mxu0 %v5326
  %v6643 = vpop.f32.mrb[0].mxu0
  %v6644 = vadd.f32 %v5401, %v6643
  %v6645 = vpop.f32.mrb[0].mxu0
  %6646 = vmatprep.mubr.f32.mxu0 %v5329
  %6647 = vmatmul.mubr.f32.gmra.mrb[0].mxu0 %v5328
  %v6648 = vpop.f32.mrb[0].mxu0
  %v6649 = vadd.f32 %v5401, %v6648
  %v6650 = vpop.f32.mrb[0].mxu0
  %6651 = vmatprep.mubr.f32.mxu0 %v5331
  %6652 = vmatmul.mubr.f32.gmra.mrb[0].mxu0 %v5330
  %v6653 = vpop.f32.mrb[0].mxu0
  %v6654 = vadd.f32 %v5401, %v6653
  %v6655 = vpop.f32.mrb[0].mxu0
  %6656 = vmatprep.mubr.f32.mxu0 %v5333
  %6657 = vmatmul.mubr.f32.gmra.mrb[0].mxu0 %v5332
  %v6658 = vpop.f32.mrb[0].mxu0
  %v6659 = vadd.f32 %v5401, %v6658
  %v6660 = vpop.f32.mrb[0].mxu0
  %6661 = vmatprep.mubr.f32.mxu0 %v5335
  %6662 = vmatmul.mubr.f32.gmra.mrb[0].mxu0 %v5334
  %v6663 = vpop.f32.mrb[0].mxu0
  %v6664 = vadd.f32 %v5401, %v6663
  %v6665 = vpop.f32.mrb[0].mxu0
  %6666 = vmatprep.mubr.f32.mxu0 %v5337
  %6667 = vmatmul.mubr.f32.gmra.mrb[0].mxu0 %v5336
  %v6668 = vpop.f32.mrb[0].mxu0
  %v6669 = vadd.f32 %v5401, %v6668
  %v6670 = vpop.f32.mrb[0].mxu0
  %6671 = vmatprep.mubr.f32.mxu0 %v5339
  %6672 = vmatmul.mubr.f32.gmra.mrb[0].mxu0 %v5338
  %v6673 = vpop.f32.mrb[0].mxu0
  %v6674 = vadd.f32 %v5401, %v6673
  %v6675 = vpop.f32.mrb[0].mxu0
  %6676 = vmatprep.mubr.f32.mxu0 %v5341
  %6677 = vmatmul.mubr.f32.gmra.mrb[0].mxu0 %v5340
  %v6678 = vpop.f32.mrb[0].mxu0
  %v6679 = vadd.f32 %v5401, %v6678
  %v6680 = vpop.f32.mrb[0].mxu0
  %6681 = vmatprep.mubr.f32.mxu0 %v5343
  %6682 = vmatmul.mubr.f32.gmra.mrb[0].mxu0 %v5342
  %v6683 = vpop.f32.mrb[0].mxu0
  %v6684 = vadd.f32 %v5401, %v6683
  %v6685 = vpop.f32.mrb[0].mxu0
  %6686 = vmatprep.mubr.f32.mxu0 %v5345
  %6687 = vmatmul.mubr.f32.gmra.mrb[0].mxu0 %v5344
  %v6688 = vpop.f32.mrb[0].mxu0
  %v6689 = vadd.f32 %v5401, %v6688
  %v6690 = vpop.f32.mrb[0].mxu0
  %6691 = vmatprep.mubr.f32.mxu0 %v5347
  %6692 = vmatmul.mubr.f32.gmra.mrb[0].mxu0 %v5346
  %v6693 = vpop.f32.mrb[0].mxu0
  %v6694 = vadd.f32 %v5401, %v6693
  %v6695 = vpop.f32.mrb[0].mxu0
  %6696 = vmatprep.mubr.f32.mxu0 %v5349
  %6697 = vmatmul.mubr.f32.gmra.mrb[0].mxu0 %v5348
  %v6698 = vpop.f32.mrb[0].mxu0
  %v6699 = vadd.f32 %v5401, %v6698
  %v6700 = vpop.f32.mrb[0].mxu0
  %6701 = vmatprep.mubr.f32.mxu0 %v5351
  %6702 = vmatmul.mubr.f32.gmra.mrb[0].mxu0 %v5350
  %v6703 = vpop.f32.mrb[0].mxu0
  %v6704 = vadd.f32 %v5401, %v6703
  %v6705 = vpop.f32.mrb[0].mxu0
  %6706 = vmatprep.mubr.f32.mxu0 %v5353
  %6707 = vmatmul.mubr.f32.gmra.mrb[0].mxu0 %v5352
  %v6708 = vpop.f32.mrb[0].mxu0
  %v6709 = vadd.f32 %v5401, %v6708
  %v6710 = vpop.f32.mrb[0].mxu0
  %6711 = vmatprep.mubr.f32.mxu0 %v5355
  %6712 = vmatmul.mubr.f32.gmra.mrb[0].mxu0 %v5354
  %v6713 = vpop.f32.mrb[0].mxu0
  %v6714 = vadd.f32 %v5401, %v6713
  %v6715 = vpop.f32.mrb[0].mxu0
  %6716 = vmatprep.mubr.f32.mxu0 %v5357
  %6717 = vmatmul.mubr.f32.gmra.mrb[0].mxu0 %v5356
  %v6718 = vpop.f32.mrb[0].mxu0
  %v6719 = vadd.f32 %v5401, %v6718
  %v6720 = vpop.f32.mrb[0].mxu0
  %6721 = vmatprep.mubr.f32.mxu0 %v5359
  %6722 = vmatmul.mubr.f32.gmra.mrb[0].mxu0 %v5358
  %v6723 = vpop.f32.mrb[0].mxu0
  %v6724 = vadd.f32 %v5401, %v6723
  %v6725 = vpop.f32.mrb[0].mxu0
  %6726 = vmatprep.mubr.f32.mxu0 %v5361
  %6727 = vmatmul.mubr.f32.gmra.mrb[0].mxu0 %v5360
  %v6728 = vpop.f32.mrb[0].mxu0
  %v6729 = vadd.f32 %v5401, %v6728
  %v6730 = vpop.f32.mrb[0].mxu0
  %6731 = vmatprep.mubr.f32.mxu0 %v5363
  %6732 = vmatmul.mubr.f32.gmra.mrb[0].mxu0 %v5362
  %v6733 = vpop.f32.mrb[0].mxu0
  %v6734 = vadd.f32 %v5401, %v6733
  %v6735 = vpop.f32.mrb[0].mxu0
  %6736 = vmatprep.mubr.f32.mxu0 %v5365
  %6737 = vmatmul.mubr.f32.gmra.mrb[0].mxu0 %v5364
  %v6738 = vpop.f32.mrb[0].mxu0
  %v6739 = vadd.f32 %v5401, %v6738
  %v6740 = vpop.f32.mrb[0].mxu0
  %6741 = vmatprep.mubr.f32.mxu0 %v5367
  %6742 = vmatmul.mubr.f32.gmra.mrb[0].mxu0 %v5366
  %v6743 = vpop.f32.mrb[0].mxu0
  %v6744 = vadd.f32 %v5401, %v6743
  %v6745 = vpop.f32.mrb[0].mxu0
  %6746 = vdwg.mxu0
  %6747 = vst.msk [vmem:[%s7] sm:$0xff] %vm297, %v5469
  %6748 = vst.msk [vmem:[%s7 + $0x8] sm:$0xff] %vm297, %v5474
  %6749 = vst.msk [vmem:[%s7 + $0x10] sm:$0xff] %vm297, %v5479
  %6750 = vst.msk [vmem:[%s7 + $0x18] sm:$0xff] %vm297, %v5484
  %6751 = vst.msk [vmem:[%s7 + $0x20] sm:$0xff] %vm297, %v5489
  %6752 = vst.msk [vmem:[%s7 + $0x28] sm:$0xff] %vm297, %v5494
  %6753 = vst.msk [vmem:[%s7 + $0x30] sm:$0xff] %vm297, %v5499
  %6754 = vst.msk [vmem:[%s7 + $0x38] sm:$0xff] %vm297, %v5504
  %6755 = vst.msk [vmem:[%s7 + $0x40] sm:$0xff] %vm297, %v5509
  %6756 = vst.msk [vmem:[%s7 + $0x48] sm:$0xff] %vm297, %v5514
  %6757 = vst.msk [vmem:[%s7 + $0x50] sm:$0xff] %vm297, %v5519
  %6758 = vst.msk [vmem:[%s7 + $0x58] sm:$0xff] %vm297, %v5524
  %6759 = vst.msk [vmem:[%s7 + $0x60] sm:$0xff] %vm297, %v5529
  %6760 = vst.msk [vmem:[%s7 + $0x68] sm:$0xff] %vm297, %v5534
  %6761 = vst.msk [vmem:[%s7 + $0x70] sm:$0xff] %vm297, %v5539
  %6762 = vst.msk [vmem:[%s7 + $0x78] sm:$0xff] %vm297, %v5544
  %6763 = vst.msk [vmem:[%s7 + $0x80] sm:$0xff] %vm297, %v5549
  %6764 = vst.msk [vmem:[%s7 + $0x88] sm:$0xff] %vm297, %v5554
  %6765 = vst.msk [vmem:[%s7 + $0x90] sm:$0xff] %vm297, %v5559
  %6766 = vst.msk [vmem:[%s7 + $0x98] sm:$0xff] %vm297, %v5564
  %6767 = vst.msk [vmem:[%s7 + $0xa0] sm:$0xff] %vm297, %v5569
  %6768 = vst.msk [vmem:[%s7 + $0xa8] sm:$0xff] %vm297, %v5574
  %6769 = vst.msk [vmem:[%s7 + $0xb0] sm:$0xff] %vm297, %v5579
  %6770 = vst.msk [vmem:[%s7 + $0xb8] sm:$0xff] %vm297, %v5584
  %6771 = vst.msk [vmem:[%s7 + $0xc0] sm:$0xff] %vm297, %v5589
  %6772 = vst.msk [vmem:[%s7 + $0xc8] sm:$0xff] %vm297, %v5594
  %6773 = vst.msk [vmem:[%s7 + $0xd0] sm:$0xff] %vm297, %v5599
  %6774 = vst.msk [vmem:[%s7 + $0xd8] sm:$0xff] %vm297, %v5604
  %6775 = vst.msk [vmem:[%s7 + $0xe0] sm:$0xff] %vm297, %v5609
  %6776 = vst.msk [vmem:[%s7 + $0xe8] sm:$0xff] %vm297, %v5614
  %6777 = vst.msk [vmem:[%s7 + $0xf0] sm:$0xff] %vm297, %v5619
  %6778 = vst.msk [vmem:[%s7 + $0xf8] sm:$0xff] %vm297, %v5624
  %6779 = vst.msk [vmem:[%s7 + $0x100] sm:$0xff] %vm297, %v5629
  %6780 = vst.msk [vmem:[%s7 + $0x108] sm:$0xff] %vm297, %v5634
  %6781 = vst.msk [vmem:[%s7 + $0x110] sm:$0xff] %vm297, %v5639
  %6782 = vst.msk [vmem:[%s7 + $0x118] sm:$0xff] %vm297, %v5644
  %6783 = vst.msk [vmem:[%s7 + $0x120] sm:$0xff] %vm297, %v5649
  %6784 = vst.msk [vmem:[%s7 + $0x128] sm:$0xff] %vm297, %v5654
  %6785 = vst.msk [vmem:[%s7 + $0x130] sm:$0xff] %vm297, %v5659
  %6786 = vst.msk [vmem:[%s7 + $0x138] sm:$0xff] %vm297, %v5664
  %6787 = vst.msk [vmem:[%s7 + $0x140] sm:$0xff] %vm297, %v5669
  %6788 = vst.msk [vmem:[%s7 + $0x148] sm:$0xff] %vm297, %v5674
  %6789 = vst.msk [vmem:[%s7 + $0x150] sm:$0xff] %vm297, %v5679
  %6790 = vst.msk [vmem:[%s7 + $0x158] sm:$0xff] %vm297, %v5684
  %6791 = vst.msk [vmem:[%s7 + $0x160] sm:$0xff] %vm297, %v5689
  %6792 = vst.msk [vmem:[%s7 + $0x168] sm:$0xff] %vm297, %v5694
  %6793 = vst.msk [vmem:[%s7 + $0x170] sm:$0xff] %vm297, %v5699
  %6794 = vst.msk [vmem:[%s7 + $0x178] sm:$0xff] %vm297, %v5704
  %6795 = vst.msk [vmem:[%s7 + $0x180] sm:$0xff] %vm297, %v5709
  %6796 = vst.msk [vmem:[%s7 + $0x188] sm:$0xff] %vm297, %v5714
  %6797 = vst.msk [vmem:[%s7 + $0x190] sm:$0xff] %vm297, %v5719
  %6798 = vst.msk [vmem:[%s7 + $0x198] sm:$0xff] %vm297, %v5724
  %6799 = vst.msk [vmem:[%s7 + $0x1a0] sm:$0xff] %vm297, %v5729
  %6800 = vst.msk [vmem:[%s7 + $0x1a8] sm:$0xff] %vm297, %v5734
  %6801 = vst.msk [vmem:[%s7 + $0x1b0] sm:$0xff] %vm297, %v5739
  %6802 = vst.msk [vmem:[%s7 + $0x1b8] sm:$0xff] %vm297, %v5744
  %6803 = vst.msk [vmem:[%s7 + $0x1c0] sm:$0xff] %vm297, %v5749
  %6804 = vst.msk [vmem:[%s7 + $0x1c8] sm:$0xff] %vm297, %v5754
  %6805 = vst.msk [vmem:[%s7 + $0x1d0] sm:$0xff] %vm297, %v5759
  %6806 = vst.msk [vmem:[%s7 + $0x1d8] sm:$0xff] %vm297, %v5764
  %6807 = vst.msk [vmem:[%s7 + $0x1e0] sm:$0xff] %vm297, %v5769
  %6808 = vst.msk [vmem:[%s7 + $0x1e8] sm:$0xff] %vm297, %v5774
  %6809 = vst.msk [vmem:[%s7 + $0x1f0] sm:$0xff] %vm297, %v5779
  %6810 = vst.msk [vmem:[%s7 + $0x1f8] sm:$0xff] %vm297, %v5784
  %6811 = vst.msk [vmem:[%s7 + $0x200] sm:$0xff] %vm297, %v5789
  %6812 = vst.msk [vmem:[%s7 + $0x208] sm:$0xff] %vm297, %v5794
  %6813 = vst.msk [vmem:[%s7 + $0x210] sm:$0xff] %vm297, %v5799
  %6814 = vst.msk [vmem:[%s7 + $0x218] sm:$0xff] %vm297, %v5804
  %6815 = vst.msk [vmem:[%s7 + $0x220] sm:$0xff] %vm297, %v5809
  %6816 = vst.msk [vmem:[%s7 + $0x228] sm:$0xff] %vm297, %v5814
  %6817 = vst.msk [vmem:[%s7 + $0x230] sm:$0xff] %vm297, %v5819
  %6818 = vst.msk [vmem:[%s7 + $0x238] sm:$0xff] %vm297, %v5824
  %6819 = vst.msk [vmem:[%s7 + $0x240] sm:$0xff] %vm297, %v5829
  %6820 = vst.msk [vmem:[%s7 + $0x248] sm:$0xff] %vm297, %v5834
  %6821 = vst.msk [vmem:[%s7 + $0x250] sm:$0xff] %vm297, %v5839
  %6822 = vst.msk [vmem:[%s7 + $0x258] sm:$0xff] %vm297, %v5844
  %6823 = vst.msk [vmem:[%s7 + $0x260] sm:$0xff] %vm297, %v5849
  %6824 = vst.msk [vmem:[%s7 + $0x268] sm:$0xff] %vm297, %v5854
  %6825 = vst.msk [vmem:[%s7 + $0x270] sm:$0xff] %vm297, %v5859
  %6826 = vst.msk [vmem:[%s7 + $0x278] sm:$0xff] %vm297, %v5864
  %6827 = vst.msk [vmem:[%s7 + $0x280] sm:$0xff] %vm297, %v5869
  %6828 = vst.msk [vmem:[%s7 + $0x288] sm:$0xff] %vm297, %v5874
  %6829 = vst.msk [vmem:[%s7 + $0x290] sm:$0xff] %vm297, %v5879
  %6830 = vst.msk [vmem:[%s7 + $0x298] sm:$0xff] %vm297, %v5884
  %6831 = vst.msk [vmem:[%s7 + $0x2a0] sm:$0xff] %vm297, %v5889
  %6832 = vst.msk [vmem:[%s7 + $0x2a8] sm:$0xff] %vm297, %v5894
  %6833 = vst.msk [vmem:[%s7 + $0x2b0] sm:$0xff] %vm297, %v5899
  %6834 = vst.msk [vmem:[%s7 + $0x2b8] sm:$0xff] %vm297, %v5904
  %6835 = vst.msk [vmem:[%s7 + $0x2c0] sm:$0xff] %vm297, %v5909
  %6836 = vst.msk [vmem:[%s7 + $0x2c8] sm:$0xff] %vm297, %v5914
  %6837 = vst.msk [vmem:[%s7 + $0x2d0] sm:$0xff] %vm297, %v5919
  %6838 = vst.msk [vmem:[%s7 + $0x2d8] sm:$0xff] %vm297, %v5924
  %6839 = vst.msk [vmem:[%s7 + $0x2e0] sm:$0xff] %vm297, %v5929
  %6840 = vst.msk [vmem:[%s7 + $0x2e8] sm:$0xff] %vm297, %v5934
  %6841 = vst.msk [vmem:[%s7 + $0x2f0] sm:$0xff] %vm297, %v5939
  %6842 = vst.msk [vmem:[%s7 + $0x2f8] sm:$0xff] %vm297, %v5944
  %6843 = vst.msk [vmem:[%s7 + $0x300] sm:$0xff] %vm297, %v5949
  %6844 = vst.msk [vmem:[%s7 + $0x308] sm:$0xff] %vm297, %v5954
  %6845 = vst.msk [vmem:[%s7 + $0x310] sm:$0xff] %vm297, %v5959
  %6846 = vst.msk [vmem:[%s7 + $0x318] sm:$0xff] %vm297, %v5964
  %6847 = vst.msk [vmem:[%s7 + $0x320] sm:$0xff] %vm297, %v5969
  %6848 = vst.msk [vmem:[%s7 + $0x328] sm:$0xff] %vm297, %v5974
  %6849 = vst.msk [vmem:[%s7 + $0x330] sm:$0xff] %vm297, %v5979
  %6850 = vst.msk [vmem:[%s7 + $0x338] sm:$0xff] %vm297, %v5984
  %6851 = vst.msk [vmem:[%s7 + $0x340] sm:$0xff] %vm297, %v5989
  %6852 = vst.msk [vmem:[%s7 + $0x348] sm:$0xff] %vm297, %v5994
  %6853 = vst.msk [vmem:[%s7 + $0x350] sm:$0xff] %vm297, %v5999
  %6854 = vst.msk [vmem:[%s7 + $0x358] sm:$0xff] %vm297, %v6004
  %6855 = vst.msk [vmem:[%s7 + $0x360] sm:$0xff] %vm297, %v6009
  %6856 = vst.msk [vmem:[%s7 + $0x368] sm:$0xff] %vm297, %v6014
  %6857 = vst.msk [vmem:[%s7 + $0x370] sm:$0xff] %vm297, %v6019
  %6858 = vst.msk [vmem:[%s7 + $0x378] sm:$0xff] %vm297, %v6024
  %6859 = vst.msk [vmem:[%s7 + $0x380] sm:$0xff] %vm297, %v6029
  %6860 = vst.msk [vmem:[%s7 + $0x388] sm:$0xff] %vm297, %v6034
  %6861 = vst.msk [vmem:[%s7 + $0x390] sm:$0xff] %vm297, %v6039
  %6862 = vst.msk [vmem:[%s7 + $0x398] sm:$0xff] %vm297, %v6044
  %6863 = vst.msk [vmem:[%s7 + $0x3a0] sm:$0xff] %vm297, %v6049
  %6864 = vst.msk [vmem:[%s7 + $0x3a8] sm:$0xff] %vm297, %v6054
  %6865 = vst.msk [vmem:[%s7 + $0x3b0] sm:$0xff] %vm297, %v6059
  %6866 = vst.msk [vmem:[%s7 + $0x3b8] sm:$0xff] %vm297, %v6064
  %6867 = vst.msk [vmem:[%s7 + $0x3c0] sm:$0xff] %vm297, %v6069
  %6868 = vst.msk [vmem:[%s7 + $0x3c8] sm:$0xff] %vm297, %v6074
  %6869 = vst.msk [vmem:[%s7 + $0x3d0] sm:$0xff] %vm297, %v6079
  %6870 = vst.msk [vmem:[%s7 + $0x3d8] sm:$0xff] %vm297, %v6084
  %6871 = vst.msk [vmem:[%s7 + $0x3e0] sm:$0xff] %vm297, %v6089
  %6872 = vst.msk [vmem:[%s7 + $0x3e8] sm:$0xff] %vm297, %v6094
  %6873 = vst.msk [vmem:[%s7 + $0x3f0] sm:$0xff] %vm297, %v6099
  %6874 = vst.msk [vmem:[%s7 + $0x3f8] sm:$0xff] %vm297, %v6104
  %6875 = vst.msk [vmem:[%s7 + $0x400] sm:$0xff] %vm297, %v6109
  %6876 = vst.msk [vmem:[%s7 + $0x408] sm:$0xff] %vm297, %v6114
  %6877 = vst.msk [vmem:[%s7 + $0x410] sm:$0xff] %vm297, %v6119
  %6878 = vst.msk [vmem:[%s7 + $0x418] sm:$0xff] %vm297, %v6124
  %6879 = vst.msk [vmem:[%s7 + $0x420] sm:$0xff] %vm297, %v6129
  %6880 = vst.msk [vmem:[%s7 + $0x428] sm:$0xff] %vm297, %v6134
  %6881 = vst.msk [vmem:[%s7 + $0x430] sm:$0xff] %vm297, %v6139
  %6882 = vst.msk [vmem:[%s7 + $0x438] sm:$0xff] %vm297, %v6144
  %6883 = vst.msk [vmem:[%s7 + $0x440] sm:$0xff] %vm297, %v6149
  %6884 = vst.msk [vmem:[%s7 + $0x448] sm:$0xff] %vm297, %v6154
  %6885 = vst.msk [vmem:[%s7 + $0x450] sm:$0xff] %vm297, %v6159
  %6886 = vst.msk [vmem:[%s7 + $0x458] sm:$0xff] %vm297, %v6164
  %6887 = vst.msk [vmem:[%s7 + $0x460] sm:$0xff] %vm297, %v6169
  %6888 = vst.msk [vmem:[%s7 + $0x468] sm:$0xff] %vm297, %v6174
  %6889 = vst.msk [vmem:[%s7 + $0x470] sm:$0xff] %vm297, %v6179
  %6890 = vst.msk [vmem:[%s7 + $0x478] sm:$0xff] %vm297, %v6184
  %6891 = vst.msk [vmem:[%s7 + $0x480] sm:$0xff] %vm297, %v6189
  %6892 = vst.msk [vmem:[%s7 + $0x488] sm:$0xff] %vm297, %v6194
  %6893 = vst.msk [vmem:[%s7 + $0x490] sm:$0xff] %vm297, %v6199
  %6894 = vst.msk [vmem:[%s7 + $0x498] sm:$0xff] %vm297, %v6204
  %6895 = vst.msk [vmem:[%s7 + $0x4a0] sm:$0xff] %vm297, %v6209
  %6896 = vst.msk [vmem:[%s7 + $0x4a8] sm:$0xff] %vm297, %v6214
  %6897 = vst.msk [vmem:[%s7 + $0x4b0] sm:$0xff] %vm297, %v6219
  %6898 = vst.msk [vmem:[%s7 + $0x4b8] sm:$0xff] %vm297, %v6224
  %6899 = vst.msk [vmem:[%s7 + $0x4c0] sm:$0xff] %vm297, %v6229
  %6900 = vst.msk [vmem:[%s7 + $0x4c8] sm:$0xff] %vm297, %v6234
  %6901 = vst.msk [vmem:[%s7 + $0x4d0] sm:$0xff] %vm297, %v6239
  %6902 = vst.msk [vmem:[%s7 + $0x4d8] sm:$0xff] %vm297, %v6244
  %6903 = vst.msk [vmem:[%s7 + $0x4e0] sm:$0xff] %vm297, %v6249
  %6904 = vst.msk [vmem:[%s7 + $0x4e8] sm:$0xff] %vm297, %v6254
  %6905 = vst.msk [vmem:[%s7 + $0x4f0] sm:$0xff] %vm297, %v6259
  %6906 = vst.msk [vmem:[%s7 + $0x4f8] sm:$0xff] %vm297, %v6264
  %6907 = vst.msk [vmem:[%s7 + $0x500] sm:$0xff] %vm297, %v6269
  %6908 = vst.msk [vmem:[%s7 + $0x508] sm:$0xff] %vm297, %v6274
  %6909 = vst.msk [vmem:[%s7 + $0x510] sm:$0xff] %vm297, %v6279
  %6910 = vst.msk [vmem:[%s7 + $0x518] sm:$0xff] %vm297, %v6284
  %6911 = vst.msk [vmem:[%s7 + $0x520] sm:$0xff] %vm297, %v6289
  %6912 = vst.msk [vmem:[%s7 + $0x528] sm:$0xff] %vm297, %v6294
  %6913 = vst.msk [vmem:[%s7 + $0x530] sm:$0xff] %vm297, %v6299
  %6914 = vst.msk [vmem:[%s7 + $0x538] sm:$0xff] %vm297, %v6304
  %6915 = vst.msk [vmem:[%s7 + $0x540] sm:$0xff] %vm297, %v6309
  %6916 = vst.msk [vmem:[%s7 + $0x548] sm:$0xff] %vm297, %v6314
  %6917 = vst.msk [vmem:[%s7 + $0x550] sm:$0xff] %vm297, %v6319
  %6918 = vst.msk [vmem:[%s7 + $0x558] sm:$0xff] %vm297, %v6324
  %6919 = vst.msk [vmem:[%s7 + $0x560] sm:$0xff] %vm297, %v6329
  %6920 = vst.msk [vmem:[%s7 + $0x568] sm:$0xff] %vm297, %v6334
  %6921 = vst.msk [vmem:[%s7 + $0x570] sm:$0xff] %vm297, %v6339
  %6922 = vst.msk [vmem:[%s7 + $0x578] sm:$0xff] %vm297, %v6344
  %6923 = vst.msk [vmem:[%s7 + $0x580] sm:$0xff] %vm297, %v6349
  %6924 = vst.msk [vmem:[%s7 + $0x588] sm:$0xff] %vm297, %v6354
  %6925 = vst.msk [vmem:[%s7 + $0x590] sm:$0xff] %vm297, %v6359
  %6926 = vst.msk [vmem:[%s7 + $0x598] sm:$0xff] %vm297, %v6364
  %6927 = vst.msk [vmem:[%s7 + $0x5a0] sm:$0xff] %vm297, %v6369
  %6928 = vst.msk [vmem:[%s7 + $0x5a8] sm:$0xff] %vm297, %v6374
  %6929 = vst.msk [vmem:[%s7 + $0x5b0] sm:$0xff] %vm297, %v6379
  %6930 = vst.msk [vmem:[%s7 + $0x5b8] sm:$0xff] %vm297, %v6384
  %6931 = vst.msk [vmem:[%s7 + $0x5c0] sm:$0xff] %vm297, %v6389
  %6932 = vst.msk [vmem:[%s7 + $0x5c8] sm:$0xff] %vm297, %v6394
  %6933 = vst.msk [vmem:[%s7 + $0x5d0] sm:$0xff] %vm297, %v6399
  %6934 = vst.msk [vmem:[%s7 + $0x5d8] sm:$0xff] %vm297, %v6404
  %6935 = vst.msk [vmem:[%s7 + $0x5e0] sm:$0xff] %vm297, %v6409
  %6936 = vst.msk [vmem:[%s7 + $0x5e8] sm:$0xff] %vm297, %v6414
  %6937 = vst.msk [vmem:[%s7 + $0x5f0] sm:$0xff] %vm297, %v6419
  %6938 = vst.msk [vmem:[%s7 + $0x5f8] sm:$0xff] %vm297, %v6424
  %6939 = vst.msk [vmem:[%s7 + $0x600] sm:$0xff] %vm297, %v6429
  %6940 = vst.msk [vmem:[%s7 + $0x608] sm:$0xff] %vm297, %v6434
  %6941 = vst.msk [vmem:[%s7 + $0x610] sm:$0xff] %vm297, %v6439
  %6942 = vst.msk [vmem:[%s7 + $0x618] sm:$0xff] %vm297, %v6444
  %6943 = vst.msk [vmem:[%s7 + $0x620] sm:$0xff] %vm297, %v6449
  %6944 = vst.msk [vmem:[%s7 + $0x628] sm:$0xff] %vm297, %v6454
  %6945 = vst.msk [vmem:[%s7 + $0x630] sm:$0xff] %vm297, %v6459
  %6946 = vst.msk [vmem:[%s7 + $0x638] sm:$0xff] %vm297, %v6464
  %6947 = vst.msk [vmem:[%s7 + $0x640] sm:$0xff] %vm297, %v6469
  %6948 = vst.msk [vmem:[%s7 + $0x648] sm:$0xff] %vm297, %v6474
  %6949 = vst.msk [vmem:[%s7 + $0x650] sm:$0xff] %vm297, %v6479
  %6950 = vst.msk [vmem:[%s7 + $0x658] sm:$0xff] %vm297, %v6484
  %6951 = vst.msk [vmem:[%s7 + $0x660] sm:$0xff] %vm297, %v6489
  %6952 = vst.msk [vmem:[%s7 + $0x668] sm:$0xff] %vm297, %v6494
  %6953 = vst.msk [vmem:[%s7 + $0x670] sm:$0xff] %vm297, %v6499
  %6954 = vst.msk [vmem:[%s7 + $0x678] sm:$0xff] %vm297, %v6504
  %6955 = vst.msk [vmem:[%s7 + $0x680] sm:$0xff] %vm297, %v6509
  %6956 = vst.msk [vmem:[%s7 + $0x688] sm:$0xff] %vm297, %v6514
  %6957 = vst.msk [vmem:[%s7 + $0x690] sm:$0xff] %vm297, %v6519
  %6958 = vst.msk [vmem:[%s7 + $0x698] sm:$0xff] %vm297, %v6524
  %6959 = vst.msk [vmem:[%s7 + $0x6a0] sm:$0xff] %vm297, %v6529
  %6960 = vst.msk [vmem:[%s7 + $0x6a8] sm:$0xff] %vm297, %v6534
  %6961 = vst.msk [vmem:[%s7 + $0x6b0] sm:$0xff] %vm297, %v6539
  %6962 = vst.msk [vmem:[%s7 + $0x6b8] sm:$0xff] %vm297, %v6544
  %6963 = vst.msk [vmem:[%s7 + $0x6c0] sm:$0xff] %vm297, %v6549
  %6964 = vst.msk [vmem:[%s7 + $0x6c8] sm:$0xff] %vm297, %v6554
  %6965 = vst.msk [vmem:[%s7 + $0x6d0] sm:$0xff] %vm297, %v6559
  %6966 = vst.msk [vmem:[%s7 + $0x6d8] sm:$0xff] %vm297, %v6564
  %6967 = vst.msk [vmem:[%s7 + $0x6e0] sm:$0xff] %vm297, %v6569
  %6968 = vst.msk [vmem:[%s7 + $0x6e8] sm:$0xff] %vm297, %v6574
  %6969 = vst.msk [vmem:[%s7 + $0x6f0] sm:$0xff] %vm297, %v6579
  %6970 = vst.msk [vmem:[%s7 + $0x6f8] sm:$0xff] %vm297, %v6584
  %6971 = vst.msk [vmem:[%s7 + $0x700] sm:$0xff] %vm297, %v6589
  %6972 = vst.msk [vmem:[%s7 + $0x708] sm:$0xff] %vm297, %v6594
  %6973 = vst.msk [vmem:[%s7 + $0x710] sm:$0xff] %vm297, %v6599
  %6974 = vst.msk [vmem:[%s7 + $0x718] sm:$0xff] %vm297, %v6604
  %6975 = vst.msk [vmem:[%s7 + $0x720] sm:$0xff] %vm297, %v6609
  %6976 = vst.msk [vmem:[%s7 + $0x728] sm:$0xff] %vm297, %v6614
  %6977 = vst.msk [vmem:[%s7 + $0x730] sm:$0xff] %vm297, %v6619
  %6978 = vst.msk [vmem:[%s7 + $0x738] sm:$0xff] %vm297, %v6624
  %6979 = vst.msk [vmem:[%s7 + $0x740] sm:$0xff] %vm297, %v6629
  %6980 = vst.msk [vmem:[%s7 + $0x748] sm:$0xff] %vm297, %v6634
  %6981 = vst.msk [vmem:[%s7 + $0x750] sm:$0xff] %vm297, %v6639
  %6982 = vst.msk [vmem:[%s7 + $0x758] sm:$0xff] %vm297, %v6644
  %6983 = vst.msk [vmem:[%s7 + $0x760] sm:$0xff] %vm297, %v6649
  %6984 = vst.msk [vmem:[%s7 + $0x768] sm:$0xff] %vm297, %v6654
  %6985 = vst.msk [vmem:[%s7 + $0x770] sm:$0xff] %vm297, %v6659
  %6986 = vst.msk [vmem:[%s7 + $0x778] sm:$0xff] %vm297, %v6664
  %6987 = vst.msk [vmem:[%s7 + $0x780] sm:$0xff] %vm297, %v6669
  %6988 = vst.msk [vmem:[%s7 + $0x788] sm:$0xff] %vm297, %v6674
  %6989 = vst.msk [vmem:[%s7 + $0x790] sm:$0xff] %vm297, %v6679
  %6990 = vst.msk [vmem:[%s7 + $0x798] sm:$0xff] %vm297, %v6684
  %6991 = vst.msk [vmem:[%s7 + $0x7a0] sm:$0xff] %vm297, %v6689
  %6992 = vst.msk [vmem:[%s7 + $0x7a8] sm:$0xff] %vm297, %v6694
  %6993 = vst.msk [vmem:[%s7 + $0x7b0] sm:$0xff] %vm297, %v6699
  %6994 = vst.msk [vmem:[%s7 + $0x7b8] sm:$0xff] %vm297, %v6704
  %6995 = vst.msk [vmem:[%s7 + $0x7c0] sm:$0xff] %vm297, %v6709
  %6996 = vst.msk [vmem:[%s7 + $0x7c8] sm:$0xff] %vm297, %v6714
  %6997 = vst.msk [vmem:[%s7 + $0x7d0] sm:$0xff] %vm297, %v6719
  %6998 = vst.msk [vmem:[%s7 + $0x7d8] sm:$0xff] %vm297, %v6724
  %6999 = vst.msk [vmem:[%s7 + $0x7e0] sm:$0xff] %vm297, %v6729
  %7000 = vst.msk [vmem:[%s7 + $0x7e8] sm:$0xff] %vm297, %v6734
  %7001 = vst.msk [vmem:[%s7 + $0x7f0] sm:$0xff] %vm297, %v6739
  %7002 = vst.msk [vmem:[%s7 + $0x7f8] sm:$0xff] %vm297, %v6744
  // Predicated region
  $region30: #{tpu_custom_call.1} parent=0 // pred_check
    _
  $region31: #{tpu_custom_call.1} parent=0 // pred_check_branch
    %7004 = sbr.rel (0) target = $region33
  $region32: #{tpu_custom_call.1} parent=0 // pred_region
    _
  $region33: #{tpu_custom_call.1} parent=0 // pred_fallthru
    _
  // Predicated region
  $region34: #{tpu_custom_call.1} parent=0 // pred_check
    _
  $region35: #{tpu_custom_call.1} parent=0 // pred_check_branch
    %7006 = sbr.rel (0) target = $region37
  $region36: #{tpu_custom_call.1} parent=0 // pred_region
    _
  $region37: #{tpu_custom_call.1} parent=0 // pred_fallthru
    _

</llo_original>
